<compile_context>
chip_gen: v7x
topology: tpu7x:2x2x1
jax: 0.10.0
libtpu: 0.0.40
codegen_flags: <defaults>
</compile_context>

<pallas_src>
import functools

import jax
import jax.numpy as jnp
from jax.experimental import pallas as pl
from jax.experimental.pallas import tpu as pltpu

_SELU_ALPHA = 1.6732632423543772848170429916717
_SELU_SCALE = 1.0507009873554804934193349852946


def _selu(x):
    return _SELU_SCALE * jnp.where(x > 0, x, _SELU_ALPHA * (jnp.exp(x) - 1.0))


def _group_norm_selu(x, proj, gamma, beta, eps):
    """GroupNorm (stats over spatial x in-group channels) + SELU.  x: (HW, C) f32.

    `proj` is the (C, C) group-mean projector (1/(HW*group_size) within a
    group, 0 elsewhere), so the per-channel group mean / mean-square come out
    of a single (1, C) x (C, C) MXU op each -- two small matmuls per GN instead
    of four one-hot reductions + broadcast-backs (review item)."""
    s1 = jnp.sum(x, axis=0, keepdims=True)           # (1, C)
    s2 = jnp.sum(x * x, axis=0, keepdims=True)       # (1, C)
    mean = jnp.dot(s1, proj, preferred_element_type=jnp.float32)   # (1, C)
    msq = jnp.dot(s2, proj, preferred_element_type=jnp.float32)    # (1, C)
    # TODO(synk): single-pass E[x^2]-mean^2 variance; switch to a two-pass form
    # if cancellation vs the torch reference ever matters.
    rstd = jax.lax.rsqrt(msq - mean * mean + eps)
    return _selu((x - mean) * rstd * gamma + beta)


def _conv3x3_stacked(h, w_ref, bias, width, tap_ref, taps_per_group):
    """3x3 / stride-1 / pad-1 conv of the flattened (HW, Cin) activation `h`.

    The 9 shifted taps (pltpu.roll on the flattened H*W axis -> XLU slot) are
    copied, masked and bf16-cast into `tap_ref` in groups of `taps_per_group`,
    so the MXU sees K = taps_per_group*Cin contractions instead of nine K=Cin
    matmuls (review item).  No im2col tensor ever touches HBM.

    w_ref : (9*Cin, Cout) bf16 ref; rows k*Cin:(k+1)*Cin belong to tap kh*3+kw.
    bias  : (1, Cout) f32.
    tap_ref: (HW, >= taps_per_group*Cin) bf16 VMEM scratch.
    """
    hw, cin = h.shape
    cout = w_ref.shape[1]
    height = hw // width

    # In-kernel boundary masks from iota (review item: no lane-padded mask
    # input).  Row bounds need only raw-index compares; column extraction is a
    # bit-and for power-of-two W.
    pos = jax.lax.broadcasted_iota(jnp.int32, (hw, cin), 0)
    if width & (width - 1) == 0:
        col = pos & (width - 1)
    else:
        # TODO(synk): non-power-of-two W relies on vector remainder lowering.
        col = pos % width
    up_ok = pos >= width                      # source row r-1 >= 0
    down_ok = pos < (height - 1) * width      # source row r+1 <= H-1
    left_ok = col >= 1                        # source col c-1 >= 0
    right_ok = col < (width - 1)              # source col c+1 <= W-1

    def tap_bf16(k):
        kh, kw = k // 3, k % 3
        dr, dc = kh - 1, kw - 1
        if dr == 0 and dc == 0:
            return h.astype(jnp.bfloat16)     # centre tap: no shift / mask
        shift = dr * width + dc               # flattened-index offset
        # rolled[p] = h[p + shift]; the wrap-around is killed by the mask.
        t = pltpu.roll(h, shift=(-shift) % hw, axis=0)
        mask = None
        for cond, needed in ((up_ok, dr < 0), (down_ok, dr > 0),
                             (left_ok, dc < 0), (right_ok, dc > 0)):
            if needed:
                mask = cond if mask is None else (mask & cond)
        # jnp.where (not *0.0): keeps NaN/Inf from leaking out of masked taps.
        return jnp.where(mask, t, 0.0).astype(jnp.bfloat16)

    acc = jnp.zeros((hw, cout), jnp.float32)
    k = 0
    while k < 9:
        g = min(taps_per_group, 9 - k)
        if g == 1:
            stacked = tap_bf16(k)
        else:
            for i in range(g):
                tap_ref[:, i * cin:(i + 1) * cin] = tap_bf16(k + i)
            stacked = tap_ref[:, 0:g * cin]
        acc = acc + jnp.dot(stacked, w_ref[k * cin:(k + g) * cin, :],
                            preferred_element_type=jnp.float32)
        k += g
    return acc + bias


def _resblock_kernel(x_ref, temb_ref,
                     g1_ref, b1_ref, p1_ref, w1_ref, cb1_ref,
                     g2_ref, b2_ref, p2_ref, w2_ref, cb2_ref,
                     o_ref, tap_ref, *, width, eps, tpg1, tpg2):
    x = x_ref[0]                                               # (HW, Cin) f32

    # --- GroupNorm1 + SELU ---------------------------------------------------
    h1 = _group_norm_selu(x, p1_ref[...], g1_ref[...], b1_ref[...], eps)

    # --- conv1 (3x3/pad1, stacked-tap MXU) + hoisted time embedding ----------
    x1t = (_conv3x3_stacked(h1, w1_ref, cb1_ref[...], width, tap_ref, tpg1)
           + temb_ref[0])                                      # conv1_out + t_emb

    # --- GroupNorm2 + SELU ----------------------------------------------------
    # TODO(synk): nn.Dropout(p=0.5) is treated as inference-mode identity.
    h2 = _group_norm_selu(x1t, p2_ref[...], g2_ref[...], b2_ref[...], eps)

    # --- conv2 with the residual (+ conv1_out + t_emb) fused into the epilogue
    out = _conv3x3_stacked(h2, w2_ref, cb2_ref[...], width, tap_ref, tpg2) + x1t
    # TODO(synk): for Cout < 128, folding two spatial rows per store
    # ((HW, Cout) -> (HW/2, 2*Cout)) would make the HBM writeback lane-dense.
    o_ref[0] = out.astype(o_ref.dtype)


def _mxu_depth():
    """128 on v5-family (4x128x128 MXU), 256 on v6e/v7x (2x256x256 MXU)."""
    try:
        kind = jax.devices()[0].device_kind.lower()
    except Exception:
        kind = ""
    return 128 if "v5" in kind else 256


def resblock_forward(x, t, params, *, num_groups=4, eps=1e-5, taps_per_group=None):
    """x: (B, H, W, Cin) NHWC, t: (B, Tin) -> (B, H, W, Cout).

    The per-batch (H*W, C) tile stays VMEM-resident for the whole block.
    TODO(synk): for very large H*W on v7x (64 MiB VMEM) this should grow a
    spatial grid axis (GN stats-accumulate pass + halo-tiled conv)."""
    B, H, W, Cin = x.shape
    Cout = params["conv1_b"].shape[0]
    G = num_groups
    HW = H * W
    assert Cin % G == 0 and Cout % G == 0

    if taps_per_group is None:
        mxu_k = _mxu_depth()
        pick = lambda c: max(1, min(9, mxu_k // max(c, 1)))
    else:
        pick = lambda c: max(1, min(9, int(taps_per_group)))
    tpg1, tpg2 = pick(Cin), pick(Cout)

    def group_proj(c):
        """(C, C) group-mean projector: 1/(HW*group_size) within a group."""
        gsz = c // G
        same = (jnp.arange(c)[:, None] // gsz) == (jnp.arange(c)[None, :] // gsz)
        return same.astype(jnp.float32) / float(HW * gsz)

    proj1 = group_proj(Cin)
    proj2 = group_proj(Cout)

    row = lambda v: v.reshape(1, -1).astype(jnp.float32)
    # bf16 weights for the MXU; biases / norm params stay f32.
    w1 = params["conv1_w"].reshape(9 * Cin, Cout).astype(jnp.bfloat16)
    w2 = params["conv2_w"].reshape(9 * Cout, Cout).astype(jnp.bfloat16)

    # Time-embedding MLP hoisted out of the kernel (review item): one batched
    # XLA matmul instead of an M=1 MXU op + EUP exp per grid step.
    t_emb = (jax.nn.selu(t.astype(jnp.float32))
             @ params["ff1_w"].astype(jnp.float32)
             + params["ff1_b"].astype(jnp.float32)).reshape(B, 1, Cout)

    flops = 2 * B * HW * 9 * (Cin * Cout + Cout * Cout) + 8 * B * HW * (Cin + Cout)
    transcendentals = B * HW * (Cin + Cout)
    bytes_accessed = (4 * B * HW * (Cin + 2 * Cout) + 4 * B * Cout
                      + 2 * 9 * (Cin + Cout) * Cout + 4 * (Cin * Cin + Cout * Cout))

    kernel = functools.partial(_resblock_kernel, width=W, eps=eps,
                               tpg1=tpg1, tpg2=tpg2)

    # NOTE: constant inputs keep default (double) buffering; pl.Buffered(1)
    # would halve their VMEM but is left off to keep lowering maximally robust
    # at these small sizes.
    rep = lambda s: pl.BlockSpec(s, lambda b: (0,) * len(s))
    out = pl.pallas_call(
        kernel,
        out_shape=jax.ShapeDtypeStruct((B, HW, Cout), jnp.float32),
        grid=(B,),
        in_specs=[
            pl.BlockSpec((1, HW, Cin), lambda b: (b, 0, 0)),   # x
            pl.BlockSpec((1, 1, Cout), lambda b: (b, 0, 0)),   # hoisted t_emb
            rep((1, Cin)), rep((1, Cin)),                      # norm1 gamma / beta
            rep((Cin, Cin)),                                   # norm1 group projector
            rep((9 * Cin, Cout)), rep((1, Cout)),              # conv1 w / b
            rep((1, Cout)), rep((1, Cout)),                    # norm2 gamma / beta
            rep((Cout, Cout)),                                 # norm2 group projector
            rep((9 * Cout, Cout)), rep((1, Cout)),             # conv2 w / b
        ],
        out_specs=pl.BlockSpec((1, HW, Cout), lambda b: (b, 0, 0)),
        scratch_shapes=[
            pltpu.VMEM((HW, max(tpg1 * Cin, tpg2 * Cout)), jnp.bfloat16),
        ],
        compiler_params=pltpu.CompilerParams(
            dimension_semantics=("parallel",)),                # both TCs on v7x
        cost_estimate=pl.CostEstimate(flops=flops,
                                      transcendentals=transcendentals,
                                      bytes_accessed=bytes_accessed),
    )(
        x.reshape(B, HW, Cin).astype(jnp.float32), t_emb,
        row(params["norm1_g"]), row(params["norm1_b"]), proj1,
        w1, row(params["conv1_b"]),
        row(params["norm2_g"]), row(params["norm2_b"]), proj2,
        w2, row(params["conv2_b"]),
    )
    return out.reshape(B, H, W, Cout)


# -----------------------------------------------------------------------------
# Pure-JAX/XLA reference (matches the torch module, NHWC activations).
# -----------------------------------------------------------------------------
def _reference_forward(x, t, params, *, num_groups=4, eps=1e-5):
    def gn(y, gamma, beta):
        b, h, w, c = y.shape
        yg = y.reshape(b, h, w, num_groups, c // num_groups)
        mean = jnp.mean(yg, axis=(1, 2, 4), keepdims=True)
        var = jnp.mean((yg - mean) ** 2, axis=(1, 2, 4), keepdims=True)
        yn = ((yg - mean) * jax.lax.rsqrt(var + eps)).reshape(b, h, w, c)
        return yn * gamma + beta

    def conv(y, w, bias):
        return jax.lax.conv_general_dilated(
            y, w, window_strides=(1, 1), padding="SAME",
            dimension_numbers=("NHWC", "HWIO", "NHWC")) + bias

    h1 = conv(jax.nn.selu(gn(x, params["norm1_g"], params["norm1_b"])),
              params["conv1_w"], params["conv1_b"])
    t_emb = (jax.nn.selu(t) @ params["ff1_w"] + params["ff1_b"])[:, None, None, :]
    x1t = h1 + t_emb
    h2 = conv(jax.nn.selu(gn(x1t, params["norm2_g"], params["norm2_b"])),
              params["conv2_w"], params["conv2_b"])
    return h2 + x1t


# -----------------------------------------------------------------------------
# Deterministic synthetic parameters (shapes match the torch module).
# -----------------------------------------------------------------------------
def init_resblock_params(key, in_dim, out_dim, in_time):
    ks = jax.random.split(key, 6)
    s = 0.05
    return {
        "norm1_g": jnp.ones((in_dim,), jnp.float32),
        "norm1_b": jnp.zeros((in_dim,), jnp.float32),
        "conv1_w": s * jax.random.normal(ks[0], (3, 3, in_dim, out_dim), jnp.float32),
        "conv1_b": s * jax.random.normal(ks[1], (out_dim,), jnp.float32),
        "norm2_g": jnp.ones((out_dim,), jnp.float32),
        "norm2_b": jnp.zeros((out_dim,), jnp.float32),
        "conv2_w": s * jax.random.normal(ks[2], (3, 3, out_dim, out_dim), jnp.float32),
        "conv2_b": s * jax.random.normal(ks[3], (out_dim,), jnp.float32),
        "ff1_w": s * jax.random.normal(ks[4], (in_time, out_dim), jnp.float32),
        "ff1_b": s * jax.random.normal(ks[5], (out_dim,), jnp.float32),
    }


if __name__ == "__main__":
    B, H, W = 2, 16, 16
    in_dim, out_dim, in_time, num_groups = 64, 64, 128, 4   # module channel defaults

    key = jax.random.PRNGKey(0)
    kp, kx, kt = jax.random.split(key, 3)
    params = init_resblock_params(kp, in_dim, out_dim, in_time)

    # NHWC input (the torch forward permutes to NCHW internally).
    x = jax.random.normal(kx, (B, H, W, in_dim), jnp.float32)
    t = jax.random.normal(kt, (B, in_time), jnp.float32)

    fwd = jax.jit(functools.partial(resblock_forward, num_groups=num_groups))
    out = jax.block_until_ready(fwd(x, t, params))

    assert out.shape == (B, H, W, out_dim), out.shape
    assert bool(jnp.all(jnp.isfinite(out)))

    # Loose tolerance: the kernel uses bf16 conv weights / activations on the
    # MXU with f32 accumulation, the reference is pure f32.
    ref = _reference_forward(x, t, params, num_groups=num_groups)
    err = float(jnp.max(jnp.abs(out - ref)))
    scale = float(jnp.max(jnp.abs(ref))) + 1.0
    assert err <= 5e-2 * scale, (err, scale)

    print("KERNEL_OK")
</pallas_src>

<mosaic_0001>
module attributes {stable_mosaic.version = 11 : i64} {
  func.func @_resblock_kernel(%arg0: i32, %arg1: memref<1x256x64xf32, #tpu.memory_space<vmem>>, %arg2: memref<1x1x64xf32, #tpu.memory_space<vmem>>, %arg3: memref<1x64xf32, #tpu.memory_space<vmem>>, %arg4: memref<1x64xf32, #tpu.memory_space<vmem>>, %arg5: memref<64x64xf32, #tpu.memory_space<vmem>>, %arg6: memref<576x64xbf16, #tpu.memory_space<vmem>>, %arg7: memref<1x64xf32, #tpu.memory_space<vmem>>, %arg8: memref<1x64xf32, #tpu.memory_space<vmem>>, %arg9: memref<1x64xf32, #tpu.memory_space<vmem>>, %arg10: memref<64x64xf32, #tpu.memory_space<vmem>>, %arg11: memref<576x64xbf16, #tpu.memory_space<vmem>>, %arg12: memref<1x64xf32, #tpu.memory_space<vmem>>, %arg13: memref<1x256x64xf32, #tpu.memory_space<vmem>>, %arg14: memref<256x256xbf16, #tpu.memory_space<vmem>>) attributes {dimension_semantics = [#tpu.dimension_semantics<parallel>], iteration_bounds = array<i64: 2>, scalar_prefetch = 0 : i64, scratch_operands = 1 : i64, tpu.core_type = #tpu.core_type<tc>, window_params = [{transform_indices = @transform_0, window_bounds = array<i64: 1, 256, 64>}, {transform_indices = @transform_1, window_bounds = array<i64: 1, 1, 64>}, {pipeline_mode = #tpu.pipeline_mode<synchronous>, transform_indices = @transform_2, window_bounds = array<i64: 1, 64>}, {pipeline_mode = #tpu.pipeline_mode<synchronous>, transform_indices = @transform_3, window_bounds = array<i64: 1, 64>}, {pipeline_mode = #tpu.pipeline_mode<synchronous>, transform_indices = @transform_4, window_bounds = array<i64: 64, 64>}, {pipeline_mode = #tpu.pipeline_mode<synchronous>, transform_indices = @transform_5, window_bounds = array<i64: 576, 64>}, {pipeline_mode = #tpu.pipeline_mode<synchronous>, transform_indices = @transform_6, window_bounds = array<i64: 1, 64>}, {pipeline_mode = #tpu.pipeline_mode<synchronous>, transform_indices = @transform_7, window_bounds = array<i64: 1, 64>}, {pipeline_mode = #tpu.pipeline_mode<synchronous>, transform_indices = @transform_8, window_bounds = array<i64: 1, 64>}, {pipeline_mode = #tpu.pipeline_mode<synchronous>, transform_indices = @transform_9, window_bounds = array<i64: 64, 64>}, {pipeline_mode = #tpu.pipeline_mode<synchronous>, transform_indices = @transform_10, window_bounds = array<i64: 576, 64>}, {pipeline_mode = #tpu.pipeline_mode<synchronous>, transform_indices = @transform_11, window_bounds = array<i64: 1, 64>}, {transform_indices = @transform_12, window_bounds = array<i64: 1, 256, 64>}]} {
    %c0 = arith.constant 0 : index
    %c0_0 = arith.constant 0 : index
    %c0_1 = arith.constant 0 : index
    %0 = vector.load %arg1[%c0, %c0_0, %c0_1] : memref<1x256x64xf32, #tpu.memory_space<vmem>>, vector<1x256x64xf32>
    %1 = vector.shape_cast %0 : vector<1x256x64xf32> to vector<256x64xf32>
    %c0_2 = arith.constant 0 : index
    %c0_3 = arith.constant 0 : index
    %2 = vector.load %arg5[%c0_2, %c0_3] : memref<64x64xf32, #tpu.memory_space<vmem>>, vector<64x64xf32>
    %c0_4 = arith.constant 0 : index
    %c0_5 = arith.constant 0 : index
    %3 = vector.load %arg3[%c0_4, %c0_5] : memref<1x64xf32, #tpu.memory_space<vmem>>, vector<1x64xf32>
    %c0_6 = arith.constant 0 : index
    %c0_7 = arith.constant 0 : index
    %4 = vector.load %arg4[%c0_6, %c0_7] : memref<1x64xf32, #tpu.memory_space<vmem>>, vector<1x64xf32>
    %cst = arith.constant dense<0.000000e+00> : vector<64xf32>
    %5 = vector.multi_reduction <add>, %1, %cst [0] : vector<256x64xf32> to vector<64xf32>
    %6 = vector.shape_cast %5 : vector<64xf32> to vector<1x64xf32>
    %7 = arith.mulf %1, %1 : vector<256x64xf32>
    %cst_8 = arith.constant dense<0.000000e+00> : vector<64xf32>
    %8 = vector.multi_reduction <add>, %7, %cst_8 [0] : vector<256x64xf32> to vector<64xf32>
    %9 = vector.shape_cast %8 : vector<64xf32> to vector<1x64xf32>
    %cst_9 = arith.constant dense<0.000000e+00> : vector<1x64xf32>
    %10 = tpu.matmul %6, %2, %cst_9 {dimension_numbers = #tpu.dot_dimension_numbers<[1], [0], [0], [1], [0, 0, 1, 1], [], []>} : vector<1x64xf32>, vector<64x64xf32>, vector<1x64xf32> -> vector<1x64xf32>
    %cst_10 = arith.constant dense<0.000000e+00> : vector<1x64xf32>
    %11 = tpu.matmul %9, %2, %cst_10 {dimension_numbers = #tpu.dot_dimension_numbers<[1], [0], [0], [1], [0, 0, 1, 1], [], []>} : vector<1x64xf32>, vector<64x64xf32>, vector<1x64xf32> -> vector<1x64xf32>
    %12 = arith.mulf %10, %10 : vector<1x64xf32>
    %13 = arith.subf %11, %12 : vector<1x64xf32>
    %cst_11 = arith.constant 9.99999974E-6 : f32
    %14 = vector.broadcast %cst_11 : f32 to vector<1x64xf32>
    %15 = arith.addf %13, %14 : vector<1x64xf32>
    %16 = math.rsqrt %15 : vector<1x64xf32>
    %17 = vector.broadcast %10 : vector<1x64xf32> to vector<256x64xf32>
    %18 = arith.subf %1, %17 : vector<256x64xf32>
    %19 = vector.broadcast %16 : vector<1x64xf32> to vector<256x64xf32>
    %20 = arith.mulf %18, %19 : vector<256x64xf32>
    %21 = vector.broadcast %3 : vector<1x64xf32> to vector<256x64xf32>
    %22 = arith.mulf %20, %21 : vector<256x64xf32>
    %23 = vector.broadcast %4 : vector<1x64xf32> to vector<256x64xf32>
    %24 = arith.addf %22, %23 : vector<256x64xf32>
    %cst_12 = arith.constant 0.000000e+00 : f32
    %25 = vector.broadcast %cst_12 : f32 to vector<256x64xf32>
    %26 = arith.cmpf ogt, %24, %25 : vector<256x64xf32>
    %27 = math.exp %24 : vector<256x64xf32>
    %cst_13 = arith.constant 1.000000e+00 : f32
    %28 = vector.broadcast %cst_13 : f32 to vector<256x64xf32>
    %29 = arith.subf %27, %28 : vector<256x64xf32>
    %cst_14 = arith.constant 1.67326319 : f32
    %30 = vector.broadcast %cst_14 : f32 to vector<256x64xf32>
    %31 = arith.mulf %30, %29 : vector<256x64xf32>
    %32 = arith.select %26, %24, %31 : vector<256x64xi1>, vector<256x64xf32>
    %cst_15 = arith.constant 1.05070102 : f32
    %33 = vector.broadcast %cst_15 : f32 to vector<256x64xf32>
    %34 = arith.mulf %33, %32 : vector<256x64xf32>
    %c0_16 = arith.constant 0 : index
    %c0_17 = arith.constant 0 : index
    %35 = vector.load %arg7[%c0_16, %c0_17] : memref<1x64xf32, #tpu.memory_space<vmem>>, vector<1x64xf32>
    %36 = tpu.iota {dimensions = array<i32: 0>} : vector<256x64xi32>
    %c15_i32 = arith.constant 15 : i32
    %37 = vector.broadcast %c15_i32 : i32 to vector<256x64xi32>
    %38 = arith.andi %36, %37 : vector<256x64xi32>
    %c16_i32 = arith.constant 16 : i32
    %39 = vector.broadcast %c16_i32 : i32 to vector<256x64xi32>
    %40 = arith.cmpi sge, %36, %39 : vector<256x64xi32>
    %c240_i32 = arith.constant 240 : i32
    %41 = vector.broadcast %c240_i32 : i32 to vector<256x64xi32>
    %42 = arith.cmpi slt, %36, %41 : vector<256x64xi32>
    %c1_i32 = arith.constant 1 : i32
    %43 = vector.broadcast %c1_i32 : i32 to vector<256x64xi32>
    %44 = arith.cmpi sge, %38, %43 : vector<256x64xi32>
    %c15_i32_18 = arith.constant 15 : i32
    %45 = vector.broadcast %c15_i32_18 : i32 to vector<256x64xi32>
    %46 = arith.cmpi slt, %38, %45 : vector<256x64xi32>
    %cst_19 = arith.constant 0.000000e+00 : f32
    %47 = vector.broadcast %cst_19 : f32 to vector<256x64xf32>
    %c17_i32 = arith.constant 17 : i32
    %48 = tpu.dynamic_rotate %34 by %c17_i32 dim 0 : vector<256x64xf32>, i32 -> vector<256x64xf32>
    %49 = arith.andi %40, %44 : vector<256x64xi1>
    %cst_20 = arith.constant 0.000000e+00 : f32
    %50 = vector.broadcast %cst_20 : f32 to vector<256x64xf32>
    %51 = arith.select %49, %48, %50 : vector<256x64xi1>, vector<256x64xf32>
    %52 = arith.truncf %51 : vector<256x64xf32> to vector<256x64xbf16>
    %c0_21 = arith.constant 0 : index
    %c0_22 = arith.constant 0 : index
    %53 = vector.load %arg14[%c0_21, %c0_22] : memref<256x256xbf16, #tpu.memory_space<vmem>>, vector<256x64xbf16>
    tpu.vector_store %arg14[%c0_21, %c0_22], %52 {strides = array<i32>} : memref<256x256xbf16, #tpu.memory_space<vmem>>, vector<256x64xbf16>,
    %c16_i32_23 = arith.constant 16 : i32
    %54 = tpu.dynamic_rotate %34 by %c16_i32_23 dim 0 : vector<256x64xf32>, i32 -> vector<256x64xf32>
    %cst_24 = arith.constant 0.000000e+00 : f32
    %55 = vector.broadcast %cst_24 : f32 to vector<256x64xf32>
    %56 = arith.select %40, %54, %55 : vector<256x64xi1>, vector<256x64xf32>
    %57 = arith.truncf %56 : vector<256x64xf32> to vector<256x64xbf16>
    %c0_25 = arith.constant 0 : index
    %c64 = arith.constant 64 : index
    %58 = vector.load %arg14[%c0_25, %c64] : memref<256x256xbf16, #tpu.memory_space<vmem>>, vector<256x64xbf16>
    tpu.vector_store %arg14[%c0_25, %c64], %57 {strides = array<i32>} : memref<256x256xbf16, #tpu.memory_space<vmem>>, vector<256x64xbf16>,
    %c15_i32_26 = arith.constant 15 : i32
    %59 = tpu.dynamic_rotate %34 by %c15_i32_26 dim 0 : vector<256x64xf32>, i32 -> vector<256x64xf32>
    %60 = arith.andi %40, %46 : vector<256x64xi1>
    %cst_27 = arith.constant 0.000000e+00 : f32
    %61 = vector.broadcast %cst_27 : f32 to vector<256x64xf32>
    %62 = arith.select %60, %59, %61 : vector<256x64xi1>, vector<256x64xf32>
    %63 = arith.truncf %62 : vector<256x64xf32> to vector<256x64xbf16>
    %c0_28 = arith.constant 0 : index
    %c128 = arith.constant 128 : index
    %64 = vector.load %arg14[%c0_28, %c128] : memref<256x256xbf16, #tpu.memory_space<vmem>>, vector<256x64xbf16>
    tpu.vector_store %arg14[%c0_28, %c128], %63 {strides = array<i32>} : memref<256x256xbf16, #tpu.memory_space<vmem>>, vector<256x64xbf16>,
    %c1_i32_29 = arith.constant 1 : i32
    %65 = tpu.dynamic_rotate %34 by %c1_i32_29 dim 0 : vector<256x64xf32>, i32 -> vector<256x64xf32>
    %cst_30 = arith.constant 0.000000e+00 : f32
    %66 = vector.broadcast %cst_30 : f32 to vector<256x64xf32>
    %67 = arith.select %44, %65, %66 : vector<256x64xi1>, vector<256x64xf32>
    %68 = arith.truncf %67 : vector<256x64xf32> to vector<256x64xbf16>
    %c0_31 = arith.constant 0 : index
    %c192 = arith.constant 192 : index
    %69 = vector.load %arg14[%c0_31, %c192] : memref<256x256xbf16, #tpu.memory_space<vmem>>, vector<256x64xbf16>
    tpu.vector_store %arg14[%c0_31, %c192], %68 {strides = array<i32>} : memref<256x256xbf16, #tpu.memory_space<vmem>>, vector<256x64xbf16>,
    %c0_32 = arith.constant 0 : index
    %c0_33 = arith.constant 0 : index
    %70 = vector.load %arg14[%c0_32, %c0_33] : memref<256x256xbf16, #tpu.memory_space<vmem>>, vector<256x256xbf16>
    %c0_34 = arith.constant 0 : index
    %c0_35 = arith.constant 0 : index
    %71 = vector.load %arg6[%c0_34, %c0_35] : memref<576x64xbf16, #tpu.memory_space<vmem>>, vector<256x64xbf16>
    %cst_36 = arith.constant dense<0.000000e+00> : vector<256x64xf32>
    %72 = tpu.matmul %70, %71, %cst_36 {dimension_numbers = #tpu.dot_dimension_numbers<[1], [0], [0], [1], [0, 0, 1, 1], [], []>} : vector<256x256xbf16>, vector<256x64xbf16>, vector<256x64xf32> -> vector<256x64xf32>
    %73 = arith.addf %47, %72 : vector<256x64xf32>
    %74 = arith.truncf %34 : vector<256x64xf32> to vector<256x64xbf16>
    %c0_37 = arith.constant 0 : index
    %c0_38 = arith.constant 0 : index
    %75 = vector.load %arg14[%c0_37, %c0_38] : memref<256x256xbf16, #tpu.memory_space<vmem>>, vector<256x64xbf16>
    tpu.vector_store %arg14[%c0_37, %c0_38], %74 {strides = array<i32>} : memref<256x256xbf16, #tpu.memory_space<vmem>>, vector<256x64xbf16>,
    %c255_i32 = arith.constant 255 : i32
    %76 = tpu.dynamic_rotate %34 by %c255_i32 dim 0 : vector<256x64xf32>, i32 -> vector<256x64xf32>
    %cst_39 = arith.constant 0.000000e+00 : f32
    %77 = vector.broadcast %cst_39 : f32 to vector<256x64xf32>
    %78 = arith.select %46, %76, %77 : vector<256x64xi1>, vector<256x64xf32>
    %79 = arith.truncf %78 : vector<256x64xf32> to vector<256x64xbf16>
    %c0_40 = arith.constant 0 : index
    %c64_41 = arith.constant 64 : index
    %80 = vector.load %arg14[%c0_40, %c64_41] : memref<256x256xbf16, #tpu.memory_space<vmem>>, vector<256x64xbf16>
    tpu.vector_store %arg14[%c0_40, %c64_41], %79 {strides = array<i32>} : memref<256x256xbf16, #tpu.memory_space<vmem>>, vector<256x64xbf16>,
    %c241_i32 = arith.constant 241 : i32
    %81 = tpu.dynamic_rotate %34 by %c241_i32 dim 0 : vector<256x64xf32>, i32 -> vector<256x64xf32>
    %82 = arith.andi %42, %44 : vector<256x64xi1>
    %cst_42 = arith.constant 0.000000e+00 : f32
    %83 = vector.broadcast %cst_42 : f32 to vector<256x64xf32>
    %84 = arith.select %82, %81, %83 : vector<256x64xi1>, vector<256x64xf32>
    %85 = arith.truncf %84 : vector<256x64xf32> to vector<256x64xbf16>
    %c0_43 = arith.constant 0 : index
    %c128_44 = arith.constant 128 : index
    %86 = vector.load %arg14[%c0_43, %c128_44] : memref<256x256xbf16, #tpu.memory_space<vmem>>, vector<256x64xbf16>
    tpu.vector_store %arg14[%c0_43, %c128_44], %85 {strides = array<i32>} : memref<256x256xbf16, #tpu.memory_space<vmem>>, vector<256x64xbf16>,
    %c240_i32_45 = arith.constant 240 : i32
    %87 = tpu.dynamic_rotate %34 by %c240_i32_45 dim 0 : vector<256x64xf32>, i32 -> vector<256x64xf32>
    %cst_46 = arith.constant 0.000000e+00 : f32
    %88 = vector.broadcast %cst_46 : f32 to vector<256x64xf32>
    %89 = arith.select %42, %87, %88 : vector<256x64xi1>, vector<256x64xf32>
    %90 = arith.truncf %89 : vector<256x64xf32> to vector<256x64xbf16>
    %c0_47 = arith.constant 0 : index
    %c192_48 = arith.constant 192 : index
    %91 = vector.load %arg14[%c0_47, %c192_48] : memref<256x256xbf16, #tpu.memory_space<vmem>>, vector<256x64xbf16>
    tpu.vector_store %arg14[%c0_47, %c192_48], %90 {strides = array<i32>} : memref<256x256xbf16, #tpu.memory_space<vmem>>, vector<256x64xbf16>,
    %c0_49 = arith.constant 0 : index
    %c0_50 = arith.constant 0 : index
    %92 = vector.load %arg14[%c0_49, %c0_50] : memref<256x256xbf16, #tpu.memory_space<vmem>>, vector<256x256xbf16>
    %c256 = arith.constant 256 : index
    %c0_51 = arith.constant 0 : index
    %93 = vector.load %arg6[%c256, %c0_51] : memref<576x64xbf16, #tpu.memory_space<vmem>>, vector<256x64xbf16>
    %cst_52 = arith.constant dense<0.000000e+00> : vector<256x64xf32>
    %94 = tpu.matmul %92, %93, %cst_52 {dimension_numbers = #tpu.dot_dimension_numbers<[1], [0], [0], [1], [0, 0, 1, 1], [], []>} : vector<256x256xbf16>, vector<256x64xbf16>, vector<256x64xf32> -> vector<256x64xf32>
    %95 = arith.addf %73, %94 : vector<256x64xf32>
    %c239_i32 = arith.constant 239 : i32
    %96 = tpu.dynamic_rotate %34 by %c239_i32 dim 0 : vector<256x64xf32>, i32 -> vector<256x64xf32>
    %97 = arith.andi %42, %46 : vector<256x64xi1>
    %cst_53 = arith.constant 0.000000e+00 : f32
    %98 = vector.broadcast %cst_53 : f32 to vector<256x64xf32>
    %99 = arith.select %97, %96, %98 : vector<256x64xi1>, vector<256x64xf32>
    %100 = arith.truncf %99 : vector<256x64xf32> to vector<256x64xbf16>
    %c512 = arith.constant 512 : index
    %c0_54 = arith.constant 0 : index
    %101 = vector.load %arg6[%c512, %c0_54] : memref<576x64xbf16, #tpu.memory_space<vmem>>, vector<64x64xbf16>
    %cst_55 = arith.constant dense<0.000000e+00> : vector<256x64xf32>
    %102 = tpu.matmul %100, %101, %cst_55 {dimension_numbers = #tpu.dot_dimension_numbers<[1], [0], [0], [1], [0, 0, 1, 1], [], []>} : vector<256x64xbf16>, vector<64x64xbf16>, vector<256x64xf32> -> vector<256x64xf32>
    %103 = arith.addf %95, %102 : vector<256x64xf32>
    %104 = vector.broadcast %35 : vector<1x64xf32> to vector<256x64xf32>
    %105 = arith.addf %103, %104 : vector<256x64xf32>
    %c0_56 = arith.constant 0 : index
    %c0_57 = arith.constant 0 : index
    %c0_58 = arith.constant 0 : index
    %106 = vector.load %arg2[%c0_56, %c0_57, %c0_58] : memref<1x1x64xf32, #tpu.memory_space<vmem>>, vector<1x1x64xf32>
    %107 = vector.shape_cast %106 : vector<1x1x64xf32> to vector<1x64xf32>
    %108 = vector.broadcast %107 : vector<1x64xf32> to vector<256x64xf32>
    %109 = arith.addf %105, %108 : vector<256x64xf32>
    %c0_59 = arith.constant 0 : index
    %c0_60 = arith.constant 0 : index
    %110 = vector.load %arg10[%c0_59, %c0_60] : memref<64x64xf32, #tpu.memory_space<vmem>>, vector<64x64xf32>
    %c0_61 = arith.constant 0 : index
    %c0_62 = arith.constant 0 : index
    %111 = vector.load %arg8[%c0_61, %c0_62] : memref<1x64xf32, #tpu.memory_space<vmem>>, vector<1x64xf32>
    %c0_63 = arith.constant 0 : index
    %c0_64 = arith.constant 0 : index
    %112 = vector.load %arg9[%c0_63, %c0_64] : memref<1x64xf32, #tpu.memory_space<vmem>>, vector<1x64xf32>
    %cst_65 = arith.constant dense<0.000000e+00> : vector<64xf32>
    %113 = vector.multi_reduction <add>, %109, %cst_65 [0] : vector<256x64xf32> to vector<64xf32>
    %114 = vector.shape_cast %113 : vector<64xf32> to vector<1x64xf32>
    %115 = arith.mulf %109, %109 : vector<256x64xf32>
    %cst_66 = arith.constant dense<0.000000e+00> : vector<64xf32>
    %116 = vector.multi_reduction <add>, %115, %cst_66 [0] : vector<256x64xf32> to vector<64xf32>
    %117 = vector.shape_cast %116 : vector<64xf32> to vector<1x64xf32>
    %cst_67 = arith.constant dense<0.000000e+00> : vector<1x64xf32>
    %118 = tpu.matmul %114, %110, %cst_67 {dimension_numbers = #tpu.dot_dimension_numbers<[1], [0], [0], [1], [0, 0, 1, 1], [], []>} : vector<1x64xf32>, vector<64x64xf32>, vector<1x64xf32> -> vector<1x64xf32>
    %cst_68 = arith.constant dense<0.000000e+00> : vector<1x64xf32>
    %119 = tpu.matmul %117, %110, %cst_68 {dimension_numbers = #tpu.dot_dimension_numbers<[1], [0], [0], [1], [0, 0, 1, 1], [], []>} : vector<1x64xf32>, vector<64x64xf32>, vector<1x64xf32> -> vector<1x64xf32>
    %120 = arith.mulf %118, %118 : vector<1x64xf32>
    %121 = arith.subf %119, %120 : vector<1x64xf32>
    %cst_69 = arith.constant 9.99999974E-6 : f32
    %122 = vector.broadcast %cst_69 : f32 to vector<1x64xf32>
    %123 = arith.addf %121, %122 : vector<1x64xf32>
    %124 = math.rsqrt %123 : vector<1x64xf32>
    %125 = vector.broadcast %118 : vector<1x64xf32> to vector<256x64xf32>
    %126 = arith.subf %109, %125 : vector<256x64xf32>
    %127 = vector.broadcast %124 : vector<1x64xf32> to vector<256x64xf32>
    %128 = arith.mulf %126, %127 : vector<256x64xf32>
    %129 = vector.broadcast %111 : vector<1x64xf32> to vector<256x64xf32>
    %130 = arith.mulf %128, %129 : vector<256x64xf32>
    %131 = vector.broadcast %112 : vector<1x64xf32> to vector<256x64xf32>
    %132 = arith.addf %130, %131 : vector<256x64xf32>
    %cst_70 = arith.constant 0.000000e+00 : f32
    %133 = vector.broadcast %cst_70 : f32 to vector<256x64xf32>
    %134 = arith.cmpf ogt, %132, %133 : vector<256x64xf32>
    %135 = math.exp %132 : vector<256x64xf32>
    %cst_71 = arith.constant 1.000000e+00 : f32
    %136 = vector.broadcast %cst_71 : f32 to vector<256x64xf32>
    %137 = arith.subf %135, %136 : vector<256x64xf32>
    %cst_72 = arith.constant 1.67326319 : f32
    %138 = vector.broadcast %cst_72 : f32 to vector<256x64xf32>
    %139 = arith.mulf %138, %137 : vector<256x64xf32>
    %140 = arith.select %134, %132, %139 : vector<256x64xi1>, vector<256x64xf32>
    %cst_73 = arith.constant 1.05070102 : f32
    %141 = vector.broadcast %cst_73 : f32 to vector<256x64xf32>
    %142 = arith.mulf %141, %140 : vector<256x64xf32>
    %c0_74 = arith.constant 0 : index
    %c0_75 = arith.constant 0 : index
    %143 = vector.load %arg12[%c0_74, %c0_75] : memref<1x64xf32, #tpu.memory_space<vmem>>, vector<1x64xf32>
    %144 = tpu.iota {dimensions = array<i32: 0>} : vector<256x64xi32>
    %c15_i32_76 = arith.constant 15 : i32
    %145 = vector.broadcast %c15_i32_76 : i32 to vector<256x64xi32>
    %146 = arith.andi %144, %145 : vector<256x64xi32>
    %c16_i32_77 = arith.constant 16 : i32
    %147 = vector.broadcast %c16_i32_77 : i32 to vector<256x64xi32>
    %148 = arith.cmpi sge, %144, %147 : vector<256x64xi32>
    %c240_i32_78 = arith.constant 240 : i32
    %149 = vector.broadcast %c240_i32_78 : i32 to vector<256x64xi32>
    %150 = arith.cmpi slt, %144, %149 : vector<256x64xi32>
    %c1_i32_79 = arith.constant 1 : i32
    %151 = vector.broadcast %c1_i32_79 : i32 to vector<256x64xi32>
    %152 = arith.cmpi sge, %146, %151 : vector<256x64xi32>
    %c15_i32_80 = arith.constant 15 : i32
    %153 = vector.broadcast %c15_i32_80 : i32 to vector<256x64xi32>
    %154 = arith.cmpi slt, %146, %153 : vector<256x64xi32>
    %cst_81 = arith.constant 0.000000e+00 : f32
    %155 = vector.broadcast %cst_81 : f32 to vector<256x64xf32>
    %c17_i32_82 = arith.constant 17 : i32
    %156 = tpu.dynamic_rotate %142 by %c17_i32_82 dim 0 : vector<256x64xf32>, i32 -> vector<256x64xf32>
    %157 = arith.andi %148, %152 : vector<256x64xi1>
    %cst_83 = arith.constant 0.000000e+00 : f32
    %158 = vector.broadcast %cst_83 : f32 to vector<256x64xf32>
    %159 = arith.select %157, %156, %158 : vector<256x64xi1>, vector<256x64xf32>
    %160 = arith.truncf %159 : vector<256x64xf32> to vector<256x64xbf16>
    %c0_84 = arith.constant 0 : index
    %c0_85 = arith.constant 0 : index
    %161 = vector.load %arg14[%c0_84, %c0_85] : memref<256x256xbf16, #tpu.memory_space<vmem>>, vector<256x64xbf16>
    tpu.vector_store %arg14[%c0_84, %c0_85], %160 {strides = array<i32>} : memref<256x256xbf16, #tpu.memory_space<vmem>>, vector<256x64xbf16>,
    %c16_i32_86 = arith.constant 16 : i32
    %162 = tpu.dynamic_rotate %142 by %c16_i32_86 dim 0 : vector<256x64xf32>, i32 -> vector<256x64xf32>
    %cst_87 = arith.constant 0.000000e+00 : f32
    %163 = vector.broadcast %cst_87 : f32 to vector<256x64xf32>
    %164 = arith.select %148, %162, %163 : vector<256x64xi1>, vector<256x64xf32>
    %165 = arith.truncf %164 : vector<256x64xf32> to vector<256x64xbf16>
    %c0_88 = arith.constant 0 : index
    %c64_89 = arith.constant 64 : index
    %166 = vector.load %arg14[%c0_88, %c64_89] : memref<256x256xbf16, #tpu.memory_space<vmem>>, vector<256x64xbf16>
    tpu.vector_store %arg14[%c0_88, %c64_89], %165 {strides = array<i32>} : memref<256x256xbf16, #tpu.memory_space<vmem>>, vector<256x64xbf16>,
    %c15_i32_90 = arith.constant 15 : i32
    %167 = tpu.dynamic_rotate %142 by %c15_i32_90 dim 0 : vector<256x64xf32>, i32 -> vector<256x64xf32>
    %168 = arith.andi %148, %154 : vector<256x64xi1>
    %cst_91 = arith.constant 0.000000e+00 : f32
    %169 = vector.broadcast %cst_91 : f32 to vector<256x64xf32>
    %170 = arith.select %168, %167, %169 : vector<256x64xi1>, vector<256x64xf32>
    %171 = arith.truncf %170 : vector<256x64xf32> to vector<256x64xbf16>
    %c0_92 = arith.constant 0 : index
    %c128_93 = arith.constant 128 : index
    %172 = vector.load %arg14[%c0_92, %c128_93] : memref<256x256xbf16, #tpu.memory_space<vmem>>, vector<256x64xbf16>
    tpu.vector_store %arg14[%c0_92, %c128_93], %171 {strides = array<i32>} : memref<256x256xbf16, #tpu.memory_space<vmem>>, vector<256x64xbf16>,
    %c1_i32_94 = arith.constant 1 : i32
    %173 = tpu.dynamic_rotate %142 by %c1_i32_94 dim 0 : vector<256x64xf32>, i32 -> vector<256x64xf32>
    %cst_95 = arith.constant 0.000000e+00 : f32
    %174 = vector.broadcast %cst_95 : f32 to vector<256x64xf32>
    %175 = arith.select %152, %173, %174 : vector<256x64xi1>, vector<256x64xf32>
    %176 = arith.truncf %175 : vector<256x64xf32> to vector<256x64xbf16>
    %c0_96 = arith.constant 0 : index
    %c192_97 = arith.constant 192 : index
    %177 = vector.load %arg14[%c0_96, %c192_97] : memref<256x256xbf16, #tpu.memory_space<vmem>>, vector<256x64xbf16>
    tpu.vector_store %arg14[%c0_96, %c192_97], %176 {strides = array<i32>} : memref<256x256xbf16, #tpu.memory_space<vmem>>, vector<256x64xbf16>,
    %c0_98 = arith.constant 0 : index
    %c0_99 = arith.constant 0 : index
    %178 = vector.load %arg14[%c0_98, %c0_99] : memref<256x256xbf16, #tpu.memory_space<vmem>>, vector<256x256xbf16>
    %c0_100 = arith.constant 0 : index
    %c0_101 = arith.constant 0 : index
    %179 = vector.load %arg11[%c0_100, %c0_101] : memref<576x64xbf16, #tpu.memory_space<vmem>>, vector<256x64xbf16>
    %cst_102 = arith.constant dense<0.000000e+00> : vector<256x64xf32>
    %180 = tpu.matmul %178, %179, %cst_102 {dimension_numbers = #tpu.dot_dimension_numbers<[1], [0], [0], [1], [0, 0, 1, 1], [], []>} : vector<256x256xbf16>, vector<256x64xbf16>, vector<256x64xf32> -> vector<256x64xf32>
    %181 = arith.addf %155, %180 : vector<256x64xf32>
    %182 = arith.truncf %142 : vector<256x64xf32> to vector<256x64xbf16>
    %c0_103 = arith.constant 0 : index
    %c0_104 = arith.constant 0 : index
    %183 = vector.load %arg14[%c0_103, %c0_104] : memref<256x256xbf16, #tpu.memory_space<vmem>>, vector<256x64xbf16>
    tpu.vector_store %arg14[%c0_103, %c0_104], %182 {strides = array<i32>} : memref<256x256xbf16, #tpu.memory_space<vmem>>, vector<256x64xbf16>,
    %c255_i32_105 = arith.constant 255 : i32
    %184 = tpu.dynamic_rotate %142 by %c255_i32_105 dim 0 : vector<256x64xf32>, i32 -> vector<256x64xf32>
    %cst_106 = arith.constant 0.000000e+00 : f32
    %185 = vector.broadcast %cst_106 : f32 to vector<256x64xf32>
    %186 = arith.select %154, %184, %185 : vector<256x64xi1>, vector<256x64xf32>
    %187 = arith.truncf %186 : vector<256x64xf32> to vector<256x64xbf16>
    %c0_107 = arith.constant 0 : index
    %c64_108 = arith.constant 64 : index
    %188 = vector.load %arg14[%c0_107, %c64_108] : memref<256x256xbf16, #tpu.memory_space<vmem>>, vector<256x64xbf16>
    tpu.vector_store %arg14[%c0_107, %c64_108], %187 {strides = array<i32>} : memref<256x256xbf16, #tpu.memory_space<vmem>>, vector<256x64xbf16>,
    %c241_i32_109 = arith.constant 241 : i32
    %189 = tpu.dynamic_rotate %142 by %c241_i32_109 dim 0 : vector<256x64xf32>, i32 -> vector<256x64xf32>
    %190 = arith.andi %150, %152 : vector<256x64xi1>
    %cst_110 = arith.constant 0.000000e+00 : f32
    %191 = vector.broadcast %cst_110 : f32 to vector<256x64xf32>
    %192 = arith.select %190, %189, %191 : vector<256x64xi1>, vector<256x64xf32>
    %193 = arith.truncf %192 : vector<256x64xf32> to vector<256x64xbf16>
    %c0_111 = arith.constant 0 : index
    %c128_112 = arith.constant 128 : index
    %194 = vector.load %arg14[%c0_111, %c128_112] : memref<256x256xbf16, #tpu.memory_space<vmem>>, vector<256x64xbf16>
    tpu.vector_store %arg14[%c0_111, %c128_112], %193 {strides = array<i32>} : memref<256x256xbf16, #tpu.memory_space<vmem>>, vector<256x64xbf16>,
    %c240_i32_113 = arith.constant 240 : i32
    %195 = tpu.dynamic_rotate %142 by %c240_i32_113 dim 0 : vector<256x64xf32>, i32 -> vector<256x64xf32>
    %cst_114 = arith.constant 0.000000e+00 : f32
    %196 = vector.broadcast %cst_114 : f32 to vector<256x64xf32>
    %197 = arith.select %150, %195, %196 : vector<256x64xi1>, vector<256x64xf32>
    %198 = arith.truncf %197 : vector<256x64xf32> to vector<256x64xbf16>
    %c0_115 = arith.constant 0 : index
    %c192_116 = arith.constant 192 : index
    %199 = vector.load %arg14[%c0_115, %c192_116] : memref<256x256xbf16, #tpu.memory_space<vmem>>, vector<256x64xbf16>
    tpu.vector_store %arg14[%c0_115, %c192_116], %198 {strides = array<i32>} : memref<256x256xbf16, #tpu.memory_space<vmem>>, vector<256x64xbf16>,
    %c0_117 = arith.constant 0 : index
    %c0_118 = arith.constant 0 : index
    %200 = vector.load %arg14[%c0_117, %c0_118] : memref<256x256xbf16, #tpu.memory_space<vmem>>, vector<256x256xbf16>
    %c256_119 = arith.constant 256 : index
    %c0_120 = arith.constant 0 : index
    %201 = vector.load %arg11[%c256_119, %c0_120] : memref<576x64xbf16, #tpu.memory_space<vmem>>, vector<256x64xbf16>
    %cst_121 = arith.constant dense<0.000000e+00> : vector<256x64xf32>
    %202 = tpu.matmul %200, %201, %cst_121 {dimension_numbers = #tpu.dot_dimension_numbers<[1], [0], [0], [1], [0, 0, 1, 1], [], []>} : vector<256x256xbf16>, vector<256x64xbf16>, vector<256x64xf32> -> vector<256x64xf32>
    %203 = arith.addf %181, %202 : vector<256x64xf32>
    %c239_i32_122 = arith.constant 239 : i32
    %204 = tpu.dynamic_rotate %142 by %c239_i32_122 dim 0 : vector<256x64xf32>, i32 -> vector<256x64xf32>
    %205 = arith.andi %150, %154 : vector<256x64xi1>
    %cst_123 = arith.constant 0.000000e+00 : f32
    %206 = vector.broadcast %cst_123 : f32 to vector<256x64xf32>
    %207 = arith.select %205, %204, %206 : vector<256x64xi1>, vector<256x64xf32>
    %208 = arith.truncf %207 : vector<256x64xf32> to vector<256x64xbf16>
    %c512_124 = arith.constant 512 : index
    %c0_125 = arith.constant 0 : index
    %209 = vector.load %arg11[%c512_124, %c0_125] : memref<576x64xbf16, #tpu.memory_space<vmem>>, vector<64x64xbf16>
    %cst_126 = arith.constant dense<0.000000e+00> : vector<256x64xf32>
    %210 = tpu.matmul %208, %209, %cst_126 {dimension_numbers = #tpu.dot_dimension_numbers<[1], [0], [0], [1], [0, 0, 1, 1], [], []>} : vector<256x64xbf16>, vector<64x64xbf16>, vector<256x64xf32> -> vector<256x64xf32>
    %211 = arith.addf %203, %210 : vector<256x64xf32>
    %212 = vector.broadcast %143 : vector<1x64xf32> to vector<256x64xf32>
    %213 = arith.addf %211, %212 : vector<256x64xf32>
    %214 = arith.addf %213, %109 : vector<256x64xf32>
    %c0_127 = arith.constant 0 : index
    %c0_128 = arith.constant 0 : index
    %c0_129 = arith.constant 0 : index
    %215 = vector.load %arg13[%c0_127, %c0_128, %c0_129] : memref<1x256x64xf32, #tpu.memory_space<vmem>>, vector<1x256x64xf32>
    %216 = vector.shape_cast %215 : vector<1x256x64xf32> to vector<256x64xf32>
    %217 = vector.shape_cast %214 : vector<256x64xf32> to vector<1x256x64xf32>
    tpu.vector_store %arg13[%c0_127, %c0_128, %c0_129], %217 {strides = array<i32>} : memref<1x256x64xf32, #tpu.memory_space<vmem>>, vector<1x256x64xf32>,
    return
  }
  func.func @transform_0(%arg0: i32) -> (i32, i32, i32) {
    %c0_i32 = arith.constant 0 : i32
    %c0_i32_0 = arith.constant 0 : i32
    %c0_i32_1 = arith.constant 0 : i32
    return %arg0, %c0_i32, %c0_i32_0 : i32, i32, i32
  }
  func.func @transform_1(%arg0: i32) -> (i32, i32, i32) {
    %c0_i32 = arith.constant 0 : i32
    %c0_i32_0 = arith.constant 0 : i32
    %c0_i32_1 = arith.constant 0 : i32
    return %arg0, %c0_i32, %c0_i32_0 : i32, i32, i32
  }
  func.func @transform_2(%arg0: i32) -> (i32, i32) {
    %c0_i32 = arith.constant 0 : i32
    %c0_i32_0 = arith.constant 0 : i32
    %c0_i32_1 = arith.constant 0 : i32
    return %c0_i32, %c0_i32_0 : i32, i32
  }
  func.func @transform_3(%arg0: i32) -> (i32, i32) {
    %c0_i32 = arith.constant 0 : i32
    %c0_i32_0 = arith.constant 0 : i32
    %c0_i32_1 = arith.constant 0 : i32
    return %c0_i32, %c0_i32_0 : i32, i32
  }
  func.func @transform_4(%arg0: i32) -> (i32, i32) {
    %c0_i32 = arith.constant 0 : i32
    %c0_i32_0 = arith.constant 0 : i32
    %c0_i32_1 = arith.constant 0 : i32
    return %c0_i32, %c0_i32_0 : i32, i32
  }
  func.func @transform_5(%arg0: i32) -> (i32, i32) {
    %c0_i32 = arith.constant 0 : i32
    %c0_i32_0 = arith.constant 0 : i32
    %c0_i32_1 = arith.constant 0 : i32
    return %c0_i32, %c0_i32_0 : i32, i32
  }
  func.func @transform_6(%arg0: i32) -> (i32, i32) {
    %c0_i32 = arith.constant 0 : i32
    %c0_i32_0 = arith.constant 0 : i32
    %c0_i32_1 = arith.constant 0 : i32
    return %c0_i32, %c0_i32_0 : i32, i32
  }
  func.func @transform_7(%arg0: i32) -> (i32, i32) {
    %c0_i32 = arith.constant 0 : i32
    %c0_i32_0 = arith.constant 0 : i32
    %c0_i32_1 = arith.constant 0 : i32
    return %c0_i32, %c0_i32_0 : i32, i32
  }
  func.func @transform_8(%arg0: i32) -> (i32, i32) {
    %c0_i32 = arith.constant 0 : i32
    %c0_i32_0 = arith.constant 0 : i32
    %c0_i32_1 = arith.constant 0 : i32
    return %c0_i32, %c0_i32_0 : i32, i32
  }
  func.func @transform_9(%arg0: i32) -> (i32, i32) {
    %c0_i32 = arith.constant 0 : i32
    %c0_i32_0 = arith.constant 0 : i32
    %c0_i32_1 = arith.constant 0 : i32
    return %c0_i32, %c0_i32_0 : i32, i32
  }
  func.func @transform_10(%arg0: i32) -> (i32, i32) {
    %c0_i32 = arith.constant 0 : i32
    %c0_i32_0 = arith.constant 0 : i32
    %c0_i32_1 = arith.constant 0 : i32
    return %c0_i32, %c0_i32_0 : i32, i32
  }
  func.func @transform_11(%arg0: i32) -> (i32, i32) {
    %c0_i32 = arith.constant 0 : i32
    %c0_i32_0 = arith.constant 0 : i32
    %c0_i32_1 = arith.constant 0 : i32
    return %c0_i32, %c0_i32_0 : i32, i32
  }
  func.func @transform_12(%arg0: i32) -> (i32, i32, i32) {
    %c0_i32 = arith.constant 0 : i32
    %c0_i32_0 = arith.constant 0 : i32
    %c0_i32_1 = arith.constant 0 : i32
    return %arg0, %c0_i32, %c0_i32_0 : i32, i32, i32
  }
}

</mosaic_0001>

<llo_original>
// kernel: resblock_forward.1
$region0: #{resblock_forward.1}
  #allocation0 [shape = 'u32[]', space=smem, size = 0x4, offset = 0x4, fixed_abs, tag = 'smem constant byte address 0x4 - core index']
  #allocation1 [shape = 'u32[144,128]{1,0:T(1,128)}', space=vmem, size = 0x12000, scoped, tag = 'internal scratch']
  #allocation2 [shape = 'bf16[256,256]{1,0:T(16,128)(2,1)}', space=vmem, size = 0x20000, scoped, tag = 'scratch operand']
  %s0 = inlined_call_operand.vmem [shape: f32[2,256,64], index: 0, kind: input, shape index: {}]
  %s1 = inlined_call_operand.vmem [shape: f32[2,1,64], index: 1, kind: input, shape index: {}]
  %s2 = inlined_call_operand.vmem [shape: f32[1,64], index: 2, kind: input, shape index: {}]
  %s3 = inlined_call_operand.vmem [shape: f32[1,64], index: 3, kind: input, shape index: {}]
  %s4 = inlined_call_operand.vmem [shape: f32[64,64], index: 4, kind: input, shape index: {}, may-alias: {4,9}]
  %s5 = inlined_call_operand.vmem [shape: bf16[576,64], index: 5, kind: input, shape index: {}]
  %s6 = inlined_call_operand.vmem [shape: f32[1,64], index: 6, kind: input, shape index: {}]
  %s7 = inlined_call_operand.vmem [shape: f32[1,64], index: 7, kind: input, shape index: {}]
  %s8 = inlined_call_operand.vmem [shape: f32[1,64], index: 8, kind: input, shape index: {}]
  %s9 = inlined_call_operand.vmem [shape: f32[64,64], index: 9, kind: input, shape index: {}, may-alias: {4,9}]
  %s10 = inlined_call_operand.vmem [shape: bf16[576,64], index: 10, kind: input, shape index: {}]
  %s11 = inlined_call_operand.vmem [shape: f32[1,64], index: 11, kind: input, shape index: {}]
  %s12 = inlined_call_operand.hbm [shape: f32[2,256,64], index: 12, kind: output, shape index: {}]
  %s13 = sld [smem:[#allocation0]]
  $region81: #{resblock_forward.1} parent=0
    _
  %s15 = ssub.s32 1, %s13
  %s16 = scalar_select 0, %s15, %s13
  $region1: #{resblock_forward.1} parent=0
    #allocation3 [shape = 'u8[262144]{0}', space=vmem, size = 0x40000, scoped, tag = 'output window, operand 0']
    #allocation4 [shape = 's32[2]{0}', space=sflag, size = 0x8, scoped, tag = 'scoped memory for resblock_forward.1']
    %17 = vsyncpa [#allocation4], 0
    %s18 = scalar_lea.sflag [#allocation4], 1
    %19 = vsyncpa %s18, 0
    loop: start=0, step=1, limit=4
    $region2: #{resblock_forward.1} parent=1 // loop_pre_header
      _
    $region3: #{resblock_forward.1} parent=1 // loop_header
      %s21 = sphi 0, %s25
      %p22 = scmp.ge.s32.totalorder %s21, 4
      %s31 = sphi 0, %s33
      %s34 = sphi 0, %s31
      %s35 = sphi 0, %s34
      %s51 = sphi 0, %s35
      %s57 = sphi 0, %s59
      %s60 = sphi 0, %s57
      %s61 = sphi 0, %s60
      %s77 = sphi 0, %s61
      %s81 = sphi 0, %s81
      %s83 = sphi 0, %s81
      %s84 = sphi 0, %s83
      %s98 = sphi 0, %s84
      %s102 = sphi 0, %s102
      %s104 = sphi 0, %s102
      %s105 = sphi 0, %s104
      %s119 = sphi 0, %s105
      %s123 = sphi 0, %s123
      %s125 = sphi 0, %s123
      %s126 = sphi 0, %s125
      %s140 = sphi 0, %s126
      %s144 = sphi 0, %s144
      %s146 = sphi 0, %s144
      %s147 = sphi 0, %s146
      %s161 = sphi 0, %s147
      %s165 = sphi 0, %s165
      %s167 = sphi 0, %s165
      %s168 = sphi 0, %s167
      %s182 = sphi 0, %s168
      %s186 = sphi 0, %s186
      %s188 = sphi 0, %s186
      %s189 = sphi 0, %s188
      %s203 = sphi 0, %s189
      %s207 = sphi 0, %s207
      %s209 = sphi 0, %s207
      %s210 = sphi 0, %s209
      %s224 = sphi 0, %s210
      %s228 = sphi 0, %s228
      %s230 = sphi 0, %s228
      %s231 = sphi 0, %s230
      %s245 = sphi 0, %s231
      %s249 = sphi 0, %s249
      %s251 = sphi 0, %s249
      %s252 = sphi 0, %s251
      %s266 = sphi 0, %s252
      %s270 = sphi 0, %s270
      %s272 = sphi 0, %s270
      %s273 = sphi 0, %s272
      %s287 = sphi 0, %s273
      %s293 = sphi 0, %s295
      %s296 = sphi 0, %s293
      %s297 = sphi 0, %s296
      %s313 = sphi 0, %s297
    $region4: #{resblock_forward.1} parent=1 // loop_header_branch
      %24 = sbr.rel (%p22) target = $region8
    $region5: #{resblock_forward.1} parent=1 // loop_body
      %s26 = ssub.s32 %s21, 1
      %s27 = ssub.s32 %s21, 2
      %s28 = sadd.s32 %s21, 1
      %s29 = ssub.s32 %s21, %s28
      %p30 = scmp.eq.s32.totalorder %s29, 0
      %s32 = sadd.s32 %s31, 1
      %s33 = scalar_select %p30, %s31, %s32
      %p36 = pneg %p30
      %p37 = scmp.eq.s32.totalorder %s21, 1
      %p38 = por %p36, %p37
      %p39 = scmp.ne.s32.totalorder %s31, %s34
      %p40 = scmp.eq.s32.totalorder %s21, 0
      %p41 = por %p39, %p40
      %p42 = scmp.ne.s32.totalorder %s31, %s34
      %p43 = scmp.eq.s32.totalorder %s26, 1
      %p44 = por %p42, %p43
      %p45 = scmp.ne.s32.totalorder %s34, %s35
      %p46 = scmp.eq.s32.totalorder %s26, 0
      %p47 = por %p45, %p46
      %p48 = scmp.ne.s32.totalorder %s34, %s35
      %p49 = scmp.eq.s32.totalorder %s27, 1
      %p50 = por %p48, %p49
      %p52 = scmp.ne.s32.totalorder %s35, %s51
      %p53 = scmp.eq.s32.totalorder %s27, 0
      %p54 = por %p52, %p53
      %s55 = ssub.s32 %s21, %s28
      %p56 = scmp.eq.s32.totalorder %s55, 0
      %s58 = sadd.s32 %s57, 1
      %s59 = scalar_select %p56, %s57, %s58
      %p62 = pneg %p56
      %p63 = scmp.eq.s32.totalorder %s21, 1
      %p64 = por %p62, %p63
      %p65 = scmp.ne.s32.totalorder %s57, %s60
      %p66 = scmp.eq.s32.totalorder %s21, 0
      %p67 = por %p65, %p66
      %p68 = scmp.ne.s32.totalorder %s57, %s60
      %p69 = scmp.eq.s32.totalorder %s26, 1
      %p70 = por %p68, %p69
      %p71 = scmp.ne.s32.totalorder %s60, %s61
      %p72 = scmp.eq.s32.totalorder %s26, 0
      %p73 = por %p71, %p72
      %p74 = scmp.ne.s32.totalorder %s60, %s61
      %p75 = scmp.eq.s32.totalorder %s27, 1
      %p76 = por %p74, %p75
      %p78 = scmp.ne.s32.totalorder %s61, %s77
      %p79 = scmp.eq.s32.totalorder %s27, 0
      %p80 = por %p78, %p79
      %s82 = sadd.s32 %s81, 1
      %p85 = scmp.eq.s32.totalorder %s21, 1
      %p86 = scmp.ne.s32.totalorder %s81, %s83
      %p87 = scmp.eq.s32.totalorder %s21, 0
      %p88 = por %p86, %p87
      %p89 = scmp.ne.s32.totalorder %s81, %s83
      %p90 = scmp.eq.s32.totalorder %s26, 1
      %p91 = por %p89, %p90
      %p92 = scmp.ne.s32.totalorder %s83, %s84
      %p93 = scmp.eq.s32.totalorder %s26, 0
      %p94 = por %p92, %p93
      %p95 = scmp.ne.s32.totalorder %s83, %s84
      %p96 = scmp.eq.s32.totalorder %s27, 1
      %p97 = por %p95, %p96
      %p99 = scmp.ne.s32.totalorder %s84, %s98
      %p100 = scmp.eq.s32.totalorder %s27, 0
      %p101 = por %p99, %p100
      %s103 = sadd.s32 %s102, 1
      %p106 = scmp.eq.s32.totalorder %s21, 1
      %p107 = scmp.ne.s32.totalorder %s102, %s104
      %p108 = scmp.eq.s32.totalorder %s21, 0
      %p109 = por %p107, %p108
      %p110 = scmp.ne.s32.totalorder %s102, %s104
      %p111 = scmp.eq.s32.totalorder %s26, 1
      %p112 = por %p110, %p111
      %p113 = scmp.ne.s32.totalorder %s104, %s105
      %p114 = scmp.eq.s32.totalorder %s26, 0
      %p115 = por %p113, %p114
      %p116 = scmp.ne.s32.totalorder %s104, %s105
      %p117 = scmp.eq.s32.totalorder %s27, 1
      %p118 = por %p116, %p117
      %p120 = scmp.ne.s32.totalorder %s105, %s119
      %p121 = scmp.eq.s32.totalorder %s27, 0
      %p122 = por %p120, %p121
      %s124 = sadd.s32 %s123, 1
      %p127 = scmp.eq.s32.totalorder %s21, 1
      %p128 = scmp.ne.s32.totalorder %s123, %s125
      %p129 = scmp.eq.s32.totalorder %s21, 0
      %p130 = por %p128, %p129
      %p131 = scmp.ne.s32.totalorder %s123, %s125
      %p132 = scmp.eq.s32.totalorder %s26, 1
      %p133 = por %p131, %p132
      %p134 = scmp.ne.s32.totalorder %s125, %s126
      %p135 = scmp.eq.s32.totalorder %s26, 0
      %p136 = por %p134, %p135
      %p137 = scmp.ne.s32.totalorder %s125, %s126
      %p138 = scmp.eq.s32.totalorder %s27, 1
      %p139 = por %p137, %p138
      %p141 = scmp.ne.s32.totalorder %s126, %s140
      %p142 = scmp.eq.s32.totalorder %s27, 0
      %p143 = por %p141, %p142
      %s145 = sadd.s32 %s144, 1
      %p148 = scmp.eq.s32.totalorder %s21, 1
      %p149 = scmp.ne.s32.totalorder %s144, %s146
      %p150 = scmp.eq.s32.totalorder %s21, 0
      %p151 = por %p149, %p150
      %p152 = scmp.ne.s32.totalorder %s144, %s146
      %p153 = scmp.eq.s32.totalorder %s26, 1
      %p154 = por %p152, %p153
      %p155 = scmp.ne.s32.totalorder %s146, %s147
      %p156 = scmp.eq.s32.totalorder %s26, 0
      %p157 = por %p155, %p156
      %p158 = scmp.ne.s32.totalorder %s146, %s147
      %p159 = scmp.eq.s32.totalorder %s27, 1
      %p160 = por %p158, %p159
      %p162 = scmp.ne.s32.totalorder %s147, %s161
      %p163 = scmp.eq.s32.totalorder %s27, 0
      %p164 = por %p162, %p163
      %s166 = sadd.s32 %s165, 1
      %p169 = scmp.eq.s32.totalorder %s21, 1
      %p170 = scmp.ne.s32.totalorder %s165, %s167
      %p171 = scmp.eq.s32.totalorder %s21, 0
      %p172 = por %p170, %p171
      %p173 = scmp.ne.s32.totalorder %s165, %s167
      %p174 = scmp.eq.s32.totalorder %s26, 1
      %p175 = por %p173, %p174
      %p176 = scmp.ne.s32.totalorder %s167, %s168
      %p177 = scmp.eq.s32.totalorder %s26, 0
      %p178 = por %p176, %p177
      %p179 = scmp.ne.s32.totalorder %s167, %s168
      %p180 = scmp.eq.s32.totalorder %s27, 1
      %p181 = por %p179, %p180
      %p183 = scmp.ne.s32.totalorder %s168, %s182
      %p184 = scmp.eq.s32.totalorder %s27, 0
      %p185 = por %p183, %p184
      %s187 = sadd.s32 %s186, 1
      %p190 = scmp.eq.s32.totalorder %s21, 1
      %p191 = scmp.ne.s32.totalorder %s186, %s188
      %p192 = scmp.eq.s32.totalorder %s21, 0
      %p193 = por %p191, %p192
      %p194 = scmp.ne.s32.totalorder %s186, %s188
      %p195 = scmp.eq.s32.totalorder %s26, 1
      %p196 = por %p194, %p195
      %p197 = scmp.ne.s32.totalorder %s188, %s189
      %p198 = scmp.eq.s32.totalorder %s26, 0
      %p199 = por %p197, %p198
      %p200 = scmp.ne.s32.totalorder %s188, %s189
      %p201 = scmp.eq.s32.totalorder %s27, 1
      %p202 = por %p200, %p201
      %p204 = scmp.ne.s32.totalorder %s189, %s203
      %p205 = scmp.eq.s32.totalorder %s27, 0
      %p206 = por %p204, %p205
      %s208 = sadd.s32 %s207, 1
      %p211 = scmp.eq.s32.totalorder %s21, 1
      %p212 = scmp.ne.s32.totalorder %s207, %s209
      %p213 = scmp.eq.s32.totalorder %s21, 0
      %p214 = por %p212, %p213
      %p215 = scmp.ne.s32.totalorder %s207, %s209
      %p216 = scmp.eq.s32.totalorder %s26, 1
      %p217 = por %p215, %p216
      %p218 = scmp.ne.s32.totalorder %s209, %s210
      %p219 = scmp.eq.s32.totalorder %s26, 0
      %p220 = por %p218, %p219
      %p221 = scmp.ne.s32.totalorder %s209, %s210
      %p222 = scmp.eq.s32.totalorder %s27, 1
      %p223 = por %p221, %p222
      %p225 = scmp.ne.s32.totalorder %s210, %s224
      %p226 = scmp.eq.s32.totalorder %s27, 0
      %p227 = por %p225, %p226
      %s229 = sadd.s32 %s228, 1
      %p232 = scmp.eq.s32.totalorder %s21, 1
      %p233 = scmp.ne.s32.totalorder %s228, %s230
      %p234 = scmp.eq.s32.totalorder %s21, 0
      %p235 = por %p233, %p234
      %p236 = scmp.ne.s32.totalorder %s228, %s230
      %p237 = scmp.eq.s32.totalorder %s26, 1
      %p238 = por %p236, %p237
      %p239 = scmp.ne.s32.totalorder %s230, %s231
      %p240 = scmp.eq.s32.totalorder %s26, 0
      %p241 = por %p239, %p240
      %p242 = scmp.ne.s32.totalorder %s230, %s231
      %p243 = scmp.eq.s32.totalorder %s27, 1
      %p244 = por %p242, %p243
      %p246 = scmp.ne.s32.totalorder %s231, %s245
      %p247 = scmp.eq.s32.totalorder %s27, 0
      %p248 = por %p246, %p247
      %s250 = sadd.s32 %s249, 1
      %p253 = scmp.eq.s32.totalorder %s21, 1
      %p254 = scmp.ne.s32.totalorder %s249, %s251
      %p255 = scmp.eq.s32.totalorder %s21, 0
      %p256 = por %p254, %p255
      %p257 = scmp.ne.s32.totalorder %s249, %s251
      %p258 = scmp.eq.s32.totalorder %s26, 1
      %p259 = por %p257, %p258
      %p260 = scmp.ne.s32.totalorder %s251, %s252
      %p261 = scmp.eq.s32.totalorder %s26, 0
      %p262 = por %p260, %p261
      %p263 = scmp.ne.s32.totalorder %s251, %s252
      %p264 = scmp.eq.s32.totalorder %s27, 1
      %p265 = por %p263, %p264
      %p267 = scmp.ne.s32.totalorder %s252, %s266
      %p268 = scmp.eq.s32.totalorder %s27, 0
      %p269 = por %p267, %p268
      %s271 = sadd.s32 %s270, 1
      %p274 = scmp.eq.s32.totalorder %s21, 1
      %p275 = scmp.ne.s32.totalorder %s270, %s272
      %p276 = scmp.eq.s32.totalorder %s21, 0
      %p277 = por %p275, %p276
      %p278 = scmp.ne.s32.totalorder %s270, %s272
      %p279 = scmp.eq.s32.totalorder %s26, 1
      %p280 = por %p278, %p279
      %p281 = scmp.ne.s32.totalorder %s272, %s273
      %p282 = scmp.eq.s32.totalorder %s26, 0
      %p283 = por %p281, %p282
      %p284 = scmp.ne.s32.totalorder %s272, %s273
      %p285 = scmp.eq.s32.totalorder %s27, 1
      %p286 = por %p284, %p285
      %p288 = scmp.ne.s32.totalorder %s273, %s287
      %p289 = scmp.eq.s32.totalorder %s27, 0
      %p290 = por %p288, %p289
      %s291 = ssub.s32 %s21, %s28
      %p292 = scmp.eq.s32.totalorder %s291, 0
      %s294 = sadd.s32 %s293, 1
      %s295 = scalar_select %p292, %s293, %s294
      %p298 = pneg %p292
      %p299 = scmp.eq.s32.totalorder %s21, 1
      %p300 = por %p298, %p299
      %p301 = scmp.ne.s32.totalorder %s293, %s296
      %p302 = scmp.eq.s32.totalorder %s21, 0
      %p303 = por %p301, %p302
      %p304 = scmp.ne.s32.totalorder %s293, %s296
      %p305 = scmp.eq.s32.totalorder %s26, 1
      %p306 = por %p304, %p305
      %p307 = scmp.ne.s32.totalorder %s296, %s297
      %p308 = scmp.eq.s32.totalorder %s26, 0
      %p309 = por %p307, %p308
      %p310 = scmp.ne.s32.totalorder %s296, %s297
      %p311 = scmp.eq.s32.totalorder %s27, 1
      %p312 = por %p310, %p311
      %p314 = scmp.ne.s32.totalorder %s297, %s313
      %p315 = scmp.eq.s32.totalorder %s27, 0
      %p316 = por %p314, %p315
      %p317 = scmp.le.s32.totalorder 1, %s21
      %p318 = scmp.lt.s32.totalorder %s21, 3
      %p319 = pnand %p317, %p318
      %p320 = pneg %p319
      // Predicated region
      $region9: #{resblock_forward.1} parent=5 // pred_check
        _
      $region10: #{resblock_forward.1} parent=5 // pred_check_branch
        %322 = sbr.rel (%p319) target = $region12
      $region11: #{resblock_forward.1} parent=5 // pred_region
        %s323 = ssub.s32 %s21, 1
        // Predicated region
        $region13: #{resblock_forward.1} parent=11 // pred_check
          %p324 = pneg %p94
        $region14: #{resblock_forward.1} parent=11 // pred_check_branch
          %326 = sbr.rel (%p324) target = $region16
        $region15: #{resblock_forward.1} parent=11 // pred_region
          _
        $region16: #{resblock_forward.1} parent=11 // pred_fallthru
          _
        // Predicated region
        $region17: #{resblock_forward.1} parent=11 // pred_check
          %p327 = pneg %p115
        $region18: #{resblock_forward.1} parent=11 // pred_check_branch
          %329 = sbr.rel (%p327) target = $region20
        $region19: #{resblock_forward.1} parent=11 // pred_region
          _
        $region20: #{resblock_forward.1} parent=11 // pred_fallthru
          _
        // Predicated region
        $region21: #{resblock_forward.1} parent=11 // pred_check
          %p330 = pneg %p136
        $region22: #{resblock_forward.1} parent=11 // pred_check_branch
          %332 = sbr.rel (%p330) target = $region24
        $region23: #{resblock_forward.1} parent=11 // pred_region
          _
        $region24: #{resblock_forward.1} parent=11 // pred_fallthru
          _
        // Predicated region
        $region25: #{resblock_forward.1} parent=11 // pred_check
          %p333 = pneg %p157
        $region26: #{resblock_forward.1} parent=11 // pred_check_branch
          %335 = sbr.rel (%p333) target = $region28
        $region27: #{resblock_forward.1} parent=11 // pred_region
          _
        $region28: #{resblock_forward.1} parent=11 // pred_fallthru
          _
        // Predicated region
        $region29: #{resblock_forward.1} parent=11 // pred_check
          %p336 = pneg %p178
        $region30: #{resblock_forward.1} parent=11 // pred_check_branch
          %338 = sbr.rel (%p336) target = $region32
        $region31: #{resblock_forward.1} parent=11 // pred_region
          _
        $region32: #{resblock_forward.1} parent=11 // pred_fallthru
          _
        // Predicated region
        $region33: #{resblock_forward.1} parent=11 // pred_check
          %p339 = pneg %p199
        $region34: #{resblock_forward.1} parent=11 // pred_check_branch
          %341 = sbr.rel (%p339) target = $region36
        $region35: #{resblock_forward.1} parent=11 // pred_region
          _
        $region36: #{resblock_forward.1} parent=11 // pred_fallthru
          _
        // Predicated region
        $region37: #{resblock_forward.1} parent=11 // pred_check
          %p342 = pneg %p220
        $region38: #{resblock_forward.1} parent=11 // pred_check_branch
          %344 = sbr.rel (%p342) target = $region40
        $region39: #{resblock_forward.1} parent=11 // pred_region
          _
        $region40: #{resblock_forward.1} parent=11 // pred_fallthru
          _
        // Predicated region
        $region41: #{resblock_forward.1} parent=11 // pred_check
          %p345 = pneg %p241
        $region42: #{resblock_forward.1} parent=11 // pred_check_branch
          %347 = sbr.rel (%p345) target = $region44
        $region43: #{resblock_forward.1} parent=11 // pred_region
          _
        $region44: #{resblock_forward.1} parent=11 // pred_fallthru
          _
        // Predicated region
        $region45: #{resblock_forward.1} parent=11 // pred_check
          %p348 = pneg %p262
        $region46: #{resblock_forward.1} parent=11 // pred_check_branch
          %350 = sbr.rel (%p348) target = $region48
        $region47: #{resblock_forward.1} parent=11 // pred_region
          _
        $region48: #{resblock_forward.1} parent=11 // pred_fallthru
          _
        // Predicated region
        $region49: #{resblock_forward.1} parent=11 // pred_check
          %p351 = pneg %p283
        $region50: #{resblock_forward.1} parent=11 // pred_check_branch
          %353 = sbr.rel (%p351) target = $region52
        $region51: #{resblock_forward.1} parent=11 // pred_region
          _
        $region52: #{resblock_forward.1} parent=11 // pred_fallthru
          _
      $region12: #{resblock_forward.1} parent=5 // pred_fallthru
        _
      %p354 = scmp.lt.s32.totalorder %s21, 2
      // Predicated region
      $region53: #{resblock_forward.1} parent=5 // pred_check
        %p355 = pneg %p354
      $region54: #{resblock_forward.1} parent=5 // pred_check_branch
        %357 = sbr.rel (%p355) target = $region56
      $region55: #{resblock_forward.1} parent=5 // pred_region
        // Predicated region
        $region57: #{resblock_forward.1} parent=55 // pred_check
          %p358 = pneg %p41
        $region58: #{resblock_forward.1} parent=55 // pred_check_branch
          %360 = sbr.rel (%p358) target = $region60
        $region59: #{resblock_forward.1} parent=55 // pred_region
          %p361 = scmp.lt.s32.totalorder %s21, 1
          %s362 = scalar_select %p361, %s21, 1
          %s363 = smul.addr %s362, 32
          %s364 = smul.addr %s363, 8
          %s365 = scalar_lea.vmem %s0, %s364
        $region60: #{resblock_forward.1} parent=55 // pred_fallthru
          _
        // Predicated region
        $region61: #{resblock_forward.1} parent=55 // pred_check
          %p366 = pneg %p67
        $region62: #{resblock_forward.1} parent=55 // pred_check_branch
          %368 = sbr.rel (%p366) target = $region64
        $region63: #{resblock_forward.1} parent=55 // pred_region
          %p369 = scmp.lt.s32.totalorder %s21, 1
          %s370 = scalar_select %p369, %s21, 1
          %s371 = scalar_lea.vmem %s1, %s370
        $region64: #{resblock_forward.1} parent=55 // pred_fallthru
          _
      $region56: #{resblock_forward.1} parent=5 // pred_fallthru
        _
      %p372 = scmp.le.s32.totalorder 1, %s21
      %p373 = scmp.lt.s32.totalorder %s21, 3
      %p374 = pnand %p372, %p373
      %p375 = pneg %p374
      // Predicated region
      $region65: #{resblock_forward.1} parent=5 // pred_check
        _
      $region66: #{resblock_forward.1} parent=5 // pred_check_branch
        %377 = sbr.rel (%p374) target = $region68
      $region67: #{resblock_forward.1} parent=5 // pred_region
        %s378 = ssub.s32 %s21, 1
        %p379 = scmp.lt.s32.totalorder %s26, 1
        %s380 = scalar_select %p379, %s26, 1
        %s381 = smul.addr %s380, 32
        %s382 = smul.addr %s381, 8
        %s383 = scalar_lea.vmem %s0, %s382
        %p384 = pneg %p47
        %p385 = pneg %p44
        %p386 = scmp.lt.s32.totalorder %s26, 1
        %s387 = scalar_select %p386, %s26, 1
        %s388 = scalar_lea.vmem %s1, %s387
        %p389 = pneg %p73
        %p390 = pneg %p70
        %p391 = pneg %p94
        %p392 = pneg %p91
        %p393 = pneg %p115
        %p394 = pneg %p112
        %p395 = pneg %p136
        %p396 = pneg %p133
        %p397 = pneg %p157
        %p398 = pneg %p154
        %p399 = pneg %p178
        %p400 = pneg %p175
        %p401 = pneg %p199
        %p402 = pneg %p196
        %p403 = pneg %p220
        %p404 = pneg %p217
        %p405 = pneg %p241
        %p406 = pneg %p238
        %p407 = pneg %p262
        %p408 = pneg %p259
        %p409 = pneg %p283
        %p410 = pneg %p280
        %p411 = pneg %p309
        %p412 = pneg %p306
        %s413 = sand.u32 %s296, 1
        %s414 = scalar_lea.sflag [#allocation4], %s413
        %s415 = sand.u32 %s296, 1
        %s416 = smul.addr %s415, 256
        %s417 = scalar_lea.vmem [#allocation3], %s416
        %p418 = scmp.lt.s32.totalorder %s26, 1
        %s419 = scalar_select %p418, %s26, 1
        %s420 = smul.addr %s419, 32
        %s421 = smul.addr %s420, 8
        %s422 = scalar_lea.vmem %s0, %s421
        %p423 = scmp.lt.s32.totalorder %s26, 1
        %s424 = scalar_select %p423, %s26, 1
        %s425 = scalar_lea.vmem %s1, %s424
        %v427 = vld [vmem:[%s422] sm:$0xff]
        %v428 = vld [vmem:[%s422 + $0x8] sm:$0xff]
        %v429 = vld [vmem:[%s422 + $0x10] sm:$0xff]
        %v430 = vld [vmem:[%s422 + $0x18] sm:$0xff]
        %v431 = vld [vmem:[%s422 + $0x20] sm:$0xff]
        %v432 = vld [vmem:[%s422 + $0x28] sm:$0xff]
        %v433 = vld [vmem:[%s422 + $0x30] sm:$0xff]
        %v434 = vld [vmem:[%s422 + $0x38] sm:$0xff]
        %v435 = vld [vmem:[%s422 + $0x40] sm:$0xff]
        %v436 = vld [vmem:[%s422 + $0x48] sm:$0xff]
        %v437 = vld [vmem:[%s422 + $0x50] sm:$0xff]
        %v438 = vld [vmem:[%s422 + $0x58] sm:$0xff]
        %v439 = vld [vmem:[%s422 + $0x60] sm:$0xff]
        %v440 = vld [vmem:[%s422 + $0x68] sm:$0xff]
        %v441 = vld [vmem:[%s422 + $0x70] sm:$0xff]
        %v442 = vld [vmem:[%s422 + $0x78] sm:$0xff]
        %v443 = vld [vmem:[%s422 + $0x80] sm:$0xff]
        %v444 = vld [vmem:[%s422 + $0x88] sm:$0xff]
        %v445 = vld [vmem:[%s422 + $0x90] sm:$0xff]
        %v446 = vld [vmem:[%s422 + $0x98] sm:$0xff]
        %v447 = vld [vmem:[%s422 + $0xa0] sm:$0xff]
        %v448 = vld [vmem:[%s422 + $0xa8] sm:$0xff]
        %v449 = vld [vmem:[%s422 + $0xb0] sm:$0xff]
        %v450 = vld [vmem:[%s422 + $0xb8] sm:$0xff]
        %v451 = vld [vmem:[%s422 + $0xc0] sm:$0xff]
        %v452 = vld [vmem:[%s422 + $0xc8] sm:$0xff]
        %v453 = vld [vmem:[%s422 + $0xd0] sm:$0xff]
        %v454 = vld [vmem:[%s422 + $0xd8] sm:$0xff]
        %v455 = vld [vmem:[%s422 + $0xe0] sm:$0xff]
        %v456 = vld [vmem:[%s422 + $0xe8] sm:$0xff]
        %v457 = vld [vmem:[%s422 + $0xf0] sm:$0xff]
        %v458 = vld [vmem:[%s422 + $0xf8] sm:$0xff]
        %v459 = vld [vmem:[%s4] sm:$0xff]
        %v460 = vld [vmem:[%s4 + $0x8] sm:$0xff]
        %v461 = vld [vmem:[%s4 + $0x10] sm:$0xff]
        %v462 = vld [vmem:[%s4 + $0x18] sm:$0xff]
        %v463 = vld [vmem:[%s4 + $0x20] sm:$0xff]
        %v464 = vld [vmem:[%s4 + $0x28] sm:$0xff]
        %v465 = vld [vmem:[%s4 + $0x30] sm:$0xff]
        %v466 = vld [vmem:[%s4 + $0x38] sm:$0xff]
        %v467 = vld [vmem:[%s2] sm:$0x1]
        %v468 = vld [vmem:[%s3] sm:$0x1]
        %vm469 = vcmask 523264
        %v470 = vsel %vm469, %v427, 0.0
        %v471 = vsel %vm469, %v428, 0.0
        %v472 = vadd.f32 %v470, %v471
        %v473 = vsel %vm469, %v429, 0.0
        %v474 = vadd.f32 %v472, %v473
        %v475 = vsel %vm469, %v430, 0.0
        %v476 = vadd.f32 %v474, %v475
        %v477 = vsel %vm469, %v431, 0.0
        %v478 = vadd.f32 %v476, %v477
        %v479 = vsel %vm469, %v432, 0.0
        %v480 = vadd.f32 %v478, %v479
        %v481 = vsel %vm469, %v433, 0.0
        %v482 = vadd.f32 %v480, %v481
        %v483 = vsel %vm469, %v434, 0.0
        %v484 = vadd.f32 %v482, %v483
        %v485 = vsel %vm469, %v435, 0.0
        %v486 = vadd.f32 %v484, %v485
        %v487 = vsel %vm469, %v436, 0.0
        %v488 = vadd.f32 %v486, %v487
        %v489 = vsel %vm469, %v437, 0.0
        %v490 = vadd.f32 %v488, %v489
        %v491 = vsel %vm469, %v438, 0.0
        %v492 = vadd.f32 %v490, %v491
        %v493 = vsel %vm469, %v439, 0.0
        %v494 = vadd.f32 %v492, %v493
        %v495 = vsel %vm469, %v440, 0.0
        %v496 = vadd.f32 %v494, %v495
        %v497 = vsel %vm469, %v441, 0.0
        %v498 = vadd.f32 %v496, %v497
        %v499 = vsel %vm469, %v442, 0.0
        %v500 = vadd.f32 %v498, %v499
        %v501 = vsel %vm469, %v443, 0.0
        %v502 = vadd.f32 %v500, %v501
        %v503 = vsel %vm469, %v444, 0.0
        %v504 = vadd.f32 %v502, %v503
        %v505 = vsel %vm469, %v445, 0.0
        %v506 = vadd.f32 %v504, %v505
        %v507 = vsel %vm469, %v446, 0.0
        %v508 = vadd.f32 %v506, %v507
        %v509 = vsel %vm469, %v447, 0.0
        %v510 = vadd.f32 %v508, %v509
        %v511 = vsel %vm469, %v448, 0.0
        %v512 = vadd.f32 %v510, %v511
        %v513 = vsel %vm469, %v449, 0.0
        %v514 = vadd.f32 %v512, %v513
        %v515 = vsel %vm469, %v450, 0.0
        %v516 = vadd.f32 %v514, %v515
        %v517 = vsel %vm469, %v451, 0.0
        %v518 = vadd.f32 %v516, %v517
        %v519 = vsel %vm469, %v452, 0.0
        %v520 = vadd.f32 %v518, %v519
        %v521 = vsel %vm469, %v453, 0.0
        %v522 = vadd.f32 %v520, %v521
        %v523 = vsel %vm469, %v454, 0.0
        %v524 = vadd.f32 %v522, %v523
        %v525 = vsel %vm469, %v455, 0.0
        %v526 = vadd.f32 %v524, %v525
        %v527 = vsel %vm469, %v456, 0.0
        %v528 = vadd.f32 %v526, %v527
        %v529 = vsel %vm469, %v457, 0.0
        %v530 = vadd.f32 %v528, %v529
        %v531 = vsel %vm469, %v458, 0.0
        %v532 = vadd.f32 %v530, %v531
        %v533 = vrot.slane %v532, 4
        %v534 = vadd.f32 %v532, %v533
        %v535 = vrot.slane %v534, 2
        %v536 = vadd.f32 %v534, %v535
        %v537 = vrot.slane %v536, 1
        %v538 = vadd.f32 %v536, %v537
        %v539 = vmul.f32 %v427, %v427
        %v540 = vmul.f32 %v428, %v428
        %v541 = vmul.f32 %v429, %v429
        %v542 = vmul.f32 %v430, %v430
        %v543 = vmul.f32 %v431, %v431
        %v544 = vmul.f32 %v432, %v432
        %v545 = vmul.f32 %v433, %v433
        %v546 = vmul.f32 %v434, %v434
        %v547 = vmul.f32 %v435, %v435
        %v548 = vmul.f32 %v436, %v436
        %v549 = vmul.f32 %v437, %v437
        %v550 = vmul.f32 %v438, %v438
        %v551 = vmul.f32 %v439, %v439
        %v552 = vmul.f32 %v440, %v440
        %v553 = vmul.f32 %v441, %v441
        %v554 = vmul.f32 %v442, %v442
        %v555 = vmul.f32 %v443, %v443
        %v556 = vmul.f32 %v444, %v444
        %v557 = vmul.f32 %v445, %v445
        %v558 = vmul.f32 %v446, %v446
        %v559 = vmul.f32 %v447, %v447
        %v560 = vmul.f32 %v448, %v448
        %v561 = vmul.f32 %v449, %v449
        %v562 = vmul.f32 %v450, %v450
        %v563 = vmul.f32 %v451, %v451
        %v564 = vmul.f32 %v452, %v452
        %v565 = vmul.f32 %v453, %v453
        %v566 = vmul.f32 %v454, %v454
        %v567 = vmul.f32 %v455, %v455
        %v568 = vmul.f32 %v456, %v456
        %v569 = vmul.f32 %v457, %v457
        %v570 = vmul.f32 %v458, %v458
        %v571 = vsel %vm469, %v539, 0.0
        %v572 = vsel %vm469, %v540, 0.0
        %v573 = vadd.f32 %v571, %v572
        %v574 = vsel %vm469, %v541, 0.0
        %v575 = vadd.f32 %v573, %v574
        %v576 = vsel %vm469, %v542, 0.0
        %v577 = vadd.f32 %v575, %v576
        %v578 = vsel %vm469, %v543, 0.0
        %v579 = vadd.f32 %v577, %v578
        %v580 = vsel %vm469, %v544, 0.0
        %v581 = vadd.f32 %v579, %v580
        %v582 = vsel %vm469, %v545, 0.0
        %v583 = vadd.f32 %v581, %v582
        %v584 = vsel %vm469, %v546, 0.0
        %v585 = vadd.f32 %v583, %v584
        %v586 = vsel %vm469, %v547, 0.0
        %v587 = vadd.f32 %v585, %v586
        %v588 = vsel %vm469, %v548, 0.0
        %v589 = vadd.f32 %v587, %v588
        %v590 = vsel %vm469, %v549, 0.0
        %v591 = vadd.f32 %v589, %v590
        %v592 = vsel %vm469, %v550, 0.0
        %v593 = vadd.f32 %v591, %v592
        %v594 = vsel %vm469, %v551, 0.0
        %v595 = vadd.f32 %v593, %v594
        %v596 = vsel %vm469, %v552, 0.0
        %v597 = vadd.f32 %v595, %v596
        %v598 = vsel %vm469, %v553, 0.0
        %v599 = vadd.f32 %v597, %v598
        %v600 = vsel %vm469, %v554, 0.0
        %v601 = vadd.f32 %v599, %v600
        %v602 = vsel %vm469, %v555, 0.0
        %v603 = vadd.f32 %v601, %v602
        %v604 = vsel %vm469, %v556, 0.0
        %v605 = vadd.f32 %v603, %v604
        %v606 = vsel %vm469, %v557, 0.0
        %v607 = vadd.f32 %v605, %v606
        %v608 = vsel %vm469, %v558, 0.0
        %v609 = vadd.f32 %v607, %v608
        %v610 = vsel %vm469, %v559, 0.0
        %v611 = vadd.f32 %v609, %v610
        %v612 = vsel %vm469, %v560, 0.0
        %v613 = vadd.f32 %v611, %v612
        %v614 = vsel %vm469, %v561, 0.0
        %v615 = vadd.f32 %v613, %v614
        %v616 = vsel %vm469, %v562, 0.0
        %v617 = vadd.f32 %v615, %v616
        %v618 = vsel %vm469, %v563, 0.0
        %v619 = vadd.f32 %v617, %v618
        %v620 = vsel %vm469, %v564, 0.0
        %v621 = vadd.f32 %v619, %v620
        %v622 = vsel %vm469, %v565, 0.0
        %v623 = vadd.f32 %v621, %v622
        %v624 = vsel %vm469, %v566, 0.0
        %v625 = vadd.f32 %v623, %v624
        %v626 = vsel %vm469, %v567, 0.0
        %v627 = vadd.f32 %v625, %v626
        %v628 = vsel %vm469, %v568, 0.0
        %v629 = vadd.f32 %v627, %v628
        %v630 = vsel %vm469, %v569, 0.0
        %v631 = vadd.f32 %v629, %v630
        %v632 = vsel %vm469, %v570, 0.0
        %v633 = vadd.f32 %v631, %v632
        %v634 = vrot.slane %v633, 4
        %v635 = vadd.f32 %v633, %v634
        %v636 = vrot.slane %v635, 2
        %v637 = vadd.f32 %v635, %v636
        %v638 = vrot.slane %v637, 1
        %v639 = vadd.f32 %v637, %v638
        %v641 = vsel %vm469, %v538, 0
        %643 = vmatprep.subr.mxu0 0.0
        %644 = vmatpush1.msra.mxu0 %v459
        %645 = vmatprep.subr.mxu0 0.0
        %646 = vmatpush1.msra.mxu0 %v460
        %647 = vmatprep.subr.mxu0 0.0
        %648 = vmatpush1.msra.mxu0 %v461
        %649 = vmatprep.subr.mxu0 0.0
        %650 = vmatpush1.msra.mxu0 %v462
        %651 = vmatprep.subr.mxu0 0.0
        %652 = vmatpush1.msra.mxu0 %v463
        %653 = vmatprep.subr.mxu0 0.0
        %654 = vmatpush1.msra.mxu0 %v464
        %655 = vmatprep.subr.mxu0 0.0
        %656 = vmatpush1.msra.mxu0 %v465
        %657 = vmatprep.subr.mxu0 0.0
        %658 = vmatpush1.msra.mxu0 %v466
        %659 = vmatprep.subr.mxu0 0.0
        %660 = vmatpush1.msra.mxu0 0.0
        %661 = vmatprep.subr.mxu0 0.0
        %662 = vmatpush1.msra.mxu0 0.0
        %663 = vmatprep.subr.mxu0 0.0
        %664 = vmatpush1.msra.mxu0 0.0
        %665 = vmatprep.subr.mxu0 0.0
        %666 = vmatpush1.msra.mxu0 0.0
        %667 = vmatprep.subr.mxu0 0.0
        %668 = vmatpush1.msra.mxu0 0.0
        %669 = vmatprep.subr.mxu0 0.0
        %670 = vmatpush1.msra.mxu0 0.0
        %671 = vmatprep.subr.mxu0 0.0
        %672 = vmatpush1.msra.mxu0 0.0
        %673 = vmatprep.subr.mxu0 0.0
        %674 = vmatpush1.msra.mxu0 0.0
        %675 = vmatprep.subr.mxu0 0.0
        %676 = vmatpush1.msra.mxu0 0.0
        %677 = vmatprep.subr.mxu0 0.0
        %678 = vmatpush1.msra.mxu0 0.0
        %679 = vmatprep.subr.mxu0 0.0
        %680 = vmatpush1.msra.mxu0 0.0
        %681 = vmatprep.subr.mxu0 0.0
        %682 = vmatpush1.msra.mxu0 0.0
        %683 = vmatprep.subr.mxu0 0.0
        %684 = vmatpush1.msra.mxu0 0.0
        %685 = vmatprep.subr.mxu0 0.0
        %686 = vmatpush1.msra.mxu0 0.0
        %687 = vmatprep.subr.mxu0 0.0
        %688 = vmatpush1.msra.mxu0 0.0
        %689 = vmatprep.subr.mxu0 0.0
        %690 = vmatpush1.msra.mxu0 0.0
        %691 = vmatprep.subr.mxu0 0.0
        %692 = vmatpush1.msra.mxu0 0.0
        %693 = vmatprep.subr.mxu0 0.0
        %694 = vmatpush1.msra.mxu0 0.0
        %695 = vmatprep.subr.mxu0 0.0
        %696 = vmatpush1.msra.mxu0 0.0
        %697 = vmatprep.subr.mxu0 0.0
        %698 = vmatpush1.msra.mxu0 0.0
        %699 = vmatprep.subr.mxu0 0.0
        %700 = vmatpush1.msra.mxu0 0.0
        %701 = vmatprep.subr.mxu0 0.0
        %702 = vmatpush1.msra.mxu0 0.0
        %703 = vmatprep.subr.mxu0 0.0
        %704 = vmatpush1.msra.mxu0 0.0
        %705 = vmatprep.subr.mxu0 0.0
        %706 = vmatpush1.msra.mxu0 0.0
        %707 = vmatprep.mubr.f32.mxu0 0.0
        %708 = vmatmul.mubr.f32.gmra.mrb[0].mxu0 %v641
        %v709 = vpop.f32.mrb[0].mxu0
        %v710 = vadd.f32 0.0, %v709
        %v711 = vpop.f32.mrb[0].mxu0
        %712 = vdwg.mxu0
        %v714 = vsel %vm469, %v639, 0
        %716 = vmatprep.subr.mxu0 0.0
        %717 = vmatpush1.msra.mxu0 %v459
        %718 = vmatprep.subr.mxu0 0.0
        %719 = vmatpush1.msra.mxu0 %v460
        %720 = vmatprep.subr.mxu0 0.0
        %721 = vmatpush1.msra.mxu0 %v461
        %722 = vmatprep.subr.mxu0 0.0
        %723 = vmatpush1.msra.mxu0 %v462
        %724 = vmatprep.subr.mxu0 0.0
        %725 = vmatpush1.msra.mxu0 %v463
        %726 = vmatprep.subr.mxu0 0.0
        %727 = vmatpush1.msra.mxu0 %v464
        %728 = vmatprep.subr.mxu0 0.0
        %729 = vmatpush1.msra.mxu0 %v465
        %730 = vmatprep.subr.mxu0 0.0
        %731 = vmatpush1.msra.mxu0 %v466
        %732 = vmatprep.subr.mxu0 0.0
        %733 = vmatpush1.msra.mxu0 0.0
        %734 = vmatprep.subr.mxu0 0.0
        %735 = vmatpush1.msra.mxu0 0.0
        %736 = vmatprep.subr.mxu0 0.0
        %737 = vmatpush1.msra.mxu0 0.0
        %738 = vmatprep.subr.mxu0 0.0
        %739 = vmatpush1.msra.mxu0 0.0
        %740 = vmatprep.subr.mxu0 0.0
        %741 = vmatpush1.msra.mxu0 0.0
        %742 = vmatprep.subr.mxu0 0.0
        %743 = vmatpush1.msra.mxu0 0.0
        %744 = vmatprep.subr.mxu0 0.0
        %745 = vmatpush1.msra.mxu0 0.0
        %746 = vmatprep.subr.mxu0 0.0
        %747 = vmatpush1.msra.mxu0 0.0
        %748 = vmatprep.subr.mxu0 0.0
        %749 = vmatpush1.msra.mxu0 0.0
        %750 = vmatprep.subr.mxu0 0.0
        %751 = vmatpush1.msra.mxu0 0.0
        %752 = vmatprep.subr.mxu0 0.0
        %753 = vmatpush1.msra.mxu0 0.0
        %754 = vmatprep.subr.mxu0 0.0
        %755 = vmatpush1.msra.mxu0 0.0
        %756 = vmatprep.subr.mxu0 0.0
        %757 = vmatpush1.msra.mxu0 0.0
        %758 = vmatprep.subr.mxu0 0.0
        %759 = vmatpush1.msra.mxu0 0.0
        %760 = vmatprep.subr.mxu0 0.0
        %761 = vmatpush1.msra.mxu0 0.0
        %762 = vmatprep.subr.mxu0 0.0
        %763 = vmatpush1.msra.mxu0 0.0
        %764 = vmatprep.subr.mxu0 0.0
        %765 = vmatpush1.msra.mxu0 0.0
        %766 = vmatprep.subr.mxu0 0.0
        %767 = vmatpush1.msra.mxu0 0.0
        %768 = vmatprep.subr.mxu0 0.0
        %769 = vmatpush1.msra.mxu0 0.0
        %770 = vmatprep.subr.mxu0 0.0
        %771 = vmatpush1.msra.mxu0 0.0
        %772 = vmatprep.subr.mxu0 0.0
        %773 = vmatpush1.msra.mxu0 0.0
        %774 = vmatprep.subr.mxu0 0.0
        %775 = vmatpush1.msra.mxu0 0.0
        %776 = vmatprep.subr.mxu0 0.0
        %777 = vmatpush1.msra.mxu0 0.0
        %778 = vmatprep.subr.mxu0 0.0
        %779 = vmatpush1.msra.mxu0 0.0
        %780 = vmatprep.mubr.f32.mxu0 0.0
        %781 = vmatmul.mubr.f32.gmra.mrb[0].mxu0 %v714
        %v782 = vpop.f32.mrb[0].mxu0
        %v783 = vadd.f32 0.0, %v782
        %v784 = vpop.f32.mrb[0].mxu0
        %785 = vdwg.mxu0
        %v786 = vmul.f32 %v710, %v710
        %v787 = vsub.f32 %v783, %v786
        %v788 = vadd.f32 %v787, 1e-05
        %v789 = vrsqrt.pop %v788
        %v790 = vlaneseq
        %v791 = vshrl.u32 %v790, 7
        %v792 = vsub.s32 0, %v791
        %v793 = vrot.slane %v710, %v792
        %v794 = vsub.f32 %v427, %v793
        %v795 = vsub.f32 %v428, %v793
        %v796 = vsub.f32 %v429, %v793
        %v797 = vsub.f32 %v430, %v793
        %v798 = vsub.f32 %v431, %v793
        %v799 = vsub.f32 %v432, %v793
        %v800 = vsub.f32 %v433, %v793
        %v801 = vsub.f32 %v434, %v793
        %v802 = vsub.f32 %v435, %v793
        %v803 = vsub.f32 %v436, %v793
        %v804 = vsub.f32 %v437, %v793
        %v805 = vsub.f32 %v438, %v793
        %v806 = vsub.f32 %v439, %v793
        %v807 = vsub.f32 %v440, %v793
        %v808 = vsub.f32 %v441, %v793
        %v809 = vsub.f32 %v442, %v793
        %v810 = vsub.f32 %v443, %v793
        %v811 = vsub.f32 %v444, %v793
        %v812 = vsub.f32 %v445, %v793
        %v813 = vsub.f32 %v446, %v793
        %v814 = vsub.f32 %v447, %v793
        %v815 = vsub.f32 %v448, %v793
        %v816 = vsub.f32 %v449, %v793
        %v817 = vsub.f32 %v450, %v793
        %v818 = vsub.f32 %v451, %v793
        %v819 = vsub.f32 %v452, %v793
        %v820 = vsub.f32 %v453, %v793
        %v821 = vsub.f32 %v454, %v793
        %v822 = vsub.f32 %v455, %v793
        %v823 = vsub.f32 %v456, %v793
        %v824 = vsub.f32 %v457, %v793
        %v825 = vsub.f32 %v458, %v793
        %v826 = vlaneseq
        %v827 = vshrl.u32 %v826, 7
        %v828 = vsub.s32 0, %v827
        %v829 = vrot.slane %v789, %v828
        %v830 = vmul.f32 %v794, %v829
        %v831 = vmul.f32 %v795, %v829
        %v832 = vmul.f32 %v796, %v829
        %v833 = vmul.f32 %v797, %v829
        %v834 = vmul.f32 %v798, %v829
        %v835 = vmul.f32 %v799, %v829
        %v836 = vmul.f32 %v800, %v829
        %v837 = vmul.f32 %v801, %v829
        %v838 = vmul.f32 %v802, %v829
        %v839 = vmul.f32 %v803, %v829
        %v840 = vmul.f32 %v804, %v829
        %v841 = vmul.f32 %v805, %v829
        %v842 = vmul.f32 %v806, %v829
        %v843 = vmul.f32 %v807, %v829
        %v844 = vmul.f32 %v808, %v829
        %v845 = vmul.f32 %v809, %v829
        %v846 = vmul.f32 %v810, %v829
        %v847 = vmul.f32 %v811, %v829
        %v848 = vmul.f32 %v812, %v829
        %v849 = vmul.f32 %v813, %v829
        %v850 = vmul.f32 %v814, %v829
        %v851 = vmul.f32 %v815, %v829
        %v852 = vmul.f32 %v816, %v829
        %v853 = vmul.f32 %v817, %v829
        %v854 = vmul.f32 %v818, %v829
        %v855 = vmul.f32 %v819, %v829
        %v856 = vmul.f32 %v820, %v829
        %v857 = vmul.f32 %v821, %v829
        %v858 = vmul.f32 %v822, %v829
        %v859 = vmul.f32 %v823, %v829
        %v860 = vmul.f32 %v824, %v829
        %v861 = vmul.f32 %v825, %v829
        %v863 = vlaneseq
        %v864 = vshrl.u32 %v863, 7
        %v865 = vsub.s32 0, %v864
        %v866 = vrot.slane %v467, %v865
        %v868 = vmul.f32 %v830, %v866
        %v869 = vmul.f32 %v831, %v866
        %v870 = vmul.f32 %v832, %v866
        %v871 = vmul.f32 %v833, %v866
        %v872 = vmul.f32 %v834, %v866
        %v873 = vmul.f32 %v835, %v866
        %v874 = vmul.f32 %v836, %v866
        %v875 = vmul.f32 %v837, %v866
        %v876 = vmul.f32 %v838, %v866
        %v877 = vmul.f32 %v839, %v866
        %v878 = vmul.f32 %v840, %v866
        %v879 = vmul.f32 %v841, %v866
        %v880 = vmul.f32 %v842, %v866
        %v881 = vmul.f32 %v843, %v866
        %v882 = vmul.f32 %v844, %v866
        %v883 = vmul.f32 %v845, %v866
        %v884 = vmul.f32 %v846, %v866
        %v885 = vmul.f32 %v847, %v866
        %v886 = vmul.f32 %v848, %v866
        %v887 = vmul.f32 %v849, %v866
        %v888 = vmul.f32 %v850, %v866
        %v889 = vmul.f32 %v851, %v866
        %v890 = vmul.f32 %v852, %v866
        %v891 = vmul.f32 %v853, %v866
        %v892 = vmul.f32 %v854, %v866
        %v893 = vmul.f32 %v855, %v866
        %v894 = vmul.f32 %v856, %v866
        %v895 = vmul.f32 %v857, %v866
        %v896 = vmul.f32 %v858, %v866
        %v897 = vmul.f32 %v859, %v866
        %v898 = vmul.f32 %v860, %v866
        %v899 = vmul.f32 %v861, %v866
        %v901 = vlaneseq
        %v902 = vshrl.u32 %v901, 7
        %v903 = vsub.s32 0, %v902
        %v904 = vrot.slane %v468, %v903
        %v906 = vadd.f32 %v868, %v904
        %v907 = vadd.f32 %v869, %v904
        %v908 = vadd.f32 %v870, %v904
        %v909 = vadd.f32 %v871, %v904
        %v910 = vadd.f32 %v872, %v904
        %v911 = vadd.f32 %v873, %v904
        %v912 = vadd.f32 %v874, %v904
        %v913 = vadd.f32 %v875, %v904
        %v914 = vadd.f32 %v876, %v904
        %v915 = vadd.f32 %v877, %v904
        %v916 = vadd.f32 %v878, %v904
        %v917 = vadd.f32 %v879, %v904
        %v918 = vadd.f32 %v880, %v904
        %v919 = vadd.f32 %v881, %v904
        %v920 = vadd.f32 %v882, %v904
        %v921 = vadd.f32 %v883, %v904
        %v922 = vadd.f32 %v884, %v904
        %v923 = vadd.f32 %v885, %v904
        %v924 = vadd.f32 %v886, %v904
        %v925 = vadd.f32 %v887, %v904
        %v926 = vadd.f32 %v888, %v904
        %v927 = vadd.f32 %v889, %v904
        %v928 = vadd.f32 %v890, %v904
        %v929 = vadd.f32 %v891, %v904
        %v930 = vadd.f32 %v892, %v904
        %v931 = vadd.f32 %v893, %v904
        %v932 = vadd.f32 %v894, %v904
        %v933 = vadd.f32 %v895, %v904
        %v934 = vadd.f32 %v896, %v904
        %v935 = vadd.f32 %v897, %v904
        %v936 = vadd.f32 %v898, %v904
        %v937 = vadd.f32 %v899, %v904
        %vm938 = vcmp.gt.f32.partialorder %v906, 0.0
        %vm939 = vcmp.gt.f32.partialorder %v907, 0.0
        %vm940 = vcmp.gt.f32.partialorder %v908, 0.0
        %vm941 = vcmp.gt.f32.partialorder %v909, 0.0
        %vm942 = vcmp.gt.f32.partialorder %v910, 0.0
        %vm943 = vcmp.gt.f32.partialorder %v911, 0.0
        %vm944 = vcmp.gt.f32.partialorder %v912, 0.0
        %vm945 = vcmp.gt.f32.partialorder %v913, 0.0
        %vm946 = vcmp.gt.f32.partialorder %v914, 0.0
        %vm947 = vcmp.gt.f32.partialorder %v915, 0.0
        %vm948 = vcmp.gt.f32.partialorder %v916, 0.0
        %vm949 = vcmp.gt.f32.partialorder %v917, 0.0
        %vm950 = vcmp.gt.f32.partialorder %v918, 0.0
        %vm951 = vcmp.gt.f32.partialorder %v919, 0.0
        %vm952 = vcmp.gt.f32.partialorder %v920, 0.0
        %vm953 = vcmp.gt.f32.partialorder %v921, 0.0
        %vm954 = vcmp.gt.f32.partialorder %v922, 0.0
        %vm955 = vcmp.gt.f32.partialorder %v923, 0.0
        %vm956 = vcmp.gt.f32.partialorder %v924, 0.0
        %vm957 = vcmp.gt.f32.partialorder %v925, 0.0
        %vm958 = vcmp.gt.f32.partialorder %v926, 0.0
        %vm959 = vcmp.gt.f32.partialorder %v927, 0.0
        %vm960 = vcmp.gt.f32.partialorder %v928, 0.0
        %vm961 = vcmp.gt.f32.partialorder %v929, 0.0
        %vm962 = vcmp.gt.f32.partialorder %v930, 0.0
        %vm963 = vcmp.gt.f32.partialorder %v931, 0.0
        %vm964 = vcmp.gt.f32.partialorder %v932, 0.0
        %vm965 = vcmp.gt.f32.partialorder %v933, 0.0
        %vm966 = vcmp.gt.f32.partialorder %v934, 0.0
        %vm967 = vcmp.gt.f32.partialorder %v935, 0.0
        %vm968 = vcmp.gt.f32.partialorder %v936, 0.0
        %vm969 = vcmp.gt.f32.partialorder %v937, 0.0
        %v970 = vmul.f32 %v906, 1.442695
        %v971 = vpow.pop %v970
        %v972 = vmul.f32 %v907, 1.442695
        %v973 = vpow.pop %v972
        %v974 = vmul.f32 %v908, 1.442695
        %v975 = vpow.pop %v974
        %v976 = vmul.f32 %v909, 1.442695
        %v977 = vpow.pop %v976
        %v978 = vmul.f32 %v910, 1.442695
        %v979 = vpow.pop %v978
        %v980 = vmul.f32 %v911, 1.442695
        %v981 = vpow.pop %v980
        %v982 = vmul.f32 %v912, 1.442695
        %v983 = vpow.pop %v982
        %v984 = vmul.f32 %v913, 1.442695
        %v985 = vpow.pop %v984
        %v986 = vmul.f32 %v914, 1.442695
        %v987 = vpow.pop %v986
        %v988 = vmul.f32 %v915, 1.442695
        %v989 = vpow.pop %v988
        %v990 = vmul.f32 %v916, 1.442695
        %v991 = vpow.pop %v990
        %v992 = vmul.f32 %v917, 1.442695
        %v993 = vpow.pop %v992
        %v994 = vmul.f32 %v918, 1.442695
        %v995 = vpow.pop %v994
        %v996 = vmul.f32 %v919, 1.442695
        %v997 = vpow.pop %v996
        %v998 = vmul.f32 %v920, 1.442695
        %v999 = vpow.pop %v998
        %v1000 = vmul.f32 %v921, 1.442695
        %v1001 = vpow.pop %v1000
        %v1002 = vmul.f32 %v922, 1.442695
        %v1003 = vpow.pop %v1002
        %v1004 = vmul.f32 %v923, 1.442695
        %v1005 = vpow.pop %v1004
        %v1006 = vmul.f32 %v924, 1.442695
        %v1007 = vpow.pop %v1006
        %v1008 = vmul.f32 %v925, 1.442695
        %v1009 = vpow.pop %v1008
        %v1010 = vmul.f32 %v926, 1.442695
        %v1011 = vpow.pop %v1010
        %v1012 = vmul.f32 %v927, 1.442695
        %v1013 = vpow.pop %v1012
        %v1014 = vmul.f32 %v928, 1.442695
        %v1015 = vpow.pop %v1014
        %v1016 = vmul.f32 %v929, 1.442695
        %v1017 = vpow.pop %v1016
        %v1018 = vmul.f32 %v930, 1.442695
        %v1019 = vpow.pop %v1018
        %v1020 = vmul.f32 %v931, 1.442695
        %v1021 = vpow.pop %v1020
        %v1022 = vmul.f32 %v932, 1.442695
        %v1023 = vpow.pop %v1022
        %v1024 = vmul.f32 %v933, 1.442695
        %v1025 = vpow.pop %v1024
        %v1026 = vmul.f32 %v934, 1.442695
        %v1027 = vpow.pop %v1026
        %v1028 = vmul.f32 %v935, 1.442695
        %v1029 = vpow.pop %v1028
        %v1030 = vmul.f32 %v936, 1.442695
        %v1031 = vpow.pop %v1030
        %v1032 = vmul.f32 %v937, 1.442695
        %v1033 = vpow.pop %v1032
        %v1034 = vsub.f32 %v971, 1.0
        %v1035 = vsub.f32 %v973, 1.0
        %v1036 = vsub.f32 %v975, 1.0
        %v1037 = vsub.f32 %v977, 1.0
        %v1038 = vsub.f32 %v979, 1.0
        %v1039 = vsub.f32 %v981, 1.0
        %v1040 = vsub.f32 %v983, 1.0
        %v1041 = vsub.f32 %v985, 1.0
        %v1042 = vsub.f32 %v987, 1.0
        %v1043 = vsub.f32 %v989, 1.0
        %v1044 = vsub.f32 %v991, 1.0
        %v1045 = vsub.f32 %v993, 1.0
        %v1046 = vsub.f32 %v995, 1.0
        %v1047 = vsub.f32 %v997, 1.0
        %v1048 = vsub.f32 %v999, 1.0
        %v1049 = vsub.f32 %v1001, 1.0
        %v1050 = vsub.f32 %v1003, 1.0
        %v1051 = vsub.f32 %v1005, 1.0
        %v1052 = vsub.f32 %v1007, 1.0
        %v1053 = vsub.f32 %v1009, 1.0
        %v1054 = vsub.f32 %v1011, 1.0
        %v1055 = vsub.f32 %v1013, 1.0
        %v1056 = vsub.f32 %v1015, 1.0
        %v1057 = vsub.f32 %v1017, 1.0
        %v1058 = vsub.f32 %v1019, 1.0
        %v1059 = vsub.f32 %v1021, 1.0
        %v1060 = vsub.f32 %v1023, 1.0
        %v1061 = vsub.f32 %v1025, 1.0
        %v1062 = vsub.f32 %v1027, 1.0
        %v1063 = vsub.f32 %v1029, 1.0
        %v1064 = vsub.f32 %v1031, 1.0
        %v1065 = vsub.f32 %v1033, 1.0
        %v1066 = vmul.f32 %v1034, 1.6732632
        %v1067 = vmul.f32 %v1035, 1.6732632
        %v1068 = vmul.f32 %v1036, 1.6732632
        %v1069 = vmul.f32 %v1037, 1.6732632
        %v1070 = vmul.f32 %v1038, 1.6732632
        %v1071 = vmul.f32 %v1039, 1.6732632
        %v1072 = vmul.f32 %v1040, 1.6732632
        %v1073 = vmul.f32 %v1041, 1.6732632
        %v1074 = vmul.f32 %v1042, 1.6732632
        %v1075 = vmul.f32 %v1043, 1.6732632
        %v1076 = vmul.f32 %v1044, 1.6732632
        %v1077 = vmul.f32 %v1045, 1.6732632
        %v1078 = vmul.f32 %v1046, 1.6732632
        %v1079 = vmul.f32 %v1047, 1.6732632
        %v1080 = vmul.f32 %v1048, 1.6732632
        %v1081 = vmul.f32 %v1049, 1.6732632
        %v1082 = vmul.f32 %v1050, 1.6732632
        %v1083 = vmul.f32 %v1051, 1.6732632
        %v1084 = vmul.f32 %v1052, 1.6732632
        %v1085 = vmul.f32 %v1053, 1.6732632
        %v1086 = vmul.f32 %v1054, 1.6732632
        %v1087 = vmul.f32 %v1055, 1.6732632
        %v1088 = vmul.f32 %v1056, 1.6732632
        %v1089 = vmul.f32 %v1057, 1.6732632
        %v1090 = vmul.f32 %v1058, 1.6732632
        %v1091 = vmul.f32 %v1059, 1.6732632
        %v1092 = vmul.f32 %v1060, 1.6732632
        %v1093 = vmul.f32 %v1061, 1.6732632
        %v1094 = vmul.f32 %v1062, 1.6732632
        %v1095 = vmul.f32 %v1063, 1.6732632
        %v1096 = vmul.f32 %v1064, 1.6732632
        %v1097 = vmul.f32 %v1065, 1.6732632
        %v1098 = vsel %vm938, %v906, %v1066
        %v1099 = vsel %vm939, %v907, %v1067
        %v1100 = vsel %vm940, %v908, %v1068
        %v1101 = vsel %vm941, %v909, %v1069
        %v1102 = vsel %vm942, %v910, %v1070
        %v1103 = vsel %vm943, %v911, %v1071
        %v1104 = vsel %vm944, %v912, %v1072
        %v1105 = vsel %vm945, %v913, %v1073
        %v1106 = vsel %vm946, %v914, %v1074
        %v1107 = vsel %vm947, %v915, %v1075
        %v1108 = vsel %vm948, %v916, %v1076
        %v1109 = vsel %vm949, %v917, %v1077
        %v1110 = vsel %vm950, %v918, %v1078
        %v1111 = vsel %vm951, %v919, %v1079
        %v1112 = vsel %vm952, %v920, %v1080
        %v1113 = vsel %vm953, %v921, %v1081
        %v1114 = vsel %vm954, %v922, %v1082
        %v1115 = vsel %vm955, %v923, %v1083
        %v1116 = vsel %vm956, %v924, %v1084
        %v1117 = vsel %vm957, %v925, %v1085
        %v1118 = vsel %vm958, %v926, %v1086
        %v1119 = vsel %vm959, %v927, %v1087
        %v1120 = vsel %vm960, %v928, %v1088
        %v1121 = vsel %vm961, %v929, %v1089
        %v1122 = vsel %vm962, %v930, %v1090
        %v1123 = vsel %vm963, %v931, %v1091
        %v1124 = vsel %vm964, %v932, %v1092
        %v1125 = vsel %vm965, %v933, %v1093
        %v1126 = vsel %vm966, %v934, %v1094
        %v1127 = vsel %vm967, %v935, %v1095
        %v1128 = vsel %vm968, %v936, %v1096
        %v1129 = vsel %vm969, %v937, %v1097
        %v1130 = vmul.f32 %v1098, 1.050701
        %v1131 = vmul.f32 %v1099, 1.050701
        %v1132 = vmul.f32 %v1100, 1.050701
        %v1133 = vmul.f32 %v1101, 1.050701
        %v1134 = vmul.f32 %v1102, 1.050701
        %v1135 = vmul.f32 %v1103, 1.050701
        %v1136 = vmul.f32 %v1104, 1.050701
        %v1137 = vmul.f32 %v1105, 1.050701
        %v1138 = vmul.f32 %v1106, 1.050701
        %v1139 = vmul.f32 %v1107, 1.050701
        %v1140 = vmul.f32 %v1108, 1.050701
        %v1141 = vmul.f32 %v1109, 1.050701
        %v1142 = vmul.f32 %v1110, 1.050701
        %v1143 = vmul.f32 %v1111, 1.050701
        %v1144 = vmul.f32 %v1112, 1.050701
        %v1145 = vmul.f32 %v1113, 1.050701
        %v1146 = vmul.f32 %v1114, 1.050701
        %v1147 = vmul.f32 %v1115, 1.050701
        %v1148 = vmul.f32 %v1116, 1.050701
        %v1149 = vmul.f32 %v1117, 1.050701
        %v1150 = vmul.f32 %v1118, 1.050701
        %v1151 = vmul.f32 %v1119, 1.050701
        %v1152 = vmul.f32 %v1120, 1.050701
        %v1153 = vmul.f32 %v1121, 1.050701
        %v1154 = vmul.f32 %v1122, 1.050701
        %v1155 = vmul.f32 %v1123, 1.050701
        %v1156 = vmul.f32 %v1124, 1.050701
        %v1157 = vmul.f32 %v1125, 1.050701
        %v1158 = vmul.f32 %v1126, 1.050701
        %v1159 = vmul.f32 %v1127, 1.050701
        %v1160 = vmul.f32 %v1128, 1.050701
        %v1161 = vmul.f32 %v1129, 1.050701
        %v1162 = vld [vmem:[%s6] sm:$0x1]
        %v1163 = vlaneseq
        %v1164 = vshrl.u32 %v1163, 7
        %v1165 = vadd.s32 %v1164, 8
        %v1166 = vadd.s32 %v1164, 16
        %v1167 = vadd.s32 %v1164, 24
        %v1168 = vadd.s32 %v1164, 32
        %v1169 = vadd.s32 %v1164, 40
        %v1170 = vadd.s32 %v1164, 48
        %v1171 = vadd.s32 %v1164, 56
        %v1172 = vadd.s32 %v1164, 64
        %v1173 = vadd.s32 %v1164, 72
        %v1174 = vadd.s32 %v1164, 80
        %v1175 = vadd.s32 %v1164, 88
        %v1176 = vadd.s32 %v1164, 96
        %v1177 = vadd.s32 %v1164, 104
        %v1178 = vadd.s32 %v1164, 112
        %v1179 = vadd.s32 %v1164, 120
        %v1180 = vadd.s32 %v1164, 128
        %v1181 = vadd.s32 %v1164, 136
        %v1182 = vadd.s32 %v1164, 144
        %v1183 = vadd.s32 %v1164, 152
        %v1184 = vadd.s32 %v1164, 160
        %v1185 = vadd.s32 %v1164, 168
        %v1186 = vadd.s32 %v1164, 176
        %v1187 = vadd.s32 %v1164, 184
        %v1188 = vadd.s32 %v1164, 192
        %v1189 = vadd.s32 %v1164, 200
        %v1190 = vadd.s32 %v1164, 208
        %v1191 = vadd.s32 %v1164, 216
        %v1192 = vadd.s32 %v1164, 224
        %v1193 = vadd.s32 %v1164, 232
        %v1194 = vadd.s32 %v1164, 240
        %v1195 = vadd.s32 %v1164, 248
        %v1196 = vand.u32 %v1164, 15
        %v1197 = vand.u32 %v1165, 15
        %v1198 = vand.u32 %v1166, 15
        %v1199 = vand.u32 %v1167, 15
        %v1200 = vand.u32 %v1168, 15
        %v1201 = vand.u32 %v1169, 15
        %v1202 = vand.u32 %v1170, 15
        %v1203 = vand.u32 %v1171, 15
        %v1204 = vand.u32 %v1172, 15
        %v1205 = vand.u32 %v1173, 15
        %v1206 = vand.u32 %v1174, 15
        %v1207 = vand.u32 %v1175, 15
        %v1208 = vand.u32 %v1176, 15
        %v1209 = vand.u32 %v1177, 15
        %v1210 = vand.u32 %v1178, 15
        %v1211 = vand.u32 %v1179, 15
        %v1212 = vand.u32 %v1180, 15
        %v1213 = vand.u32 %v1181, 15
        %v1214 = vand.u32 %v1182, 15
        %v1215 = vand.u32 %v1183, 15
        %v1216 = vand.u32 %v1184, 15
        %v1217 = vand.u32 %v1185, 15
        %v1218 = vand.u32 %v1186, 15
        %v1219 = vand.u32 %v1187, 15
        %v1220 = vand.u32 %v1188, 15
        %v1221 = vand.u32 %v1189, 15
        %v1222 = vand.u32 %v1190, 15
        %v1223 = vand.u32 %v1191, 15
        %v1224 = vand.u32 %v1192, 15
        %v1225 = vand.u32 %v1193, 15
        %v1226 = vand.u32 %v1194, 15
        %v1227 = vand.u32 %v1195, 15
        %vm1228 = vcmp.ge.s32.totalorder %v1164, 16
        %vm1229 = vcmp.ge.s32.totalorder %v1165, 16
        %vm1230 = vcmp.ge.s32.totalorder %v1166, 16
        %vm1231 = vcmp.ge.s32.totalorder %v1167, 16
        %vm1232 = vcmp.ge.s32.totalorder %v1168, 16
        %vm1233 = vcmp.ge.s32.totalorder %v1169, 16
        %vm1234 = vcmp.ge.s32.totalorder %v1170, 16
        %vm1235 = vcmp.ge.s32.totalorder %v1171, 16
        %vm1236 = vcmp.ge.s32.totalorder %v1172, 16
        %vm1237 = vcmp.ge.s32.totalorder %v1173, 16
        %vm1238 = vcmp.ge.s32.totalorder %v1174, 16
        %vm1239 = vcmp.ge.s32.totalorder %v1175, 16
        %vm1240 = vcmp.ge.s32.totalorder %v1176, 16
        %vm1241 = vcmp.ge.s32.totalorder %v1177, 16
        %vm1242 = vcmp.ge.s32.totalorder %v1178, 16
        %vm1243 = vcmp.ge.s32.totalorder %v1179, 16
        %vm1244 = vcmp.ge.s32.totalorder %v1180, 16
        %vm1245 = vcmp.ge.s32.totalorder %v1181, 16
        %vm1246 = vcmp.ge.s32.totalorder %v1182, 16
        %vm1247 = vcmp.ge.s32.totalorder %v1183, 16
        %vm1248 = vcmp.ge.s32.totalorder %v1184, 16
        %vm1249 = vcmp.ge.s32.totalorder %v1185, 16
        %vm1250 = vcmp.ge.s32.totalorder %v1186, 16
        %vm1251 = vcmp.ge.s32.totalorder %v1187, 16
        %vm1252 = vcmp.ge.s32.totalorder %v1188, 16
        %vm1253 = vcmp.ge.s32.totalorder %v1189, 16
        %vm1254 = vcmp.ge.s32.totalorder %v1190, 16
        %vm1255 = vcmp.ge.s32.totalorder %v1191, 16
        %vm1256 = vcmp.ge.s32.totalorder %v1192, 16
        %vm1257 = vcmp.ge.s32.totalorder %v1193, 16
        %vm1258 = vcmp.ge.s32.totalorder %v1194, 16
        %vm1259 = vcmp.ge.s32.totalorder %v1195, 16
        %vm1260 = vcmp.lt.s32.totalorder %v1164, 240
        %vm1261 = vcmp.lt.s32.totalorder %v1165, 240
        %vm1262 = vcmp.lt.s32.totalorder %v1166, 240
        %vm1263 = vcmp.lt.s32.totalorder %v1167, 240
        %vm1264 = vcmp.lt.s32.totalorder %v1168, 240
        %vm1265 = vcmp.lt.s32.totalorder %v1169, 240
        %vm1266 = vcmp.lt.s32.totalorder %v1170, 240
        %vm1267 = vcmp.lt.s32.totalorder %v1171, 240
        %vm1268 = vcmp.lt.s32.totalorder %v1172, 240
        %vm1269 = vcmp.lt.s32.totalorder %v1173, 240
        %vm1270 = vcmp.lt.s32.totalorder %v1174, 240
        %vm1271 = vcmp.lt.s32.totalorder %v1175, 240
        %vm1272 = vcmp.lt.s32.totalorder %v1176, 240
        %vm1273 = vcmp.lt.s32.totalorder %v1177, 240
        %vm1274 = vcmp.lt.s32.totalorder %v1178, 240
        %vm1275 = vcmp.lt.s32.totalorder %v1179, 240
        %vm1276 = vcmp.lt.s32.totalorder %v1180, 240
        %vm1277 = vcmp.lt.s32.totalorder %v1181, 240
        %vm1278 = vcmp.lt.s32.totalorder %v1182, 240
        %vm1279 = vcmp.lt.s32.totalorder %v1183, 240
        %vm1280 = vcmp.lt.s32.totalorder %v1184, 240
        %vm1281 = vcmp.lt.s32.totalorder %v1185, 240
        %vm1282 = vcmp.lt.s32.totalorder %v1186, 240
        %vm1283 = vcmp.lt.s32.totalorder %v1187, 240
        %vm1284 = vcmp.lt.s32.totalorder %v1188, 240
        %vm1285 = vcmp.lt.s32.totalorder %v1189, 240
        %vm1286 = vcmp.lt.s32.totalorder %v1190, 240
        %vm1287 = vcmp.lt.s32.totalorder %v1191, 240
        %vm1288 = vcmp.lt.s32.totalorder %v1192, 240
        %vm1289 = vcmp.lt.s32.totalorder %v1193, 240
        %vm1290 = vcmp.lt.s32.totalorder %v1194, 240
        %vm1291 = vcmp.lt.s32.totalorder %v1195, 240
        %vm1292 = vcmp.ge.s32.totalorder %v1196, 1
        %vm1293 = vcmp.ge.s32.totalorder %v1197, 1
        %vm1294 = vcmp.ge.s32.totalorder %v1198, 1
        %vm1295 = vcmp.ge.s32.totalorder %v1199, 1
        %vm1296 = vcmp.ge.s32.totalorder %v1200, 1
        %vm1297 = vcmp.ge.s32.totalorder %v1201, 1
        %vm1298 = vcmp.ge.s32.totalorder %v1202, 1
        %vm1299 = vcmp.ge.s32.totalorder %v1203, 1
        %vm1300 = vcmp.ge.s32.totalorder %v1204, 1
        %vm1301 = vcmp.ge.s32.totalorder %v1205, 1
        %vm1302 = vcmp.ge.s32.totalorder %v1206, 1
        %vm1303 = vcmp.ge.s32.totalorder %v1207, 1
        %vm1304 = vcmp.ge.s32.totalorder %v1208, 1
        %vm1305 = vcmp.ge.s32.totalorder %v1209, 1
        %vm1306 = vcmp.ge.s32.totalorder %v1210, 1
        %vm1307 = vcmp.ge.s32.totalorder %v1211, 1
        %vm1308 = vcmp.ge.s32.totalorder %v1212, 1
        %vm1309 = vcmp.ge.s32.totalorder %v1213, 1
        %vm1310 = vcmp.ge.s32.totalorder %v1214, 1
        %vm1311 = vcmp.ge.s32.totalorder %v1215, 1
        %vm1312 = vcmp.ge.s32.totalorder %v1216, 1
        %vm1313 = vcmp.ge.s32.totalorder %v1217, 1
        %vm1314 = vcmp.ge.s32.totalorder %v1218, 1
        %vm1315 = vcmp.ge.s32.totalorder %v1219, 1
        %vm1316 = vcmp.ge.s32.totalorder %v1220, 1
        %vm1317 = vcmp.ge.s32.totalorder %v1221, 1
        %vm1318 = vcmp.ge.s32.totalorder %v1222, 1
        %vm1319 = vcmp.ge.s32.totalorder %v1223, 1
        %vm1320 = vcmp.ge.s32.totalorder %v1224, 1
        %vm1321 = vcmp.ge.s32.totalorder %v1225, 1
        %vm1322 = vcmp.ge.s32.totalorder %v1226, 1
        %vm1323 = vcmp.ge.s32.totalorder %v1227, 1
        %vm1324 = vcmp.lt.s32.totalorder %v1196, 15
        %vm1325 = vcmp.lt.s32.totalorder %v1197, 15
        %vm1326 = vcmp.lt.s32.totalorder %v1198, 15
        %vm1327 = vcmp.lt.s32.totalorder %v1199, 15
        %vm1328 = vcmp.lt.s32.totalorder %v1200, 15
        %vm1329 = vcmp.lt.s32.totalorder %v1201, 15
        %vm1330 = vcmp.lt.s32.totalorder %v1202, 15
        %vm1331 = vcmp.lt.s32.totalorder %v1203, 15
        %vm1332 = vcmp.lt.s32.totalorder %v1204, 15
        %vm1333 = vcmp.lt.s32.totalorder %v1205, 15
        %vm1334 = vcmp.lt.s32.totalorder %v1206, 15
        %vm1335 = vcmp.lt.s32.totalorder %v1207, 15
        %vm1336 = vcmp.lt.s32.totalorder %v1208, 15
        %vm1337 = vcmp.lt.s32.totalorder %v1209, 15
        %vm1338 = vcmp.lt.s32.totalorder %v1210, 15
        %vm1339 = vcmp.lt.s32.totalorder %v1211, 15
        %vm1340 = vcmp.lt.s32.totalorder %v1212, 15
        %vm1341 = vcmp.lt.s32.totalorder %v1213, 15
        %vm1342 = vcmp.lt.s32.totalorder %v1214, 15
        %vm1343 = vcmp.lt.s32.totalorder %v1215, 15
        %vm1344 = vcmp.lt.s32.totalorder %v1216, 15
        %vm1345 = vcmp.lt.s32.totalorder %v1217, 15
        %vm1346 = vcmp.lt.s32.totalorder %v1218, 15
        %vm1347 = vcmp.lt.s32.totalorder %v1219, 15
        %vm1348 = vcmp.lt.s32.totalorder %v1220, 15
        %vm1349 = vcmp.lt.s32.totalorder %v1221, 15
        %vm1350 = vcmp.lt.s32.totalorder %v1222, 15
        %vm1351 = vcmp.lt.s32.totalorder %v1223, 15
        %vm1352 = vcmp.lt.s32.totalorder %v1224, 15
        %vm1353 = vcmp.lt.s32.totalorder %v1225, 15
        %vm1354 = vcmp.lt.s32.totalorder %v1226, 15
        %vm1355 = vcmp.lt.s32.totalorder %v1227, 15
        %v1356 = vrot.slane %v1130, 7
        %v1357 = vrot.slane %v1131, 7
        %v1358 = vrot.slane %v1132, 7
        %v1359 = vrot.slane %v1133, 7
        %v1360 = vrot.slane %v1134, 7
        %v1361 = vrot.slane %v1135, 7
        %v1362 = vrot.slane %v1136, 7
        %v1363 = vrot.slane %v1137, 7
        %v1364 = vrot.slane %v1138, 7
        %v1365 = vrot.slane %v1139, 7
        %v1366 = vrot.slane %v1140, 7
        %v1367 = vrot.slane %v1141, 7
        %v1368 = vrot.slane %v1142, 7
        %v1369 = vrot.slane %v1143, 7
        %v1370 = vrot.slane %v1144, 7
        %v1371 = vrot.slane %v1145, 7
        %v1372 = vrot.slane %v1146, 7
        %v1373 = vrot.slane %v1147, 7
        %v1374 = vrot.slane %v1148, 7
        %v1375 = vrot.slane %v1149, 7
        %v1376 = vrot.slane %v1150, 7
        %v1377 = vrot.slane %v1151, 7
        %v1378 = vrot.slane %v1152, 7
        %v1379 = vrot.slane %v1153, 7
        %v1380 = vrot.slane %v1154, 7
        %v1381 = vrot.slane %v1155, 7
        %v1382 = vrot.slane %v1156, 7
        %v1383 = vrot.slane %v1157, 7
        %v1384 = vrot.slane %v1158, 7
        %v1385 = vrot.slane %v1159, 7
        %v1386 = vrot.slane %v1160, 7
        %v1387 = vrot.slane %v1161, 7
        %vm1388 = vcmp.lt.s32.totalorder %v1164, 1
        %v1389 = vsel %vm1388, %v1386, %v1387
        %v1390 = vsel %vm1388, %v1385, %v1386
        %v1391 = vsel %vm1388, %v1384, %v1385
        %v1392 = vsel %vm1388, %v1383, %v1384
        %v1393 = vsel %vm1388, %v1382, %v1383
        %v1394 = vsel %vm1388, %v1381, %v1382
        %v1395 = vsel %vm1388, %v1380, %v1381
        %v1396 = vsel %vm1388, %v1379, %v1380
        %v1397 = vsel %vm1388, %v1378, %v1379
        %v1398 = vsel %vm1388, %v1377, %v1378
        %v1399 = vsel %vm1388, %v1376, %v1377
        %v1400 = vsel %vm1388, %v1375, %v1376
        %v1401 = vsel %vm1388, %v1374, %v1375
        %v1402 = vsel %vm1388, %v1373, %v1374
        %v1403 = vsel %vm1388, %v1372, %v1373
        %v1404 = vsel %vm1388, %v1371, %v1372
        %v1405 = vsel %vm1388, %v1370, %v1371
        %v1406 = vsel %vm1388, %v1369, %v1370
        %v1407 = vsel %vm1388, %v1368, %v1369
        %v1408 = vsel %vm1388, %v1367, %v1368
        %v1409 = vsel %vm1388, %v1366, %v1367
        %v1410 = vsel %vm1388, %v1365, %v1366
        %v1411 = vsel %vm1388, %v1364, %v1365
        %v1412 = vsel %vm1388, %v1363, %v1364
        %v1413 = vsel %vm1388, %v1362, %v1363
        %v1414 = vsel %vm1388, %v1361, %v1362
        %v1415 = vsel %vm1388, %v1360, %v1361
        %v1416 = vsel %vm1388, %v1359, %v1360
        %v1417 = vsel %vm1388, %v1358, %v1359
        %v1418 = vsel %vm1388, %v1357, %v1358
        %v1419 = vsel %vm1388, %v1356, %v1357
        %v1420 = vsel %vm1388, %v1387, %v1356
        %vm1421 = vmand %vm1228, %vm1292
        %vm1422 = vmand %vm1229, %vm1293
        %vm1423 = vmand %vm1230, %vm1294
        %vm1424 = vmand %vm1231, %vm1295
        %vm1425 = vmand %vm1232, %vm1296
        %vm1426 = vmand %vm1233, %vm1297
        %vm1427 = vmand %vm1234, %vm1298
        %vm1428 = vmand %vm1235, %vm1299
        %vm1429 = vmand %vm1236, %vm1300
        %vm1430 = vmand %vm1237, %vm1301
        %vm1431 = vmand %vm1238, %vm1302
        %vm1432 = vmand %vm1239, %vm1303
        %vm1433 = vmand %vm1240, %vm1304
        %vm1434 = vmand %vm1241, %vm1305
        %vm1435 = vmand %vm1242, %vm1306
        %vm1436 = vmand %vm1243, %vm1307
        %vm1437 = vmand %vm1244, %vm1308
        %vm1438 = vmand %vm1245, %vm1309
        %vm1439 = vmand %vm1246, %vm1310
        %vm1440 = vmand %vm1247, %vm1311
        %vm1441 = vmand %vm1248, %vm1312
        %vm1442 = vmand %vm1249, %vm1313
        %vm1443 = vmand %vm1250, %vm1314
        %vm1444 = vmand %vm1251, %vm1315
        %vm1445 = vmand %vm1252, %vm1316
        %vm1446 = vmand %vm1253, %vm1317
        %vm1447 = vmand %vm1254, %vm1318
        %vm1448 = vmand %vm1255, %vm1319
        %vm1449 = vmand %vm1256, %vm1320
        %vm1450 = vmand %vm1257, %vm1321
        %vm1451 = vmand %vm1258, %vm1322
        %vm1452 = vmand %vm1259, %vm1323
        %v1453 = vsel %vm1421, %v1390, 0.0
        %v1454 = vsel %vm1422, %v1389, 0.0
        %v1455 = vsel %vm1423, %v1420, 0.0
        %v1456 = vsel %vm1424, %v1419, 0.0
        %v1457 = vsel %vm1425, %v1418, 0.0
        %v1458 = vsel %vm1426, %v1417, 0.0
        %v1459 = vsel %vm1427, %v1416, 0.0
        %v1460 = vsel %vm1428, %v1415, 0.0
        %v1461 = vsel %vm1429, %v1414, 0.0
        %v1462 = vsel %vm1430, %v1413, 0.0
        %v1463 = vsel %vm1431, %v1412, 0.0
        %v1464 = vsel %vm1432, %v1411, 0.0
        %v1465 = vsel %vm1433, %v1410, 0.0
        %v1466 = vsel %vm1434, %v1409, 0.0
        %v1467 = vsel %vm1435, %v1408, 0.0
        %v1468 = vsel %vm1436, %v1407, 0.0
        %v1469 = vsel %vm1437, %v1406, 0.0
        %v1470 = vsel %vm1438, %v1405, 0.0
        %v1471 = vsel %vm1439, %v1404, 0.0
        %v1472 = vsel %vm1440, %v1403, 0.0
        %v1473 = vsel %vm1441, %v1402, 0.0
        %v1474 = vsel %vm1442, %v1401, 0.0
        %v1475 = vsel %vm1443, %v1400, 0.0
        %v1476 = vsel %vm1444, %v1399, 0.0
        %v1477 = vsel %vm1445, %v1398, 0.0
        %v1478 = vsel %vm1446, %v1397, 0.0
        %v1479 = vsel %vm1447, %v1396, 0.0
        %v1480 = vsel %vm1448, %v1395, 0.0
        %v1481 = vsel %vm1449, %v1394, 0.0
        %v1482 = vsel %vm1450, %v1393, 0.0
        %v1483 = vsel %vm1451, %v1392, 0.0
        %v1484 = vsel %vm1452, %v1391, 0.0
        %v1485 = vpack.c.bf16 %v1454, %v1453
        %v1486 = vpack.c.bf16 %v1456, %v1455
        %v1487 = vpack.c.bf16 %v1458, %v1457
        %v1488 = vpack.c.bf16 %v1460, %v1459
        %v1489 = vpack.c.bf16 %v1462, %v1461
        %v1490 = vpack.c.bf16 %v1464, %v1463
        %v1491 = vpack.c.bf16 %v1466, %v1465
        %v1492 = vpack.c.bf16 %v1468, %v1467
        %v1493 = vpack.c.bf16 %v1470, %v1469
        %v1494 = vpack.c.bf16 %v1472, %v1471
        %v1495 = vpack.c.bf16 %v1474, %v1473
        %v1496 = vpack.c.bf16 %v1476, %v1475
        %v1497 = vpack.c.bf16 %v1478, %v1477
        %v1498 = vpack.c.bf16 %v1480, %v1479
        %v1499 = vpack.c.bf16 %v1482, %v1481
        %v1500 = vpack.c.bf16 %v1484, %v1483
        %1501 = vst.msk [vmem:[#allocation2] sm:$0xff] %vm469, %v1485
        %1502 = vst.msk [vmem:[#allocation2 + $0x10] sm:$0xff] %vm469, %v1486
        %1503 = vst.msk [vmem:[#allocation2 + $0x20] sm:$0xff] %vm469, %v1487
        %1504 = vst.msk [vmem:[#allocation2 + $0x30] sm:$0xff] %vm469, %v1488
        %1505 = vst.msk [vmem:[#allocation2 + $0x40] sm:$0xff] %vm469, %v1489
        %1506 = vst.msk [vmem:[#allocation2 + $0x50] sm:$0xff] %vm469, %v1490
        %1507 = vst.msk [vmem:[#allocation2 + $0x60] sm:$0xff] %vm469, %v1491
        %1508 = vst.msk [vmem:[#allocation2 + $0x70] sm:$0xff] %vm469, %v1492
        %1509 = vst.msk [vmem:[#allocation2 + $0x80] sm:$0xff] %vm469, %v1493
        %1510 = vst.msk [vmem:[#allocation2 + $0x90] sm:$0xff] %vm469, %v1494
        %1511 = vst.msk [vmem:[#allocation2 + $0xa0] sm:$0xff] %vm469, %v1495
        %1512 = vst.msk [vmem:[#allocation2 + $0xb0] sm:$0xff] %vm469, %v1496
        %1513 = vst.msk [vmem:[#allocation2 + $0xc0] sm:$0xff] %vm469, %v1497
        %1514 = vst.msk [vmem:[#allocation2 + $0xd0] sm:$0xff] %vm469, %v1498
        %1515 = vst.msk [vmem:[#allocation2 + $0xe0] sm:$0xff] %vm469, %v1499
        %1516 = vst.msk [vmem:[#allocation2 + $0xf0] sm:$0xff] %vm469, %v1500
        %v1517 = vsel %vm1228, %v1160, 0.0
        %v1518 = vsel %vm1229, %v1161, 0.0
        %v1519 = vsel %vm1230, %v1130, 0.0
        %v1520 = vsel %vm1231, %v1131, 0.0
        %v1521 = vsel %vm1232, %v1132, 0.0
        %v1522 = vsel %vm1233, %v1133, 0.0
        %v1523 = vsel %vm1234, %v1134, 0.0
        %v1524 = vsel %vm1235, %v1135, 0.0
        %v1525 = vsel %vm1236, %v1136, 0.0
        %v1526 = vsel %vm1237, %v1137, 0.0
        %v1527 = vsel %vm1238, %v1138, 0.0
        %v1528 = vsel %vm1239, %v1139, 0.0
        %v1529 = vsel %vm1240, %v1140, 0.0
        %v1530 = vsel %vm1241, %v1141, 0.0
        %v1531 = vsel %vm1242, %v1142, 0.0
        %v1532 = vsel %vm1243, %v1143, 0.0
        %v1533 = vsel %vm1244, %v1144, 0.0
        %v1534 = vsel %vm1245, %v1145, 0.0
        %v1535 = vsel %vm1246, %v1146, 0.0
        %v1536 = vsel %vm1247, %v1147, 0.0
        %v1537 = vsel %vm1248, %v1148, 0.0
        %v1538 = vsel %vm1249, %v1149, 0.0
        %v1539 = vsel %vm1250, %v1150, 0.0
        %v1540 = vsel %vm1251, %v1151, 0.0
        %v1541 = vsel %vm1252, %v1152, 0.0
        %v1542 = vsel %vm1253, %v1153, 0.0
        %v1543 = vsel %vm1254, %v1154, 0.0
        %v1544 = vsel %vm1255, %v1155, 0.0
        %v1545 = vsel %vm1256, %v1156, 0.0
        %v1546 = vsel %vm1257, %v1157, 0.0
        %v1547 = vsel %vm1258, %v1158, 0.0
        %v1548 = vsel %vm1259, %v1159, 0.0
        %v1549 = vpack.c.bf16 %v1518, %v1517
        %v1550 = vpack.c.bf16 %v1520, %v1519
        %v1551 = vpack.c.bf16 %v1522, %v1521
        %v1552 = vpack.c.bf16 %v1524, %v1523
        %v1553 = vpack.c.bf16 %v1526, %v1525
        %v1554 = vpack.c.bf16 %v1528, %v1527
        %v1555 = vpack.c.bf16 %v1530, %v1529
        %v1556 = vpack.c.bf16 %v1532, %v1531
        %v1557 = vpack.c.bf16 %v1534, %v1533
        %v1558 = vpack.c.bf16 %v1536, %v1535
        %v1559 = vpack.c.bf16 %v1538, %v1537
        %v1560 = vpack.c.bf16 %v1540, %v1539
        %v1561 = vpack.c.bf16 %v1542, %v1541
        %v1562 = vpack.c.bf16 %v1544, %v1543
        %v1563 = vpack.c.bf16 %v1546, %v1545
        %v1564 = vpack.c.bf16 %v1548, %v1547
        %1581 = vrot.lane.b32.xlu0 %v1549, 64
        %v1582 = vpop.permute.xlu0 %1581
        %1583 = vrot.lane.b32.xlu0 %v1550, 64
        %v1584 = vpop.permute.xlu0 %1583
        %1585 = vrot.lane.b32.xlu0 %v1551, 64
        %v1586 = vpop.permute.xlu0 %1585
        %1587 = vrot.lane.b32.xlu0 %v1552, 64
        %v1588 = vpop.permute.xlu0 %1587
        %1589 = vrot.lane.b32.xlu0 %v1553, 64
        %v1590 = vpop.permute.xlu0 %1589
        %1591 = vrot.lane.b32.xlu0 %v1554, 64
        %v1592 = vpop.permute.xlu0 %1591
        %1593 = vrot.lane.b32.xlu0 %v1555, 64
        %v1594 = vpop.permute.xlu0 %1593
        %1595 = vrot.lane.b32.xlu0 %v1556, 64
        %v1596 = vpop.permute.xlu0 %1595
        %1597 = vrot.lane.b32.xlu0 %v1557, 64
        %v1598 = vpop.permute.xlu0 %1597
        %1599 = vrot.lane.b32.xlu0 %v1558, 64
        %v1600 = vpop.permute.xlu0 %1599
        %1601 = vrot.lane.b32.xlu0 %v1559, 64
        %v1602 = vpop.permute.xlu0 %1601
        %1603 = vrot.lane.b32.xlu0 %v1560, 64
        %v1604 = vpop.permute.xlu0 %1603
        %1605 = vrot.lane.b32.xlu0 %v1561, 64
        %v1606 = vpop.permute.xlu0 %1605
        %1607 = vrot.lane.b32.xlu0 %v1562, 64
        %v1608 = vpop.permute.xlu0 %1607
        %1609 = vrot.lane.b32.xlu0 %v1563, 64
        %v1610 = vpop.permute.xlu0 %1609
        %1611 = vrot.lane.b32.xlu0 %v1564, 64
        %v1612 = vpop.permute.xlu0 %1611
        %vm1629 = vcmask 1048064
        %1630 = vst.msk [vmem:[#allocation2] sm:$0xff] %vm1629, %v1582
        %1631 = vst.msk [vmem:[#allocation2 + $0x10] sm:$0xff] %vm1629, %v1584
        %1632 = vst.msk [vmem:[#allocation2 + $0x20] sm:$0xff] %vm1629, %v1586
        %1633 = vst.msk [vmem:[#allocation2 + $0x30] sm:$0xff] %vm1629, %v1588
        %1634 = vst.msk [vmem:[#allocation2 + $0x40] sm:$0xff] %vm1629, %v1590
        %1635 = vst.msk [vmem:[#allocation2 + $0x50] sm:$0xff] %vm1629, %v1592
        %1636 = vst.msk [vmem:[#allocation2 + $0x60] sm:$0xff] %vm1629, %v1594
        %1637 = vst.msk [vmem:[#allocation2 + $0x70] sm:$0xff] %vm1629, %v1596
        %1638 = vst.msk [vmem:[#allocation2 + $0x80] sm:$0xff] %vm1629, %v1598
        %1639 = vst.msk [vmem:[#allocation2 + $0x90] sm:$0xff] %vm1629, %v1600
        %1640 = vst.msk [vmem:[#allocation2 + $0xa0] sm:$0xff] %vm1629, %v1602
        %1641 = vst.msk [vmem:[#allocation2 + $0xb0] sm:$0xff] %vm1629, %v1604
        %1642 = vst.msk [vmem:[#allocation2 + $0xc0] sm:$0xff] %vm1629, %v1606
        %1643 = vst.msk [vmem:[#allocation2 + $0xd0] sm:$0xff] %vm1629, %v1608
        %1644 = vst.msk [vmem:[#allocation2 + $0xe0] sm:$0xff] %vm1629, %v1610
        %1645 = vst.msk [vmem:[#allocation2 + $0xf0] sm:$0xff] %vm1629, %v1612
        %v1646 = vrot.slane %v1130, 1
        %v1647 = vrot.slane %v1131, 1
        %v1648 = vrot.slane %v1132, 1
        %v1649 = vrot.slane %v1133, 1
        %v1650 = vrot.slane %v1134, 1
        %v1651 = vrot.slane %v1135, 1
        %v1652 = vrot.slane %v1136, 1
        %v1653 = vrot.slane %v1137, 1
        %v1654 = vrot.slane %v1138, 1
        %v1655 = vrot.slane %v1139, 1
        %v1656 = vrot.slane %v1140, 1
        %v1657 = vrot.slane %v1141, 1
        %v1658 = vrot.slane %v1142, 1
        %v1659 = vrot.slane %v1143, 1
        %v1660 = vrot.slane %v1144, 1
        %v1661 = vrot.slane %v1145, 1
        %v1662 = vrot.slane %v1146, 1
        %v1663 = vrot.slane %v1147, 1
        %v1664 = vrot.slane %v1148, 1
        %v1665 = vrot.slane %v1149, 1
        %v1666 = vrot.slane %v1150, 1
        %v1667 = vrot.slane %v1151, 1
        %v1668 = vrot.slane %v1152, 1
        %v1669 = vrot.slane %v1153, 1
        %v1670 = vrot.slane %v1154, 1
        %v1671 = vrot.slane %v1155, 1
        %v1672 = vrot.slane %v1156, 1
        %v1673 = vrot.slane %v1157, 1
        %v1674 = vrot.slane %v1158, 1
        %v1675 = vrot.slane %v1159, 1
        %v1676 = vrot.slane %v1160, 1
        %v1677 = vrot.slane %v1161, 1
        %vm1678 = vcmp.lt.s32.totalorder %v1164, 7
        %v1679 = vsel %vm1678, %v1676, %v1677
        %v1680 = vsel %vm1678, %v1675, %v1676
        %v1681 = vsel %vm1678, %v1674, %v1675
        %v1682 = vsel %vm1678, %v1673, %v1674
        %v1683 = vsel %vm1678, %v1672, %v1673
        %v1684 = vsel %vm1678, %v1671, %v1672
        %v1685 = vsel %vm1678, %v1670, %v1671
        %v1686 = vsel %vm1678, %v1669, %v1670
        %v1687 = vsel %vm1678, %v1668, %v1669
        %v1688 = vsel %vm1678, %v1667, %v1668
        %v1689 = vsel %vm1678, %v1666, %v1667
        %v1690 = vsel %vm1678, %v1665, %v1666
        %v1691 = vsel %vm1678, %v1664, %v1665
        %v1692 = vsel %vm1678, %v1663, %v1664
        %v1693 = vsel %vm1678, %v1662, %v1663
        %v1694 = vsel %vm1678, %v1661, %v1662
        %v1695 = vsel %vm1678, %v1660, %v1661
        %v1696 = vsel %vm1678, %v1659, %v1660
        %v1697 = vsel %vm1678, %v1658, %v1659
        %v1698 = vsel %vm1678, %v1657, %v1658
        %v1699 = vsel %vm1678, %v1656, %v1657
        %v1700 = vsel %vm1678, %v1655, %v1656
        %v1701 = vsel %vm1678, %v1654, %v1655
        %v1702 = vsel %vm1678, %v1653, %v1654
        %v1703 = vsel %vm1678, %v1652, %v1653
        %v1704 = vsel %vm1678, %v1651, %v1652
        %v1705 = vsel %vm1678, %v1650, %v1651
        %v1706 = vsel %vm1678, %v1649, %v1650
        %v1707 = vsel %vm1678, %v1648, %v1649
        %v1708 = vsel %vm1678, %v1647, %v1648
        %v1709 = vsel %vm1678, %v1646, %v1647
        %v1710 = vsel %vm1678, %v1677, %v1646
        %vm1711 = vmand %vm1228, %vm1324
        %vm1712 = vmand %vm1229, %vm1325
        %vm1713 = vmand %vm1230, %vm1326
        %vm1714 = vmand %vm1231, %vm1327
        %vm1715 = vmand %vm1232, %vm1328
        %vm1716 = vmand %vm1233, %vm1329
        %vm1717 = vmand %vm1234, %vm1330
        %vm1718 = vmand %vm1235, %vm1331
        %vm1719 = vmand %vm1236, %vm1332
        %vm1720 = vmand %vm1237, %vm1333
        %vm1721 = vmand %vm1238, %vm1334
        %vm1722 = vmand %vm1239, %vm1335
        %vm1723 = vmand %vm1240, %vm1336
        %vm1724 = vmand %vm1241, %vm1337
        %vm1725 = vmand %vm1242, %vm1338
        %vm1726 = vmand %vm1243, %vm1339
        %vm1727 = vmand %vm1244, %vm1340
        %vm1728 = vmand %vm1245, %vm1341
        %vm1729 = vmand %vm1246, %vm1342
        %vm1730 = vmand %vm1247, %vm1343
        %vm1731 = vmand %vm1248, %vm1344
        %vm1732 = vmand %vm1249, %vm1345
        %vm1733 = vmand %vm1250, %vm1346
        %vm1734 = vmand %vm1251, %vm1347
        %vm1735 = vmand %vm1252, %vm1348
        %vm1736 = vmand %vm1253, %vm1349
        %vm1737 = vmand %vm1254, %vm1350
        %vm1738 = vmand %vm1255, %vm1351
        %vm1739 = vmand %vm1256, %vm1352
        %vm1740 = vmand %vm1257, %vm1353
        %vm1741 = vmand %vm1258, %vm1354
        %vm1742 = vmand %vm1259, %vm1355
        %v1743 = vsel %vm1711, %v1679, 0.0
        %v1744 = vsel %vm1712, %v1710, 0.0
        %v1745 = vsel %vm1713, %v1709, 0.0
        %v1746 = vsel %vm1714, %v1708, 0.0
        %v1747 = vsel %vm1715, %v1707, 0.0
        %v1748 = vsel %vm1716, %v1706, 0.0
        %v1749 = vsel %vm1717, %v1705, 0.0
        %v1750 = vsel %vm1718, %v1704, 0.0
        %v1751 = vsel %vm1719, %v1703, 0.0
        %v1752 = vsel %vm1720, %v1702, 0.0
        %v1753 = vsel %vm1721, %v1701, 0.0
        %v1754 = vsel %vm1722, %v1700, 0.0
        %v1755 = vsel %vm1723, %v1699, 0.0
        %v1756 = vsel %vm1724, %v1698, 0.0
        %v1757 = vsel %vm1725, %v1697, 0.0
        %v1758 = vsel %vm1726, %v1696, 0.0
        %v1759 = vsel %vm1727, %v1695, 0.0
        %v1760 = vsel %vm1728, %v1694, 0.0
        %v1761 = vsel %vm1729, %v1693, 0.0
        %v1762 = vsel %vm1730, %v1692, 0.0
        %v1763 = vsel %vm1731, %v1691, 0.0
        %v1764 = vsel %vm1732, %v1690, 0.0
        %v1765 = vsel %vm1733, %v1689, 0.0
        %v1766 = vsel %vm1734, %v1688, 0.0
        %v1767 = vsel %vm1735, %v1687, 0.0
        %v1768 = vsel %vm1736, %v1686, 0.0
        %v1769 = vsel %vm1737, %v1685, 0.0
        %v1770 = vsel %vm1738, %v1684, 0.0
        %v1771 = vsel %vm1739, %v1683, 0.0
        %v1772 = vsel %vm1740, %v1682, 0.0
        %v1773 = vsel %vm1741, %v1681, 0.0
        %v1774 = vsel %vm1742, %v1680, 0.0
        %v1775 = vpack.c.bf16 %v1744, %v1743
        %v1776 = vpack.c.bf16 %v1746, %v1745
        %v1777 = vpack.c.bf16 %v1748, %v1747
        %v1778 = vpack.c.bf16 %v1750, %v1749
        %v1779 = vpack.c.bf16 %v1752, %v1751
        %v1780 = vpack.c.bf16 %v1754, %v1753
        %v1781 = vpack.c.bf16 %v1756, %v1755
        %v1782 = vpack.c.bf16 %v1758, %v1757
        %v1783 = vpack.c.bf16 %v1760, %v1759
        %v1784 = vpack.c.bf16 %v1762, %v1761
        %v1785 = vpack.c.bf16 %v1764, %v1763
        %v1786 = vpack.c.bf16 %v1766, %v1765
        %v1787 = vpack.c.bf16 %v1768, %v1767
        %v1788 = vpack.c.bf16 %v1770, %v1769
        %v1789 = vpack.c.bf16 %v1772, %v1771
        %v1790 = vpack.c.bf16 %v1774, %v1773
        %1791 = vst.msk [vmem:[#allocation2 + $0x8] sm:$0xff] %vm469, %v1775
        %1792 = vst.msk [vmem:[#allocation2 + $0x18] sm:$0xff] %vm469, %v1776
        %1793 = vst.msk [vmem:[#allocation2 + $0x28] sm:$0xff] %vm469, %v1777
        %1794 = vst.msk [vmem:[#allocation2 + $0x38] sm:$0xff] %vm469, %v1778
        %1795 = vst.msk [vmem:[#allocation2 + $0x48] sm:$0xff] %vm469, %v1779
        %1796 = vst.msk [vmem:[#allocation2 + $0x58] sm:$0xff] %vm469, %v1780
        %1797 = vst.msk [vmem:[#allocation2 + $0x68] sm:$0xff] %vm469, %v1781
        %1798 = vst.msk [vmem:[#allocation2 + $0x78] sm:$0xff] %vm469, %v1782
        %1799 = vst.msk [vmem:[#allocation2 + $0x88] sm:$0xff] %vm469, %v1783
        %1800 = vst.msk [vmem:[#allocation2 + $0x98] sm:$0xff] %vm469, %v1784
        %1801 = vst.msk [vmem:[#allocation2 + $0xa8] sm:$0xff] %vm469, %v1785
        %1802 = vst.msk [vmem:[#allocation2 + $0xb8] sm:$0xff] %vm469, %v1786
        %1803 = vst.msk [vmem:[#allocation2 + $0xc8] sm:$0xff] %vm469, %v1787
        %1804 = vst.msk [vmem:[#allocation2 + $0xd8] sm:$0xff] %vm469, %v1788
        %1805 = vst.msk [vmem:[#allocation2 + $0xe8] sm:$0xff] %vm469, %v1789
        %1806 = vst.msk [vmem:[#allocation2 + $0xf8] sm:$0xff] %vm469, %v1790
        %v1807 = vsel %vm1292, %v1420, 0.0
        %v1808 = vsel %vm1293, %v1419, 0.0
        %v1809 = vsel %vm1294, %v1418, 0.0
        %v1810 = vsel %vm1295, %v1417, 0.0
        %v1811 = vsel %vm1296, %v1416, 0.0
        %v1812 = vsel %vm1297, %v1415, 0.0
        %v1813 = vsel %vm1298, %v1414, 0.0
        %v1814 = vsel %vm1299, %v1413, 0.0
        %v1815 = vsel %vm1300, %v1412, 0.0
        %v1816 = vsel %vm1301, %v1411, 0.0
        %v1817 = vsel %vm1302, %v1410, 0.0
        %v1818 = vsel %vm1303, %v1409, 0.0
        %v1819 = vsel %vm1304, %v1408, 0.0
        %v1820 = vsel %vm1305, %v1407, 0.0
        %v1821 = vsel %vm1306, %v1406, 0.0
        %v1822 = vsel %vm1307, %v1405, 0.0
        %v1823 = vsel %vm1308, %v1404, 0.0
        %v1824 = vsel %vm1309, %v1403, 0.0
        %v1825 = vsel %vm1310, %v1402, 0.0
        %v1826 = vsel %vm1311, %v1401, 0.0
        %v1827 = vsel %vm1312, %v1400, 0.0
        %v1828 = vsel %vm1313, %v1399, 0.0
        %v1829 = vsel %vm1314, %v1398, 0.0
        %v1830 = vsel %vm1315, %v1397, 0.0
        %v1831 = vsel %vm1316, %v1396, 0.0
        %v1832 = vsel %vm1317, %v1395, 0.0
        %v1833 = vsel %vm1318, %v1394, 0.0
        %v1834 = vsel %vm1319, %v1393, 0.0
        %v1835 = vsel %vm1320, %v1392, 0.0
        %v1836 = vsel %vm1321, %v1391, 0.0
        %v1837 = vsel %vm1322, %v1390, 0.0
        %v1838 = vsel %vm1323, %v1389, 0.0
        %v1839 = vpack.c.bf16 %v1808, %v1807
        %v1840 = vpack.c.bf16 %v1810, %v1809
        %v1841 = vpack.c.bf16 %v1812, %v1811
        %v1842 = vpack.c.bf16 %v1814, %v1813
        %v1843 = vpack.c.bf16 %v1816, %v1815
        %v1844 = vpack.c.bf16 %v1818, %v1817
        %v1845 = vpack.c.bf16 %v1820, %v1819
        %v1846 = vpack.c.bf16 %v1822, %v1821
        %v1847 = vpack.c.bf16 %v1824, %v1823
        %v1848 = vpack.c.bf16 %v1826, %v1825
        %v1849 = vpack.c.bf16 %v1828, %v1827
        %v1850 = vpack.c.bf16 %v1830, %v1829
        %v1851 = vpack.c.bf16 %v1832, %v1831
        %v1852 = vpack.c.bf16 %v1834, %v1833
        %v1853 = vpack.c.bf16 %v1836, %v1835
        %v1854 = vpack.c.bf16 %v1838, %v1837
        %1871 = vrot.lane.b32.xlu0 %v1839, 64
        %v1872 = vpop.permute.xlu0 %1871
        %1873 = vrot.lane.b32.xlu0 %v1840, 64
        %v1874 = vpop.permute.xlu0 %1873
        %1875 = vrot.lane.b32.xlu0 %v1841, 64
        %v1876 = vpop.permute.xlu0 %1875
        %1877 = vrot.lane.b32.xlu0 %v1842, 64
        %v1878 = vpop.permute.xlu0 %1877
        %1879 = vrot.lane.b32.xlu0 %v1843, 64
        %v1880 = vpop.permute.xlu0 %1879
        %1881 = vrot.lane.b32.xlu0 %v1844, 64
        %v1882 = vpop.permute.xlu0 %1881
        %1883 = vrot.lane.b32.xlu0 %v1845, 64
        %v1884 = vpop.permute.xlu0 %1883
        %1885 = vrot.lane.b32.xlu0 %v1846, 64
        %v1886 = vpop.permute.xlu0 %1885
        %1887 = vrot.lane.b32.xlu0 %v1847, 64
        %v1888 = vpop.permute.xlu0 %1887
        %1889 = vrot.lane.b32.xlu0 %v1848, 64
        %v1890 = vpop.permute.xlu0 %1889
        %1891 = vrot.lane.b32.xlu0 %v1849, 64
        %v1892 = vpop.permute.xlu0 %1891
        %1893 = vrot.lane.b32.xlu0 %v1850, 64
        %v1894 = vpop.permute.xlu0 %1893
        %1895 = vrot.lane.b32.xlu0 %v1851, 64
        %v1896 = vpop.permute.xlu0 %1895
        %1897 = vrot.lane.b32.xlu0 %v1852, 64
        %v1898 = vpop.permute.xlu0 %1897
        %1899 = vrot.lane.b32.xlu0 %v1853, 64
        %v1900 = vpop.permute.xlu0 %1899
        %1901 = vrot.lane.b32.xlu0 %v1854, 64
        %v1902 = vpop.permute.xlu0 %1901
        %1919 = vst.msk [vmem:[#allocation2 + $0x8] sm:$0xff] %vm1629, %v1872
        %1920 = vst.msk [vmem:[#allocation2 + $0x18] sm:$0xff] %vm1629, %v1874
        %1921 = vst.msk [vmem:[#allocation2 + $0x28] sm:$0xff] %vm1629, %v1876
        %1922 = vst.msk [vmem:[#allocation2 + $0x38] sm:$0xff] %vm1629, %v1878
        %1923 = vst.msk [vmem:[#allocation2 + $0x48] sm:$0xff] %vm1629, %v1880
        %1924 = vst.msk [vmem:[#allocation2 + $0x58] sm:$0xff] %vm1629, %v1882
        %1925 = vst.msk [vmem:[#allocation2 + $0x68] sm:$0xff] %vm1629, %v1884
        %1926 = vst.msk [vmem:[#allocation2 + $0x78] sm:$0xff] %vm1629, %v1886
        %1927 = vst.msk [vmem:[#allocation2 + $0x88] sm:$0xff] %vm1629, %v1888
        %1928 = vst.msk [vmem:[#allocation2 + $0x98] sm:$0xff] %vm1629, %v1890
        %1929 = vst.msk [vmem:[#allocation2 + $0xa8] sm:$0xff] %vm1629, %v1892
        %1930 = vst.msk [vmem:[#allocation2 + $0xb8] sm:$0xff] %vm1629, %v1894
        %1931 = vst.msk [vmem:[#allocation2 + $0xc8] sm:$0xff] %vm1629, %v1896
        %1932 = vst.msk [vmem:[#allocation2 + $0xd8] sm:$0xff] %vm1629, %v1898
        %1933 = vst.msk [vmem:[#allocation2 + $0xe8] sm:$0xff] %vm1629, %v1900
        %1934 = vst.msk [vmem:[#allocation2 + $0xf8] sm:$0xff] %vm1629, %v1902
        %v1935 = vld [vmem:[#allocation2] sm:$0xff]
        %v1936 = vld [vmem:[#allocation2 + $0x8] sm:$0xff]
        %v1937 = vld [vmem:[#allocation2 + $0x10] sm:$0xff]
        %v1938 = vld [vmem:[#allocation2 + $0x18] sm:$0xff]
        %v1939 = vld [vmem:[#allocation2 + $0x20] sm:$0xff]
        %v1940 = vld [vmem:[#allocation2 + $0x28] sm:$0xff]
        %v1941 = vld [vmem:[#allocation2 + $0x30] sm:$0xff]
        %v1942 = vld [vmem:[#allocation2 + $0x38] sm:$0xff]
        %v1943 = vld [vmem:[#allocation2 + $0x40] sm:$0xff]
        %v1944 = vld [vmem:[#allocation2 + $0x48] sm:$0xff]
        %v1945 = vld [vmem:[#allocation2 + $0x50] sm:$0xff]
        %v1946 = vld [vmem:[#allocation2 + $0x58] sm:$0xff]
        %v1947 = vld [vmem:[#allocation2 + $0x60] sm:$0xff]
        %v1948 = vld [vmem:[#allocation2 + $0x68] sm:$0xff]
        %v1949 = vld [vmem:[#allocation2 + $0x70] sm:$0xff]
        %v1950 = vld [vmem:[#allocation2 + $0x78] sm:$0xff]
        %v1951 = vld [vmem:[#allocation2 + $0x80] sm:$0xff]
        %v1952 = vld [vmem:[#allocation2 + $0x88] sm:$0xff]
        %v1953 = vld [vmem:[#allocation2 + $0x90] sm:$0xff]
        %v1954 = vld [vmem:[#allocation2 + $0x98] sm:$0xff]
        %v1955 = vld [vmem:[#allocation2 + $0xa0] sm:$0xff]
        %v1956 = vld [vmem:[#allocation2 + $0xa8] sm:$0xff]
        %v1957 = vld [vmem:[#allocation2 + $0xb0] sm:$0xff]
        %v1958 = vld [vmem:[#allocation2 + $0xb8] sm:$0xff]
        %v1959 = vld [vmem:[#allocation2 + $0xc0] sm:$0xff]
        %v1960 = vld [vmem:[#allocation2 + $0xc8] sm:$0xff]
        %v1961 = vld [vmem:[#allocation2 + $0xd0] sm:$0xff]
        %v1962 = vld [vmem:[#allocation2 + $0xd8] sm:$0xff]
        %v1963 = vld [vmem:[#allocation2 + $0xe0] sm:$0xff]
        %v1964 = vld [vmem:[#allocation2 + $0xe8] sm:$0xff]
        %v1965 = vld [vmem:[#allocation2 + $0xf0] sm:$0xff]
        %v1966 = vld [vmem:[#allocation2 + $0xf8] sm:$0xff]
        %v1967 = vld [vmem:[%s5] sm:$0xf]
        %v1968 = vld [vmem:[%s5 + $0x4] sm:$0xf]
        %v1969 = vld [vmem:[%s5 + $0x8] sm:$0xf]
        %v1970 = vld [vmem:[%s5 + $0xc] sm:$0xf]
        %v1971 = vld [vmem:[%s5 + $0x10] sm:$0xf]
        %v1972 = vld [vmem:[%s5 + $0x14] sm:$0xf]
        %v1973 = vld [vmem:[%s5 + $0x18] sm:$0xf]
        %v1974 = vld [vmem:[%s5 + $0x1c] sm:$0xf]
        %v1975 = vld [vmem:[%s5 + $0x20] sm:$0xf]
        %v1976 = vld [vmem:[%s5 + $0x24] sm:$0xf]
        %v1977 = vld [vmem:[%s5 + $0x28] sm:$0xf]
        %v1978 = vld [vmem:[%s5 + $0x2c] sm:$0xf]
        %v1979 = vld [vmem:[%s5 + $0x30] sm:$0xf]
        %v1980 = vld [vmem:[%s5 + $0x34] sm:$0xf]
        %v1981 = vld [vmem:[%s5 + $0x38] sm:$0xf]
        %v1982 = vld [vmem:[%s5 + $0x3c] sm:$0xf]
        %v1983 = vld [vmem:[%s5 + $0x40] sm:$0xf]
        %v1984 = vld [vmem:[%s5 + $0x44] sm:$0xf]
        %v1985 = vld [vmem:[%s5 + $0x48] sm:$0xf]
        %v1986 = vld [vmem:[%s5 + $0x4c] sm:$0xf]
        %v1987 = vld [vmem:[%s5 + $0x50] sm:$0xf]
        %v1988 = vld [vmem:[%s5 + $0x54] sm:$0xf]
        %v1989 = vld [vmem:[%s5 + $0x58] sm:$0xf]
        %v1990 = vld [vmem:[%s5 + $0x5c] sm:$0xf]
        %v1991 = vld [vmem:[%s5 + $0x60] sm:$0xf]
        %v1992 = vld [vmem:[%s5 + $0x64] sm:$0xf]
        %v1993 = vld [vmem:[%s5 + $0x68] sm:$0xf]
        %v1994 = vld [vmem:[%s5 + $0x6c] sm:$0xf]
        %v1995 = vld [vmem:[%s5 + $0x70] sm:$0xf]
        %v1996 = vld [vmem:[%s5 + $0x74] sm:$0xf]
        %v1997 = vld [vmem:[%s5 + $0x78] sm:$0xf]
        %v1998 = vld [vmem:[%s5 + $0x7c] sm:$0xf]
        %v1999 = vpack.c.bf16 %v1131, %v1130
        %v2000 = vpack.c.bf16 %v1133, %v1132
        %v2001 = vpack.c.bf16 %v1135, %v1134
        %v2002 = vpack.c.bf16 %v1137, %v1136
        %v2003 = vpack.c.bf16 %v1139, %v1138
        %v2004 = vpack.c.bf16 %v1141, %v1140
        %v2005 = vpack.c.bf16 %v1143, %v1142
        %v2006 = vpack.c.bf16 %v1145, %v1144
        %v2007 = vpack.c.bf16 %v1147, %v1146
        %v2008 = vpack.c.bf16 %v1149, %v1148
        %v2009 = vpack.c.bf16 %v1151, %v1150
        %v2010 = vpack.c.bf16 %v1153, %v1152
        %v2011 = vpack.c.bf16 %v1155, %v1154
        %v2012 = vpack.c.bf16 %v1157, %v1156
        %v2013 = vpack.c.bf16 %v1159, %v1158
        %v2014 = vpack.c.bf16 %v1161, %v1160
        %2015 = vst.msk [vmem:[#allocation2] sm:$0xff] %vm469, %v1999
        %2016 = vst.msk [vmem:[#allocation2 + $0x10] sm:$0xff] %vm469, %v2000
        %2017 = vst.msk [vmem:[#allocation2 + $0x20] sm:$0xff] %vm469, %v2001
        %2018 = vst.msk [vmem:[#allocation2 + $0x30] sm:$0xff] %vm469, %v2002
        %2019 = vst.msk [vmem:[#allocation2 + $0x40] sm:$0xff] %vm469, %v2003
        %2020 = vst.msk [vmem:[#allocation2 + $0x50] sm:$0xff] %vm469, %v2004
        %2021 = vst.msk [vmem:[#allocation2 + $0x60] sm:$0xff] %vm469, %v2005
        %2022 = vst.msk [vmem:[#allocation2 + $0x70] sm:$0xff] %vm469, %v2006
        %2023 = vst.msk [vmem:[#allocation2 + $0x80] sm:$0xff] %vm469, %v2007
        %2024 = vst.msk [vmem:[#allocation2 + $0x90] sm:$0xff] %vm469, %v2008
        %2025 = vst.msk [vmem:[#allocation2 + $0xa0] sm:$0xff] %vm469, %v2009
        %2026 = vst.msk [vmem:[#allocation2 + $0xb0] sm:$0xff] %vm469, %v2010
        %2027 = vst.msk [vmem:[#allocation2 + $0xc0] sm:$0xff] %vm469, %v2011
        %2028 = vst.msk [vmem:[#allocation2 + $0xd0] sm:$0xff] %vm469, %v2012
        %2029 = vst.msk [vmem:[#allocation2 + $0xe0] sm:$0xff] %vm469, %v2013
        %2030 = vst.msk [vmem:[#allocation2 + $0xf0] sm:$0xff] %vm469, %v2014
        %v2031 = vsel %vm1324, %v1709, 0.0
        %v2032 = vsel %vm1325, %v1708, 0.0
        %v2033 = vsel %vm1326, %v1707, 0.0
        %v2034 = vsel %vm1327, %v1706, 0.0
        %v2035 = vsel %vm1328, %v1705, 0.0
        %v2036 = vsel %vm1329, %v1704, 0.0
        %v2037 = vsel %vm1330, %v1703, 0.0
        %v2038 = vsel %vm1331, %v1702, 0.0
        %v2039 = vsel %vm1332, %v1701, 0.0
        %v2040 = vsel %vm1333, %v1700, 0.0
        %v2041 = vsel %vm1334, %v1699, 0.0
        %v2042 = vsel %vm1335, %v1698, 0.0
        %v2043 = vsel %vm1336, %v1697, 0.0
        %v2044 = vsel %vm1337, %v1696, 0.0
        %v2045 = vsel %vm1338, %v1695, 0.0
        %v2046 = vsel %vm1339, %v1694, 0.0
        %v2047 = vsel %vm1340, %v1693, 0.0
        %v2048 = vsel %vm1341, %v1692, 0.0
        %v2049 = vsel %vm1342, %v1691, 0.0
        %v2050 = vsel %vm1343, %v1690, 0.0
        %v2051 = vsel %vm1344, %v1689, 0.0
        %v2052 = vsel %vm1345, %v1688, 0.0
        %v2053 = vsel %vm1346, %v1687, 0.0
        %v2054 = vsel %vm1347, %v1686, 0.0
        %v2055 = vsel %vm1348, %v1685, 0.0
        %v2056 = vsel %vm1349, %v1684, 0.0
        %v2057 = vsel %vm1350, %v1683, 0.0
        %v2058 = vsel %vm1351, %v1682, 0.0
        %v2059 = vsel %vm1352, %v1681, 0.0
        %v2060 = vsel %vm1353, %v1680, 0.0
        %v2061 = vsel %vm1354, %v1679, 0.0
        %v2062 = vsel %vm1355, %v1710, 0.0
        %v2063 = vpack.c.bf16 %v2032, %v2031
        %v2064 = vpack.c.bf16 %v2034, %v2033
        %v2065 = vpack.c.bf16 %v2036, %v2035
        %v2066 = vpack.c.bf16 %v2038, %v2037
        %v2067 = vpack.c.bf16 %v2040, %v2039
        %v2068 = vpack.c.bf16 %v2042, %v2041
        %v2069 = vpack.c.bf16 %v2044, %v2043
        %v2070 = vpack.c.bf16 %v2046, %v2045
        %v2071 = vpack.c.bf16 %v2048, %v2047
        %v2072 = vpack.c.bf16 %v2050, %v2049
        %v2073 = vpack.c.bf16 %v2052, %v2051
        %v2074 = vpack.c.bf16 %v2054, %v2053
        %v2075 = vpack.c.bf16 %v2056, %v2055
        %v2076 = vpack.c.bf16 %v2058, %v2057
        %v2077 = vpack.c.bf16 %v2060, %v2059
        %v2078 = vpack.c.bf16 %v2062, %v2061
        %2095 = vrot.lane.b32.xlu0 %v2063, 64
        %v2096 = vpop.permute.xlu0 %2095
        %2097 = vrot.lane.b32.xlu0 %v2064, 64
        %v2098 = vpop.permute.xlu0 %2097
        %2099 = vrot.lane.b32.xlu0 %v2065, 64
        %v2100 = vpop.permute.xlu0 %2099
        %2101 = vrot.lane.b32.xlu0 %v2066, 64
        %v2102 = vpop.permute.xlu0 %2101
        %2103 = vrot.lane.b32.xlu0 %v2067, 64
        %v2104 = vpop.permute.xlu0 %2103
        %2105 = vrot.lane.b32.xlu0 %v2068, 64
        %v2106 = vpop.permute.xlu0 %2105
        %2107 = vrot.lane.b32.xlu0 %v2069, 64
        %v2108 = vpop.permute.xlu0 %2107
        %2109 = vrot.lane.b32.xlu0 %v2070, 64
        %v2110 = vpop.permute.xlu0 %2109
        %2111 = vrot.lane.b32.xlu0 %v2071, 64
        %v2112 = vpop.permute.xlu0 %2111
        %2113 = vrot.lane.b32.xlu0 %v2072, 64
        %v2114 = vpop.permute.xlu0 %2113
        %2115 = vrot.lane.b32.xlu0 %v2073, 64
        %v2116 = vpop.permute.xlu0 %2115
        %2117 = vrot.lane.b32.xlu0 %v2074, 64
        %v2118 = vpop.permute.xlu0 %2117
        %2119 = vrot.lane.b32.xlu0 %v2075, 64
        %v2120 = vpop.permute.xlu0 %2119
        %2121 = vrot.lane.b32.xlu0 %v2076, 64
        %v2122 = vpop.permute.xlu0 %2121
        %2123 = vrot.lane.b32.xlu0 %v2077, 64
        %v2124 = vpop.permute.xlu0 %2123
        %2125 = vrot.lane.b32.xlu0 %v2078, 64
        %v2126 = vpop.permute.xlu0 %2125
        %2143 = vst.msk [vmem:[#allocation2] sm:$0xff] %vm1629, %v2096
        %2144 = vst.msk [vmem:[#allocation2 + $0x10] sm:$0xff] %vm1629, %v2098
        %2145 = vst.msk [vmem:[#allocation2 + $0x20] sm:$0xff] %vm1629, %v2100
        %2146 = vst.msk [vmem:[#allocation2 + $0x30] sm:$0xff] %vm1629, %v2102
        %2147 = vst.msk [vmem:[#allocation2 + $0x40] sm:$0xff] %vm1629, %v2104
        %2148 = vst.msk [vmem:[#allocation2 + $0x50] sm:$0xff] %vm1629, %v2106
        %2149 = vst.msk [vmem:[#allocation2 + $0x60] sm:$0xff] %vm1629, %v2108
        %2150 = vst.msk [vmem:[#allocation2 + $0x70] sm:$0xff] %vm1629, %v2110
        %2151 = vst.msk [vmem:[#allocation2 + $0x80] sm:$0xff] %vm1629, %v2112
        %2152 = vst.msk [vmem:[#allocation2 + $0x90] sm:$0xff] %vm1629, %v2114
        %2153 = vst.msk [vmem:[#allocation2 + $0xa0] sm:$0xff] %vm1629, %v2116
        %2154 = vst.msk [vmem:[#allocation2 + $0xb0] sm:$0xff] %vm1629, %v2118
        %2155 = vst.msk [vmem:[#allocation2 + $0xc0] sm:$0xff] %vm1629, %v2120
        %2156 = vst.msk [vmem:[#allocation2 + $0xd0] sm:$0xff] %vm1629, %v2122
        %2157 = vst.msk [vmem:[#allocation2 + $0xe0] sm:$0xff] %vm1629, %v2124
        %2158 = vst.msk [vmem:[#allocation2 + $0xf0] sm:$0xff] %vm1629, %v2126
        %vm2159 = vmand %vm1260, %vm1292
        %vm2160 = vmand %vm1261, %vm1293
        %vm2161 = vmand %vm1262, %vm1294
        %vm2162 = vmand %vm1263, %vm1295
        %vm2163 = vmand %vm1264, %vm1296
        %vm2164 = vmand %vm1265, %vm1297
        %vm2165 = vmand %vm1266, %vm1298
        %vm2166 = vmand %vm1267, %vm1299
        %vm2167 = vmand %vm1268, %vm1300
        %vm2168 = vmand %vm1269, %vm1301
        %vm2169 = vmand %vm1270, %vm1302
        %vm2170 = vmand %vm1271, %vm1303
        %vm2171 = vmand %vm1272, %vm1304
        %vm2172 = vmand %vm1273, %vm1305
        %vm2173 = vmand %vm1274, %vm1306
        %vm2174 = vmand %vm1275, %vm1307
        %vm2175 = vmand %vm1276, %vm1308
        %vm2176 = vmand %vm1277, %vm1309
        %vm2177 = vmand %vm1278, %vm1310
        %vm2178 = vmand %vm1279, %vm1311
        %vm2179 = vmand %vm1280, %vm1312
        %vm2180 = vmand %vm1281, %vm1313
        %vm2181 = vmand %vm1282, %vm1314
        %vm2182 = vmand %vm1283, %vm1315
        %vm2183 = vmand %vm1284, %vm1316
        %vm2184 = vmand %vm1285, %vm1317
        %vm2185 = vmand %vm1286, %vm1318
        %vm2186 = vmand %vm1287, %vm1319
        %vm2187 = vmand %vm1288, %vm1320
        %vm2188 = vmand %vm1289, %vm1321
        %vm2189 = vmand %vm1290, %vm1322
        %vm2190 = vmand %vm1291, %vm1323
        %v2191 = vsel %vm2159, %v1418, 0.0
        %v2192 = vsel %vm2160, %v1417, 0.0
        %v2193 = vsel %vm2161, %v1416, 0.0
        %v2194 = vsel %vm2162, %v1415, 0.0
        %v2195 = vsel %vm2163, %v1414, 0.0
        %v2196 = vsel %vm2164, %v1413, 0.0
        %v2197 = vsel %vm2165, %v1412, 0.0
        %v2198 = vsel %vm2166, %v1411, 0.0
        %v2199 = vsel %vm2167, %v1410, 0.0
        %v2200 = vsel %vm2168, %v1409, 0.0
        %v2201 = vsel %vm2169, %v1408, 0.0
        %v2202 = vsel %vm2170, %v1407, 0.0
        %v2203 = vsel %vm2171, %v1406, 0.0
        %v2204 = vsel %vm2172, %v1405, 0.0
        %v2205 = vsel %vm2173, %v1404, 0.0
        %v2206 = vsel %vm2174, %v1403, 0.0
        %v2207 = vsel %vm2175, %v1402, 0.0
        %v2208 = vsel %vm2176, %v1401, 0.0
        %v2209 = vsel %vm2177, %v1400, 0.0
        %v2210 = vsel %vm2178, %v1399, 0.0
        %v2211 = vsel %vm2179, %v1398, 0.0
        %v2212 = vsel %vm2180, %v1397, 0.0
        %v2213 = vsel %vm2181, %v1396, 0.0
        %v2214 = vsel %vm2182, %v1395, 0.0
        %v2215 = vsel %vm2183, %v1394, 0.0
        %v2216 = vsel %vm2184, %v1393, 0.0
        %v2217 = vsel %vm2185, %v1392, 0.0
        %v2218 = vsel %vm2186, %v1391, 0.0
        %v2219 = vsel %vm2187, %v1390, 0.0
        %v2220 = vsel %vm2188, %v1389, 0.0
        %v2221 = vsel %vm2189, %v1420, 0.0
        %v2222 = vsel %vm2190, %v1419, 0.0
        %v2223 = vpack.c.bf16 %v2192, %v2191
        %v2224 = vpack.c.bf16 %v2194, %v2193
        %v2225 = vpack.c.bf16 %v2196, %v2195
        %v2226 = vpack.c.bf16 %v2198, %v2197
        %v2227 = vpack.c.bf16 %v2200, %v2199
        %v2228 = vpack.c.bf16 %v2202, %v2201
        %v2229 = vpack.c.bf16 %v2204, %v2203
        %v2230 = vpack.c.bf16 %v2206, %v2205
        %v2231 = vpack.c.bf16 %v2208, %v2207
        %v2232 = vpack.c.bf16 %v2210, %v2209
        %v2233 = vpack.c.bf16 %v2212, %v2211
        %v2234 = vpack.c.bf16 %v2214, %v2213
        %v2235 = vpack.c.bf16 %v2216, %v2215
        %v2236 = vpack.c.bf16 %v2218, %v2217
        %v2237 = vpack.c.bf16 %v2220, %v2219
        %v2238 = vpack.c.bf16 %v2222, %v2221
        %2239 = vst.msk [vmem:[#allocation2 + $0x8] sm:$0xff] %vm469, %v2223
        %2240 = vst.msk [vmem:[#allocation2 + $0x18] sm:$0xff] %vm469, %v2224
        %2241 = vst.msk [vmem:[#allocation2 + $0x28] sm:$0xff] %vm469, %v2225
        %2242 = vst.msk [vmem:[#allocation2 + $0x38] sm:$0xff] %vm469, %v2226
        %2243 = vst.msk [vmem:[#allocation2 + $0x48] sm:$0xff] %vm469, %v2227
        %2244 = vst.msk [vmem:[#allocation2 + $0x58] sm:$0xff] %vm469, %v2228
        %2245 = vst.msk [vmem:[#allocation2 + $0x68] sm:$0xff] %vm469, %v2229
        %2246 = vst.msk [vmem:[#allocation2 + $0x78] sm:$0xff] %vm469, %v2230
        %2247 = vst.msk [vmem:[#allocation2 + $0x88] sm:$0xff] %vm469, %v2231
        %2248 = vst.msk [vmem:[#allocation2 + $0x98] sm:$0xff] %vm469, %v2232
        %2249 = vst.msk [vmem:[#allocation2 + $0xa8] sm:$0xff] %vm469, %v2233
        %2250 = vst.msk [vmem:[#allocation2 + $0xb8] sm:$0xff] %vm469, %v2234
        %2251 = vst.msk [vmem:[#allocation2 + $0xc8] sm:$0xff] %vm469, %v2235
        %2252 = vst.msk [vmem:[#allocation2 + $0xd8] sm:$0xff] %vm469, %v2236
        %2253 = vst.msk [vmem:[#allocation2 + $0xe8] sm:$0xff] %vm469, %v2237
        %2254 = vst.msk [vmem:[#allocation2 + $0xf8] sm:$0xff] %vm469, %v2238
        %v2255 = vsel %vm1260, %v1132, 0.0
        %v2256 = vsel %vm1261, %v1133, 0.0
        %v2257 = vsel %vm1262, %v1134, 0.0
        %v2258 = vsel %vm1263, %v1135, 0.0
        %v2259 = vsel %vm1264, %v1136, 0.0
        %v2260 = vsel %vm1265, %v1137, 0.0
        %v2261 = vsel %vm1266, %v1138, 0.0
        %v2262 = vsel %vm1267, %v1139, 0.0
        %v2263 = vsel %vm1268, %v1140, 0.0
        %v2264 = vsel %vm1269, %v1141, 0.0
        %v2265 = vsel %vm1270, %v1142, 0.0
        %v2266 = vsel %vm1271, %v1143, 0.0
        %v2267 = vsel %vm1272, %v1144, 0.0
        %v2268 = vsel %vm1273, %v1145, 0.0
        %v2269 = vsel %vm1274, %v1146, 0.0
        %v2270 = vsel %vm1275, %v1147, 0.0
        %v2271 = vsel %vm1276, %v1148, 0.0
        %v2272 = vsel %vm1277, %v1149, 0.0
        %v2273 = vsel %vm1278, %v1150, 0.0
        %v2274 = vsel %vm1279, %v1151, 0.0
        %v2275 = vsel %vm1280, %v1152, 0.0
        %v2276 = vsel %vm1281, %v1153, 0.0
        %v2277 = vsel %vm1282, %v1154, 0.0
        %v2278 = vsel %vm1283, %v1155, 0.0
        %v2279 = vsel %vm1284, %v1156, 0.0
        %v2280 = vsel %vm1285, %v1157, 0.0
        %v2281 = vsel %vm1286, %v1158, 0.0
        %v2282 = vsel %vm1287, %v1159, 0.0
        %v2283 = vsel %vm1288, %v1160, 0.0
        %v2284 = vsel %vm1289, %v1161, 0.0
        %v2285 = vsel %vm1290, %v1130, 0.0
        %v2286 = vsel %vm1291, %v1131, 0.0
        %v2287 = vpack.c.bf16 %v2256, %v2255
        %v2288 = vpack.c.bf16 %v2258, %v2257
        %v2289 = vpack.c.bf16 %v2260, %v2259
        %v2290 = vpack.c.bf16 %v2262, %v2261
        %v2291 = vpack.c.bf16 %v2264, %v2263
        %v2292 = vpack.c.bf16 %v2266, %v2265
        %v2293 = vpack.c.bf16 %v2268, %v2267
        %v2294 = vpack.c.bf16 %v2270, %v2269
        %v2295 = vpack.c.bf16 %v2272, %v2271
        %v2296 = vpack.c.bf16 %v2274, %v2273
        %v2297 = vpack.c.bf16 %v2276, %v2275
        %v2298 = vpack.c.bf16 %v2278, %v2277
        %v2299 = vpack.c.bf16 %v2280, %v2279
        %v2300 = vpack.c.bf16 %v2282, %v2281
        %v2301 = vpack.c.bf16 %v2284, %v2283
        %v2302 = vpack.c.bf16 %v2286, %v2285
        %2319 = vrot.lane.b32.xlu0 %v2287, 64
        %v2320 = vpop.permute.xlu0 %2319
        %2321 = vrot.lane.b32.xlu0 %v2288, 64
        %v2322 = vpop.permute.xlu0 %2321
        %2323 = vrot.lane.b32.xlu0 %v2289, 64
        %v2324 = vpop.permute.xlu0 %2323
        %2325 = vrot.lane.b32.xlu0 %v2290, 64
        %v2326 = vpop.permute.xlu0 %2325
        %2327 = vrot.lane.b32.xlu0 %v2291, 64
        %v2328 = vpop.permute.xlu0 %2327
        %2329 = vrot.lane.b32.xlu0 %v2292, 64
        %v2330 = vpop.permute.xlu0 %2329
        %2331 = vrot.lane.b32.xlu0 %v2293, 64
        %v2332 = vpop.permute.xlu0 %2331
        %2333 = vrot.lane.b32.xlu0 %v2294, 64
        %v2334 = vpop.permute.xlu0 %2333
        %2335 = vrot.lane.b32.xlu0 %v2295, 64
        %v2336 = vpop.permute.xlu0 %2335
        %2337 = vrot.lane.b32.xlu0 %v2296, 64
        %v2338 = vpop.permute.xlu0 %2337
        %2339 = vrot.lane.b32.xlu0 %v2297, 64
        %v2340 = vpop.permute.xlu0 %2339
        %2341 = vrot.lane.b32.xlu0 %v2298, 64
        %v2342 = vpop.permute.xlu0 %2341
        %2343 = vrot.lane.b32.xlu0 %v2299, 64
        %v2344 = vpop.permute.xlu0 %2343
        %2345 = vrot.lane.b32.xlu0 %v2300, 64
        %v2346 = vpop.permute.xlu0 %2345
        %2347 = vrot.lane.b32.xlu0 %v2301, 64
        %v2348 = vpop.permute.xlu0 %2347
        %2349 = vrot.lane.b32.xlu0 %v2302, 64
        %v2350 = vpop.permute.xlu0 %2349
        %2367 = vst.msk [vmem:[#allocation2 + $0x8] sm:$0xff] %vm1629, %v2320
        %2368 = vst.msk [vmem:[#allocation2 + $0x18] sm:$0xff] %vm1629, %v2322
        %2369 = vst.msk [vmem:[#allocation2 + $0x28] sm:$0xff] %vm1629, %v2324
        %2370 = vst.msk [vmem:[#allocation2 + $0x38] sm:$0xff] %vm1629, %v2326
        %2371 = vst.msk [vmem:[#allocation2 + $0x48] sm:$0xff] %vm1629, %v2328
        %2372 = vst.msk [vmem:[#allocation2 + $0x58] sm:$0xff] %vm1629, %v2330
        %2373 = vst.msk [vmem:[#allocation2 + $0x68] sm:$0xff] %vm1629, %v2332
        %2374 = vst.msk [vmem:[#allocation2 + $0x78] sm:$0xff] %vm1629, %v2334
        %2375 = vst.msk [vmem:[#allocation2 + $0x88] sm:$0xff] %vm1629, %v2336
        %2376 = vst.msk [vmem:[#allocation2 + $0x98] sm:$0xff] %vm1629, %v2338
        %2377 = vst.msk [vmem:[#allocation2 + $0xa8] sm:$0xff] %vm1629, %v2340
        %2378 = vst.msk [vmem:[#allocation2 + $0xb8] sm:$0xff] %vm1629, %v2342
        %2379 = vst.msk [vmem:[#allocation2 + $0xc8] sm:$0xff] %vm1629, %v2344
        %2380 = vst.msk [vmem:[#allocation2 + $0xd8] sm:$0xff] %vm1629, %v2346
        %2381 = vst.msk [vmem:[#allocation2 + $0xe8] sm:$0xff] %vm1629, %v2348
        %2382 = vst.msk [vmem:[#allocation2 + $0xf8] sm:$0xff] %vm1629, %v2350
        %v2383 = vld [vmem:[#allocation2] sm:$0xff]
        %v2384 = vld [vmem:[#allocation2 + $0x8] sm:$0xff]
        %v2385 = vld [vmem:[#allocation2 + $0x10] sm:$0xff]
        %v2386 = vld [vmem:[#allocation2 + $0x18] sm:$0xff]
        %v2387 = vld [vmem:[#allocation2 + $0x20] sm:$0xff]
        %v2388 = vld [vmem:[#allocation2 + $0x28] sm:$0xff]
        %v2389 = vld [vmem:[#allocation2 + $0x30] sm:$0xff]
        %v2390 = vld [vmem:[#allocation2 + $0x38] sm:$0xff]
        %v2391 = vld [vmem:[#allocation2 + $0x40] sm:$0xff]
        %v2392 = vld [vmem:[#allocation2 + $0x48] sm:$0xff]
        %v2393 = vld [vmem:[#allocation2 + $0x50] sm:$0xff]
        %v2394 = vld [vmem:[#allocation2 + $0x58] sm:$0xff]
        %v2395 = vld [vmem:[#allocation2 + $0x60] sm:$0xff]
        %v2396 = vld [vmem:[#allocation2 + $0x68] sm:$0xff]
        %v2397 = vld [vmem:[#allocation2 + $0x70] sm:$0xff]
        %v2398 = vld [vmem:[#allocation2 + $0x78] sm:$0xff]
        %v2399 = vld [vmem:[#allocation2 + $0x80] sm:$0xff]
        %v2400 = vld [vmem:[#allocation2 + $0x88] sm:$0xff]
        %v2401 = vld [vmem:[#allocation2 + $0x90] sm:$0xff]
        %v2402 = vld [vmem:[#allocation2 + $0x98] sm:$0xff]
        %v2403 = vld [vmem:[#allocation2 + $0xa0] sm:$0xff]
        %v2404 = vld [vmem:[#allocation2 + $0xa8] sm:$0xff]
        %v2405 = vld [vmem:[#allocation2 + $0xb0] sm:$0xff]
        %v2406 = vld [vmem:[#allocation2 + $0xb8] sm:$0xff]
        %v2407 = vld [vmem:[#allocation2 + $0xc0] sm:$0xff]
        %v2408 = vld [vmem:[#allocation2 + $0xc8] sm:$0xff]
        %v2409 = vld [vmem:[#allocation2 + $0xd0] sm:$0xff]
        %v2410 = vld [vmem:[#allocation2 + $0xd8] sm:$0xff]
        %v2411 = vld [vmem:[#allocation2 + $0xe0] sm:$0xff]
        %v2412 = vld [vmem:[#allocation2 + $0xe8] sm:$0xff]
        %v2413 = vld [vmem:[#allocation2 + $0xf0] sm:$0xff]
        %v2414 = vld [vmem:[#allocation2 + $0xf8] sm:$0xff]
        %v2415 = vld [vmem:[%s5 + $0x80] sm:$0xf]
        %v2416 = vld [vmem:[%s5 + $0x84] sm:$0xf]
        %v2417 = vld [vmem:[%s5 + $0x88] sm:$0xf]
        %v2418 = vld [vmem:[%s5 + $0x8c] sm:$0xf]
        %v2419 = vld [vmem:[%s5 + $0x90] sm:$0xf]
        %v2420 = vld [vmem:[%s5 + $0x94] sm:$0xf]
        %v2421 = vld [vmem:[%s5 + $0x98] sm:$0xf]
        %v2422 = vld [vmem:[%s5 + $0x9c] sm:$0xf]
        %v2423 = vld [vmem:[%s5 + $0xa0] sm:$0xf]
        %v2424 = vld [vmem:[%s5 + $0xa4] sm:$0xf]
        %v2425 = vld [vmem:[%s5 + $0xa8] sm:$0xf]
        %v2426 = vld [vmem:[%s5 + $0xac] sm:$0xf]
        %v2427 = vld [vmem:[%s5 + $0xb0] sm:$0xf]
        %v2428 = vld [vmem:[%s5 + $0xb4] sm:$0xf]
        %v2429 = vld [vmem:[%s5 + $0xb8] sm:$0xf]
        %v2430 = vld [vmem:[%s5 + $0xbc] sm:$0xf]
        %v2431 = vld [vmem:[%s5 + $0xc0] sm:$0xf]
        %v2432 = vld [vmem:[%s5 + $0xc4] sm:$0xf]
        %v2433 = vld [vmem:[%s5 + $0xc8] sm:$0xf]
        %v2434 = vld [vmem:[%s5 + $0xcc] sm:$0xf]
        %v2435 = vld [vmem:[%s5 + $0xd0] sm:$0xf]
        %v2436 = vld [vmem:[%s5 + $0xd4] sm:$0xf]
        %v2437 = vld [vmem:[%s5 + $0xd8] sm:$0xf]
        %v2438 = vld [vmem:[%s5 + $0xdc] sm:$0xf]
        %v2439 = vld [vmem:[%s5 + $0xe0] sm:$0xf]
        %v2440 = vld [vmem:[%s5 + $0xe4] sm:$0xf]
        %v2441 = vld [vmem:[%s5 + $0xe8] sm:$0xf]
        %v2442 = vld [vmem:[%s5 + $0xec] sm:$0xf]
        %v2443 = vld [vmem:[%s5 + $0xf0] sm:$0xf]
        %v2444 = vld [vmem:[%s5 + $0xf4] sm:$0xf]
        %v2445 = vld [vmem:[%s5 + $0xf8] sm:$0xf]
        %v2446 = vld [vmem:[%s5 + $0xfc] sm:$0xf]
        %v2479 = vunpack.c.l.b16 %v2415
        %v2480 = vunpack.c.l.b16 %v2416
        %v2481 = vunpack.c.l.b16 %v2417
        %v2482 = vunpack.c.l.b16 %v2418
        %v2483 = vunpack.c.l.b16 %v2419
        %v2484 = vunpack.c.l.b16 %v2420
        %v2485 = vunpack.c.l.b16 %v2421
        %v2486 = vunpack.c.l.b16 %v2422
        %v2487 = vunpack.c.l.b16 %v2423
        %v2488 = vunpack.c.l.b16 %v2424
        %v2489 = vunpack.c.l.b16 %v2425
        %v2490 = vunpack.c.l.b16 %v2426
        %v2491 = vunpack.c.l.b16 %v2427
        %v2492 = vunpack.c.l.b16 %v2428
        %v2493 = vunpack.c.l.b16 %v2429
        %v2494 = vunpack.c.l.b16 %v2430
        %v2495 = vunpack.c.l.b16 %v2431
        %v2496 = vunpack.c.l.b16 %v2432
        %v2497 = vunpack.c.l.b16 %v2433
        %v2498 = vunpack.c.l.b16 %v2434
        %v2499 = vunpack.c.l.b16 %v2435
        %v2500 = vunpack.c.l.b16 %v2436
        %v2501 = vunpack.c.l.b16 %v2437
        %v2502 = vunpack.c.l.b16 %v2438
        %v2503 = vunpack.c.l.b16 %v2439
        %v2504 = vunpack.c.l.b16 %v2440
        %v2505 = vunpack.c.l.b16 %v2441
        %v2506 = vunpack.c.l.b16 %v2442
        %v2507 = vunpack.c.l.b16 %v2443
        %v2508 = vunpack.c.l.b16 %v2444
        %v2509 = vunpack.c.l.b16 %v2445
        %v2510 = vunpack.c.l.b16 %v2446
        %v2511 = vpack.c.b16 %v2480, %v2479
        %v2512 = vpack.c.b16 %v2482, %v2481
        %v2513 = vpack.c.b16 %v2484, %v2483
        %v2514 = vpack.c.b16 %v2486, %v2485
        %v2515 = vpack.c.b16 %v2488, %v2487
        %v2516 = vpack.c.b16 %v2490, %v2489
        %v2517 = vpack.c.b16 %v2492, %v2491
        %v2518 = vpack.c.b16 %v2494, %v2493
        %v2519 = vpack.c.b16 %v2496, %v2495
        %v2520 = vpack.c.b16 %v2498, %v2497
        %v2521 = vpack.c.b16 %v2500, %v2499
        %v2522 = vpack.c.b16 %v2502, %v2501
        %v2523 = vpack.c.b16 %v2504, %v2503
        %v2524 = vpack.c.b16 %v2506, %v2505
        %v2525 = vpack.c.b16 %v2508, %v2507
        %v2526 = vpack.c.b16 %v2510, %v2509
        %2543 = vmatprep.subr.bf16.mxu0 0
        %2544 = vmatpush1.bf16.msra.mxu0 %v2511
        %2545 = vmatprep.subr.bf16.mxu0 0
        %2546 = vmatpush1.bf16.msra.mxu0 %v2512
        %2547 = vmatprep.subr.bf16.mxu0 0
        %2548 = vmatpush1.bf16.msra.mxu0 %v2513
        %2549 = vmatprep.subr.bf16.mxu0 0
        %2550 = vmatpush1.bf16.msra.mxu0 %v2514
        %2551 = vmatprep.subr.bf16.mxu0 0
        %2552 = vmatpush1.bf16.msra.mxu0 %v2515
        %2553 = vmatprep.subr.bf16.mxu0 0
        %2554 = vmatpush1.bf16.msra.mxu0 %v2516
        %2555 = vmatprep.subr.bf16.mxu0 0
        %2556 = vmatpush1.bf16.msra.mxu0 %v2517
        %2557 = vmatprep.subr.bf16.mxu0 0
        %2558 = vmatpush1.bf16.msra.mxu0 %v2518
        %2559 = vmatprep.subr.bf16.mxu0 0
        %2560 = vmatpush1.bf16.msra.mxu0 %v2519
        %2561 = vmatprep.subr.bf16.mxu0 0
        %2562 = vmatpush1.bf16.msra.mxu0 %v2520
        %2563 = vmatprep.subr.bf16.mxu0 0
        %2564 = vmatpush1.bf16.msra.mxu0 %v2521
        %2565 = vmatprep.subr.bf16.mxu0 0
        %2566 = vmatpush1.bf16.msra.mxu0 %v2522
        %2567 = vmatprep.subr.bf16.mxu0 0
        %2568 = vmatpush1.bf16.msra.mxu0 %v2523
        %2569 = vmatprep.subr.bf16.mxu0 0
        %2570 = vmatpush1.bf16.msra.mxu0 %v2524
        %2571 = vmatprep.subr.bf16.mxu0 0
        %2572 = vmatpush1.bf16.msra.mxu0 %v2525
        %2573 = vmatprep.subr.bf16.mxu0 0
        %2574 = vmatpush1.bf16.msra.mxu0 %v2526
        %2575 = vmatprep.mubr.bf16.mxu0 %v2384
        %2576 = vmatmul.mubr.bf16.gmra.mrb[0].mxu0 %v2383
        %v2577 = vpop.f32.mrb[0].mxu0
        %v2578 = vadd.f32 0.0, %v2577
        %v2579 = vpop.f32.mrb[0].mxu0
        %v2580 = vpop.f32.mrb[0].mxu0
        %v2581 = vadd.f32 0.0, %v2580
        %v2582 = vpop.f32.mrb[0].mxu0
        %2583 = vmatprep.mubr.bf16.mxu0 %v2386
        %2584 = vmatmul.mubr.bf16.gmra.mrb[0].mxu0 %v2385
        %v2585 = vpop.f32.mrb[0].mxu0
        %v2586 = vadd.f32 0.0, %v2585
        %v2587 = vpop.f32.mrb[0].mxu0
        %v2588 = vpop.f32.mrb[0].mxu0
        %v2589 = vadd.f32 0.0, %v2588
        %v2590 = vpop.f32.mrb[0].mxu0
        %2591 = vmatprep.mubr.bf16.mxu0 %v2388
        %2592 = vmatmul.mubr.bf16.gmra.mrb[0].mxu0 %v2387
        %v2593 = vpop.f32.mrb[0].mxu0
        %v2594 = vadd.f32 0.0, %v2593
        %v2595 = vpop.f32.mrb[0].mxu0
        %v2596 = vpop.f32.mrb[0].mxu0
        %v2597 = vadd.f32 0.0, %v2596
        %v2598 = vpop.f32.mrb[0].mxu0
        %2599 = vmatprep.mubr.bf16.mxu0 %v2390
        %2600 = vmatmul.mubr.bf16.gmra.mrb[0].mxu0 %v2389
        %v2601 = vpop.f32.mrb[0].mxu0
        %v2602 = vadd.f32 0.0, %v2601
        %v2603 = vpop.f32.mrb[0].mxu0
        %v2604 = vpop.f32.mrb[0].mxu0
        %v2605 = vadd.f32 0.0, %v2604
        %v2606 = vpop.f32.mrb[0].mxu0
        %2607 = vmatprep.mubr.bf16.mxu0 %v2392
        %2608 = vmatmul.mubr.bf16.gmra.mrb[0].mxu0 %v2391
        %v2609 = vpop.f32.mrb[0].mxu0
        %v2610 = vadd.f32 0.0, %v2609
        %v2611 = vpop.f32.mrb[0].mxu0
        %v2612 = vpop.f32.mrb[0].mxu0
        %v2613 = vadd.f32 0.0, %v2612
        %v2614 = vpop.f32.mrb[0].mxu0
        %2615 = vmatprep.mubr.bf16.mxu0 %v2394
        %2616 = vmatmul.mubr.bf16.gmra.mrb[0].mxu0 %v2393
        %v2617 = vpop.f32.mrb[0].mxu0
        %v2618 = vadd.f32 0.0, %v2617
        %v2619 = vpop.f32.mrb[0].mxu0
        %v2620 = vpop.f32.mrb[0].mxu0
        %v2621 = vadd.f32 0.0, %v2620
        %v2622 = vpop.f32.mrb[0].mxu0
        %2623 = vmatprep.mubr.bf16.mxu0 %v2396
        %2624 = vmatmul.mubr.bf16.gmra.mrb[0].mxu0 %v2395
        %v2625 = vpop.f32.mrb[0].mxu0
        %v2626 = vadd.f32 0.0, %v2625
        %v2627 = vpop.f32.mrb[0].mxu0
        %v2628 = vpop.f32.mrb[0].mxu0
        %v2629 = vadd.f32 0.0, %v2628
        %v2630 = vpop.f32.mrb[0].mxu0
        %2631 = vmatprep.mubr.bf16.mxu0 %v2398
        %2632 = vmatmul.mubr.bf16.gmra.mrb[0].mxu0 %v2397
        %v2633 = vpop.f32.mrb[0].mxu0
        %v2634 = vadd.f32 0.0, %v2633
        %v2635 = vpop.f32.mrb[0].mxu0
        %v2636 = vpop.f32.mrb[0].mxu0
        %v2637 = vadd.f32 0.0, %v2636
        %v2638 = vpop.f32.mrb[0].mxu0
        %2639 = vmatprep.mubr.bf16.mxu0 %v2400
        %2640 = vmatmul.mubr.bf16.gmra.mrb[0].mxu0 %v2399
        %v2641 = vpop.f32.mrb[0].mxu0
        %v2642 = vadd.f32 0.0, %v2641
        %v2643 = vpop.f32.mrb[0].mxu0
        %v2644 = vpop.f32.mrb[0].mxu0
        %v2645 = vadd.f32 0.0, %v2644
        %v2646 = vpop.f32.mrb[0].mxu0
        %2647 = vmatprep.mubr.bf16.mxu0 %v2402
        %2648 = vmatmul.mubr.bf16.gmra.mrb[0].mxu0 %v2401
        %v2649 = vpop.f32.mrb[0].mxu0
        %v2650 = vadd.f32 0.0, %v2649
        %v2651 = vpop.f32.mrb[0].mxu0
        %v2652 = vpop.f32.mrb[0].mxu0
        %v2653 = vadd.f32 0.0, %v2652
        %v2654 = vpop.f32.mrb[0].mxu0
        %2655 = vmatprep.mubr.bf16.mxu0 %v2404
        %2656 = vmatmul.mubr.bf16.gmra.mrb[0].mxu0 %v2403
        %v2657 = vpop.f32.mrb[0].mxu0
        %v2658 = vadd.f32 0.0, %v2657
        %v2659 = vpop.f32.mrb[0].mxu0
        %v2660 = vpop.f32.mrb[0].mxu0
        %v2661 = vadd.f32 0.0, %v2660
        %v2662 = vpop.f32.mrb[0].mxu0
        %2663 = vmatprep.mubr.bf16.mxu0 %v2406
        %2664 = vmatmul.mubr.bf16.gmra.mrb[0].mxu0 %v2405
        %v2665 = vpop.f32.mrb[0].mxu0
        %v2666 = vadd.f32 0.0, %v2665
        %v2667 = vpop.f32.mrb[0].mxu0
        %v2668 = vpop.f32.mrb[0].mxu0
        %v2669 = vadd.f32 0.0, %v2668
        %v2670 = vpop.f32.mrb[0].mxu0
        %2671 = vmatprep.mubr.bf16.mxu0 %v2408
        %2672 = vmatmul.mubr.bf16.gmra.mrb[0].mxu0 %v2407
        %v2673 = vpop.f32.mrb[0].mxu0
        %v2674 = vadd.f32 0.0, %v2673
        %v2675 = vpop.f32.mrb[0].mxu0
        %v2676 = vpop.f32.mrb[0].mxu0
        %v2677 = vadd.f32 0.0, %v2676
        %v2678 = vpop.f32.mrb[0].mxu0
        %2679 = vmatprep.mubr.bf16.mxu0 %v2410
        %2680 = vmatmul.mubr.bf16.gmra.mrb[0].mxu0 %v2409
        %v2681 = vpop.f32.mrb[0].mxu0
        %v2682 = vadd.f32 0.0, %v2681
        %v2683 = vpop.f32.mrb[0].mxu0
        %v2684 = vpop.f32.mrb[0].mxu0
        %v2685 = vadd.f32 0.0, %v2684
        %v2686 = vpop.f32.mrb[0].mxu0
        %2687 = vmatprep.mubr.bf16.mxu0 %v2412
        %2688 = vmatmul.mubr.bf16.gmra.mrb[0].mxu0 %v2411
        %v2689 = vpop.f32.mrb[0].mxu0
        %v2690 = vadd.f32 0.0, %v2689
        %v2691 = vpop.f32.mrb[0].mxu0
        %v2692 = vpop.f32.mrb[0].mxu0
        %v2693 = vadd.f32 0.0, %v2692
        %v2694 = vpop.f32.mrb[0].mxu0
        %2695 = vmatprep.mubr.bf16.mxu0 %v2414
        %2696 = vmatmul.mubr.bf16.gmra.mrb[0].mxu0 %v2413
        %v2697 = vpop.f32.mrb[0].mxu0
        %v2698 = vadd.f32 0.0, %v2697
        %v2699 = vpop.f32.mrb[0].mxu0
        %v2700 = vpop.f32.mrb[0].mxu0
        %v2701 = vadd.f32 0.0, %v2700
        %v2702 = vpop.f32.mrb[0].mxu0
        %2703 = vdwg.mxu0
        %v2736 = vunpack.c.l.b16 %v1967
        %v2737 = vunpack.c.l.b16 %v1968
        %v2738 = vunpack.c.l.b16 %v1969
        %v2739 = vunpack.c.l.b16 %v1970
        %v2740 = vunpack.c.l.b16 %v1971
        %v2741 = vunpack.c.l.b16 %v1972
        %v2742 = vunpack.c.l.b16 %v1973
        %v2743 = vunpack.c.l.b16 %v1974
        %v2744 = vunpack.c.l.b16 %v1975
        %v2745 = vunpack.c.l.b16 %v1976
        %v2746 = vunpack.c.l.b16 %v1977
        %v2747 = vunpack.c.l.b16 %v1978
        %v2748 = vunpack.c.l.b16 %v1979
        %v2749 = vunpack.c.l.b16 %v1980
        %v2750 = vunpack.c.l.b16 %v1981
        %v2751 = vunpack.c.l.b16 %v1982
        %v2752 = vunpack.c.l.b16 %v1983
        %v2753 = vunpack.c.l.b16 %v1984
        %v2754 = vunpack.c.l.b16 %v1985
        %v2755 = vunpack.c.l.b16 %v1986
        %v2756 = vunpack.c.l.b16 %v1987
        %v2757 = vunpack.c.l.b16 %v1988
        %v2758 = vunpack.c.l.b16 %v1989
        %v2759 = vunpack.c.l.b16 %v1990
        %v2760 = vunpack.c.l.b16 %v1991
        %v2761 = vunpack.c.l.b16 %v1992
        %v2762 = vunpack.c.l.b16 %v1993
        %v2763 = vunpack.c.l.b16 %v1994
        %v2764 = vunpack.c.l.b16 %v1995
        %v2765 = vunpack.c.l.b16 %v1996
        %v2766 = vunpack.c.l.b16 %v1997
        %v2767 = vunpack.c.l.b16 %v1998
        %v2768 = vpack.c.b16 %v2737, %v2736
        %v2769 = vpack.c.b16 %v2739, %v2738
        %v2770 = vpack.c.b16 %v2741, %v2740
        %v2771 = vpack.c.b16 %v2743, %v2742
        %v2772 = vpack.c.b16 %v2745, %v2744
        %v2773 = vpack.c.b16 %v2747, %v2746
        %v2774 = vpack.c.b16 %v2749, %v2748
        %v2775 = vpack.c.b16 %v2751, %v2750
        %v2776 = vpack.c.b16 %v2753, %v2752
        %v2777 = vpack.c.b16 %v2755, %v2754
        %v2778 = vpack.c.b16 %v2757, %v2756
        %v2779 = vpack.c.b16 %v2759, %v2758
        %v2780 = vpack.c.b16 %v2761, %v2760
        %v2781 = vpack.c.b16 %v2763, %v2762
        %v2782 = vpack.c.b16 %v2765, %v2764
        %v2783 = vpack.c.b16 %v2767, %v2766
        %2800 = vmatprep.subr.bf16.mxu0 0
        %2801 = vmatpush1.bf16.msra.mxu0 %v2768
        %2802 = vmatprep.subr.bf16.mxu0 0
        %2803 = vmatpush1.bf16.msra.mxu0 %v2769
        %2804 = vmatprep.subr.bf16.mxu0 0
        %2805 = vmatpush1.bf16.msra.mxu0 %v2770
        %2806 = vmatprep.subr.bf16.mxu0 0
        %2807 = vmatpush1.bf16.msra.mxu0 %v2771
        %2808 = vmatprep.subr.bf16.mxu0 0
        %2809 = vmatpush1.bf16.msra.mxu0 %v2772
        %2810 = vmatprep.subr.bf16.mxu0 0
        %2811 = vmatpush1.bf16.msra.mxu0 %v2773
        %2812 = vmatprep.subr.bf16.mxu0 0
        %2813 = vmatpush1.bf16.msra.mxu0 %v2774
        %2814 = vmatprep.subr.bf16.mxu0 0
        %2815 = vmatpush1.bf16.msra.mxu0 %v2775
        %2816 = vmatprep.subr.bf16.mxu0 0
        %2817 = vmatpush1.bf16.msra.mxu0 %v2776
        %2818 = vmatprep.subr.bf16.mxu0 0
        %2819 = vmatpush1.bf16.msra.mxu0 %v2777
        %2820 = vmatprep.subr.bf16.mxu0 0
        %2821 = vmatpush1.bf16.msra.mxu0 %v2778
        %2822 = vmatprep.subr.bf16.mxu0 0
        %2823 = vmatpush1.bf16.msra.mxu0 %v2779
        %2824 = vmatprep.subr.bf16.mxu0 0
        %2825 = vmatpush1.bf16.msra.mxu0 %v2780
        %2826 = vmatprep.subr.bf16.mxu0 0
        %2827 = vmatpush1.bf16.msra.mxu0 %v2781
        %2828 = vmatprep.subr.bf16.mxu0 0
        %2829 = vmatpush1.bf16.msra.mxu0 %v2782
        %2830 = vmatprep.subr.bf16.mxu0 0
        %2831 = vmatpush1.bf16.msra.mxu0 %v2783
        %2832 = vmatprep.mubr.bf16.mxu0 %v1936
        %2833 = vmatmul.mubr.bf16.gmra.mrb[0].mxu0 %v1935
        %v2834 = vpop.f32.mrb[0].mxu0
        %v2835 = vadd.f32 %v2578, %v2834
        %v2836 = vpop.f32.mrb[0].mxu0
        %v2837 = vpop.f32.mrb[0].mxu0
        %v2838 = vadd.f32 %v2581, %v2837
        %v2839 = vpop.f32.mrb[0].mxu0
        %2840 = vmatprep.mubr.bf16.mxu0 %v1938
        %2841 = vmatmul.mubr.bf16.gmra.mrb[0].mxu0 %v1937
        %v2842 = vpop.f32.mrb[0].mxu0
        %v2843 = vadd.f32 %v2586, %v2842
        %v2844 = vpop.f32.mrb[0].mxu0
        %v2845 = vpop.f32.mrb[0].mxu0
        %v2846 = vadd.f32 %v2589, %v2845
        %v2847 = vpop.f32.mrb[0].mxu0
        %2848 = vmatprep.mubr.bf16.mxu0 %v1940
        %2849 = vmatmul.mubr.bf16.gmra.mrb[0].mxu0 %v1939
        %v2850 = vpop.f32.mrb[0].mxu0
        %v2851 = vadd.f32 %v2594, %v2850
        %v2852 = vpop.f32.mrb[0].mxu0
        %v2853 = vpop.f32.mrb[0].mxu0
        %v2854 = vadd.f32 %v2597, %v2853
        %v2855 = vpop.f32.mrb[0].mxu0
        %2856 = vmatprep.mubr.bf16.mxu0 %v1942
        %2857 = vmatmul.mubr.bf16.gmra.mrb[0].mxu0 %v1941
        %v2858 = vpop.f32.mrb[0].mxu0
        %v2859 = vadd.f32 %v2602, %v2858
        %v2860 = vpop.f32.mrb[0].mxu0
        %v2861 = vpop.f32.mrb[0].mxu0
        %v2862 = vadd.f32 %v2605, %v2861
        %v2863 = vpop.f32.mrb[0].mxu0
        %2864 = vmatprep.mubr.bf16.mxu0 %v1944
        %2865 = vmatmul.mubr.bf16.gmra.mrb[0].mxu0 %v1943
        %v2866 = vpop.f32.mrb[0].mxu0
        %v2867 = vadd.f32 %v2610, %v2866
        %v2868 = vpop.f32.mrb[0].mxu0
        %v2869 = vpop.f32.mrb[0].mxu0
        %v2870 = vadd.f32 %v2613, %v2869
        %v2871 = vpop.f32.mrb[0].mxu0
        %2872 = vmatprep.mubr.bf16.mxu0 %v1946
        %2873 = vmatmul.mubr.bf16.gmra.mrb[0].mxu0 %v1945
        %v2874 = vpop.f32.mrb[0].mxu0
        %v2875 = vadd.f32 %v2618, %v2874
        %v2876 = vpop.f32.mrb[0].mxu0
        %v2877 = vpop.f32.mrb[0].mxu0
        %v2878 = vadd.f32 %v2621, %v2877
        %v2879 = vpop.f32.mrb[0].mxu0
        %2880 = vmatprep.mubr.bf16.mxu0 %v1948
        %2881 = vmatmul.mubr.bf16.gmra.mrb[0].mxu0 %v1947
        %v2882 = vpop.f32.mrb[0].mxu0
        %v2883 = vadd.f32 %v2626, %v2882
        %v2884 = vpop.f32.mrb[0].mxu0
        %v2885 = vpop.f32.mrb[0].mxu0
        %v2886 = vadd.f32 %v2629, %v2885
        %v2887 = vpop.f32.mrb[0].mxu0
        %2888 = vmatprep.mubr.bf16.mxu0 %v1950
        %2889 = vmatmul.mubr.bf16.gmra.mrb[0].mxu0 %v1949
        %v2890 = vpop.f32.mrb[0].mxu0
        %v2891 = vadd.f32 %v2634, %v2890
        %v2892 = vpop.f32.mrb[0].mxu0
        %v2893 = vpop.f32.mrb[0].mxu0
        %v2894 = vadd.f32 %v2637, %v2893
        %v2895 = vpop.f32.mrb[0].mxu0
        %2896 = vmatprep.mubr.bf16.mxu0 %v1952
        %2897 = vmatmul.mubr.bf16.gmra.mrb[0].mxu0 %v1951
        %v2898 = vpop.f32.mrb[0].mxu0
        %v2899 = vadd.f32 %v2642, %v2898
        %v2900 = vpop.f32.mrb[0].mxu0
        %v2901 = vpop.f32.mrb[0].mxu0
        %v2902 = vadd.f32 %v2645, %v2901
        %v2903 = vpop.f32.mrb[0].mxu0
        %2904 = vmatprep.mubr.bf16.mxu0 %v1954
        %2905 = vmatmul.mubr.bf16.gmra.mrb[0].mxu0 %v1953
        %v2906 = vpop.f32.mrb[0].mxu0
        %v2907 = vadd.f32 %v2650, %v2906
        %v2908 = vpop.f32.mrb[0].mxu0
        %v2909 = vpop.f32.mrb[0].mxu0
        %v2910 = vadd.f32 %v2653, %v2909
        %v2911 = vpop.f32.mrb[0].mxu0
        %2912 = vmatprep.mubr.bf16.mxu0 %v1956
        %2913 = vmatmul.mubr.bf16.gmra.mrb[0].mxu0 %v1955
        %v2914 = vpop.f32.mrb[0].mxu0
        %v2915 = vadd.f32 %v2658, %v2914
        %v2916 = vpop.f32.mrb[0].mxu0
        %v2917 = vpop.f32.mrb[0].mxu0
        %v2918 = vadd.f32 %v2661, %v2917
        %v2919 = vpop.f32.mrb[0].mxu0
        %2920 = vmatprep.mubr.bf16.mxu0 %v1958
        %2921 = vmatmul.mubr.bf16.gmra.mrb[0].mxu0 %v1957
        %v2922 = vpop.f32.mrb[0].mxu0
        %v2923 = vadd.f32 %v2666, %v2922
        %v2924 = vpop.f32.mrb[0].mxu0
        %v2925 = vpop.f32.mrb[0].mxu0
        %v2926 = vadd.f32 %v2669, %v2925
        %v2927 = vpop.f32.mrb[0].mxu0
        %2928 = vmatprep.mubr.bf16.mxu0 %v1960
        %2929 = vmatmul.mubr.bf16.gmra.mrb[0].mxu0 %v1959
        %v2930 = vpop.f32.mrb[0].mxu0
        %v2931 = vadd.f32 %v2674, %v2930
        %v2932 = vpop.f32.mrb[0].mxu0
        %v2933 = vpop.f32.mrb[0].mxu0
        %v2934 = vadd.f32 %v2677, %v2933
        %v2935 = vpop.f32.mrb[0].mxu0
        %2936 = vmatprep.mubr.bf16.mxu0 %v1962
        %2937 = vmatmul.mubr.bf16.gmra.mrb[0].mxu0 %v1961
        %v2938 = vpop.f32.mrb[0].mxu0
        %v2939 = vadd.f32 %v2682, %v2938
        %v2940 = vpop.f32.mrb[0].mxu0
        %v2941 = vpop.f32.mrb[0].mxu0
        %v2942 = vadd.f32 %v2685, %v2941
        %v2943 = vpop.f32.mrb[0].mxu0
        %2944 = vmatprep.mubr.bf16.mxu0 %v1964
        %2945 = vmatmul.mubr.bf16.gmra.mrb[0].mxu0 %v1963
        %v2946 = vpop.f32.mrb[0].mxu0
        %v2947 = vadd.f32 %v2690, %v2946
        %v2948 = vpop.f32.mrb[0].mxu0
        %v2949 = vpop.f32.mrb[0].mxu0
        %v2950 = vadd.f32 %v2693, %v2949
        %v2951 = vpop.f32.mrb[0].mxu0
        %2952 = vmatprep.mubr.bf16.mxu0 %v1966
        %2953 = vmatmul.mubr.bf16.gmra.mrb[0].mxu0 %v1965
        %v2954 = vpop.f32.mrb[0].mxu0
        %v2955 = vadd.f32 %v2698, %v2954
        %v2956 = vpop.f32.mrb[0].mxu0
        %v2957 = vpop.f32.mrb[0].mxu0
        %v2958 = vadd.f32 %v2701, %v2957
        %v2959 = vpop.f32.mrb[0].mxu0
        %2960 = vdwg.mxu0
        %vm2961 = vmand %vm1260, %vm1324
        %vm2962 = vmand %vm1261, %vm1325
        %vm2963 = vmand %vm1262, %vm1326
        %vm2964 = vmand %vm1263, %vm1327
        %vm2965 = vmand %vm1264, %vm1328
        %vm2966 = vmand %vm1265, %vm1329
        %vm2967 = vmand %vm1266, %vm1330
        %vm2968 = vmand %vm1267, %vm1331
        %vm2969 = vmand %vm1268, %vm1332
        %vm2970 = vmand %vm1269, %vm1333
        %vm2971 = vmand %vm1270, %vm1334
        %vm2972 = vmand %vm1271, %vm1335
        %vm2973 = vmand %vm1272, %vm1336
        %vm2974 = vmand %vm1273, %vm1337
        %vm2975 = vmand %vm1274, %vm1338
        %vm2976 = vmand %vm1275, %vm1339
        %vm2977 = vmand %vm1276, %vm1340
        %vm2978 = vmand %vm1277, %vm1341
        %vm2979 = vmand %vm1278, %vm1342
        %vm2980 = vmand %vm1279, %vm1343
        %vm2981 = vmand %vm1280, %vm1344
        %vm2982 = vmand %vm1281, %vm1345
        %vm2983 = vmand %vm1282, %vm1346
        %vm2984 = vmand %vm1283, %vm1347
        %vm2985 = vmand %vm1284, %vm1348
        %vm2986 = vmand %vm1285, %vm1349
        %vm2987 = vmand %vm1286, %vm1350
        %vm2988 = vmand %vm1287, %vm1351
        %vm2989 = vmand %vm1288, %vm1352
        %vm2990 = vmand %vm1289, %vm1353
        %vm2991 = vmand %vm1290, %vm1354
        %vm2992 = vmand %vm1291, %vm1355
        %v2993 = vsel %vm2961, %v1707, 0.0
        %v2994 = vsel %vm2962, %v1706, 0.0
        %v2995 = vsel %vm2963, %v1705, 0.0
        %v2996 = vsel %vm2964, %v1704, 0.0
        %v2997 = vsel %vm2965, %v1703, 0.0
        %v2998 = vsel %vm2966, %v1702, 0.0
        %v2999 = vsel %vm2967, %v1701, 0.0
        %v3000 = vsel %vm2968, %v1700, 0.0
        %v3001 = vsel %vm2969, %v1699, 0.0
        %v3002 = vsel %vm2970, %v1698, 0.0
        %v3003 = vsel %vm2971, %v1697, 0.0
        %v3004 = vsel %vm2972, %v1696, 0.0
        %v3005 = vsel %vm2973, %v1695, 0.0
        %v3006 = vsel %vm2974, %v1694, 0.0
        %v3007 = vsel %vm2975, %v1693, 0.0
        %v3008 = vsel %vm2976, %v1692, 0.0
        %v3009 = vsel %vm2977, %v1691, 0.0
        %v3010 = vsel %vm2978, %v1690, 0.0
        %v3011 = vsel %vm2979, %v1689, 0.0
        %v3012 = vsel %vm2980, %v1688, 0.0
        %v3013 = vsel %vm2981, %v1687, 0.0
        %v3014 = vsel %vm2982, %v1686, 0.0
        %v3015 = vsel %vm2983, %v1685, 0.0
        %v3016 = vsel %vm2984, %v1684, 0.0
        %v3017 = vsel %vm2985, %v1683, 0.0
        %v3018 = vsel %vm2986, %v1682, 0.0
        %v3019 = vsel %vm2987, %v1681, 0.0
        %v3020 = vsel %vm2988, %v1680, 0.0
        %v3021 = vsel %vm2989, %v1679, 0.0
        %v3022 = vsel %vm2990, %v1710, 0.0
        %v3023 = vsel %vm2991, %v1709, 0.0
        %v3024 = vsel %vm2992, %v1708, 0.0
        %v3025 = vpack.c.bf16 %v2994, %v2993
        %v3026 = vpack.c.bf16 %v2996, %v2995
        %v3027 = vpack.c.bf16 %v2998, %v2997
        %v3028 = vpack.c.bf16 %v3000, %v2999
        %v3029 = vpack.c.bf16 %v3002, %v3001
        %v3030 = vpack.c.bf16 %v3004, %v3003
        %v3031 = vpack.c.bf16 %v3006, %v3005
        %v3032 = vpack.c.bf16 %v3008, %v3007
        %v3033 = vpack.c.bf16 %v3010, %v3009
        %v3034 = vpack.c.bf16 %v3012, %v3011
        %v3035 = vpack.c.bf16 %v3014, %v3013
        %v3036 = vpack.c.bf16 %v3016, %v3015
        %v3037 = vpack.c.bf16 %v3018, %v3017
        %v3038 = vpack.c.bf16 %v3020, %v3019
        %v3039 = vpack.c.bf16 %v3022, %v3021
        %v3040 = vpack.c.bf16 %v3024, %v3023
        %v3041 = vld [vmem:[%s5 + $0x100] sm:$0xf]
        %v3042 = vld [vmem:[%s5 + $0x104] sm:$0xf]
        %v3043 = vld [vmem:[%s5 + $0x108] sm:$0xf]
        %v3044 = vld [vmem:[%s5 + $0x10c] sm:$0xf]
        %v3045 = vld [vmem:[%s5 + $0x110] sm:$0xf]
        %v3046 = vld [vmem:[%s5 + $0x114] sm:$0xf]
        %v3047 = vld [vmem:[%s5 + $0x118] sm:$0xf]
        %v3048 = vld [vmem:[%s5 + $0x11c] sm:$0xf]
        %v3057 = vunpack.c.l.b16 %v3041
        %v3058 = vunpack.c.l.b16 %v3042
        %v3059 = vunpack.c.l.b16 %v3043
        %v3060 = vunpack.c.l.b16 %v3044
        %v3061 = vunpack.c.l.b16 %v3045
        %v3062 = vunpack.c.l.b16 %v3046
        %v3063 = vunpack.c.l.b16 %v3047
        %v3064 = vunpack.c.l.b16 %v3048
        %v3065 = vpack.c.b16 %v3058, %v3057
        %v3066 = vpack.c.b16 %v3060, %v3059
        %v3067 = vpack.c.b16 %v3062, %v3061
        %v3068 = vpack.c.b16 %v3064, %v3063
        %v3074 = vsel %vm469, %v3025, 0
        %v3077 = vsel %vm469, %v3026, 0
        %v3080 = vsel %vm469, %v3027, 0
        %v3083 = vsel %vm469, %v3028, 0
        %v3086 = vsel %vm469, %v3029, 0
        %v3089 = vsel %vm469, %v3030, 0
        %v3092 = vsel %vm469, %v3031, 0
        %v3095 = vsel %vm469, %v3032, 0
        %v3098 = vsel %vm469, %v3033, 0
        %v3101 = vsel %vm469, %v3034, 0
        %v3104 = vsel %vm469, %v3035, 0
        %v3107 = vsel %vm469, %v3036, 0
        %v3110 = vsel %vm469, %v3037, 0
        %v3113 = vsel %vm469, %v3038, 0
        %v3116 = vsel %vm469, %v3039, 0
        %v3119 = vsel %vm469, %v3040, 0
        %3121 = vmatprep.subr.bf16.mxu0 0
        %3122 = vmatpush1.bf16.msra.mxu0 %v3065
        %3123 = vmatprep.subr.bf16.mxu0 0
        %3124 = vmatpush1.bf16.msra.mxu0 %v3066
        %3125 = vmatprep.subr.bf16.mxu0 0
        %3126 = vmatpush1.bf16.msra.mxu0 %v3067
        %3127 = vmatprep.subr.bf16.mxu0 0
        %3128 = vmatpush1.bf16.msra.mxu0 %v3068
        %3129 = vmatprep.subr.bf16.mxu0 0
        %3130 = vmatpush1.bf16.msra.mxu0 0
        %3131 = vmatprep.subr.bf16.mxu0 0
        %3132 = vmatpush1.bf16.msra.mxu0 0
        %3133 = vmatprep.subr.bf16.mxu0 0
        %3134 = vmatpush1.bf16.msra.mxu0 0
        %3135 = vmatprep.subr.bf16.mxu0 0
        %3136 = vmatpush1.bf16.msra.mxu0 0
        %3137 = vmatprep.subr.bf16.mxu0 0
        %3138 = vmatpush1.bf16.msra.mxu0 0
        %3139 = vmatprep.subr.bf16.mxu0 0
        %3140 = vmatpush1.bf16.msra.mxu0 0
        %3141 = vmatprep.subr.bf16.mxu0 0
        %3142 = vmatpush1.bf16.msra.mxu0 0
        %3143 = vmatprep.subr.bf16.mxu0 0
        %3144 = vmatpush1.bf16.msra.mxu0 0
        %3145 = vmatprep.subr.bf16.mxu0 0
        %3146 = vmatpush1.bf16.msra.mxu0 0
        %3147 = vmatprep.subr.bf16.mxu0 0
        %3148 = vmatpush1.bf16.msra.mxu0 0
        %3149 = vmatprep.subr.bf16.mxu0 0
        %3150 = vmatpush1.bf16.msra.mxu0 0
        %3151 = vmatprep.subr.bf16.mxu0 0
        %3152 = vmatpush1.bf16.msra.mxu0 0
        %3153 = vmatprep.mubr.bf16.mxu0 0
        %3154 = vmatmul.mubr.bf16.gmra.mrb[0].mxu0 %v3074
        %v3155 = vpop.f32.mrb[0].mxu0
        %v3156 = vadd.f32 0.0, %v3155
        %v3157 = vpop.f32.mrb[0].mxu0
        %v3158 = vpop.f32.mrb[0].mxu0
        %v3159 = vadd.f32 0.0, %v3158
        %v3160 = vpop.f32.mrb[0].mxu0
        %3161 = vmatprep.mubr.bf16.mxu0 0
        %3162 = vmatmul.mubr.bf16.gmra.mrb[0].mxu0 %v3077
        %v3163 = vpop.f32.mrb[0].mxu0
        %v3164 = vadd.f32 0.0, %v3163
        %v3165 = vpop.f32.mrb[0].mxu0
        %v3166 = vpop.f32.mrb[0].mxu0
        %v3167 = vadd.f32 0.0, %v3166
        %v3168 = vpop.f32.mrb[0].mxu0
        %3169 = vmatprep.mubr.bf16.mxu0 0
        %3170 = vmatmul.mubr.bf16.gmra.mrb[0].mxu0 %v3080
        %v3171 = vpop.f32.mrb[0].mxu0
        %v3172 = vadd.f32 0.0, %v3171
        %v3173 = vpop.f32.mrb[0].mxu0
        %v3174 = vpop.f32.mrb[0].mxu0
        %v3175 = vadd.f32 0.0, %v3174
        %v3176 = vpop.f32.mrb[0].mxu0
        %3177 = vmatprep.mubr.bf16.mxu0 0
        %3178 = vmatmul.mubr.bf16.gmra.mrb[0].mxu0 %v3083
        %v3179 = vpop.f32.mrb[0].mxu0
        %v3180 = vadd.f32 0.0, %v3179
        %v3181 = vpop.f32.mrb[0].mxu0
        %v3182 = vpop.f32.mrb[0].mxu0
        %v3183 = vadd.f32 0.0, %v3182
        %v3184 = vpop.f32.mrb[0].mxu0
        %3185 = vmatprep.mubr.bf16.mxu0 0
        %3186 = vmatmul.mubr.bf16.gmra.mrb[0].mxu0 %v3086
        %v3187 = vpop.f32.mrb[0].mxu0
        %v3188 = vadd.f32 0.0, %v3187
        %v3189 = vpop.f32.mrb[0].mxu0
        %v3190 = vpop.f32.mrb[0].mxu0
        %v3191 = vadd.f32 0.0, %v3190
        %v3192 = vpop.f32.mrb[0].mxu0
        %3193 = vmatprep.mubr.bf16.mxu0 0
        %3194 = vmatmul.mubr.bf16.gmra.mrb[0].mxu0 %v3089
        %v3195 = vpop.f32.mrb[0].mxu0
        %v3196 = vadd.f32 0.0, %v3195
        %v3197 = vpop.f32.mrb[0].mxu0
        %v3198 = vpop.f32.mrb[0].mxu0
        %v3199 = vadd.f32 0.0, %v3198
        %v3200 = vpop.f32.mrb[0].mxu0
        %3201 = vmatprep.mubr.bf16.mxu0 0
        %3202 = vmatmul.mubr.bf16.gmra.mrb[0].mxu0 %v3092
        %v3203 = vpop.f32.mrb[0].mxu0
        %v3204 = vadd.f32 0.0, %v3203
        %v3205 = vpop.f32.mrb[0].mxu0
        %v3206 = vpop.f32.mrb[0].mxu0
        %v3207 = vadd.f32 0.0, %v3206
        %v3208 = vpop.f32.mrb[0].mxu0
        %3209 = vmatprep.mubr.bf16.mxu0 0
        %3210 = vmatmul.mubr.bf16.gmra.mrb[0].mxu0 %v3095
        %v3211 = vpop.f32.mrb[0].mxu0
        %v3212 = vadd.f32 0.0, %v3211
        %v3213 = vpop.f32.mrb[0].mxu0
        %v3214 = vpop.f32.mrb[0].mxu0
        %v3215 = vadd.f32 0.0, %v3214
        %v3216 = vpop.f32.mrb[0].mxu0
        %3217 = vmatprep.mubr.bf16.mxu0 0
        %3218 = vmatmul.mubr.bf16.gmra.mrb[0].mxu0 %v3098
        %v3219 = vpop.f32.mrb[0].mxu0
        %v3220 = vadd.f32 0.0, %v3219
        %v3221 = vpop.f32.mrb[0].mxu0
        %v3222 = vpop.f32.mrb[0].mxu0
        %v3223 = vadd.f32 0.0, %v3222
        %v3224 = vpop.f32.mrb[0].mxu0
        %3225 = vmatprep.mubr.bf16.mxu0 0
        %3226 = vmatmul.mubr.bf16.gmra.mrb[0].mxu0 %v3101
        %v3227 = vpop.f32.mrb[0].mxu0
        %v3228 = vadd.f32 0.0, %v3227
        %v3229 = vpop.f32.mrb[0].mxu0
        %v3230 = vpop.f32.mrb[0].mxu0
        %v3231 = vadd.f32 0.0, %v3230
        %v3232 = vpop.f32.mrb[0].mxu0
        %3233 = vmatprep.mubr.bf16.mxu0 0
        %3234 = vmatmul.mubr.bf16.gmra.mrb[0].mxu0 %v3104
        %v3235 = vpop.f32.mrb[0].mxu0
        %v3236 = vadd.f32 0.0, %v3235
        %v3237 = vpop.f32.mrb[0].mxu0
        %v3238 = vpop.f32.mrb[0].mxu0
        %v3239 = vadd.f32 0.0, %v3238
        %v3240 = vpop.f32.mrb[0].mxu0
        %3241 = vmatprep.mubr.bf16.mxu0 0
        %3242 = vmatmul.mubr.bf16.gmra.mrb[0].mxu0 %v3107
        %v3243 = vpop.f32.mrb[0].mxu0
        %v3244 = vadd.f32 0.0, %v3243
        %v3245 = vpop.f32.mrb[0].mxu0
        %v3246 = vpop.f32.mrb[0].mxu0
        %v3247 = vadd.f32 0.0, %v3246
        %v3248 = vpop.f32.mrb[0].mxu0
        %3249 = vmatprep.mubr.bf16.mxu0 0
        %3250 = vmatmul.mubr.bf16.gmra.mrb[0].mxu0 %v3110
        %v3251 = vpop.f32.mrb[0].mxu0
        %v3252 = vadd.f32 0.0, %v3251
        %v3253 = vpop.f32.mrb[0].mxu0
        %v3254 = vpop.f32.mrb[0].mxu0
        %v3255 = vadd.f32 0.0, %v3254
        %v3256 = vpop.f32.mrb[0].mxu0
        %3257 = vmatprep.mubr.bf16.mxu0 0
        %3258 = vmatmul.mubr.bf16.gmra.mrb[0].mxu0 %v3113
        %v3259 = vpop.f32.mrb[0].mxu0
        %v3260 = vadd.f32 0.0, %v3259
        %v3261 = vpop.f32.mrb[0].mxu0
        %v3262 = vpop.f32.mrb[0].mxu0
        %v3263 = vadd.f32 0.0, %v3262
        %v3264 = vpop.f32.mrb[0].mxu0
        %3265 = vmatprep.mubr.bf16.mxu0 0
        %3266 = vmatmul.mubr.bf16.gmra.mrb[0].mxu0 %v3116
        %v3267 = vpop.f32.mrb[0].mxu0
        %v3268 = vadd.f32 0.0, %v3267
        %v3269 = vpop.f32.mrb[0].mxu0
        %v3270 = vpop.f32.mrb[0].mxu0
        %v3271 = vadd.f32 0.0, %v3270
        %v3272 = vpop.f32.mrb[0].mxu0
        %3273 = vmatprep.mubr.bf16.mxu0 0
        %3274 = vmatmul.mubr.bf16.gmra.mrb[0].mxu0 %v3119
        %v3275 = vpop.f32.mrb[0].mxu0
        %v3276 = vadd.f32 0.0, %v3275
        %v3277 = vpop.f32.mrb[0].mxu0
        %v3278 = vpop.f32.mrb[0].mxu0
        %v3279 = vadd.f32 0.0, %v3278
        %v3280 = vpop.f32.mrb[0].mxu0
        %3281 = vdwg.mxu0
        %v3282 = vadd.f32 %v2835, %v3156
        %v3283 = vadd.f32 %v2838, %v3159
        %v3284 = vadd.f32 %v2843, %v3164
        %v3285 = vadd.f32 %v2846, %v3167
        %v3286 = vadd.f32 %v2851, %v3172
        %v3287 = vadd.f32 %v2854, %v3175
        %v3288 = vadd.f32 %v2859, %v3180
        %v3289 = vadd.f32 %v2862, %v3183
        %v3290 = vadd.f32 %v2867, %v3188
        %v3291 = vadd.f32 %v2870, %v3191
        %v3292 = vadd.f32 %v2875, %v3196
        %v3293 = vadd.f32 %v2878, %v3199
        %v3294 = vadd.f32 %v2883, %v3204
        %v3295 = vadd.f32 %v2886, %v3207
        %v3296 = vadd.f32 %v2891, %v3212
        %v3297 = vadd.f32 %v2894, %v3215
        %v3298 = vadd.f32 %v2899, %v3220
        %v3299 = vadd.f32 %v2902, %v3223
        %v3300 = vadd.f32 %v2907, %v3228
        %v3301 = vadd.f32 %v2910, %v3231
        %v3302 = vadd.f32 %v2915, %v3236
        %v3303 = vadd.f32 %v2918, %v3239
        %v3304 = vadd.f32 %v2923, %v3244
        %v3305 = vadd.f32 %v2926, %v3247
        %v3306 = vadd.f32 %v2931, %v3252
        %v3307 = vadd.f32 %v2934, %v3255
        %v3308 = vadd.f32 %v2939, %v3260
        %v3309 = vadd.f32 %v2942, %v3263
        %v3310 = vadd.f32 %v2947, %v3268
        %v3311 = vadd.f32 %v2950, %v3271
        %v3312 = vadd.f32 %v2955, %v3276
        %v3313 = vadd.f32 %v2958, %v3279
        %v3315 = vlaneseq
        %v3316 = vshrl.u32 %v3315, 7
        %v3317 = vsub.s32 0, %v3316
        %v3318 = vrot.slane %v1162, %v3317
        %v3320 = vadd.f32 %v3282, %v3318
        %v3321 = vadd.f32 %v3283, %v3318
        %v3322 = vadd.f32 %v3284, %v3318
        %v3323 = vadd.f32 %v3285, %v3318
        %v3324 = vadd.f32 %v3286, %v3318
        %v3325 = vadd.f32 %v3287, %v3318
        %v3326 = vadd.f32 %v3288, %v3318
        %v3327 = vadd.f32 %v3289, %v3318
        %v3328 = vadd.f32 %v3290, %v3318
        %v3329 = vadd.f32 %v3291, %v3318
        %v3330 = vadd.f32 %v3292, %v3318
        %v3331 = vadd.f32 %v3293, %v3318
        %v3332 = vadd.f32 %v3294, %v3318
        %v3333 = vadd.f32 %v3295, %v3318
        %v3334 = vadd.f32 %v3296, %v3318
        %v3335 = vadd.f32 %v3297, %v3318
        %v3336 = vadd.f32 %v3298, %v3318
        %v3337 = vadd.f32 %v3299, %v3318
        %v3338 = vadd.f32 %v3300, %v3318
        %v3339 = vadd.f32 %v3301, %v3318
        %v3340 = vadd.f32 %v3302, %v3318
        %v3341 = vadd.f32 %v3303, %v3318
        %v3342 = vadd.f32 %v3304, %v3318
        %v3343 = vadd.f32 %v3305, %v3318
        %v3344 = vadd.f32 %v3306, %v3318
        %v3345 = vadd.f32 %v3307, %v3318
        %v3346 = vadd.f32 %v3308, %v3318
        %v3347 = vadd.f32 %v3309, %v3318
        %v3348 = vadd.f32 %v3310, %v3318
        %v3349 = vadd.f32 %v3311, %v3318
        %v3350 = vadd.f32 %v3312, %v3318
        %v3351 = vadd.f32 %v3313, %v3318
        %v3352 = vld [vmem:[%s425] sm:$0x1]
        %v3354 = vlaneseq
        %v3355 = vshrl.u32 %v3354, 7
        %v3356 = vsub.s32 0, %v3355
        %v3357 = vrot.slane %v3352, %v3356
        %v3359 = vadd.f32 %v3320, %v3357
        %v3360 = vadd.f32 %v3321, %v3357
        %v3361 = vadd.f32 %v3322, %v3357
        %v3362 = vadd.f32 %v3323, %v3357
        %v3363 = vadd.f32 %v3324, %v3357
        %v3364 = vadd.f32 %v3325, %v3357
        %v3365 = vadd.f32 %v3326, %v3357
        %v3366 = vadd.f32 %v3327, %v3357
        %v3367 = vadd.f32 %v3328, %v3357
        %v3368 = vadd.f32 %v3329, %v3357
        %v3369 = vadd.f32 %v3330, %v3357
        %v3370 = vadd.f32 %v3331, %v3357
        %v3371 = vadd.f32 %v3332, %v3357
        %v3372 = vadd.f32 %v3333, %v3357
        %v3373 = vadd.f32 %v3334, %v3357
        %v3374 = vadd.f32 %v3335, %v3357
        %v3375 = vadd.f32 %v3336, %v3357
        %v3376 = vadd.f32 %v3337, %v3357
        %v3377 = vadd.f32 %v3338, %v3357
        %v3378 = vadd.f32 %v3339, %v3357
        %v3379 = vadd.f32 %v3340, %v3357
        %v3380 = vadd.f32 %v3341, %v3357
        %v3381 = vadd.f32 %v3342, %v3357
        %v3382 = vadd.f32 %v3343, %v3357
        %v3383 = vadd.f32 %v3344, %v3357
        %v3384 = vadd.f32 %v3345, %v3357
        %v3385 = vadd.f32 %v3346, %v3357
        %v3386 = vadd.f32 %v3347, %v3357
        %v3387 = vadd.f32 %v3348, %v3357
        %v3388 = vadd.f32 %v3349, %v3357
        %v3389 = vadd.f32 %v3350, %v3357
        %v3390 = vadd.f32 %v3351, %v3357
        %v3391 = vld [vmem:[%s9] sm:$0xff]
        %v3392 = vld [vmem:[%s9 + $0x8] sm:$0xff]
        %v3393 = vld [vmem:[%s9 + $0x10] sm:$0xff]
        %v3394 = vld [vmem:[%s9 + $0x18] sm:$0xff]
        %v3395 = vld [vmem:[%s9 + $0x20] sm:$0xff]
        %v3396 = vld [vmem:[%s9 + $0x28] sm:$0xff]
        %v3397 = vld [vmem:[%s9 + $0x30] sm:$0xff]
        %v3398 = vld [vmem:[%s9 + $0x38] sm:$0xff]
        %v3399 = vld [vmem:[%s7] sm:$0x1]
        %v3400 = vld [vmem:[%s8] sm:$0x1]
        %v3401 = vsel %vm469, %v3359, 0.0
        %v3402 = vsel %vm469, %v3360, 0.0
        %v3403 = vadd.f32 %v3401, %v3402
        %v3404 = vsel %vm469, %v3361, 0.0
        %v3405 = vadd.f32 %v3403, %v3404
        %v3406 = vsel %vm469, %v3362, 0.0
        %v3407 = vadd.f32 %v3405, %v3406
        %v3408 = vsel %vm469, %v3363, 0.0
        %v3409 = vadd.f32 %v3407, %v3408
        %v3410 = vsel %vm469, %v3364, 0.0
        %v3411 = vadd.f32 %v3409, %v3410
        %v3412 = vsel %vm469, %v3365, 0.0
        %v3413 = vadd.f32 %v3411, %v3412
        %v3414 = vsel %vm469, %v3366, 0.0
        %v3415 = vadd.f32 %v3413, %v3414
        %v3416 = vsel %vm469, %v3367, 0.0
        %v3417 = vadd.f32 %v3415, %v3416
        %v3418 = vsel %vm469, %v3368, 0.0
        %v3419 = vadd.f32 %v3417, %v3418
        %v3420 = vsel %vm469, %v3369, 0.0
        %v3421 = vadd.f32 %v3419, %v3420
        %v3422 = vsel %vm469, %v3370, 0.0
        %v3423 = vadd.f32 %v3421, %v3422
        %v3424 = vsel %vm469, %v3371, 0.0
        %v3425 = vadd.f32 %v3423, %v3424
        %v3426 = vsel %vm469, %v3372, 0.0
        %v3427 = vadd.f32 %v3425, %v3426
        %v3428 = vsel %vm469, %v3373, 0.0
        %v3429 = vadd.f32 %v3427, %v3428
        %v3430 = vsel %vm469, %v3374, 0.0
        %v3431 = vadd.f32 %v3429, %v3430
        %v3432 = vsel %vm469, %v3375, 0.0
        %v3433 = vadd.f32 %v3431, %v3432
        %v3434 = vsel %vm469, %v3376, 0.0
        %v3435 = vadd.f32 %v3433, %v3434
        %v3436 = vsel %vm469, %v3377, 0.0
        %v3437 = vadd.f32 %v3435, %v3436
        %v3438 = vsel %vm469, %v3378, 0.0
        %v3439 = vadd.f32 %v3437, %v3438
        %v3440 = vsel %vm469, %v3379, 0.0
        %v3441 = vadd.f32 %v3439, %v3440
        %v3442 = vsel %vm469, %v3380, 0.0
        %v3443 = vadd.f32 %v3441, %v3442
        %v3444 = vsel %vm469, %v3381, 0.0
        %v3445 = vadd.f32 %v3443, %v3444
        %v3446 = vsel %vm469, %v3382, 0.0
        %v3447 = vadd.f32 %v3445, %v3446
        %v3448 = vsel %vm469, %v3383, 0.0
        %v3449 = vadd.f32 %v3447, %v3448
        %v3450 = vsel %vm469, %v3384, 0.0
        %v3451 = vadd.f32 %v3449, %v3450
        %v3452 = vsel %vm469, %v3385, 0.0
        %v3453 = vadd.f32 %v3451, %v3452
        %v3454 = vsel %vm469, %v3386, 0.0
        %v3455 = vadd.f32 %v3453, %v3454
        %v3456 = vsel %vm469, %v3387, 0.0
        %v3457 = vadd.f32 %v3455, %v3456
        %v3458 = vsel %vm469, %v3388, 0.0
        %v3459 = vadd.f32 %v3457, %v3458
        %v3460 = vsel %vm469, %v3389, 0.0
        %v3461 = vadd.f32 %v3459, %v3460
        %v3462 = vsel %vm469, %v3390, 0.0
        %v3463 = vadd.f32 %v3461, %v3462
        %v3464 = vrot.slane %v3463, 4
        %v3465 = vadd.f32 %v3463, %v3464
        %v3466 = vrot.slane %v3465, 2
        %v3467 = vadd.f32 %v3465, %v3466
        %v3468 = vrot.slane %v3467, 1
        %v3469 = vadd.f32 %v3467, %v3468
        %v3470 = vmul.f32 %v3359, %v3359
        %v3471 = vmul.f32 %v3360, %v3360
        %v3472 = vmul.f32 %v3361, %v3361
        %v3473 = vmul.f32 %v3362, %v3362
        %v3474 = vmul.f32 %v3363, %v3363
        %v3475 = vmul.f32 %v3364, %v3364
        %v3476 = vmul.f32 %v3365, %v3365
        %v3477 = vmul.f32 %v3366, %v3366
        %v3478 = vmul.f32 %v3367, %v3367
        %v3479 = vmul.f32 %v3368, %v3368
        %v3480 = vmul.f32 %v3369, %v3369
        %v3481 = vmul.f32 %v3370, %v3370
        %v3482 = vmul.f32 %v3371, %v3371
        %v3483 = vmul.f32 %v3372, %v3372
        %v3484 = vmul.f32 %v3373, %v3373
        %v3485 = vmul.f32 %v3374, %v3374
        %v3486 = vmul.f32 %v3375, %v3375
        %v3487 = vmul.f32 %v3376, %v3376
        %v3488 = vmul.f32 %v3377, %v3377
        %v3489 = vmul.f32 %v3378, %v3378
        %v3490 = vmul.f32 %v3379, %v3379
        %v3491 = vmul.f32 %v3380, %v3380
        %v3492 = vmul.f32 %v3381, %v3381
        %v3493 = vmul.f32 %v3382, %v3382
        %v3494 = vmul.f32 %v3383, %v3383
        %v3495 = vmul.f32 %v3384, %v3384
        %v3496 = vmul.f32 %v3385, %v3385
        %v3497 = vmul.f32 %v3386, %v3386
        %v3498 = vmul.f32 %v3387, %v3387
        %v3499 = vmul.f32 %v3388, %v3388
        %v3500 = vmul.f32 %v3389, %v3389
        %v3501 = vmul.f32 %v3390, %v3390
        %v3502 = vsel %vm469, %v3470, 0.0
        %v3503 = vsel %vm469, %v3471, 0.0
        %v3504 = vadd.f32 %v3502, %v3503
        %v3505 = vsel %vm469, %v3472, 0.0
        %v3506 = vadd.f32 %v3504, %v3505
        %v3507 = vsel %vm469, %v3473, 0.0
        %v3508 = vadd.f32 %v3506, %v3507
        %v3509 = vsel %vm469, %v3474, 0.0
        %v3510 = vadd.f32 %v3508, %v3509
        %v3511 = vsel %vm469, %v3475, 0.0
        %v3512 = vadd.f32 %v3510, %v3511
        %v3513 = vsel %vm469, %v3476, 0.0
        %v3514 = vadd.f32 %v3512, %v3513
        %v3515 = vsel %vm469, %v3477, 0.0
        %v3516 = vadd.f32 %v3514, %v3515
        %v3517 = vsel %vm469, %v3478, 0.0
        %v3518 = vadd.f32 %v3516, %v3517
        %v3519 = vsel %vm469, %v3479, 0.0
        %v3520 = vadd.f32 %v3518, %v3519
        %v3521 = vsel %vm469, %v3480, 0.0
        %v3522 = vadd.f32 %v3520, %v3521
        %v3523 = vsel %vm469, %v3481, 0.0
        %v3524 = vadd.f32 %v3522, %v3523
        %v3525 = vsel %vm469, %v3482, 0.0
        %v3526 = vadd.f32 %v3524, %v3525
        %v3527 = vsel %vm469, %v3483, 0.0
        %v3528 = vadd.f32 %v3526, %v3527
        %v3529 = vsel %vm469, %v3484, 0.0
        %v3530 = vadd.f32 %v3528, %v3529
        %v3531 = vsel %vm469, %v3485, 0.0
        %v3532 = vadd.f32 %v3530, %v3531
        %v3533 = vsel %vm469, %v3486, 0.0
        %v3534 = vadd.f32 %v3532, %v3533
        %v3535 = vsel %vm469, %v3487, 0.0
        %v3536 = vadd.f32 %v3534, %v3535
        %v3537 = vsel %vm469, %v3488, 0.0
        %v3538 = vadd.f32 %v3536, %v3537
        %v3539 = vsel %vm469, %v3489, 0.0
        %v3540 = vadd.f32 %v3538, %v3539
        %v3541 = vsel %vm469, %v3490, 0.0
        %v3542 = vadd.f32 %v3540, %v3541
        %v3543 = vsel %vm469, %v3491, 0.0
        %v3544 = vadd.f32 %v3542, %v3543
        %v3545 = vsel %vm469, %v3492, 0.0
        %v3546 = vadd.f32 %v3544, %v3545
        %v3547 = vsel %vm469, %v3493, 0.0
        %v3548 = vadd.f32 %v3546, %v3547
        %v3549 = vsel %vm469, %v3494, 0.0
        %v3550 = vadd.f32 %v3548, %v3549
        %v3551 = vsel %vm469, %v3495, 0.0
        %v3552 = vadd.f32 %v3550, %v3551
        %v3553 = vsel %vm469, %v3496, 0.0
        %v3554 = vadd.f32 %v3552, %v3553
        %v3555 = vsel %vm469, %v3497, 0.0
        %v3556 = vadd.f32 %v3554, %v3555
        %v3557 = vsel %vm469, %v3498, 0.0
        %v3558 = vadd.f32 %v3556, %v3557
        %v3559 = vsel %vm469, %v3499, 0.0
        %v3560 = vadd.f32 %v3558, %v3559
        %v3561 = vsel %vm469, %v3500, 0.0
        %v3562 = vadd.f32 %v3560, %v3561
        %v3563 = vsel %vm469, %v3501, 0.0
        %v3564 = vadd.f32 %v3562, %v3563
        %v3565 = vrot.slane %v3564, 4
        %v3566 = vadd.f32 %v3564, %v3565
        %v3567 = vrot.slane %v3566, 2
        %v3568 = vadd.f32 %v3566, %v3567
        %v3569 = vrot.slane %v3568, 1
        %v3570 = vadd.f32 %v3568, %v3569
        %v3572 = vsel %vm469, %v3469, 0
        %3574 = vmatprep.subr.mxu0 0.0
        %3575 = vmatpush1.msra.mxu0 %v3391
        %3576 = vmatprep.subr.mxu0 0.0
        %3577 = vmatpush1.msra.mxu0 %v3392
        %3578 = vmatprep.subr.mxu0 0.0
        %3579 = vmatpush1.msra.mxu0 %v3393
        %3580 = vmatprep.subr.mxu0 0.0
        %3581 = vmatpush1.msra.mxu0 %v3394
        %3582 = vmatprep.subr.mxu0 0.0
        %3583 = vmatpush1.msra.mxu0 %v3395
        %3584 = vmatprep.subr.mxu0 0.0
        %3585 = vmatpush1.msra.mxu0 %v3396
        %3586 = vmatprep.subr.mxu0 0.0
        %3587 = vmatpush1.msra.mxu0 %v3397
        %3588 = vmatprep.subr.mxu0 0.0
        %3589 = vmatpush1.msra.mxu0 %v3398
        %3590 = vmatprep.subr.mxu0 0.0
        %3591 = vmatpush1.msra.mxu0 0.0
        %3592 = vmatprep.subr.mxu0 0.0
        %3593 = vmatpush1.msra.mxu0 0.0
        %3594 = vmatprep.subr.mxu0 0.0
        %3595 = vmatpush1.msra.mxu0 0.0
        %3596 = vmatprep.subr.mxu0 0.0
        %3597 = vmatpush1.msra.mxu0 0.0
        %3598 = vmatprep.subr.mxu0 0.0
        %3599 = vmatpush1.msra.mxu0 0.0
        %3600 = vmatprep.subr.mxu0 0.0
        %3601 = vmatpush1.msra.mxu0 0.0
        %3602 = vmatprep.subr.mxu0 0.0
        %3603 = vmatpush1.msra.mxu0 0.0
        %3604 = vmatprep.subr.mxu0 0.0
        %3605 = vmatpush1.msra.mxu0 0.0
        %3606 = vmatprep.subr.mxu0 0.0
        %3607 = vmatpush1.msra.mxu0 0.0
        %3608 = vmatprep.subr.mxu0 0.0
        %3609 = vmatpush1.msra.mxu0 0.0
        %3610 = vmatprep.subr.mxu0 0.0
        %3611 = vmatpush1.msra.mxu0 0.0
        %3612 = vmatprep.subr.mxu0 0.0
        %3613 = vmatpush1.msra.mxu0 0.0
        %3614 = vmatprep.subr.mxu0 0.0
        %3615 = vmatpush1.msra.mxu0 0.0
        %3616 = vmatprep.subr.mxu0 0.0
        %3617 = vmatpush1.msra.mxu0 0.0
        %3618 = vmatprep.subr.mxu0 0.0
        %3619 = vmatpush1.msra.mxu0 0.0
        %3620 = vmatprep.subr.mxu0 0.0
        %3621 = vmatpush1.msra.mxu0 0.0
        %3622 = vmatprep.subr.mxu0 0.0
        %3623 = vmatpush1.msra.mxu0 0.0
        %3624 = vmatprep.subr.mxu0 0.0
        %3625 = vmatpush1.msra.mxu0 0.0
        %3626 = vmatprep.subr.mxu0 0.0
        %3627 = vmatpush1.msra.mxu0 0.0
        %3628 = vmatprep.subr.mxu0 0.0
        %3629 = vmatpush1.msra.mxu0 0.0
        %3630 = vmatprep.subr.mxu0 0.0
        %3631 = vmatpush1.msra.mxu0 0.0
        %3632 = vmatprep.subr.mxu0 0.0
        %3633 = vmatpush1.msra.mxu0 0.0
        %3634 = vmatprep.subr.mxu0 0.0
        %3635 = vmatpush1.msra.mxu0 0.0
        %3636 = vmatprep.subr.mxu0 0.0
        %3637 = vmatpush1.msra.mxu0 0.0
        %3638 = vmatprep.mubr.f32.mxu0 0.0
        %3639 = vmatmul.mubr.f32.gmra.mrb[0].mxu0 %v3572
        %v3640 = vpop.f32.mrb[0].mxu0
        %v3641 = vadd.f32 0.0, %v3640
        %v3642 = vpop.f32.mrb[0].mxu0
        %3643 = vdwg.mxu0
        %v3645 = vsel %vm469, %v3570, 0
        %3647 = vmatprep.subr.mxu0 0.0
        %3648 = vmatpush1.msra.mxu0 %v3391
        %3649 = vmatprep.subr.mxu0 0.0
        %3650 = vmatpush1.msra.mxu0 %v3392
        %3651 = vmatprep.subr.mxu0 0.0
        %3652 = vmatpush1.msra.mxu0 %v3393
        %3653 = vmatprep.subr.mxu0 0.0
        %3654 = vmatpush1.msra.mxu0 %v3394
        %3655 = vmatprep.subr.mxu0 0.0
        %3656 = vmatpush1.msra.mxu0 %v3395
        %3657 = vmatprep.subr.mxu0 0.0
        %3658 = vmatpush1.msra.mxu0 %v3396
        %3659 = vmatprep.subr.mxu0 0.0
        %3660 = vmatpush1.msra.mxu0 %v3397
        %3661 = vmatprep.subr.mxu0 0.0
        %3662 = vmatpush1.msra.mxu0 %v3398
        %3663 = vmatprep.subr.mxu0 0.0
        %3664 = vmatpush1.msra.mxu0 0.0
        %3665 = vmatprep.subr.mxu0 0.0
        %3666 = vmatpush1.msra.mxu0 0.0
        %3667 = vmatprep.subr.mxu0 0.0
        %3668 = vmatpush1.msra.mxu0 0.0
        %3669 = vmatprep.subr.mxu0 0.0
        %3670 = vmatpush1.msra.mxu0 0.0
        %3671 = vmatprep.subr.mxu0 0.0
        %3672 = vmatpush1.msra.mxu0 0.0
        %3673 = vmatprep.subr.mxu0 0.0
        %3674 = vmatpush1.msra.mxu0 0.0
        %3675 = vmatprep.subr.mxu0 0.0
        %3676 = vmatpush1.msra.mxu0 0.0
        %3677 = vmatprep.subr.mxu0 0.0
        %3678 = vmatpush1.msra.mxu0 0.0
        %3679 = vmatprep.subr.mxu0 0.0
        %3680 = vmatpush1.msra.mxu0 0.0
        %3681 = vmatprep.subr.mxu0 0.0
        %3682 = vmatpush1.msra.mxu0 0.0
        %3683 = vmatprep.subr.mxu0 0.0
        %3684 = vmatpush1.msra.mxu0 0.0
        %3685 = vmatprep.subr.mxu0 0.0
        %3686 = vmatpush1.msra.mxu0 0.0
        %3687 = vmatprep.subr.mxu0 0.0
        %3688 = vmatpush1.msra.mxu0 0.0
        %3689 = vmatprep.subr.mxu0 0.0
        %3690 = vmatpush1.msra.mxu0 0.0
        %3691 = vmatprep.subr.mxu0 0.0
        %3692 = vmatpush1.msra.mxu0 0.0
        %3693 = vmatprep.subr.mxu0 0.0
        %3694 = vmatpush1.msra.mxu0 0.0
        %3695 = vmatprep.subr.mxu0 0.0
        %3696 = vmatpush1.msra.mxu0 0.0
        %3697 = vmatprep.subr.mxu0 0.0
        %3698 = vmatpush1.msra.mxu0 0.0
        %3699 = vmatprep.subr.mxu0 0.0
        %3700 = vmatpush1.msra.mxu0 0.0
        %3701 = vmatprep.subr.mxu0 0.0
        %3702 = vmatpush1.msra.mxu0 0.0
        %3703 = vmatprep.subr.mxu0 0.0
        %3704 = vmatpush1.msra.mxu0 0.0
        %3705 = vmatprep.subr.mxu0 0.0
        %3706 = vmatpush1.msra.mxu0 0.0
        %3707 = vmatprep.subr.mxu0 0.0
        %3708 = vmatpush1.msra.mxu0 0.0
        %3709 = vmatprep.subr.mxu0 0.0
        %3710 = vmatpush1.msra.mxu0 0.0
        %3711 = vmatprep.mubr.f32.mxu0 0.0
        %3712 = vmatmul.mubr.f32.gmra.mrb[0].mxu0 %v3645
        %v3713 = vpop.f32.mrb[0].mxu0
        %v3714 = vadd.f32 0.0, %v3713
        %v3715 = vpop.f32.mrb[0].mxu0
        %3716 = vdwg.mxu0
        %v3717 = vmul.f32 %v3641, %v3641
        %v3718 = vsub.f32 %v3714, %v3717
        %v3719 = vadd.f32 %v3718, 1e-05
        %v3720 = vrsqrt.pop %v3719
        %v3721 = vlaneseq
        %v3722 = vshrl.u32 %v3721, 7
        %v3723 = vsub.s32 0, %v3722
        %v3724 = vrot.slane %v3641, %v3723
        %v3725 = vsub.f32 %v3359, %v3724
        %v3726 = vsub.f32 %v3360, %v3724
        %v3727 = vsub.f32 %v3361, %v3724
        %v3728 = vsub.f32 %v3362, %v3724
        %v3729 = vsub.f32 %v3363, %v3724
        %v3730 = vsub.f32 %v3364, %v3724
        %v3731 = vsub.f32 %v3365, %v3724
        %v3732 = vsub.f32 %v3366, %v3724
        %v3733 = vsub.f32 %v3367, %v3724
        %v3734 = vsub.f32 %v3368, %v3724
        %v3735 = vsub.f32 %v3369, %v3724
        %v3736 = vsub.f32 %v3370, %v3724
        %v3737 = vsub.f32 %v3371, %v3724
        %v3738 = vsub.f32 %v3372, %v3724
        %v3739 = vsub.f32 %v3373, %v3724
        %v3740 = vsub.f32 %v3374, %v3724
        %v3741 = vsub.f32 %v3375, %v3724
        %v3742 = vsub.f32 %v3376, %v3724
        %v3743 = vsub.f32 %v3377, %v3724
        %v3744 = vsub.f32 %v3378, %v3724
        %v3745 = vsub.f32 %v3379, %v3724
        %v3746 = vsub.f32 %v3380, %v3724
        %v3747 = vsub.f32 %v3381, %v3724
        %v3748 = vsub.f32 %v3382, %v3724
        %v3749 = vsub.f32 %v3383, %v3724
        %v3750 = vsub.f32 %v3384, %v3724
        %v3751 = vsub.f32 %v3385, %v3724
        %v3752 = vsub.f32 %v3386, %v3724
        %v3753 = vsub.f32 %v3387, %v3724
        %v3754 = vsub.f32 %v3388, %v3724
        %v3755 = vsub.f32 %v3389, %v3724
        %v3756 = vsub.f32 %v3390, %v3724
        %v3757 = vlaneseq
        %v3758 = vshrl.u32 %v3757, 7
        %v3759 = vsub.s32 0, %v3758
        %v3760 = vrot.slane %v3720, %v3759
        %v3761 = vmul.f32 %v3725, %v3760
        %v3762 = vmul.f32 %v3726, %v3760
        %v3763 = vmul.f32 %v3727, %v3760
        %v3764 = vmul.f32 %v3728, %v3760
        %v3765 = vmul.f32 %v3729, %v3760
        %v3766 = vmul.f32 %v3730, %v3760
        %v3767 = vmul.f32 %v3731, %v3760
        %v3768 = vmul.f32 %v3732, %v3760
        %v3769 = vmul.f32 %v3733, %v3760
        %v3770 = vmul.f32 %v3734, %v3760
        %v3771 = vmul.f32 %v3735, %v3760
        %v3772 = vmul.f32 %v3736, %v3760
        %v3773 = vmul.f32 %v3737, %v3760
        %v3774 = vmul.f32 %v3738, %v3760
        %v3775 = vmul.f32 %v3739, %v3760
        %v3776 = vmul.f32 %v3740, %v3760
        %v3777 = vmul.f32 %v3741, %v3760
        %v3778 = vmul.f32 %v3742, %v3760
        %v3779 = vmul.f32 %v3743, %v3760
        %v3780 = vmul.f32 %v3744, %v3760
        %v3781 = vmul.f32 %v3745, %v3760
        %v3782 = vmul.f32 %v3746, %v3760
        %v3783 = vmul.f32 %v3747, %v3760
        %v3784 = vmul.f32 %v3748, %v3760
        %v3785 = vmul.f32 %v3749, %v3760
        %v3786 = vmul.f32 %v3750, %v3760
        %v3787 = vmul.f32 %v3751, %v3760
        %v3788 = vmul.f32 %v3752, %v3760
        %v3789 = vmul.f32 %v3753, %v3760
        %v3790 = vmul.f32 %v3754, %v3760
        %v3791 = vmul.f32 %v3755, %v3760
        %v3792 = vmul.f32 %v3756, %v3760
        %v3794 = vlaneseq
        %v3795 = vshrl.u32 %v3794, 7
        %v3796 = vsub.s32 0, %v3795
        %v3797 = vrot.slane %v3399, %v3796
        %v3799 = vmul.f32 %v3761, %v3797
        %v3800 = vmul.f32 %v3762, %v3797
        %v3801 = vmul.f32 %v3763, %v3797
        %v3802 = vmul.f32 %v3764, %v3797
        %v3803 = vmul.f32 %v3765, %v3797
        %v3804 = vmul.f32 %v3766, %v3797
        %v3805 = vmul.f32 %v3767, %v3797
        %v3806 = vmul.f32 %v3768, %v3797
        %v3807 = vmul.f32 %v3769, %v3797
        %v3808 = vmul.f32 %v3770, %v3797
        %v3809 = vmul.f32 %v3771, %v3797
        %v3810 = vmul.f32 %v3772, %v3797
        %v3811 = vmul.f32 %v3773, %v3797
        %v3812 = vmul.f32 %v3774, %v3797
        %v3813 = vmul.f32 %v3775, %v3797
        %v3814 = vmul.f32 %v3776, %v3797
        %v3815 = vmul.f32 %v3777, %v3797
        %v3816 = vmul.f32 %v3778, %v3797
        %v3817 = vmul.f32 %v3779, %v3797
        %v3818 = vmul.f32 %v3780, %v3797
        %v3819 = vmul.f32 %v3781, %v3797
        %v3820 = vmul.f32 %v3782, %v3797
        %v3821 = vmul.f32 %v3783, %v3797
        %v3822 = vmul.f32 %v3784, %v3797
        %v3823 = vmul.f32 %v3785, %v3797
        %v3824 = vmul.f32 %v3786, %v3797
        %v3825 = vmul.f32 %v3787, %v3797
        %v3826 = vmul.f32 %v3788, %v3797
        %v3827 = vmul.f32 %v3789, %v3797
        %v3828 = vmul.f32 %v3790, %v3797
        %v3829 = vmul.f32 %v3791, %v3797
        %v3830 = vmul.f32 %v3792, %v3797
        %v3832 = vlaneseq
        %v3833 = vshrl.u32 %v3832, 7
        %v3834 = vsub.s32 0, %v3833
        %v3835 = vrot.slane %v3400, %v3834
        %v3837 = vadd.f32 %v3799, %v3835
        %v3838 = vadd.f32 %v3800, %v3835
        %v3839 = vadd.f32 %v3801, %v3835
        %v3840 = vadd.f32 %v3802, %v3835
        %v3841 = vadd.f32 %v3803, %v3835
        %v3842 = vadd.f32 %v3804, %v3835
        %v3843 = vadd.f32 %v3805, %v3835
        %v3844 = vadd.f32 %v3806, %v3835
        %v3845 = vadd.f32 %v3807, %v3835
        %v3846 = vadd.f32 %v3808, %v3835
        %v3847 = vadd.f32 %v3809, %v3835
        %v3848 = vadd.f32 %v3810, %v3835
        %v3849 = vadd.f32 %v3811, %v3835
        %v3850 = vadd.f32 %v3812, %v3835
        %v3851 = vadd.f32 %v3813, %v3835
        %v3852 = vadd.f32 %v3814, %v3835
        %v3853 = vadd.f32 %v3815, %v3835
        %v3854 = vadd.f32 %v3816, %v3835
        %v3855 = vadd.f32 %v3817, %v3835
        %v3856 = vadd.f32 %v3818, %v3835
        %v3857 = vadd.f32 %v3819, %v3835
        %v3858 = vadd.f32 %v3820, %v3835
        %v3859 = vadd.f32 %v3821, %v3835
        %v3860 = vadd.f32 %v3822, %v3835
        %v3861 = vadd.f32 %v3823, %v3835
        %v3862 = vadd.f32 %v3824, %v3835
        %v3863 = vadd.f32 %v3825, %v3835
        %v3864 = vadd.f32 %v3826, %v3835
        %v3865 = vadd.f32 %v3827, %v3835
        %v3866 = vadd.f32 %v3828, %v3835
        %v3867 = vadd.f32 %v3829, %v3835
        %v3868 = vadd.f32 %v3830, %v3835
        %vm3869 = vcmp.gt.f32.partialorder %v3837, 0.0
        %vm3870 = vcmp.gt.f32.partialorder %v3838, 0.0
        %vm3871 = vcmp.gt.f32.partialorder %v3839, 0.0
        %vm3872 = vcmp.gt.f32.partialorder %v3840, 0.0
        %vm3873 = vcmp.gt.f32.partialorder %v3841, 0.0
        %vm3874 = vcmp.gt.f32.partialorder %v3842, 0.0
        %vm3875 = vcmp.gt.f32.partialorder %v3843, 0.0
        %vm3876 = vcmp.gt.f32.partialorder %v3844, 0.0
        %vm3877 = vcmp.gt.f32.partialorder %v3845, 0.0
        %vm3878 = vcmp.gt.f32.partialorder %v3846, 0.0
        %vm3879 = vcmp.gt.f32.partialorder %v3847, 0.0
        %vm3880 = vcmp.gt.f32.partialorder %v3848, 0.0
        %vm3881 = vcmp.gt.f32.partialorder %v3849, 0.0
        %vm3882 = vcmp.gt.f32.partialorder %v3850, 0.0
        %vm3883 = vcmp.gt.f32.partialorder %v3851, 0.0
        %vm3884 = vcmp.gt.f32.partialorder %v3852, 0.0
        %vm3885 = vcmp.gt.f32.partialorder %v3853, 0.0
        %vm3886 = vcmp.gt.f32.partialorder %v3854, 0.0
        %vm3887 = vcmp.gt.f32.partialorder %v3855, 0.0
        %vm3888 = vcmp.gt.f32.partialorder %v3856, 0.0
        %vm3889 = vcmp.gt.f32.partialorder %v3857, 0.0
        %vm3890 = vcmp.gt.f32.partialorder %v3858, 0.0
        %vm3891 = vcmp.gt.f32.partialorder %v3859, 0.0
        %vm3892 = vcmp.gt.f32.partialorder %v3860, 0.0
        %vm3893 = vcmp.gt.f32.partialorder %v3861, 0.0
        %vm3894 = vcmp.gt.f32.partialorder %v3862, 0.0
        %vm3895 = vcmp.gt.f32.partialorder %v3863, 0.0
        %vm3896 = vcmp.gt.f32.partialorder %v3864, 0.0
        %vm3897 = vcmp.gt.f32.partialorder %v3865, 0.0
        %vm3898 = vcmp.gt.f32.partialorder %v3866, 0.0
        %vm3899 = vcmp.gt.f32.partialorder %v3867, 0.0
        %vm3900 = vcmp.gt.f32.partialorder %v3868, 0.0
        %v3901 = vmul.f32 %v3837, 1.442695
        %v3902 = vpow.pop %v3901
        %v3903 = vmul.f32 %v3838, 1.442695
        %v3904 = vpow.pop %v3903
        %v3905 = vmul.f32 %v3839, 1.442695
        %v3906 = vpow.pop %v3905
        %v3907 = vmul.f32 %v3840, 1.442695
        %v3908 = vpow.pop %v3907
        %v3909 = vmul.f32 %v3841, 1.442695
        %v3910 = vpow.pop %v3909
        %v3911 = vmul.f32 %v3842, 1.442695
        %v3912 = vpow.pop %v3911
        %v3913 = vmul.f32 %v3843, 1.442695
        %v3914 = vpow.pop %v3913
        %v3915 = vmul.f32 %v3844, 1.442695
        %v3916 = vpow.pop %v3915
        %v3917 = vmul.f32 %v3845, 1.442695
        %v3918 = vpow.pop %v3917
        %v3919 = vmul.f32 %v3846, 1.442695
        %v3920 = vpow.pop %v3919
        %v3921 = vmul.f32 %v3847, 1.442695
        %v3922 = vpow.pop %v3921
        %v3923 = vmul.f32 %v3848, 1.442695
        %v3924 = vpow.pop %v3923
        %v3925 = vmul.f32 %v3849, 1.442695
        %v3926 = vpow.pop %v3925
        %v3927 = vmul.f32 %v3850, 1.442695
        %v3928 = vpow.pop %v3927
        %v3929 = vmul.f32 %v3851, 1.442695
        %v3930 = vpow.pop %v3929
        %v3931 = vmul.f32 %v3852, 1.442695
        %v3932 = vpow.pop %v3931
        %v3933 = vmul.f32 %v3853, 1.442695
        %v3934 = vpow.pop %v3933
        %v3935 = vmul.f32 %v3854, 1.442695
        %v3936 = vpow.pop %v3935
        %v3937 = vmul.f32 %v3855, 1.442695
        %v3938 = vpow.pop %v3937
        %v3939 = vmul.f32 %v3856, 1.442695
        %v3940 = vpow.pop %v3939
        %v3941 = vmul.f32 %v3857, 1.442695
        %v3942 = vpow.pop %v3941
        %v3943 = vmul.f32 %v3858, 1.442695
        %v3944 = vpow.pop %v3943
        %v3945 = vmul.f32 %v3859, 1.442695
        %v3946 = vpow.pop %v3945
        %v3947 = vmul.f32 %v3860, 1.442695
        %v3948 = vpow.pop %v3947
        %v3949 = vmul.f32 %v3861, 1.442695
        %v3950 = vpow.pop %v3949
        %v3951 = vmul.f32 %v3862, 1.442695
        %v3952 = vpow.pop %v3951
        %v3953 = vmul.f32 %v3863, 1.442695
        %v3954 = vpow.pop %v3953
        %v3955 = vmul.f32 %v3864, 1.442695
        %v3956 = vpow.pop %v3955
        %v3957 = vmul.f32 %v3865, 1.442695
        %v3958 = vpow.pop %v3957
        %v3959 = vmul.f32 %v3866, 1.442695
        %v3960 = vpow.pop %v3959
        %v3961 = vmul.f32 %v3867, 1.442695
        %v3962 = vpow.pop %v3961
        %v3963 = vmul.f32 %v3868, 1.442695
        %v3964 = vpow.pop %v3963
        %v3965 = vsub.f32 %v3902, 1.0
        %v3966 = vsub.f32 %v3904, 1.0
        %v3967 = vsub.f32 %v3906, 1.0
        %v3968 = vsub.f32 %v3908, 1.0
        %v3969 = vsub.f32 %v3910, 1.0
        %v3970 = vsub.f32 %v3912, 1.0
        %v3971 = vsub.f32 %v3914, 1.0
        %v3972 = vsub.f32 %v3916, 1.0
        %v3973 = vsub.f32 %v3918, 1.0
        %v3974 = vsub.f32 %v3920, 1.0
        %v3975 = vsub.f32 %v3922, 1.0
        %v3976 = vsub.f32 %v3924, 1.0
        %v3977 = vsub.f32 %v3926, 1.0
        %v3978 = vsub.f32 %v3928, 1.0
        %v3979 = vsub.f32 %v3930, 1.0
        %v3980 = vsub.f32 %v3932, 1.0
        %v3981 = vsub.f32 %v3934, 1.0
        %v3982 = vsub.f32 %v3936, 1.0
        %v3983 = vsub.f32 %v3938, 1.0
        %v3984 = vsub.f32 %v3940, 1.0
        %v3985 = vsub.f32 %v3942, 1.0
        %v3986 = vsub.f32 %v3944, 1.0
        %v3987 = vsub.f32 %v3946, 1.0
        %v3988 = vsub.f32 %v3948, 1.0
        %v3989 = vsub.f32 %v3950, 1.0
        %v3990 = vsub.f32 %v3952, 1.0
        %v3991 = vsub.f32 %v3954, 1.0
        %v3992 = vsub.f32 %v3956, 1.0
        %v3993 = vsub.f32 %v3958, 1.0
        %v3994 = vsub.f32 %v3960, 1.0
        %v3995 = vsub.f32 %v3962, 1.0
        %v3996 = vsub.f32 %v3964, 1.0
        %v3997 = vmul.f32 %v3965, 1.6732632
        %v3998 = vmul.f32 %v3966, 1.6732632
        %v3999 = vmul.f32 %v3967, 1.6732632
        %v4000 = vmul.f32 %v3968, 1.6732632
        %v4001 = vmul.f32 %v3969, 1.6732632
        %v4002 = vmul.f32 %v3970, 1.6732632
        %v4003 = vmul.f32 %v3971, 1.6732632
        %v4004 = vmul.f32 %v3972, 1.6732632
        %v4005 = vmul.f32 %v3973, 1.6732632
        %v4006 = vmul.f32 %v3974, 1.6732632
        %v4007 = vmul.f32 %v3975, 1.6732632
        %v4008 = vmul.f32 %v3976, 1.6732632
        %v4009 = vmul.f32 %v3977, 1.6732632
        %v4010 = vmul.f32 %v3978, 1.6732632
        %v4011 = vmul.f32 %v3979, 1.6732632
        %v4012 = vmul.f32 %v3980, 1.6732632
        %v4013 = vmul.f32 %v3981, 1.6732632
        %v4014 = vmul.f32 %v3982, 1.6732632
        %v4015 = vmul.f32 %v3983, 1.6732632
        %v4016 = vmul.f32 %v3984, 1.6732632
        %v4017 = vmul.f32 %v3985, 1.6732632
        %v4018 = vmul.f32 %v3986, 1.6732632
        %v4019 = vmul.f32 %v3987, 1.6732632
        %v4020 = vmul.f32 %v3988, 1.6732632
        %v4021 = vmul.f32 %v3989, 1.6732632
        %v4022 = vmul.f32 %v3990, 1.6732632
        %v4023 = vmul.f32 %v3991, 1.6732632
        %v4024 = vmul.f32 %v3992, 1.6732632
        %v4025 = vmul.f32 %v3993, 1.6732632
        %v4026 = vmul.f32 %v3994, 1.6732632
        %v4027 = vmul.f32 %v3995, 1.6732632
        %v4028 = vmul.f32 %v3996, 1.6732632
        %v4029 = vsel %vm3869, %v3837, %v3997
        %v4030 = vsel %vm3870, %v3838, %v3998
        %v4031 = vsel %vm3871, %v3839, %v3999
        %v4032 = vsel %vm3872, %v3840, %v4000
        %v4033 = vsel %vm3873, %v3841, %v4001
        %v4034 = vsel %vm3874, %v3842, %v4002
        %v4035 = vsel %vm3875, %v3843, %v4003
        %v4036 = vsel %vm3876, %v3844, %v4004
        %v4037 = vsel %vm3877, %v3845, %v4005
        %v4038 = vsel %vm3878, %v3846, %v4006
        %v4039 = vsel %vm3879, %v3847, %v4007
        %v4040 = vsel %vm3880, %v3848, %v4008
        %v4041 = vsel %vm3881, %v3849, %v4009
        %v4042 = vsel %vm3882, %v3850, %v4010
        %v4043 = vsel %vm3883, %v3851, %v4011
        %v4044 = vsel %vm3884, %v3852, %v4012
        %v4045 = vsel %vm3885, %v3853, %v4013
        %v4046 = vsel %vm3886, %v3854, %v4014
        %v4047 = vsel %vm3887, %v3855, %v4015
        %v4048 = vsel %vm3888, %v3856, %v4016
        %v4049 = vsel %vm3889, %v3857, %v4017
        %v4050 = vsel %vm3890, %v3858, %v4018
        %v4051 = vsel %vm3891, %v3859, %v4019
        %v4052 = vsel %vm3892, %v3860, %v4020
        %v4053 = vsel %vm3893, %v3861, %v4021
        %v4054 = vsel %vm3894, %v3862, %v4022
        %v4055 = vsel %vm3895, %v3863, %v4023
        %v4056 = vsel %vm3896, %v3864, %v4024
        %v4057 = vsel %vm3897, %v3865, %v4025
        %v4058 = vsel %vm3898, %v3866, %v4026
        %v4059 = vsel %vm3899, %v3867, %v4027
        %v4060 = vsel %vm3900, %v3868, %v4028
        %v4061 = vmul.f32 %v4029, 1.050701
        %v4062 = vmul.f32 %v4030, 1.050701
        %v4063 = vmul.f32 %v4031, 1.050701
        %v4064 = vmul.f32 %v4032, 1.050701
        %v4065 = vmul.f32 %v4033, 1.050701
        %v4066 = vmul.f32 %v4034, 1.050701
        %v4067 = vmul.f32 %v4035, 1.050701
        %v4068 = vmul.f32 %v4036, 1.050701
        %v4069 = vmul.f32 %v4037, 1.050701
        %v4070 = vmul.f32 %v4038, 1.050701
        %v4071 = vmul.f32 %v4039, 1.050701
        %v4072 = vmul.f32 %v4040, 1.050701
        %v4073 = vmul.f32 %v4041, 1.050701
        %v4074 = vmul.f32 %v4042, 1.050701
        %v4075 = vmul.f32 %v4043, 1.050701
        %v4076 = vmul.f32 %v4044, 1.050701
        %v4077 = vmul.f32 %v4045, 1.050701
        %v4078 = vmul.f32 %v4046, 1.050701
        %v4079 = vmul.f32 %v4047, 1.050701
        %v4080 = vmul.f32 %v4048, 1.050701
        %v4081 = vmul.f32 %v4049, 1.050701
        %v4082 = vmul.f32 %v4050, 1.050701
        %v4083 = vmul.f32 %v4051, 1.050701
        %v4084 = vmul.f32 %v4052, 1.050701
        %v4085 = vmul.f32 %v4053, 1.050701
        %v4086 = vmul.f32 %v4054, 1.050701
        %v4087 = vmul.f32 %v4055, 1.050701
        %v4088 = vmul.f32 %v4056, 1.050701
        %v4089 = vmul.f32 %v4057, 1.050701
        %v4090 = vmul.f32 %v4058, 1.050701
        %v4091 = vmul.f32 %v4059, 1.050701
        %v4092 = vmul.f32 %v4060, 1.050701
        %v4093 = vld [vmem:[%s11] sm:$0x1]
        %v4094 = vrot.slane %v4061, 7
        %v4095 = vrot.slane %v4062, 7
        %v4096 = vrot.slane %v4063, 7
        %v4097 = vrot.slane %v4064, 7
        %v4098 = vrot.slane %v4065, 7
        %v4099 = vrot.slane %v4066, 7
        %v4100 = vrot.slane %v4067, 7
        %v4101 = vrot.slane %v4068, 7
        %v4102 = vrot.slane %v4069, 7
        %v4103 = vrot.slane %v4070, 7
        %v4104 = vrot.slane %v4071, 7
        %v4105 = vrot.slane %v4072, 7
        %v4106 = vrot.slane %v4073, 7
        %v4107 = vrot.slane %v4074, 7
        %v4108 = vrot.slane %v4075, 7
        %v4109 = vrot.slane %v4076, 7
        %v4110 = vrot.slane %v4077, 7
        %v4111 = vrot.slane %v4078, 7
        %v4112 = vrot.slane %v4079, 7
        %v4113 = vrot.slane %v4080, 7
        %v4114 = vrot.slane %v4081, 7
        %v4115 = vrot.slane %v4082, 7
        %v4116 = vrot.slane %v4083, 7
        %v4117 = vrot.slane %v4084, 7
        %v4118 = vrot.slane %v4085, 7
        %v4119 = vrot.slane %v4086, 7
        %v4120 = vrot.slane %v4087, 7
        %v4121 = vrot.slane %v4088, 7
        %v4122 = vrot.slane %v4089, 7
        %v4123 = vrot.slane %v4090, 7
        %v4124 = vrot.slane %v4091, 7
        %v4125 = vrot.slane %v4092, 7
        %v4126 = vsel %vm1388, %v4124, %v4125
        %v4127 = vsel %vm1388, %v4123, %v4124
        %v4128 = vsel %vm1388, %v4122, %v4123
        %v4129 = vsel %vm1388, %v4121, %v4122
        %v4130 = vsel %vm1388, %v4120, %v4121
        %v4131 = vsel %vm1388, %v4119, %v4120
        %v4132 = vsel %vm1388, %v4118, %v4119
        %v4133 = vsel %vm1388, %v4117, %v4118
        %v4134 = vsel %vm1388, %v4116, %v4117
        %v4135 = vsel %vm1388, %v4115, %v4116
        %v4136 = vsel %vm1388, %v4114, %v4115
        %v4137 = vsel %vm1388, %v4113, %v4114
        %v4138 = vsel %vm1388, %v4112, %v4113
        %v4139 = vsel %vm1388, %v4111, %v4112
        %v4140 = vsel %vm1388, %v4110, %v4111
        %v4141 = vsel %vm1388, %v4109, %v4110
        %v4142 = vsel %vm1388, %v4108, %v4109
        %v4143 = vsel %vm1388, %v4107, %v4108
        %v4144 = vsel %vm1388, %v4106, %v4107
        %v4145 = vsel %vm1388, %v4105, %v4106
        %v4146 = vsel %vm1388, %v4104, %v4105
        %v4147 = vsel %vm1388, %v4103, %v4104
        %v4148 = vsel %vm1388, %v4102, %v4103
        %v4149 = vsel %vm1388, %v4101, %v4102
        %v4150 = vsel %vm1388, %v4100, %v4101
        %v4151 = vsel %vm1388, %v4099, %v4100
        %v4152 = vsel %vm1388, %v4098, %v4099
        %v4153 = vsel %vm1388, %v4097, %v4098
        %v4154 = vsel %vm1388, %v4096, %v4097
        %v4155 = vsel %vm1388, %v4095, %v4096
        %v4156 = vsel %vm1388, %v4094, %v4095
        %v4157 = vsel %vm1388, %v4125, %v4094
        %v4158 = vsel %vm1421, %v4127, 0.0
        %v4159 = vsel %vm1422, %v4126, 0.0
        %v4160 = vsel %vm1423, %v4157, 0.0
        %v4161 = vsel %vm1424, %v4156, 0.0
        %v4162 = vsel %vm1425, %v4155, 0.0
        %v4163 = vsel %vm1426, %v4154, 0.0
        %v4164 = vsel %vm1427, %v4153, 0.0
        %v4165 = vsel %vm1428, %v4152, 0.0
        %v4166 = vsel %vm1429, %v4151, 0.0
        %v4167 = vsel %vm1430, %v4150, 0.0
        %v4168 = vsel %vm1431, %v4149, 0.0
        %v4169 = vsel %vm1432, %v4148, 0.0
        %v4170 = vsel %vm1433, %v4147, 0.0
        %v4171 = vsel %vm1434, %v4146, 0.0
        %v4172 = vsel %vm1435, %v4145, 0.0
        %v4173 = vsel %vm1436, %v4144, 0.0
        %v4174 = vsel %vm1437, %v4143, 0.0
        %v4175 = vsel %vm1438, %v4142, 0.0
        %v4176 = vsel %vm1439, %v4141, 0.0
        %v4177 = vsel %vm1440, %v4140, 0.0
        %v4178 = vsel %vm1441, %v4139, 0.0
        %v4179 = vsel %vm1442, %v4138, 0.0
        %v4180 = vsel %vm1443, %v4137, 0.0
        %v4181 = vsel %vm1444, %v4136, 0.0
        %v4182 = vsel %vm1445, %v4135, 0.0
        %v4183 = vsel %vm1446, %v4134, 0.0
        %v4184 = vsel %vm1447, %v4133, 0.0
        %v4185 = vsel %vm1448, %v4132, 0.0
        %v4186 = vsel %vm1449, %v4131, 0.0
        %v4187 = vsel %vm1450, %v4130, 0.0
        %v4188 = vsel %vm1451, %v4129, 0.0
        %v4189 = vsel %vm1452, %v4128, 0.0
        %v4190 = vpack.c.bf16 %v4159, %v4158
        %v4191 = vpack.c.bf16 %v4161, %v4160
        %v4192 = vpack.c.bf16 %v4163, %v4162
        %v4193 = vpack.c.bf16 %v4165, %v4164
        %v4194 = vpack.c.bf16 %v4167, %v4166
        %v4195 = vpack.c.bf16 %v4169, %v4168
        %v4196 = vpack.c.bf16 %v4171, %v4170
        %v4197 = vpack.c.bf16 %v4173, %v4172
        %v4198 = vpack.c.bf16 %v4175, %v4174
        %v4199 = vpack.c.bf16 %v4177, %v4176
        %v4200 = vpack.c.bf16 %v4179, %v4178
        %v4201 = vpack.c.bf16 %v4181, %v4180
        %v4202 = vpack.c.bf16 %v4183, %v4182
        %v4203 = vpack.c.bf16 %v4185, %v4184
        %v4204 = vpack.c.bf16 %v4187, %v4186
        %v4205 = vpack.c.bf16 %v4189, %v4188
        %4206 = vst.msk [vmem:[#allocation2] sm:$0xff] %vm469, %v4190
        %4207 = vst.msk [vmem:[#allocation2 + $0x10] sm:$0xff] %vm469, %v4191
        %4208 = vst.msk [vmem:[#allocation2 + $0x20] sm:$0xff] %vm469, %v4192
        %4209 = vst.msk [vmem:[#allocation2 + $0x30] sm:$0xff] %vm469, %v4193
        %4210 = vst.msk [vmem:[#allocation2 + $0x40] sm:$0xff] %vm469, %v4194
        %4211 = vst.msk [vmem:[#allocation2 + $0x50] sm:$0xff] %vm469, %v4195
        %4212 = vst.msk [vmem:[#allocation2 + $0x60] sm:$0xff] %vm469, %v4196
        %4213 = vst.msk [vmem:[#allocation2 + $0x70] sm:$0xff] %vm469, %v4197
        %4214 = vst.msk [vmem:[#allocation2 + $0x80] sm:$0xff] %vm469, %v4198
        %4215 = vst.msk [vmem:[#allocation2 + $0x90] sm:$0xff] %vm469, %v4199
        %4216 = vst.msk [vmem:[#allocation2 + $0xa0] sm:$0xff] %vm469, %v4200
        %4217 = vst.msk [vmem:[#allocation2 + $0xb0] sm:$0xff] %vm469, %v4201
        %4218 = vst.msk [vmem:[#allocation2 + $0xc0] sm:$0xff] %vm469, %v4202
        %4219 = vst.msk [vmem:[#allocation2 + $0xd0] sm:$0xff] %vm469, %v4203
        %4220 = vst.msk [vmem:[#allocation2 + $0xe0] sm:$0xff] %vm469, %v4204
        %4221 = vst.msk [vmem:[#allocation2 + $0xf0] sm:$0xff] %vm469, %v4205
        %v4222 = vsel %vm1228, %v4091, 0.0
        %v4223 = vsel %vm1229, %v4092, 0.0
        %v4224 = vsel %vm1230, %v4061, 0.0
        %v4225 = vsel %vm1231, %v4062, 0.0
        %v4226 = vsel %vm1232, %v4063, 0.0
        %v4227 = vsel %vm1233, %v4064, 0.0
        %v4228 = vsel %vm1234, %v4065, 0.0
        %v4229 = vsel %vm1235, %v4066, 0.0
        %v4230 = vsel %vm1236, %v4067, 0.0
        %v4231 = vsel %vm1237, %v4068, 0.0
        %v4232 = vsel %vm1238, %v4069, 0.0
        %v4233 = vsel %vm1239, %v4070, 0.0
        %v4234 = vsel %vm1240, %v4071, 0.0
        %v4235 = vsel %vm1241, %v4072, 0.0
        %v4236 = vsel %vm1242, %v4073, 0.0
        %v4237 = vsel %vm1243, %v4074, 0.0
        %v4238 = vsel %vm1244, %v4075, 0.0
        %v4239 = vsel %vm1245, %v4076, 0.0
        %v4240 = vsel %vm1246, %v4077, 0.0
        %v4241 = vsel %vm1247, %v4078, 0.0
        %v4242 = vsel %vm1248, %v4079, 0.0
        %v4243 = vsel %vm1249, %v4080, 0.0
        %v4244 = vsel %vm1250, %v4081, 0.0
        %v4245 = vsel %vm1251, %v4082, 0.0
        %v4246 = vsel %vm1252, %v4083, 0.0
        %v4247 = vsel %vm1253, %v4084, 0.0
        %v4248 = vsel %vm1254, %v4085, 0.0
        %v4249 = vsel %vm1255, %v4086, 0.0
        %v4250 = vsel %vm1256, %v4087, 0.0
        %v4251 = vsel %vm1257, %v4088, 0.0
        %v4252 = vsel %vm1258, %v4089, 0.0
        %v4253 = vsel %vm1259, %v4090, 0.0
        %v4254 = vpack.c.bf16 %v4223, %v4222
        %v4255 = vpack.c.bf16 %v4225, %v4224
        %v4256 = vpack.c.bf16 %v4227, %v4226
        %v4257 = vpack.c.bf16 %v4229, %v4228
        %v4258 = vpack.c.bf16 %v4231, %v4230
        %v4259 = vpack.c.bf16 %v4233, %v4232
        %v4260 = vpack.c.bf16 %v4235, %v4234
        %v4261 = vpack.c.bf16 %v4237, %v4236
        %v4262 = vpack.c.bf16 %v4239, %v4238
        %v4263 = vpack.c.bf16 %v4241, %v4240
        %v4264 = vpack.c.bf16 %v4243, %v4242
        %v4265 = vpack.c.bf16 %v4245, %v4244
        %v4266 = vpack.c.bf16 %v4247, %v4246
        %v4267 = vpack.c.bf16 %v4249, %v4248
        %v4268 = vpack.c.bf16 %v4251, %v4250
        %v4269 = vpack.c.bf16 %v4253, %v4252
        %4286 = vrot.lane.b32.xlu0 %v4254, 64
        %v4287 = vpop.permute.xlu0 %4286
        %4288 = vrot.lane.b32.xlu0 %v4255, 64
        %v4289 = vpop.permute.xlu0 %4288
        %4290 = vrot.lane.b32.xlu0 %v4256, 64
        %v4291 = vpop.permute.xlu0 %4290
        %4292 = vrot.lane.b32.xlu0 %v4257, 64
        %v4293 = vpop.permute.xlu0 %4292
        %4294 = vrot.lane.b32.xlu0 %v4258, 64
        %v4295 = vpop.permute.xlu0 %4294
        %4296 = vrot.lane.b32.xlu0 %v4259, 64
        %v4297 = vpop.permute.xlu0 %4296
        %4298 = vrot.lane.b32.xlu0 %v4260, 64
        %v4299 = vpop.permute.xlu0 %4298
        %4300 = vrot.lane.b32.xlu0 %v4261, 64
        %v4301 = vpop.permute.xlu0 %4300
        %4302 = vrot.lane.b32.xlu0 %v4262, 64
        %v4303 = vpop.permute.xlu0 %4302
        %4304 = vrot.lane.b32.xlu0 %v4263, 64
        %v4305 = vpop.permute.xlu0 %4304
        %4306 = vrot.lane.b32.xlu0 %v4264, 64
        %v4307 = vpop.permute.xlu0 %4306
        %4308 = vrot.lane.b32.xlu0 %v4265, 64
        %v4309 = vpop.permute.xlu0 %4308
        %4310 = vrot.lane.b32.xlu0 %v4266, 64
        %v4311 = vpop.permute.xlu0 %4310
        %4312 = vrot.lane.b32.xlu0 %v4267, 64
        %v4313 = vpop.permute.xlu0 %4312
        %4314 = vrot.lane.b32.xlu0 %v4268, 64
        %v4315 = vpop.permute.xlu0 %4314
        %4316 = vrot.lane.b32.xlu0 %v4269, 64
        %v4317 = vpop.permute.xlu0 %4316
        %4334 = vst.msk [vmem:[#allocation2] sm:$0xff] %vm1629, %v4287
        %4335 = vst.msk [vmem:[#allocation2 + $0x10] sm:$0xff] %vm1629, %v4289
        %4336 = vst.msk [vmem:[#allocation2 + $0x20] sm:$0xff] %vm1629, %v4291
        %4337 = vst.msk [vmem:[#allocation2 + $0x30] sm:$0xff] %vm1629, %v4293
        %4338 = vst.msk [vmem:[#allocation2 + $0x40] sm:$0xff] %vm1629, %v4295
        %4339 = vst.msk [vmem:[#allocation2 + $0x50] sm:$0xff] %vm1629, %v4297
        %4340 = vst.msk [vmem:[#allocation2 + $0x60] sm:$0xff] %vm1629, %v4299
        %4341 = vst.msk [vmem:[#allocation2 + $0x70] sm:$0xff] %vm1629, %v4301
        %4342 = vst.msk [vmem:[#allocation2 + $0x80] sm:$0xff] %vm1629, %v4303
        %4343 = vst.msk [vmem:[#allocation2 + $0x90] sm:$0xff] %vm1629, %v4305
        %4344 = vst.msk [vmem:[#allocation2 + $0xa0] sm:$0xff] %vm1629, %v4307
        %4345 = vst.msk [vmem:[#allocation2 + $0xb0] sm:$0xff] %vm1629, %v4309
        %4346 = vst.msk [vmem:[#allocation2 + $0xc0] sm:$0xff] %vm1629, %v4311
        %4347 = vst.msk [vmem:[#allocation2 + $0xd0] sm:$0xff] %vm1629, %v4313
        %4348 = vst.msk [vmem:[#allocation2 + $0xe0] sm:$0xff] %vm1629, %v4315
        %4349 = vst.msk [vmem:[#allocation2 + $0xf0] sm:$0xff] %vm1629, %v4317
        %v4350 = vrot.slane %v4061, 1
        %v4351 = vrot.slane %v4062, 1
        %v4352 = vrot.slane %v4063, 1
        %v4353 = vrot.slane %v4064, 1
        %v4354 = vrot.slane %v4065, 1
        %v4355 = vrot.slane %v4066, 1
        %v4356 = vrot.slane %v4067, 1
        %v4357 = vrot.slane %v4068, 1
        %v4358 = vrot.slane %v4069, 1
        %v4359 = vrot.slane %v4070, 1
        %v4360 = vrot.slane %v4071, 1
        %v4361 = vrot.slane %v4072, 1
        %v4362 = vrot.slane %v4073, 1
        %v4363 = vrot.slane %v4074, 1
        %v4364 = vrot.slane %v4075, 1
        %v4365 = vrot.slane %v4076, 1
        %v4366 = vrot.slane %v4077, 1
        %v4367 = vrot.slane %v4078, 1
        %v4368 = vrot.slane %v4079, 1
        %v4369 = vrot.slane %v4080, 1
        %v4370 = vrot.slane %v4081, 1
        %v4371 = vrot.slane %v4082, 1
        %v4372 = vrot.slane %v4083, 1
        %v4373 = vrot.slane %v4084, 1
        %v4374 = vrot.slane %v4085, 1
        %v4375 = vrot.slane %v4086, 1
        %v4376 = vrot.slane %v4087, 1
        %v4377 = vrot.slane %v4088, 1
        %v4378 = vrot.slane %v4089, 1
        %v4379 = vrot.slane %v4090, 1
        %v4380 = vrot.slane %v4091, 1
        %v4381 = vrot.slane %v4092, 1
        %v4382 = vsel %vm1678, %v4380, %v4381
        %v4383 = vsel %vm1678, %v4379, %v4380
        %v4384 = vsel %vm1678, %v4378, %v4379
        %v4385 = vsel %vm1678, %v4377, %v4378
        %v4386 = vsel %vm1678, %v4376, %v4377
        %v4387 = vsel %vm1678, %v4375, %v4376
        %v4388 = vsel %vm1678, %v4374, %v4375
        %v4389 = vsel %vm1678, %v4373, %v4374
        %v4390 = vsel %vm1678, %v4372, %v4373
        %v4391 = vsel %vm1678, %v4371, %v4372
        %v4392 = vsel %vm1678, %v4370, %v4371
        %v4393 = vsel %vm1678, %v4369, %v4370
        %v4394 = vsel %vm1678, %v4368, %v4369
        %v4395 = vsel %vm1678, %v4367, %v4368
        %v4396 = vsel %vm1678, %v4366, %v4367
        %v4397 = vsel %vm1678, %v4365, %v4366
        %v4398 = vsel %vm1678, %v4364, %v4365
        %v4399 = vsel %vm1678, %v4363, %v4364
        %v4400 = vsel %vm1678, %v4362, %v4363
        %v4401 = vsel %vm1678, %v4361, %v4362
        %v4402 = vsel %vm1678, %v4360, %v4361
        %v4403 = vsel %vm1678, %v4359, %v4360
        %v4404 = vsel %vm1678, %v4358, %v4359
        %v4405 = vsel %vm1678, %v4357, %v4358
        %v4406 = vsel %vm1678, %v4356, %v4357
        %v4407 = vsel %vm1678, %v4355, %v4356
        %v4408 = vsel %vm1678, %v4354, %v4355
        %v4409 = vsel %vm1678, %v4353, %v4354
        %v4410 = vsel %vm1678, %v4352, %v4353
        %v4411 = vsel %vm1678, %v4351, %v4352
        %v4412 = vsel %vm1678, %v4350, %v4351
        %v4413 = vsel %vm1678, %v4381, %v4350
        %v4414 = vsel %vm1711, %v4382, 0.0
        %v4415 = vsel %vm1712, %v4413, 0.0
        %v4416 = vsel %vm1713, %v4412, 0.0
        %v4417 = vsel %vm1714, %v4411, 0.0
        %v4418 = vsel %vm1715, %v4410, 0.0
        %v4419 = vsel %vm1716, %v4409, 0.0
        %v4420 = vsel %vm1717, %v4408, 0.0
        %v4421 = vsel %vm1718, %v4407, 0.0
        %v4422 = vsel %vm1719, %v4406, 0.0
        %v4423 = vsel %vm1720, %v4405, 0.0
        %v4424 = vsel %vm1721, %v4404, 0.0
        %v4425 = vsel %vm1722, %v4403, 0.0
        %v4426 = vsel %vm1723, %v4402, 0.0
        %v4427 = vsel %vm1724, %v4401, 0.0
        %v4428 = vsel %vm1725, %v4400, 0.0
        %v4429 = vsel %vm1726, %v4399, 0.0
        %v4430 = vsel %vm1727, %v4398, 0.0
        %v4431 = vsel %vm1728, %v4397, 0.0
        %v4432 = vsel %vm1729, %v4396, 0.0
        %v4433 = vsel %vm1730, %v4395, 0.0
        %v4434 = vsel %vm1731, %v4394, 0.0
        %v4435 = vsel %vm1732, %v4393, 0.0
        %v4436 = vsel %vm1733, %v4392, 0.0
        %v4437 = vsel %vm1734, %v4391, 0.0
        %v4438 = vsel %vm1735, %v4390, 0.0
        %v4439 = vsel %vm1736, %v4389, 0.0
        %v4440 = vsel %vm1737, %v4388, 0.0
        %v4441 = vsel %vm1738, %v4387, 0.0
        %v4442 = vsel %vm1739, %v4386, 0.0
        %v4443 = vsel %vm1740, %v4385, 0.0
        %v4444 = vsel %vm1741, %v4384, 0.0
        %v4445 = vsel %vm1742, %v4383, 0.0
        %v4446 = vpack.c.bf16 %v4415, %v4414
        %v4447 = vpack.c.bf16 %v4417, %v4416
        %v4448 = vpack.c.bf16 %v4419, %v4418
        %v4449 = vpack.c.bf16 %v4421, %v4420
        %v4450 = vpack.c.bf16 %v4423, %v4422
        %v4451 = vpack.c.bf16 %v4425, %v4424
        %v4452 = vpack.c.bf16 %v4427, %v4426
        %v4453 = vpack.c.bf16 %v4429, %v4428
        %v4454 = vpack.c.bf16 %v4431, %v4430
        %v4455 = vpack.c.bf16 %v4433, %v4432
        %v4456 = vpack.c.bf16 %v4435, %v4434
        %v4457 = vpack.c.bf16 %v4437, %v4436
        %v4458 = vpack.c.bf16 %v4439, %v4438
        %v4459 = vpack.c.bf16 %v4441, %v4440
        %v4460 = vpack.c.bf16 %v4443, %v4442
        %v4461 = vpack.c.bf16 %v4445, %v4444
        %4462 = vst.msk [vmem:[#allocation2 + $0x8] sm:$0xff] %vm469, %v4446
        %4463 = vst.msk [vmem:[#allocation2 + $0x18] sm:$0xff] %vm469, %v4447
        %4464 = vst.msk [vmem:[#allocation2 + $0x28] sm:$0xff] %vm469, %v4448
        %4465 = vst.msk [vmem:[#allocation2 + $0x38] sm:$0xff] %vm469, %v4449
        %4466 = vst.msk [vmem:[#allocation2 + $0x48] sm:$0xff] %vm469, %v4450
        %4467 = vst.msk [vmem:[#allocation2 + $0x58] sm:$0xff] %vm469, %v4451
        %4468 = vst.msk [vmem:[#allocation2 + $0x68] sm:$0xff] %vm469, %v4452
        %4469 = vst.msk [vmem:[#allocation2 + $0x78] sm:$0xff] %vm469, %v4453
        %4470 = vst.msk [vmem:[#allocation2 + $0x88] sm:$0xff] %vm469, %v4454
        %4471 = vst.msk [vmem:[#allocation2 + $0x98] sm:$0xff] %vm469, %v4455
        %4472 = vst.msk [vmem:[#allocation2 + $0xa8] sm:$0xff] %vm469, %v4456
        %4473 = vst.msk [vmem:[#allocation2 + $0xb8] sm:$0xff] %vm469, %v4457
        %4474 = vst.msk [vmem:[#allocation2 + $0xc8] sm:$0xff] %vm469, %v4458
        %4475 = vst.msk [vmem:[#allocation2 + $0xd8] sm:$0xff] %vm469, %v4459
        %4476 = vst.msk [vmem:[#allocation2 + $0xe8] sm:$0xff] %vm469, %v4460
        %4477 = vst.msk [vmem:[#allocation2 + $0xf8] sm:$0xff] %vm469, %v4461
        %v4478 = vsel %vm1292, %v4157, 0.0
        %v4479 = vsel %vm1293, %v4156, 0.0
        %v4480 = vsel %vm1294, %v4155, 0.0
        %v4481 = vsel %vm1295, %v4154, 0.0
        %v4482 = vsel %vm1296, %v4153, 0.0
        %v4483 = vsel %vm1297, %v4152, 0.0
        %v4484 = vsel %vm1298, %v4151, 0.0
        %v4485 = vsel %vm1299, %v4150, 0.0
        %v4486 = vsel %vm1300, %v4149, 0.0
        %v4487 = vsel %vm1301, %v4148, 0.0
        %v4488 = vsel %vm1302, %v4147, 0.0
        %v4489 = vsel %vm1303, %v4146, 0.0
        %v4490 = vsel %vm1304, %v4145, 0.0
        %v4491 = vsel %vm1305, %v4144, 0.0
        %v4492 = vsel %vm1306, %v4143, 0.0
        %v4493 = vsel %vm1307, %v4142, 0.0
        %v4494 = vsel %vm1308, %v4141, 0.0
        %v4495 = vsel %vm1309, %v4140, 0.0
        %v4496 = vsel %vm1310, %v4139, 0.0
        %v4497 = vsel %vm1311, %v4138, 0.0
        %v4498 = vsel %vm1312, %v4137, 0.0
        %v4499 = vsel %vm1313, %v4136, 0.0
        %v4500 = vsel %vm1314, %v4135, 0.0
        %v4501 = vsel %vm1315, %v4134, 0.0
        %v4502 = vsel %vm1316, %v4133, 0.0
        %v4503 = vsel %vm1317, %v4132, 0.0
        %v4504 = vsel %vm1318, %v4131, 0.0
        %v4505 = vsel %vm1319, %v4130, 0.0
        %v4506 = vsel %vm1320, %v4129, 0.0
        %v4507 = vsel %vm1321, %v4128, 0.0
        %v4508 = vsel %vm1322, %v4127, 0.0
        %v4509 = vsel %vm1323, %v4126, 0.0
        %v4510 = vpack.c.bf16 %v4479, %v4478
        %v4511 = vpack.c.bf16 %v4481, %v4480
        %v4512 = vpack.c.bf16 %v4483, %v4482
        %v4513 = vpack.c.bf16 %v4485, %v4484
        %v4514 = vpack.c.bf16 %v4487, %v4486
        %v4515 = vpack.c.bf16 %v4489, %v4488
        %v4516 = vpack.c.bf16 %v4491, %v4490
        %v4517 = vpack.c.bf16 %v4493, %v4492
        %v4518 = vpack.c.bf16 %v4495, %v4494
        %v4519 = vpack.c.bf16 %v4497, %v4496
        %v4520 = vpack.c.bf16 %v4499, %v4498
        %v4521 = vpack.c.bf16 %v4501, %v4500
        %v4522 = vpack.c.bf16 %v4503, %v4502
        %v4523 = vpack.c.bf16 %v4505, %v4504
        %v4524 = vpack.c.bf16 %v4507, %v4506
        %v4525 = vpack.c.bf16 %v4509, %v4508
        %4542 = vrot.lane.b32.xlu0 %v4510, 64
        %v4543 = vpop.permute.xlu0 %4542
        %4544 = vrot.lane.b32.xlu0 %v4511, 64
        %v4545 = vpop.permute.xlu0 %4544
        %4546 = vrot.lane.b32.xlu0 %v4512, 64
        %v4547 = vpop.permute.xlu0 %4546
        %4548 = vrot.lane.b32.xlu0 %v4513, 64
        %v4549 = vpop.permute.xlu0 %4548
        %4550 = vrot.lane.b32.xlu0 %v4514, 64
        %v4551 = vpop.permute.xlu0 %4550
        %4552 = vrot.lane.b32.xlu0 %v4515, 64
        %v4553 = vpop.permute.xlu0 %4552
        %4554 = vrot.lane.b32.xlu0 %v4516, 64
        %v4555 = vpop.permute.xlu0 %4554
        %4556 = vrot.lane.b32.xlu0 %v4517, 64
        %v4557 = vpop.permute.xlu0 %4556
        %4558 = vrot.lane.b32.xlu0 %v4518, 64
        %v4559 = vpop.permute.xlu0 %4558
        %4560 = vrot.lane.b32.xlu0 %v4519, 64
        %v4561 = vpop.permute.xlu0 %4560
        %4562 = vrot.lane.b32.xlu0 %v4520, 64
        %v4563 = vpop.permute.xlu0 %4562
        %4564 = vrot.lane.b32.xlu0 %v4521, 64
        %v4565 = vpop.permute.xlu0 %4564
        %4566 = vrot.lane.b32.xlu0 %v4522, 64
        %v4567 = vpop.permute.xlu0 %4566
        %4568 = vrot.lane.b32.xlu0 %v4523, 64
        %v4569 = vpop.permute.xlu0 %4568
        %4570 = vrot.lane.b32.xlu0 %v4524, 64
        %v4571 = vpop.permute.xlu0 %4570
        %4572 = vrot.lane.b32.xlu0 %v4525, 64
        %v4573 = vpop.permute.xlu0 %4572
        %4590 = vst.msk [vmem:[#allocation2 + $0x8] sm:$0xff] %vm1629, %v4543
        %4591 = vst.msk [vmem:[#allocation2 + $0x18] sm:$0xff] %vm1629, %v4545
        %4592 = vst.msk [vmem:[#allocation2 + $0x28] sm:$0xff] %vm1629, %v4547
        %4593 = vst.msk [vmem:[#allocation2 + $0x38] sm:$0xff] %vm1629, %v4549
        %4594 = vst.msk [vmem:[#allocation2 + $0x48] sm:$0xff] %vm1629, %v4551
        %4595 = vst.msk [vmem:[#allocation2 + $0x58] sm:$0xff] %vm1629, %v4553
        %4596 = vst.msk [vmem:[#allocation2 + $0x68] sm:$0xff] %vm1629, %v4555
        %4597 = vst.msk [vmem:[#allocation2 + $0x78] sm:$0xff] %vm1629, %v4557
        %4598 = vst.msk [vmem:[#allocation2 + $0x88] sm:$0xff] %vm1629, %v4559
        %4599 = vst.msk [vmem:[#allocation2 + $0x98] sm:$0xff] %vm1629, %v4561
        %4600 = vst.msk [vmem:[#allocation2 + $0xa8] sm:$0xff] %vm1629, %v4563
        %4601 = vst.msk [vmem:[#allocation2 + $0xb8] sm:$0xff] %vm1629, %v4565
        %4602 = vst.msk [vmem:[#allocation2 + $0xc8] sm:$0xff] %vm1629, %v4567
        %4603 = vst.msk [vmem:[#allocation2 + $0xd8] sm:$0xff] %vm1629, %v4569
        %4604 = vst.msk [vmem:[#allocation2 + $0xe8] sm:$0xff] %vm1629, %v4571
        %4605 = vst.msk [vmem:[#allocation2 + $0xf8] sm:$0xff] %vm1629, %v4573
        %v4606 = vld [vmem:[#allocation2] sm:$0xff]
        %v4607 = vld [vmem:[#allocation2 + $0x8] sm:$0xff]
        %v4608 = vld [vmem:[#allocation2 + $0x10] sm:$0xff]
        %v4609 = vld [vmem:[#allocation2 + $0x18] sm:$0xff]
        %v4610 = vld [vmem:[#allocation2 + $0x20] sm:$0xff]
        %v4611 = vld [vmem:[#allocation2 + $0x28] sm:$0xff]
        %v4612 = vld [vmem:[#allocation2 + $0x30] sm:$0xff]
        %v4613 = vld [vmem:[#allocation2 + $0x38] sm:$0xff]
        %v4614 = vld [vmem:[#allocation2 + $0x40] sm:$0xff]
        %v4615 = vld [vmem:[#allocation2 + $0x48] sm:$0xff]
        %v4616 = vld [vmem:[#allocation2 + $0x50] sm:$0xff]
        %v4617 = vld [vmem:[#allocation2 + $0x58] sm:$0xff]
        %v4618 = vld [vmem:[#allocation2 + $0x60] sm:$0xff]
        %v4619 = vld [vmem:[#allocation2 + $0x68] sm:$0xff]
        %v4620 = vld [vmem:[#allocation2 + $0x70] sm:$0xff]
        %v4621 = vld [vmem:[#allocation2 + $0x78] sm:$0xff]
        %v4622 = vld [vmem:[#allocation2 + $0x80] sm:$0xff]
        %v4623 = vld [vmem:[#allocation2 + $0x88] sm:$0xff]
        %v4624 = vld [vmem:[#allocation2 + $0x90] sm:$0xff]
        %v4625 = vld [vmem:[#allocation2 + $0x98] sm:$0xff]
        %v4626 = vld [vmem:[#allocation2 + $0xa0] sm:$0xff]
        %v4627 = vld [vmem:[#allocation2 + $0xa8] sm:$0xff]
        %v4628 = vld [vmem:[#allocation2 + $0xb0] sm:$0xff]
        %v4629 = vld [vmem:[#allocation2 + $0xb8] sm:$0xff]
        %v4630 = vld [vmem:[#allocation2 + $0xc0] sm:$0xff]
        %v4631 = vld [vmem:[#allocation2 + $0xc8] sm:$0xff]
        %v4632 = vld [vmem:[#allocation2 + $0xd0] sm:$0xff]
        %v4633 = vld [vmem:[#allocation2 + $0xd8] sm:$0xff]
        %v4634 = vld [vmem:[#allocation2 + $0xe0] sm:$0xff]
        %v4635 = vld [vmem:[#allocation2 + $0xe8] sm:$0xff]
        %v4636 = vld [vmem:[#allocation2 + $0xf0] sm:$0xff]
        %v4637 = vld [vmem:[#allocation2 + $0xf8] sm:$0xff]
        %v4638 = vld [vmem:[%s10] sm:$0xf]
        %v4639 = vld [vmem:[%s10 + $0x4] sm:$0xf]
        %v4640 = vld [vmem:[%s10 + $0x8] sm:$0xf]
        %v4641 = vld [vmem:[%s10 + $0xc] sm:$0xf]
        %v4642 = vld [vmem:[%s10 + $0x10] sm:$0xf]
        %v4643 = vld [vmem:[%s10 + $0x14] sm:$0xf]
        %v4644 = vld [vmem:[%s10 + $0x18] sm:$0xf]
        %v4645 = vld [vmem:[%s10 + $0x1c] sm:$0xf]
        %v4646 = vld [vmem:[%s10 + $0x20] sm:$0xf]
        %v4647 = vld [vmem:[%s10 + $0x24] sm:$0xf]
        %v4648 = vld [vmem:[%s10 + $0x28] sm:$0xf]
        %v4649 = vld [vmem:[%s10 + $0x2c] sm:$0xf]
        %v4650 = vld [vmem:[%s10 + $0x30] sm:$0xf]
        %v4651 = vld [vmem:[%s10 + $0x34] sm:$0xf]
        %v4652 = vld [vmem:[%s10 + $0x38] sm:$0xf]
        %v4653 = vld [vmem:[%s10 + $0x3c] sm:$0xf]
        %v4654 = vld [vmem:[%s10 + $0x40] sm:$0xf]
        %v4655 = vld [vmem:[%s10 + $0x44] sm:$0xf]
        %v4656 = vld [vmem:[%s10 + $0x48] sm:$0xf]
        %v4657 = vld [vmem:[%s10 + $0x4c] sm:$0xf]
        %v4658 = vld [vmem:[%s10 + $0x50] sm:$0xf]
        %v4659 = vld [vmem:[%s10 + $0x54] sm:$0xf]
        %v4660 = vld [vmem:[%s10 + $0x58] sm:$0xf]
        %v4661 = vld [vmem:[%s10 + $0x5c] sm:$0xf]
        %v4662 = vld [vmem:[%s10 + $0x60] sm:$0xf]
        %v4663 = vld [vmem:[%s10 + $0x64] sm:$0xf]
        %v4664 = vld [vmem:[%s10 + $0x68] sm:$0xf]
        %v4665 = vld [vmem:[%s10 + $0x6c] sm:$0xf]
        %v4666 = vld [vmem:[%s10 + $0x70] sm:$0xf]
        %v4667 = vld [vmem:[%s10 + $0x74] sm:$0xf]
        %v4668 = vld [vmem:[%s10 + $0x78] sm:$0xf]
        %v4669 = vld [vmem:[%s10 + $0x7c] sm:$0xf]
        %v4670 = vpack.c.bf16 %v4062, %v4061
        %v4671 = vpack.c.bf16 %v4064, %v4063
        %v4672 = vpack.c.bf16 %v4066, %v4065
        %v4673 = vpack.c.bf16 %v4068, %v4067
        %v4674 = vpack.c.bf16 %v4070, %v4069
        %v4675 = vpack.c.bf16 %v4072, %v4071
        %v4676 = vpack.c.bf16 %v4074, %v4073
        %v4677 = vpack.c.bf16 %v4076, %v4075
        %v4678 = vpack.c.bf16 %v4078, %v4077
        %v4679 = vpack.c.bf16 %v4080, %v4079
        %v4680 = vpack.c.bf16 %v4082, %v4081
        %v4681 = vpack.c.bf16 %v4084, %v4083
        %v4682 = vpack.c.bf16 %v4086, %v4085
        %v4683 = vpack.c.bf16 %v4088, %v4087
        %v4684 = vpack.c.bf16 %v4090, %v4089
        %v4685 = vpack.c.bf16 %v4092, %v4091
        %4686 = vst.msk [vmem:[#allocation2] sm:$0xff] %vm469, %v4670
        %4687 = vst.msk [vmem:[#allocation2 + $0x10] sm:$0xff] %vm469, %v4671
        %4688 = vst.msk [vmem:[#allocation2 + $0x20] sm:$0xff] %vm469, %v4672
        %4689 = vst.msk [vmem:[#allocation2 + $0x30] sm:$0xff] %vm469, %v4673
        %4690 = vst.msk [vmem:[#allocation2 + $0x40] sm:$0xff] %vm469, %v4674
        %4691 = vst.msk [vmem:[#allocation2 + $0x50] sm:$0xff] %vm469, %v4675
        %4692 = vst.msk [vmem:[#allocation2 + $0x60] sm:$0xff] %vm469, %v4676
        %4693 = vst.msk [vmem:[#allocation2 + $0x70] sm:$0xff] %vm469, %v4677
        %4694 = vst.msk [vmem:[#allocation2 + $0x80] sm:$0xff] %vm469, %v4678
        %4695 = vst.msk [vmem:[#allocation2 + $0x90] sm:$0xff] %vm469, %v4679
        %4696 = vst.msk [vmem:[#allocation2 + $0xa0] sm:$0xff] %vm469, %v4680
        %4697 = vst.msk [vmem:[#allocation2 + $0xb0] sm:$0xff] %vm469, %v4681
        %4698 = vst.msk [vmem:[#allocation2 + $0xc0] sm:$0xff] %vm469, %v4682
        %4699 = vst.msk [vmem:[#allocation2 + $0xd0] sm:$0xff] %vm469, %v4683
        %4700 = vst.msk [vmem:[#allocation2 + $0xe0] sm:$0xff] %vm469, %v4684
        %4701 = vst.msk [vmem:[#allocation2 + $0xf0] sm:$0xff] %vm469, %v4685
        %v4702 = vsel %vm1324, %v4412, 0.0
        %v4703 = vsel %vm1325, %v4411, 0.0
        %v4704 = vsel %vm1326, %v4410, 0.0
        %v4705 = vsel %vm1327, %v4409, 0.0
        %v4706 = vsel %vm1328, %v4408, 0.0
        %v4707 = vsel %vm1329, %v4407, 0.0
        %v4708 = vsel %vm1330, %v4406, 0.0
        %v4709 = vsel %vm1331, %v4405, 0.0
        %v4710 = vsel %vm1332, %v4404, 0.0
        %v4711 = vsel %vm1333, %v4403, 0.0
        %v4712 = vsel %vm1334, %v4402, 0.0
        %v4713 = vsel %vm1335, %v4401, 0.0
        %v4714 = vsel %vm1336, %v4400, 0.0
        %v4715 = vsel %vm1337, %v4399, 0.0
        %v4716 = vsel %vm1338, %v4398, 0.0
        %v4717 = vsel %vm1339, %v4397, 0.0
        %v4718 = vsel %vm1340, %v4396, 0.0
        %v4719 = vsel %vm1341, %v4395, 0.0
        %v4720 = vsel %vm1342, %v4394, 0.0
        %v4721 = vsel %vm1343, %v4393, 0.0
        %v4722 = vsel %vm1344, %v4392, 0.0
        %v4723 = vsel %vm1345, %v4391, 0.0
        %v4724 = vsel %vm1346, %v4390, 0.0
        %v4725 = vsel %vm1347, %v4389, 0.0
        %v4726 = vsel %vm1348, %v4388, 0.0
        %v4727 = vsel %vm1349, %v4387, 0.0
        %v4728 = vsel %vm1350, %v4386, 0.0
        %v4729 = vsel %vm1351, %v4385, 0.0
        %v4730 = vsel %vm1352, %v4384, 0.0
        %v4731 = vsel %vm1353, %v4383, 0.0
        %v4732 = vsel %vm1354, %v4382, 0.0
        %v4733 = vsel %vm1355, %v4413, 0.0
        %v4734 = vpack.c.bf16 %v4703, %v4702
        %v4735 = vpack.c.bf16 %v4705, %v4704
        %v4736 = vpack.c.bf16 %v4707, %v4706
        %v4737 = vpack.c.bf16 %v4709, %v4708
        %v4738 = vpack.c.bf16 %v4711, %v4710
        %v4739 = vpack.c.bf16 %v4713, %v4712
        %v4740 = vpack.c.bf16 %v4715, %v4714
        %v4741 = vpack.c.bf16 %v4717, %v4716
        %v4742 = vpack.c.bf16 %v4719, %v4718
        %v4743 = vpack.c.bf16 %v4721, %v4720
        %v4744 = vpack.c.bf16 %v4723, %v4722
        %v4745 = vpack.c.bf16 %v4725, %v4724
        %v4746 = vpack.c.bf16 %v4727, %v4726
        %v4747 = vpack.c.bf16 %v4729, %v4728
        %v4748 = vpack.c.bf16 %v4731, %v4730
        %v4749 = vpack.c.bf16 %v4733, %v4732
        %4766 = vrot.lane.b32.xlu0 %v4734, 64
        %v4767 = vpop.permute.xlu0 %4766
        %4768 = vrot.lane.b32.xlu0 %v4735, 64
        %v4769 = vpop.permute.xlu0 %4768
        %4770 = vrot.lane.b32.xlu0 %v4736, 64
        %v4771 = vpop.permute.xlu0 %4770
        %4772 = vrot.lane.b32.xlu0 %v4737, 64
        %v4773 = vpop.permute.xlu0 %4772
        %4774 = vrot.lane.b32.xlu0 %v4738, 64
        %v4775 = vpop.permute.xlu0 %4774
        %4776 = vrot.lane.b32.xlu0 %v4739, 64
        %v4777 = vpop.permute.xlu0 %4776
        %4778 = vrot.lane.b32.xlu0 %v4740, 64
        %v4779 = vpop.permute.xlu0 %4778
        %4780 = vrot.lane.b32.xlu0 %v4741, 64
        %v4781 = vpop.permute.xlu0 %4780
        %4782 = vrot.lane.b32.xlu0 %v4742, 64
        %v4783 = vpop.permute.xlu0 %4782
        %4784 = vrot.lane.b32.xlu0 %v4743, 64
        %v4785 = vpop.permute.xlu0 %4784
        %4786 = vrot.lane.b32.xlu0 %v4744, 64
        %v4787 = vpop.permute.xlu0 %4786
        %4788 = vrot.lane.b32.xlu0 %v4745, 64
        %v4789 = vpop.permute.xlu0 %4788
        %4790 = vrot.lane.b32.xlu0 %v4746, 64
        %v4791 = vpop.permute.xlu0 %4790
        %4792 = vrot.lane.b32.xlu0 %v4747, 64
        %v4793 = vpop.permute.xlu0 %4792
        %4794 = vrot.lane.b32.xlu0 %v4748, 64
        %v4795 = vpop.permute.xlu0 %4794
        %4796 = vrot.lane.b32.xlu0 %v4749, 64
        %v4797 = vpop.permute.xlu0 %4796
        %4814 = vst.msk [vmem:[#allocation2] sm:$0xff] %vm1629, %v4767
        %4815 = vst.msk [vmem:[#allocation2 + $0x10] sm:$0xff] %vm1629, %v4769
        %4816 = vst.msk [vmem:[#allocation2 + $0x20] sm:$0xff] %vm1629, %v4771
        %4817 = vst.msk [vmem:[#allocation2 + $0x30] sm:$0xff] %vm1629, %v4773
        %4818 = vst.msk [vmem:[#allocation2 + $0x40] sm:$0xff] %vm1629, %v4775
        %4819 = vst.msk [vmem:[#allocation2 + $0x50] sm:$0xff] %vm1629, %v4777
        %4820 = vst.msk [vmem:[#allocation2 + $0x60] sm:$0xff] %vm1629, %v4779
        %4821 = vst.msk [vmem:[#allocation2 + $0x70] sm:$0xff] %vm1629, %v4781
        %4822 = vst.msk [vmem:[#allocation2 + $0x80] sm:$0xff] %vm1629, %v4783
        %4823 = vst.msk [vmem:[#allocation2 + $0x90] sm:$0xff] %vm1629, %v4785
        %4824 = vst.msk [vmem:[#allocation2 + $0xa0] sm:$0xff] %vm1629, %v4787
        %4825 = vst.msk [vmem:[#allocation2 + $0xb0] sm:$0xff] %vm1629, %v4789
        %4826 = vst.msk [vmem:[#allocation2 + $0xc0] sm:$0xff] %vm1629, %v4791
        %4827 = vst.msk [vmem:[#allocation2 + $0xd0] sm:$0xff] %vm1629, %v4793
        %4828 = vst.msk [vmem:[#allocation2 + $0xe0] sm:$0xff] %vm1629, %v4795
        %4829 = vst.msk [vmem:[#allocation2 + $0xf0] sm:$0xff] %vm1629, %v4797
        %v4830 = vsel %vm2159, %v4155, 0.0
        %v4831 = vsel %vm2160, %v4154, 0.0
        %v4832 = vsel %vm2161, %v4153, 0.0
        %v4833 = vsel %vm2162, %v4152, 0.0
        %v4834 = vsel %vm2163, %v4151, 0.0
        %v4835 = vsel %vm2164, %v4150, 0.0
        %v4836 = vsel %vm2165, %v4149, 0.0
        %v4837 = vsel %vm2166, %v4148, 0.0
        %v4838 = vsel %vm2167, %v4147, 0.0
        %v4839 = vsel %vm2168, %v4146, 0.0
        %v4840 = vsel %vm2169, %v4145, 0.0
        %v4841 = vsel %vm2170, %v4144, 0.0
        %v4842 = vsel %vm2171, %v4143, 0.0
        %v4843 = vsel %vm2172, %v4142, 0.0
        %v4844 = vsel %vm2173, %v4141, 0.0
        %v4845 = vsel %vm2174, %v4140, 0.0
        %v4846 = vsel %vm2175, %v4139, 0.0
        %v4847 = vsel %vm2176, %v4138, 0.0
        %v4848 = vsel %vm2177, %v4137, 0.0
        %v4849 = vsel %vm2178, %v4136, 0.0
        %v4850 = vsel %vm2179, %v4135, 0.0
        %v4851 = vsel %vm2180, %v4134, 0.0
        %v4852 = vsel %vm2181, %v4133, 0.0
        %v4853 = vsel %vm2182, %v4132, 0.0
        %v4854 = vsel %vm2183, %v4131, 0.0
        %v4855 = vsel %vm2184, %v4130, 0.0
        %v4856 = vsel %vm2185, %v4129, 0.0
        %v4857 = vsel %vm2186, %v4128, 0.0
        %v4858 = vsel %vm2187, %v4127, 0.0
        %v4859 = vsel %vm2188, %v4126, 0.0
        %v4860 = vsel %vm2189, %v4157, 0.0
        %v4861 = vsel %vm2190, %v4156, 0.0
        %v4862 = vpack.c.bf16 %v4831, %v4830
        %v4863 = vpack.c.bf16 %v4833, %v4832
        %v4864 = vpack.c.bf16 %v4835, %v4834
        %v4865 = vpack.c.bf16 %v4837, %v4836
        %v4866 = vpack.c.bf16 %v4839, %v4838
        %v4867 = vpack.c.bf16 %v4841, %v4840
        %v4868 = vpack.c.bf16 %v4843, %v4842
        %v4869 = vpack.c.bf16 %v4845, %v4844
        %v4870 = vpack.c.bf16 %v4847, %v4846
        %v4871 = vpack.c.bf16 %v4849, %v4848
        %v4872 = vpack.c.bf16 %v4851, %v4850
        %v4873 = vpack.c.bf16 %v4853, %v4852
        %v4874 = vpack.c.bf16 %v4855, %v4854
        %v4875 = vpack.c.bf16 %v4857, %v4856
        %v4876 = vpack.c.bf16 %v4859, %v4858
        %v4877 = vpack.c.bf16 %v4861, %v4860
        %4878 = vst.msk [vmem:[#allocation2 + $0x8] sm:$0xff] %vm469, %v4862
        %4879 = vst.msk [vmem:[#allocation2 + $0x18] sm:$0xff] %vm469, %v4863
        %4880 = vst.msk [vmem:[#allocation2 + $0x28] sm:$0xff] %vm469, %v4864
        %4881 = vst.msk [vmem:[#allocation2 + $0x38] sm:$0xff] %vm469, %v4865
        %4882 = vst.msk [vmem:[#allocation2 + $0x48] sm:$0xff] %vm469, %v4866
        %4883 = vst.msk [vmem:[#allocation2 + $0x58] sm:$0xff] %vm469, %v4867
        %4884 = vst.msk [vmem:[#allocation2 + $0x68] sm:$0xff] %vm469, %v4868
        %4885 = vst.msk [vmem:[#allocation2 + $0x78] sm:$0xff] %vm469, %v4869
        %4886 = vst.msk [vmem:[#allocation2 + $0x88] sm:$0xff] %vm469, %v4870
        %4887 = vst.msk [vmem:[#allocation2 + $0x98] sm:$0xff] %vm469, %v4871
        %4888 = vst.msk [vmem:[#allocation2 + $0xa8] sm:$0xff] %vm469, %v4872
        %4889 = vst.msk [vmem:[#allocation2 + $0xb8] sm:$0xff] %vm469, %v4873
        %4890 = vst.msk [vmem:[#allocation2 + $0xc8] sm:$0xff] %vm469, %v4874
        %4891 = vst.msk [vmem:[#allocation2 + $0xd8] sm:$0xff] %vm469, %v4875
        %4892 = vst.msk [vmem:[#allocation2 + $0xe8] sm:$0xff] %vm469, %v4876
        %4893 = vst.msk [vmem:[#allocation2 + $0xf8] sm:$0xff] %vm469, %v4877
        %v4894 = vsel %vm1260, %v4063, 0.0
        %v4895 = vsel %vm1261, %v4064, 0.0
        %v4896 = vsel %vm1262, %v4065, 0.0
        %v4897 = vsel %vm1263, %v4066, 0.0
        %v4898 = vsel %vm1264, %v4067, 0.0
        %v4899 = vsel %vm1265, %v4068, 0.0
        %v4900 = vsel %vm1266, %v4069, 0.0
        %v4901 = vsel %vm1267, %v4070, 0.0
        %v4902 = vsel %vm1268, %v4071, 0.0
        %v4903 = vsel %vm1269, %v4072, 0.0
        %v4904 = vsel %vm1270, %v4073, 0.0
        %v4905 = vsel %vm1271, %v4074, 0.0
        %v4906 = vsel %vm1272, %v4075, 0.0
        %v4907 = vsel %vm1273, %v4076, 0.0
        %v4908 = vsel %vm1274, %v4077, 0.0
        %v4909 = vsel %vm1275, %v4078, 0.0
        %v4910 = vsel %vm1276, %v4079, 0.0
        %v4911 = vsel %vm1277, %v4080, 0.0
        %v4912 = vsel %vm1278, %v4081, 0.0
        %v4913 = vsel %vm1279, %v4082, 0.0
        %v4914 = vsel %vm1280, %v4083, 0.0
        %v4915 = vsel %vm1281, %v4084, 0.0
        %v4916 = vsel %vm1282, %v4085, 0.0
        %v4917 = vsel %vm1283, %v4086, 0.0
        %v4918 = vsel %vm1284, %v4087, 0.0
        %v4919 = vsel %vm1285, %v4088, 0.0
        %v4920 = vsel %vm1286, %v4089, 0.0
        %v4921 = vsel %vm1287, %v4090, 0.0
        %v4922 = vsel %vm1288, %v4091, 0.0
        %v4923 = vsel %vm1289, %v4092, 0.0
        %v4924 = vsel %vm1290, %v4061, 0.0
        %v4925 = vsel %vm1291, %v4062, 0.0
        %v4926 = vpack.c.bf16 %v4895, %v4894
        %v4927 = vpack.c.bf16 %v4897, %v4896
        %v4928 = vpack.c.bf16 %v4899, %v4898
        %v4929 = vpack.c.bf16 %v4901, %v4900
        %v4930 = vpack.c.bf16 %v4903, %v4902
        %v4931 = vpack.c.bf16 %v4905, %v4904
        %v4932 = vpack.c.bf16 %v4907, %v4906
        %v4933 = vpack.c.bf16 %v4909, %v4908
        %v4934 = vpack.c.bf16 %v4911, %v4910
        %v4935 = vpack.c.bf16 %v4913, %v4912
        %v4936 = vpack.c.bf16 %v4915, %v4914
        %v4937 = vpack.c.bf16 %v4917, %v4916
        %v4938 = vpack.c.bf16 %v4919, %v4918
        %v4939 = vpack.c.bf16 %v4921, %v4920
        %v4940 = vpack.c.bf16 %v4923, %v4922
        %v4941 = vpack.c.bf16 %v4925, %v4924
        %4958 = vrot.lane.b32.xlu0 %v4926, 64
        %v4959 = vpop.permute.xlu0 %4958
        %4960 = vrot.lane.b32.xlu0 %v4927, 64
        %v4961 = vpop.permute.xlu0 %4960
        %4962 = vrot.lane.b32.xlu0 %v4928, 64
        %v4963 = vpop.permute.xlu0 %4962
        %4964 = vrot.lane.b32.xlu0 %v4929, 64
        %v4965 = vpop.permute.xlu0 %4964
        %4966 = vrot.lane.b32.xlu0 %v4930, 64
        %v4967 = vpop.permute.xlu0 %4966
        %4968 = vrot.lane.b32.xlu0 %v4931, 64
        %v4969 = vpop.permute.xlu0 %4968
        %4970 = vrot.lane.b32.xlu0 %v4932, 64
        %v4971 = vpop.permute.xlu0 %4970
        %4972 = vrot.lane.b32.xlu0 %v4933, 64
        %v4973 = vpop.permute.xlu0 %4972
        %4974 = vrot.lane.b32.xlu0 %v4934, 64
        %v4975 = vpop.permute.xlu0 %4974
        %4976 = vrot.lane.b32.xlu0 %v4935, 64
        %v4977 = vpop.permute.xlu0 %4976
        %4978 = vrot.lane.b32.xlu0 %v4936, 64
        %v4979 = vpop.permute.xlu0 %4978
        %4980 = vrot.lane.b32.xlu0 %v4937, 64
        %v4981 = vpop.permute.xlu0 %4980
        %4982 = vrot.lane.b32.xlu0 %v4938, 64
        %v4983 = vpop.permute.xlu0 %4982
        %4984 = vrot.lane.b32.xlu0 %v4939, 64
        %v4985 = vpop.permute.xlu0 %4984
        %4986 = vrot.lane.b32.xlu0 %v4940, 64
        %v4987 = vpop.permute.xlu0 %4986
        %4988 = vrot.lane.b32.xlu0 %v4941, 64
        %v4989 = vpop.permute.xlu0 %4988
        %5006 = vst.msk [vmem:[#allocation2 + $0x8] sm:$0xff] %vm1629, %v4959
        %5007 = vst.msk [vmem:[#allocation2 + $0x18] sm:$0xff] %vm1629, %v4961
        %5008 = vst.msk [vmem:[#allocation2 + $0x28] sm:$0xff] %vm1629, %v4963
        %5009 = vst.msk [vmem:[#allocation2 + $0x38] sm:$0xff] %vm1629, %v4965
        %5010 = vst.msk [vmem:[#allocation2 + $0x48] sm:$0xff] %vm1629, %v4967
        %5011 = vst.msk [vmem:[#allocation2 + $0x58] sm:$0xff] %vm1629, %v4969
        %5012 = vst.msk [vmem:[#allocation2 + $0x68] sm:$0xff] %vm1629, %v4971
        %5013 = vst.msk [vmem:[#allocation2 + $0x78] sm:$0xff] %vm1629, %v4973
        %5014 = vst.msk [vmem:[#allocation2 + $0x88] sm:$0xff] %vm1629, %v4975
        %5015 = vst.msk [vmem:[#allocation2 + $0x98] sm:$0xff] %vm1629, %v4977
        %5016 = vst.msk [vmem:[#allocation2 + $0xa8] sm:$0xff] %vm1629, %v4979
        %5017 = vst.msk [vmem:[#allocation2 + $0xb8] sm:$0xff] %vm1629, %v4981
        %5018 = vst.msk [vmem:[#allocation2 + $0xc8] sm:$0xff] %vm1629, %v4983
        %5019 = vst.msk [vmem:[#allocation2 + $0xd8] sm:$0xff] %vm1629, %v4985
        %5020 = vst.msk [vmem:[#allocation2 + $0xe8] sm:$0xff] %vm1629, %v4987
        %5021 = vst.msk [vmem:[#allocation2 + $0xf8] sm:$0xff] %vm1629, %v4989
        %v5022 = vld [vmem:[#allocation2] sm:$0xff]
        %v5023 = vld [vmem:[#allocation2 + $0x8] sm:$0xff]
        %v5024 = vld [vmem:[#allocation2 + $0x10] sm:$0xff]
        %v5025 = vld [vmem:[#allocation2 + $0x18] sm:$0xff]
        %v5026 = vld [vmem:[#allocation2 + $0x20] sm:$0xff]
        %v5027 = vld [vmem:[#allocation2 + $0x28] sm:$0xff]
        %v5028 = vld [vmem:[#allocation2 + $0x30] sm:$0xff]
        %v5029 = vld [vmem:[#allocation2 + $0x38] sm:$0xff]
        %v5030 = vld [vmem:[#allocation2 + $0x40] sm:$0xff]
        %v5031 = vld [vmem:[#allocation2 + $0x48] sm:$0xff]
        %v5032 = vld [vmem:[#allocation2 + $0x50] sm:$0xff]
        %v5033 = vld [vmem:[#allocation2 + $0x58] sm:$0xff]
        %v5034 = vld [vmem:[#allocation2 + $0x60] sm:$0xff]
        %v5035 = vld [vmem:[#allocation2 + $0x68] sm:$0xff]
        %v5036 = vld [vmem:[#allocation2 + $0x70] sm:$0xff]
        %v5037 = vld [vmem:[#allocation2 + $0x78] sm:$0xff]
        %v5038 = vld [vmem:[#allocation2 + $0x80] sm:$0xff]
        %v5039 = vld [vmem:[#allocation2 + $0x88] sm:$0xff]
        %v5040 = vld [vmem:[#allocation2 + $0x90] sm:$0xff]
        %v5041 = vld [vmem:[#allocation2 + $0x98] sm:$0xff]
        %v5042 = vld [vmem:[#allocation2 + $0xa0] sm:$0xff]
        %v5043 = vld [vmem:[#allocation2 + $0xa8] sm:$0xff]
        %v5044 = vld [vmem:[#allocation2 + $0xb0] sm:$0xff]
        %v5045 = vld [vmem:[#allocation2 + $0xb8] sm:$0xff]
        %v5046 = vld [vmem:[#allocation2 + $0xc0] sm:$0xff]
        %v5047 = vld [vmem:[#allocation2 + $0xc8] sm:$0xff]
        %v5048 = vld [vmem:[#allocation2 + $0xd0] sm:$0xff]
        %v5049 = vld [vmem:[#allocation2 + $0xd8] sm:$0xff]
        %v5050 = vld [vmem:[#allocation2 + $0xe0] sm:$0xff]
        %v5051 = vld [vmem:[#allocation2 + $0xe8] sm:$0xff]
        %v5052 = vld [vmem:[#allocation2 + $0xf0] sm:$0xff]
        %v5053 = vld [vmem:[#allocation2 + $0xf8] sm:$0xff]
        %v5054 = vld [vmem:[%s10 + $0x80] sm:$0xf]
        %v5055 = vld [vmem:[%s10 + $0x84] sm:$0xf]
        %v5056 = vld [vmem:[%s10 + $0x88] sm:$0xf]
        %v5057 = vld [vmem:[%s10 + $0x8c] sm:$0xf]
        %v5058 = vld [vmem:[%s10 + $0x90] sm:$0xf]
        %v5059 = vld [vmem:[%s10 + $0x94] sm:$0xf]
        %v5060 = vld [vmem:[%s10 + $0x98] sm:$0xf]
        %v5061 = vld [vmem:[%s10 + $0x9c] sm:$0xf]
        %v5062 = vld [vmem:[%s10 + $0xa0] sm:$0xf]
        %v5063 = vld [vmem:[%s10 + $0xa4] sm:$0xf]
        %v5064 = vld [vmem:[%s10 + $0xa8] sm:$0xf]
        %v5065 = vld [vmem:[%s10 + $0xac] sm:$0xf]
        %v5066 = vld [vmem:[%s10 + $0xb0] sm:$0xf]
        %v5067 = vld [vmem:[%s10 + $0xb4] sm:$0xf]
        %v5068 = vld [vmem:[%s10 + $0xb8] sm:$0xf]
        %v5069 = vld [vmem:[%s10 + $0xbc] sm:$0xf]
        %v5070 = vld [vmem:[%s10 + $0xc0] sm:$0xf]
        %v5071 = vld [vmem:[%s10 + $0xc4] sm:$0xf]
        %v5072 = vld [vmem:[%s10 + $0xc8] sm:$0xf]
        %v5073 = vld [vmem:[%s10 + $0xcc] sm:$0xf]
        %v5074 = vld [vmem:[%s10 + $0xd0] sm:$0xf]
        %v5075 = vld [vmem:[%s10 + $0xd4] sm:$0xf]
        %v5076 = vld [vmem:[%s10 + $0xd8] sm:$0xf]
        %v5077 = vld [vmem:[%s10 + $0xdc] sm:$0xf]
        %v5078 = vld [vmem:[%s10 + $0xe0] sm:$0xf]
        %v5079 = vld [vmem:[%s10 + $0xe4] sm:$0xf]
        %v5080 = vld [vmem:[%s10 + $0xe8] sm:$0xf]
        %v5081 = vld [vmem:[%s10 + $0xec] sm:$0xf]
        %v5082 = vld [vmem:[%s10 + $0xf0] sm:$0xf]
        %v5083 = vld [vmem:[%s10 + $0xf4] sm:$0xf]
        %v5084 = vld [vmem:[%s10 + $0xf8] sm:$0xf]
        %v5085 = vld [vmem:[%s10 + $0xfc] sm:$0xf]
        %v5118 = vunpack.c.l.b16 %v5054
        %v5119 = vunpack.c.l.b16 %v5055
        %v5120 = vunpack.c.l.b16 %v5056
        %v5121 = vunpack.c.l.b16 %v5057
        %v5122 = vunpack.c.l.b16 %v5058
        %v5123 = vunpack.c.l.b16 %v5059
        %v5124 = vunpack.c.l.b16 %v5060
        %v5125 = vunpack.c.l.b16 %v5061
        %v5126 = vunpack.c.l.b16 %v5062
        %v5127 = vunpack.c.l.b16 %v5063
        %v5128 = vunpack.c.l.b16 %v5064
        %v5129 = vunpack.c.l.b16 %v5065
        %v5130 = vunpack.c.l.b16 %v5066
        %v5131 = vunpack.c.l.b16 %v5067
        %v5132 = vunpack.c.l.b16 %v5068
        %v5133 = vunpack.c.l.b16 %v5069
        %v5134 = vunpack.c.l.b16 %v5070
        %v5135 = vunpack.c.l.b16 %v5071
        %v5136 = vunpack.c.l.b16 %v5072
        %v5137 = vunpack.c.l.b16 %v5073
        %v5138 = vunpack.c.l.b16 %v5074
        %v5139 = vunpack.c.l.b16 %v5075
        %v5140 = vunpack.c.l.b16 %v5076
        %v5141 = vunpack.c.l.b16 %v5077
        %v5142 = vunpack.c.l.b16 %v5078
        %v5143 = vunpack.c.l.b16 %v5079
        %v5144 = vunpack.c.l.b16 %v5080
        %v5145 = vunpack.c.l.b16 %v5081
        %v5146 = vunpack.c.l.b16 %v5082
        %v5147 = vunpack.c.l.b16 %v5083
        %v5148 = vunpack.c.l.b16 %v5084
        %v5149 = vunpack.c.l.b16 %v5085
        %v5150 = vpack.c.b16 %v5119, %v5118
        %v5151 = vpack.c.b16 %v5121, %v5120
        %v5152 = vpack.c.b16 %v5123, %v5122
        %v5153 = vpack.c.b16 %v5125, %v5124
        %v5154 = vpack.c.b16 %v5127, %v5126
        %v5155 = vpack.c.b16 %v5129, %v5128
        %v5156 = vpack.c.b16 %v5131, %v5130
        %v5157 = vpack.c.b16 %v5133, %v5132
        %v5158 = vpack.c.b16 %v5135, %v5134
        %v5159 = vpack.c.b16 %v5137, %v5136
        %v5160 = vpack.c.b16 %v5139, %v5138
        %v5161 = vpack.c.b16 %v5141, %v5140
        %v5162 = vpack.c.b16 %v5143, %v5142
        %v5163 = vpack.c.b16 %v5145, %v5144
        %v5164 = vpack.c.b16 %v5147, %v5146
        %v5165 = vpack.c.b16 %v5149, %v5148
        %5182 = vmatprep.subr.bf16.mxu0 0
        %5183 = vmatpush1.bf16.msra.mxu0 %v5150
        %5184 = vmatprep.subr.bf16.mxu0 0
        %5185 = vmatpush1.bf16.msra.mxu0 %v5151
        %5186 = vmatprep.subr.bf16.mxu0 0
        %5187 = vmatpush1.bf16.msra.mxu0 %v5152
        %5188 = vmatprep.subr.bf16.mxu0 0
        %5189 = vmatpush1.bf16.msra.mxu0 %v5153
        %5190 = vmatprep.subr.bf16.mxu0 0
        %5191 = vmatpush1.bf16.msra.mxu0 %v5154
        %5192 = vmatprep.subr.bf16.mxu0 0
        %5193 = vmatpush1.bf16.msra.mxu0 %v5155
        %5194 = vmatprep.subr.bf16.mxu0 0
        %5195 = vmatpush1.bf16.msra.mxu0 %v5156
        %5196 = vmatprep.subr.bf16.mxu0 0
        %5197 = vmatpush1.bf16.msra.mxu0 %v5157
        %5198 = vmatprep.subr.bf16.mxu0 0
        %5199 = vmatpush1.bf16.msra.mxu0 %v5158
        %5200 = vmatprep.subr.bf16.mxu0 0
        %5201 = vmatpush1.bf16.msra.mxu0 %v5159
        %5202 = vmatprep.subr.bf16.mxu0 0
        %5203 = vmatpush1.bf16.msra.mxu0 %v5160
        %5204 = vmatprep.subr.bf16.mxu0 0
        %5205 = vmatpush1.bf16.msra.mxu0 %v5161
        %5206 = vmatprep.subr.bf16.mxu0 0
        %5207 = vmatpush1.bf16.msra.mxu0 %v5162
        %5208 = vmatprep.subr.bf16.mxu0 0
        %5209 = vmatpush1.bf16.msra.mxu0 %v5163
        %5210 = vmatprep.subr.bf16.mxu0 0
        %5211 = vmatpush1.bf16.msra.mxu0 %v5164
        %5212 = vmatprep.subr.bf16.mxu0 0
        %5213 = vmatpush1.bf16.msra.mxu0 %v5165
        %5214 = vmatprep.mubr.bf16.mxu0 %v5023
        %5215 = vmatmul.mubr.bf16.gmra.mrb[0].mxu0 %v5022
        %v5216 = vpop.f32.mrb[0].mxu0
        %v5217 = vadd.f32 0.0, %v5216
        %v5218 = vpop.f32.mrb[0].mxu0
        %v5219 = vpop.f32.mrb[0].mxu0
        %v5220 = vadd.f32 0.0, %v5219
        %v5221 = vpop.f32.mrb[0].mxu0
        %5222 = vmatprep.mubr.bf16.mxu0 %v5025
        %5223 = vmatmul.mubr.bf16.gmra.mrb[0].mxu0 %v5024
        %v5224 = vpop.f32.mrb[0].mxu0
        %v5225 = vadd.f32 0.0, %v5224
        %v5226 = vpop.f32.mrb[0].mxu0
        %v5227 = vpop.f32.mrb[0].mxu0
        %v5228 = vadd.f32 0.0, %v5227
        %v5229 = vpop.f32.mrb[0].mxu0
        %5230 = vmatprep.mubr.bf16.mxu0 %v5027
        %5231 = vmatmul.mubr.bf16.gmra.mrb[0].mxu0 %v5026
        %v5232 = vpop.f32.mrb[0].mxu0
        %v5233 = vadd.f32 0.0, %v5232
        %v5234 = vpop.f32.mrb[0].mxu0
        %v5235 = vpop.f32.mrb[0].mxu0
        %v5236 = vadd.f32 0.0, %v5235
        %v5237 = vpop.f32.mrb[0].mxu0
        %5238 = vmatprep.mubr.bf16.mxu0 %v5029
        %5239 = vmatmul.mubr.bf16.gmra.mrb[0].mxu0 %v5028
        %v5240 = vpop.f32.mrb[0].mxu0
        %v5241 = vadd.f32 0.0, %v5240
        %v5242 = vpop.f32.mrb[0].mxu0
        %v5243 = vpop.f32.mrb[0].mxu0
        %v5244 = vadd.f32 0.0, %v5243
        %v5245 = vpop.f32.mrb[0].mxu0
        %5246 = vmatprep.mubr.bf16.mxu0 %v5031
        %5247 = vmatmul.mubr.bf16.gmra.mrb[0].mxu0 %v5030
        %v5248 = vpop.f32.mrb[0].mxu0
        %v5249 = vadd.f32 0.0, %v5248
        %v5250 = vpop.f32.mrb[0].mxu0
        %v5251 = vpop.f32.mrb[0].mxu0
        %v5252 = vadd.f32 0.0, %v5251
        %v5253 = vpop.f32.mrb[0].mxu0
        %5254 = vmatprep.mubr.bf16.mxu0 %v5033
        %5255 = vmatmul.mubr.bf16.gmra.mrb[0].mxu0 %v5032
        %v5256 = vpop.f32.mrb[0].mxu0
        %v5257 = vadd.f32 0.0, %v5256
        %v5258 = vpop.f32.mrb[0].mxu0
        %v5259 = vpop.f32.mrb[0].mxu0
        %v5260 = vadd.f32 0.0, %v5259
        %v5261 = vpop.f32.mrb[0].mxu0
        %5262 = vmatprep.mubr.bf16.mxu0 %v5035
        %5263 = vmatmul.mubr.bf16.gmra.mrb[0].mxu0 %v5034
        %v5264 = vpop.f32.mrb[0].mxu0
        %v5265 = vadd.f32 0.0, %v5264
        %v5266 = vpop.f32.mrb[0].mxu0
        %v5267 = vpop.f32.mrb[0].mxu0
        %v5268 = vadd.f32 0.0, %v5267
        %v5269 = vpop.f32.mrb[0].mxu0
        %5270 = vmatprep.mubr.bf16.mxu0 %v5037
        %5271 = vmatmul.mubr.bf16.gmra.mrb[0].mxu0 %v5036
        %v5272 = vpop.f32.mrb[0].mxu0
        %v5273 = vadd.f32 0.0, %v5272
        %v5274 = vpop.f32.mrb[0].mxu0
        %v5275 = vpop.f32.mrb[0].mxu0
        %v5276 = vadd.f32 0.0, %v5275
        %v5277 = vpop.f32.mrb[0].mxu0
        %5278 = vmatprep.mubr.bf16.mxu0 %v5039
        %5279 = vmatmul.mubr.bf16.gmra.mrb[0].mxu0 %v5038
        %v5280 = vpop.f32.mrb[0].mxu0
        %v5281 = vadd.f32 0.0, %v5280
        %v5282 = vpop.f32.mrb[0].mxu0
        %v5283 = vpop.f32.mrb[0].mxu0
        %v5284 = vadd.f32 0.0, %v5283
        %v5285 = vpop.f32.mrb[0].mxu0
        %5286 = vmatprep.mubr.bf16.mxu0 %v5041
        %5287 = vmatmul.mubr.bf16.gmra.mrb[0].mxu0 %v5040
        %v5288 = vpop.f32.mrb[0].mxu0
        %v5289 = vadd.f32 0.0, %v5288
        %v5290 = vpop.f32.mrb[0].mxu0
        %v5291 = vpop.f32.mrb[0].mxu0
        %v5292 = vadd.f32 0.0, %v5291
        %v5293 = vpop.f32.mrb[0].mxu0
        %5294 = vmatprep.mubr.bf16.mxu0 %v5043
        %5295 = vmatmul.mubr.bf16.gmra.mrb[0].mxu0 %v5042
        %v5296 = vpop.f32.mrb[0].mxu0
        %v5297 = vadd.f32 0.0, %v5296
        %v5298 = vpop.f32.mrb[0].mxu0
        %v5299 = vpop.f32.mrb[0].mxu0
        %v5300 = vadd.f32 0.0, %v5299
        %v5301 = vpop.f32.mrb[0].mxu0
        %5302 = vmatprep.mubr.bf16.mxu0 %v5045
        %5303 = vmatmul.mubr.bf16.gmra.mrb[0].mxu0 %v5044
        %v5304 = vpop.f32.mrb[0].mxu0
        %v5305 = vadd.f32 0.0, %v5304
        %v5306 = vpop.f32.mrb[0].mxu0
        %v5307 = vpop.f32.mrb[0].mxu0
        %v5308 = vadd.f32 0.0, %v5307
        %v5309 = vpop.f32.mrb[0].mxu0
        %5310 = vmatprep.mubr.bf16.mxu0 %v5047
        %5311 = vmatmul.mubr.bf16.gmra.mrb[0].mxu0 %v5046
        %v5312 = vpop.f32.mrb[0].mxu0
        %v5313 = vadd.f32 0.0, %v5312
        %v5314 = vpop.f32.mrb[0].mxu0
        %v5315 = vpop.f32.mrb[0].mxu0
        %v5316 = vadd.f32 0.0, %v5315
        %v5317 = vpop.f32.mrb[0].mxu0
        %5318 = vmatprep.mubr.bf16.mxu0 %v5049
        %5319 = vmatmul.mubr.bf16.gmra.mrb[0].mxu0 %v5048
        %v5320 = vpop.f32.mrb[0].mxu0
        %v5321 = vadd.f32 0.0, %v5320
        %v5322 = vpop.f32.mrb[0].mxu0
        %v5323 = vpop.f32.mrb[0].mxu0
        %v5324 = vadd.f32 0.0, %v5323
        %v5325 = vpop.f32.mrb[0].mxu0
        %5326 = vmatprep.mubr.bf16.mxu0 %v5051
        %5327 = vmatmul.mubr.bf16.gmra.mrb[0].mxu0 %v5050
        %v5328 = vpop.f32.mrb[0].mxu0
        %v5329 = vadd.f32 0.0, %v5328
        %v5330 = vpop.f32.mrb[0].mxu0
        %v5331 = vpop.f32.mrb[0].mxu0
        %v5332 = vadd.f32 0.0, %v5331
        %v5333 = vpop.f32.mrb[0].mxu0
        %5334 = vmatprep.mubr.bf16.mxu0 %v5053
        %5335 = vmatmul.mubr.bf16.gmra.mrb[0].mxu0 %v5052
        %v5336 = vpop.f32.mrb[0].mxu0
        %v5337 = vadd.f32 0.0, %v5336
        %v5338 = vpop.f32.mrb[0].mxu0
        %v5339 = vpop.f32.mrb[0].mxu0
        %v5340 = vadd.f32 0.0, %v5339
        %v5341 = vpop.f32.mrb[0].mxu0
        %5342 = vdwg.mxu0
        %v5375 = vunpack.c.l.b16 %v4638
        %v5376 = vunpack.c.l.b16 %v4639
        %v5377 = vunpack.c.l.b16 %v4640
        %v5378 = vunpack.c.l.b16 %v4641
        %v5379 = vunpack.c.l.b16 %v4642
        %v5380 = vunpack.c.l.b16 %v4643
        %v5381 = vunpack.c.l.b16 %v4644
        %v5382 = vunpack.c.l.b16 %v4645
        %v5383 = vunpack.c.l.b16 %v4646
        %v5384 = vunpack.c.l.b16 %v4647
        %v5385 = vunpack.c.l.b16 %v4648
        %v5386 = vunpack.c.l.b16 %v4649
        %v5387 = vunpack.c.l.b16 %v4650
        %v5388 = vunpack.c.l.b16 %v4651
        %v5389 = vunpack.c.l.b16 %v4652
        %v5390 = vunpack.c.l.b16 %v4653
        %v5391 = vunpack.c.l.b16 %v4654
        %v5392 = vunpack.c.l.b16 %v4655
        %v5393 = vunpack.c.l.b16 %v4656
        %v5394 = vunpack.c.l.b16 %v4657
        %v5395 = vunpack.c.l.b16 %v4658
        %v5396 = vunpack.c.l.b16 %v4659
        %v5397 = vunpack.c.l.b16 %v4660
        %v5398 = vunpack.c.l.b16 %v4661
        %v5399 = vunpack.c.l.b16 %v4662
        %v5400 = vunpack.c.l.b16 %v4663
        %v5401 = vunpack.c.l.b16 %v4664
        %v5402 = vunpack.c.l.b16 %v4665
        %v5403 = vunpack.c.l.b16 %v4666
        %v5404 = vunpack.c.l.b16 %v4667
        %v5405 = vunpack.c.l.b16 %v4668
        %v5406 = vunpack.c.l.b16 %v4669
        %v5407 = vpack.c.b16 %v5376, %v5375
        %v5408 = vpack.c.b16 %v5378, %v5377
        %v5409 = vpack.c.b16 %v5380, %v5379
        %v5410 = vpack.c.b16 %v5382, %v5381
        %v5411 = vpack.c.b16 %v5384, %v5383
        %v5412 = vpack.c.b16 %v5386, %v5385
        %v5413 = vpack.c.b16 %v5388, %v5387
        %v5414 = vpack.c.b16 %v5390, %v5389
        %v5415 = vpack.c.b16 %v5392, %v5391
        %v5416 = vpack.c.b16 %v5394, %v5393
        %v5417 = vpack.c.b16 %v5396, %v5395
        %v5418 = vpack.c.b16 %v5398, %v5397
        %v5419 = vpack.c.b16 %v5400, %v5399
        %v5420 = vpack.c.b16 %v5402, %v5401
        %v5421 = vpack.c.b16 %v5404, %v5403
        %v5422 = vpack.c.b16 %v5406, %v5405
        %5439 = vmatprep.subr.bf16.mxu0 0
        %5440 = vmatpush1.bf16.msra.mxu0 %v5407
        %5441 = vmatprep.subr.bf16.mxu0 0
        %5442 = vmatpush1.bf16.msra.mxu0 %v5408
        %5443 = vmatprep.subr.bf16.mxu0 0
        %5444 = vmatpush1.bf16.msra.mxu0 %v5409
        %5445 = vmatprep.subr.bf16.mxu0 0
        %5446 = vmatpush1.bf16.msra.mxu0 %v5410
        %5447 = vmatprep.subr.bf16.mxu0 0
        %5448 = vmatpush1.bf16.msra.mxu0 %v5411
        %5449 = vmatprep.subr.bf16.mxu0 0
        %5450 = vmatpush1.bf16.msra.mxu0 %v5412
        %5451 = vmatprep.subr.bf16.mxu0 0
        %5452 = vmatpush1.bf16.msra.mxu0 %v5413
        %5453 = vmatprep.subr.bf16.mxu0 0
        %5454 = vmatpush1.bf16.msra.mxu0 %v5414
        %5455 = vmatprep.subr.bf16.mxu0 0
        %5456 = vmatpush1.bf16.msra.mxu0 %v5415
        %5457 = vmatprep.subr.bf16.mxu0 0
        %5458 = vmatpush1.bf16.msra.mxu0 %v5416
        %5459 = vmatprep.subr.bf16.mxu0 0
        %5460 = vmatpush1.bf16.msra.mxu0 %v5417
        %5461 = vmatprep.subr.bf16.mxu0 0
        %5462 = vmatpush1.bf16.msra.mxu0 %v5418
        %5463 = vmatprep.subr.bf16.mxu0 0
        %5464 = vmatpush1.bf16.msra.mxu0 %v5419
        %5465 = vmatprep.subr.bf16.mxu0 0
        %5466 = vmatpush1.bf16.msra.mxu0 %v5420
        %5467 = vmatprep.subr.bf16.mxu0 0
        %5468 = vmatpush1.bf16.msra.mxu0 %v5421
        %5469 = vmatprep.subr.bf16.mxu0 0
        %5470 = vmatpush1.bf16.msra.mxu0 %v5422
        %5471 = vmatprep.mubr.bf16.mxu0 %v4607
        %5472 = vmatmul.mubr.bf16.gmra.mrb[0].mxu0 %v4606
        %v5473 = vpop.f32.mrb[0].mxu0
        %v5474 = vadd.f32 %v5217, %v5473
        %v5475 = vpop.f32.mrb[0].mxu0
        %v5476 = vpop.f32.mrb[0].mxu0
        %v5477 = vadd.f32 %v5220, %v5476
        %v5478 = vpop.f32.mrb[0].mxu0
        %5479 = vmatprep.mubr.bf16.mxu0 %v4609
        %5480 = vmatmul.mubr.bf16.gmra.mrb[0].mxu0 %v4608
        %v5481 = vpop.f32.mrb[0].mxu0
        %v5482 = vadd.f32 %v5225, %v5481
        %v5483 = vpop.f32.mrb[0].mxu0
        %v5484 = vpop.f32.mrb[0].mxu0
        %v5485 = vadd.f32 %v5228, %v5484
        %v5486 = vpop.f32.mrb[0].mxu0
        %5487 = vmatprep.mubr.bf16.mxu0 %v4611
        %5488 = vmatmul.mubr.bf16.gmra.mrb[0].mxu0 %v4610
        %v5489 = vpop.f32.mrb[0].mxu0
        %v5490 = vadd.f32 %v5233, %v5489
        %v5491 = vpop.f32.mrb[0].mxu0
        %v5492 = vpop.f32.mrb[0].mxu0
        %v5493 = vadd.f32 %v5236, %v5492
        %v5494 = vpop.f32.mrb[0].mxu0
        %5495 = vmatprep.mubr.bf16.mxu0 %v4613
        %5496 = vmatmul.mubr.bf16.gmra.mrb[0].mxu0 %v4612
        %v5497 = vpop.f32.mrb[0].mxu0
        %v5498 = vadd.f32 %v5241, %v5497
        %v5499 = vpop.f32.mrb[0].mxu0
        %v5500 = vpop.f32.mrb[0].mxu0
        %v5501 = vadd.f32 %v5244, %v5500
        %v5502 = vpop.f32.mrb[0].mxu0
        %5503 = vmatprep.mubr.bf16.mxu0 %v4615
        %5504 = vmatmul.mubr.bf16.gmra.mrb[0].mxu0 %v4614
        %v5505 = vpop.f32.mrb[0].mxu0
        %v5506 = vadd.f32 %v5249, %v5505
        %v5507 = vpop.f32.mrb[0].mxu0
        %v5508 = vpop.f32.mrb[0].mxu0
        %v5509 = vadd.f32 %v5252, %v5508
        %v5510 = vpop.f32.mrb[0].mxu0
        %5511 = vmatprep.mubr.bf16.mxu0 %v4617
        %5512 = vmatmul.mubr.bf16.gmra.mrb[0].mxu0 %v4616
        %v5513 = vpop.f32.mrb[0].mxu0
        %v5514 = vadd.f32 %v5257, %v5513
        %v5515 = vpop.f32.mrb[0].mxu0
        %v5516 = vpop.f32.mrb[0].mxu0
        %v5517 = vadd.f32 %v5260, %v5516
        %v5518 = vpop.f32.mrb[0].mxu0
        %5519 = vmatprep.mubr.bf16.mxu0 %v4619
        %5520 = vmatmul.mubr.bf16.gmra.mrb[0].mxu0 %v4618
        %v5521 = vpop.f32.mrb[0].mxu0
        %v5522 = vadd.f32 %v5265, %v5521
        %v5523 = vpop.f32.mrb[0].mxu0
        %v5524 = vpop.f32.mrb[0].mxu0
        %v5525 = vadd.f32 %v5268, %v5524
        %v5526 = vpop.f32.mrb[0].mxu0
        %5527 = vmatprep.mubr.bf16.mxu0 %v4621
        %5528 = vmatmul.mubr.bf16.gmra.mrb[0].mxu0 %v4620
        %v5529 = vpop.f32.mrb[0].mxu0
        %v5530 = vadd.f32 %v5273, %v5529
        %v5531 = vpop.f32.mrb[0].mxu0
        %v5532 = vpop.f32.mrb[0].mxu0
        %v5533 = vadd.f32 %v5276, %v5532
        %v5534 = vpop.f32.mrb[0].mxu0
        %5535 = vmatprep.mubr.bf16.mxu0 %v4623
        %5536 = vmatmul.mubr.bf16.gmra.mrb[0].mxu0 %v4622
        %v5537 = vpop.f32.mrb[0].mxu0
        %v5538 = vadd.f32 %v5281, %v5537
        %v5539 = vpop.f32.mrb[0].mxu0
        %v5540 = vpop.f32.mrb[0].mxu0
        %v5541 = vadd.f32 %v5284, %v5540
        %v5542 = vpop.f32.mrb[0].mxu0
        %5543 = vmatprep.mubr.bf16.mxu0 %v4625
        %5544 = vmatmul.mubr.bf16.gmra.mrb[0].mxu0 %v4624
        %v5545 = vpop.f32.mrb[0].mxu0
        %v5546 = vadd.f32 %v5289, %v5545
        %v5547 = vpop.f32.mrb[0].mxu0
        %v5548 = vpop.f32.mrb[0].mxu0
        %v5549 = vadd.f32 %v5292, %v5548
        %v5550 = vpop.f32.mrb[0].mxu0
        %5551 = vmatprep.mubr.bf16.mxu0 %v4627
        %5552 = vmatmul.mubr.bf16.gmra.mrb[0].mxu0 %v4626
        %v5553 = vpop.f32.mrb[0].mxu0
        %v5554 = vadd.f32 %v5297, %v5553
        %v5555 = vpop.f32.mrb[0].mxu0
        %v5556 = vpop.f32.mrb[0].mxu0
        %v5557 = vadd.f32 %v5300, %v5556
        %v5558 = vpop.f32.mrb[0].mxu0
        %5559 = vmatprep.mubr.bf16.mxu0 %v4629
        %5560 = vmatmul.mubr.bf16.gmra.mrb[0].mxu0 %v4628
        %v5561 = vpop.f32.mrb[0].mxu0
        %v5562 = vadd.f32 %v5305, %v5561
        %v5563 = vpop.f32.mrb[0].mxu0
        %v5564 = vpop.f32.mrb[0].mxu0
        %v5565 = vadd.f32 %v5308, %v5564
        %v5566 = vpop.f32.mrb[0].mxu0
        %5567 = vmatprep.mubr.bf16.mxu0 %v4631
        %5568 = vmatmul.mubr.bf16.gmra.mrb[0].mxu0 %v4630
        %v5569 = vpop.f32.mrb[0].mxu0
        %v5570 = vadd.f32 %v5313, %v5569
        %v5571 = vpop.f32.mrb[0].mxu0
        %v5572 = vpop.f32.mrb[0].mxu0
        %v5573 = vadd.f32 %v5316, %v5572
        %v5574 = vpop.f32.mrb[0].mxu0
        %5575 = vmatprep.mubr.bf16.mxu0 %v4633
        %5576 = vmatmul.mubr.bf16.gmra.mrb[0].mxu0 %v4632
        %v5577 = vpop.f32.mrb[0].mxu0
        %v5578 = vadd.f32 %v5321, %v5577
        %v5579 = vpop.f32.mrb[0].mxu0
        %v5580 = vpop.f32.mrb[0].mxu0
        %v5581 = vadd.f32 %v5324, %v5580
        %v5582 = vpop.f32.mrb[0].mxu0
        %5583 = vmatprep.mubr.bf16.mxu0 %v4635
        %5584 = vmatmul.mubr.bf16.gmra.mrb[0].mxu0 %v4634
        %v5585 = vpop.f32.mrb[0].mxu0
        %v5586 = vadd.f32 %v5329, %v5585
        %v5587 = vpop.f32.mrb[0].mxu0
        %v5588 = vpop.f32.mrb[0].mxu0
        %v5589 = vadd.f32 %v5332, %v5588
        %v5590 = vpop.f32.mrb[0].mxu0
        %5591 = vmatprep.mubr.bf16.mxu0 %v4637
        %5592 = vmatmul.mubr.bf16.gmra.mrb[0].mxu0 %v4636
        %v5593 = vpop.f32.mrb[0].mxu0
        %v5594 = vadd.f32 %v5337, %v5593
        %v5595 = vpop.f32.mrb[0].mxu0
        %v5596 = vpop.f32.mrb[0].mxu0
        %v5597 = vadd.f32 %v5340, %v5596
        %v5598 = vpop.f32.mrb[0].mxu0
        %5599 = vdwg.mxu0
        %v5600 = vsel %vm2961, %v4410, 0.0
        %v5601 = vsel %vm2962, %v4409, 0.0
        %v5602 = vsel %vm2963, %v4408, 0.0
        %v5603 = vsel %vm2964, %v4407, 0.0
        %v5604 = vsel %vm2965, %v4406, 0.0
        %v5605 = vsel %vm2966, %v4405, 0.0
        %v5606 = vsel %vm2967, %v4404, 0.0
        %v5607 = vsel %vm2968, %v4403, 0.0
        %v5608 = vsel %vm2969, %v4402, 0.0
        %v5609 = vsel %vm2970, %v4401, 0.0
        %v5610 = vsel %vm2971, %v4400, 0.0
        %v5611 = vsel %vm2972, %v4399, 0.0
        %v5612 = vsel %vm2973, %v4398, 0.0
        %v5613 = vsel %vm2974, %v4397, 0.0
        %v5614 = vsel %vm2975, %v4396, 0.0
        %v5615 = vsel %vm2976, %v4395, 0.0
        %v5616 = vsel %vm2977, %v4394, 0.0
        %v5617 = vsel %vm2978, %v4393, 0.0
        %v5618 = vsel %vm2979, %v4392, 0.0
        %v5619 = vsel %vm2980, %v4391, 0.0
        %v5620 = vsel %vm2981, %v4390, 0.0
        %v5621 = vsel %vm2982, %v4389, 0.0
        %v5622 = vsel %vm2983, %v4388, 0.0
        %v5623 = vsel %vm2984, %v4387, 0.0
        %v5624 = vsel %vm2985, %v4386, 0.0
        %v5625 = vsel %vm2986, %v4385, 0.0
        %v5626 = vsel %vm2987, %v4384, 0.0
        %v5627 = vsel %vm2988, %v4383, 0.0
        %v5628 = vsel %vm2989, %v4382, 0.0
        %v5629 = vsel %vm2990, %v4413, 0.0
        %v5630 = vsel %vm2991, %v4412, 0.0
        %v5631 = vsel %vm2992, %v4411, 0.0
        %v5632 = vpack.c.bf16 %v5601, %v5600
        %v5633 = vpack.c.bf16 %v5603, %v5602
        %v5634 = vpack.c.bf16 %v5605, %v5604
        %v5635 = vpack.c.bf16 %v5607, %v5606
        %v5636 = vpack.c.bf16 %v5609, %v5608
        %v5637 = vpack.c.bf16 %v5611, %v5610
        %v5638 = vpack.c.bf16 %v5613, %v5612
        %v5639 = vpack.c.bf16 %v5615, %v5614
        %v5640 = vpack.c.bf16 %v5617, %v5616
        %v5641 = vpack.c.bf16 %v5619, %v5618
        %v5642 = vpack.c.bf16 %v5621, %v5620
        %v5643 = vpack.c.bf16 %v5623, %v5622
        %v5644 = vpack.c.bf16 %v5625, %v5624
        %v5645 = vpack.c.bf16 %v5627, %v5626
        %v5646 = vpack.c.bf16 %v5629, %v5628
        %v5647 = vpack.c.bf16 %v5631, %v5630
        %v5648 = vld [vmem:[%s10 + $0x100] sm:$0xf]
        %v5649 = vld [vmem:[%s10 + $0x104] sm:$0xf]
        %v5650 = vld [vmem:[%s10 + $0x108] sm:$0xf]
        %v5651 = vld [vmem:[%s10 + $0x10c] sm:$0xf]
        %v5652 = vld [vmem:[%s10 + $0x110] sm:$0xf]
        %v5653 = vld [vmem:[%s10 + $0x114] sm:$0xf]
        %v5654 = vld [vmem:[%s10 + $0x118] sm:$0xf]
        %v5655 = vld [vmem:[%s10 + $0x11c] sm:$0xf]
        %v5664 = vunpack.c.l.b16 %v5648
        %v5665 = vunpack.c.l.b16 %v5649
        %v5666 = vunpack.c.l.b16 %v5650
        %v5667 = vunpack.c.l.b16 %v5651
        %v5668 = vunpack.c.l.b16 %v5652
        %v5669 = vunpack.c.l.b16 %v5653
        %v5670 = vunpack.c.l.b16 %v5654
        %v5671 = vunpack.c.l.b16 %v5655
        %v5672 = vpack.c.b16 %v5665, %v5664
        %v5673 = vpack.c.b16 %v5667, %v5666
        %v5674 = vpack.c.b16 %v5669, %v5668
        %v5675 = vpack.c.b16 %v5671, %v5670
        %v5681 = vsel %vm469, %v5632, 0
        %v5684 = vsel %vm469, %v5633, 0
        %v5687 = vsel %vm469, %v5634, 0
        %v5690 = vsel %vm469, %v5635, 0
        %v5693 = vsel %vm469, %v5636, 0
        %v5696 = vsel %vm469, %v5637, 0
        %v5699 = vsel %vm469, %v5638, 0
        %v5702 = vsel %vm469, %v5639, 0
        %v5705 = vsel %vm469, %v5640, 0
        %v5708 = vsel %vm469, %v5641, 0
        %v5711 = vsel %vm469, %v5642, 0
        %v5714 = vsel %vm469, %v5643, 0
        %v5717 = vsel %vm469, %v5644, 0
        %v5720 = vsel %vm469, %v5645, 0
        %v5723 = vsel %vm469, %v5646, 0
        %v5726 = vsel %vm469, %v5647, 0
        %5728 = vmatprep.subr.bf16.mxu0 0
        %5729 = vmatpush1.bf16.msra.mxu0 %v5672
        %5730 = vmatprep.subr.bf16.mxu0 0
        %5731 = vmatpush1.bf16.msra.mxu0 %v5673
        %5732 = vmatprep.subr.bf16.mxu0 0
        %5733 = vmatpush1.bf16.msra.mxu0 %v5674
        %5734 = vmatprep.subr.bf16.mxu0 0
        %5735 = vmatpush1.bf16.msra.mxu0 %v5675
        %5736 = vmatprep.subr.bf16.mxu0 0
        %5737 = vmatpush1.bf16.msra.mxu0 0
        %5738 = vmatprep.subr.bf16.mxu0 0
        %5739 = vmatpush1.bf16.msra.mxu0 0
        %5740 = vmatprep.subr.bf16.mxu0 0
        %5741 = vmatpush1.bf16.msra.mxu0 0
        %5742 = vmatprep.subr.bf16.mxu0 0
        %5743 = vmatpush1.bf16.msra.mxu0 0
        %5744 = vmatprep.subr.bf16.mxu0 0
        %5745 = vmatpush1.bf16.msra.mxu0 0
        %5746 = vmatprep.subr.bf16.mxu0 0
        %5747 = vmatpush1.bf16.msra.mxu0 0
        %5748 = vmatprep.subr.bf16.mxu0 0
        %5749 = vmatpush1.bf16.msra.mxu0 0
        %5750 = vmatprep.subr.bf16.mxu0 0
        %5751 = vmatpush1.bf16.msra.mxu0 0
        %5752 = vmatprep.subr.bf16.mxu0 0
        %5753 = vmatpush1.bf16.msra.mxu0 0
        %5754 = vmatprep.subr.bf16.mxu0 0
        %5755 = vmatpush1.bf16.msra.mxu0 0
        %5756 = vmatprep.subr.bf16.mxu0 0
        %5757 = vmatpush1.bf16.msra.mxu0 0
        %5758 = vmatprep.subr.bf16.mxu0 0
        %5759 = vmatpush1.bf16.msra.mxu0 0
        %5760 = vmatprep.mubr.bf16.mxu0 0
        %5761 = vmatmul.mubr.bf16.gmra.mrb[0].mxu0 %v5681
        %v5762 = vpop.f32.mrb[0].mxu0
        %v5763 = vadd.f32 0.0, %v5762
        %v5764 = vpop.f32.mrb[0].mxu0
        %v5765 = vpop.f32.mrb[0].mxu0
        %v5766 = vadd.f32 0.0, %v5765
        %v5767 = vpop.f32.mrb[0].mxu0
        %5768 = vmatprep.mubr.bf16.mxu0 0
        %5769 = vmatmul.mubr.bf16.gmra.mrb[0].mxu0 %v5684
        %v5770 = vpop.f32.mrb[0].mxu0
        %v5771 = vadd.f32 0.0, %v5770
        %v5772 = vpop.f32.mrb[0].mxu0
        %v5773 = vpop.f32.mrb[0].mxu0
        %v5774 = vadd.f32 0.0, %v5773
        %v5775 = vpop.f32.mrb[0].mxu0
        %5776 = vmatprep.mubr.bf16.mxu0 0
        %5777 = vmatmul.mubr.bf16.gmra.mrb[0].mxu0 %v5687
        %v5778 = vpop.f32.mrb[0].mxu0
        %v5779 = vadd.f32 0.0, %v5778
        %v5780 = vpop.f32.mrb[0].mxu0
        %v5781 = vpop.f32.mrb[0].mxu0
        %v5782 = vadd.f32 0.0, %v5781
        %v5783 = vpop.f32.mrb[0].mxu0
        %5784 = vmatprep.mubr.bf16.mxu0 0
        %5785 = vmatmul.mubr.bf16.gmra.mrb[0].mxu0 %v5690
        %v5786 = vpop.f32.mrb[0].mxu0
        %v5787 = vadd.f32 0.0, %v5786
        %v5788 = vpop.f32.mrb[0].mxu0
        %v5789 = vpop.f32.mrb[0].mxu0
        %v5790 = vadd.f32 0.0, %v5789
        %v5791 = vpop.f32.mrb[0].mxu0
        %5792 = vmatprep.mubr.bf16.mxu0 0
        %5793 = vmatmul.mubr.bf16.gmra.mrb[0].mxu0 %v5693
        %v5794 = vpop.f32.mrb[0].mxu0
        %v5795 = vadd.f32 0.0, %v5794
        %v5796 = vpop.f32.mrb[0].mxu0
        %v5797 = vpop.f32.mrb[0].mxu0
        %v5798 = vadd.f32 0.0, %v5797
        %v5799 = vpop.f32.mrb[0].mxu0
        %5800 = vmatprep.mubr.bf16.mxu0 0
        %5801 = vmatmul.mubr.bf16.gmra.mrb[0].mxu0 %v5696
        %v5802 = vpop.f32.mrb[0].mxu0
        %v5803 = vadd.f32 0.0, %v5802
        %v5804 = vpop.f32.mrb[0].mxu0
        %v5805 = vpop.f32.mrb[0].mxu0
        %v5806 = vadd.f32 0.0, %v5805
        %v5807 = vpop.f32.mrb[0].mxu0
        %5808 = vmatprep.mubr.bf16.mxu0 0
        %5809 = vmatmul.mubr.bf16.gmra.mrb[0].mxu0 %v5699
        %v5810 = vpop.f32.mrb[0].mxu0
        %v5811 = vadd.f32 0.0, %v5810
        %v5812 = vpop.f32.mrb[0].mxu0
        %v5813 = vpop.f32.mrb[0].mxu0
        %v5814 = vadd.f32 0.0, %v5813
        %v5815 = vpop.f32.mrb[0].mxu0
        %5816 = vmatprep.mubr.bf16.mxu0 0
        %5817 = vmatmul.mubr.bf16.gmra.mrb[0].mxu0 %v5702
        %v5818 = vpop.f32.mrb[0].mxu0
        %v5819 = vadd.f32 0.0, %v5818
        %v5820 = vpop.f32.mrb[0].mxu0
        %v5821 = vpop.f32.mrb[0].mxu0
        %v5822 = vadd.f32 0.0, %v5821
        %v5823 = vpop.f32.mrb[0].mxu0
        %5824 = vmatprep.mubr.bf16.mxu0 0
        %5825 = vmatmul.mubr.bf16.gmra.mrb[0].mxu0 %v5705
        %v5826 = vpop.f32.mrb[0].mxu0
        %v5827 = vadd.f32 0.0, %v5826
        %v5828 = vpop.f32.mrb[0].mxu0
        %v5829 = vpop.f32.mrb[0].mxu0
        %v5830 = vadd.f32 0.0, %v5829
        %v5831 = vpop.f32.mrb[0].mxu0
        %5832 = vmatprep.mubr.bf16.mxu0 0
        %5833 = vmatmul.mubr.bf16.gmra.mrb[0].mxu0 %v5708
        %v5834 = vpop.f32.mrb[0].mxu0
        %v5835 = vadd.f32 0.0, %v5834
        %v5836 = vpop.f32.mrb[0].mxu0
        %v5837 = vpop.f32.mrb[0].mxu0
        %v5838 = vadd.f32 0.0, %v5837
        %v5839 = vpop.f32.mrb[0].mxu0
        %5840 = vmatprep.mubr.bf16.mxu0 0
        %5841 = vmatmul.mubr.bf16.gmra.mrb[0].mxu0 %v5711
        %v5842 = vpop.f32.mrb[0].mxu0
        %v5843 = vadd.f32 0.0, %v5842
        %v5844 = vpop.f32.mrb[0].mxu0
        %v5845 = vpop.f32.mrb[0].mxu0
        %v5846 = vadd.f32 0.0, %v5845
        %v5847 = vpop.f32.mrb[0].mxu0
        %5848 = vmatprep.mubr.bf16.mxu0 0
        %5849 = vmatmul.mubr.bf16.gmra.mrb[0].mxu0 %v5714
        %v5850 = vpop.f32.mrb[0].mxu0
        %v5851 = vadd.f32 0.0, %v5850
        %v5852 = vpop.f32.mrb[0].mxu0
        %v5853 = vpop.f32.mrb[0].mxu0
        %v5854 = vadd.f32 0.0, %v5853
        %v5855 = vpop.f32.mrb[0].mxu0
        %5856 = vmatprep.mubr.bf16.mxu0 0
        %5857 = vmatmul.mubr.bf16.gmra.mrb[0].mxu0 %v5717
        %v5858 = vpop.f32.mrb[0].mxu0
        %v5859 = vadd.f32 0.0, %v5858
        %v5860 = vpop.f32.mrb[0].mxu0
        %v5861 = vpop.f32.mrb[0].mxu0
        %v5862 = vadd.f32 0.0, %v5861
        %v5863 = vpop.f32.mrb[0].mxu0
        %5864 = vmatprep.mubr.bf16.mxu0 0
        %5865 = vmatmul.mubr.bf16.gmra.mrb[0].mxu0 %v5720
        %v5866 = vpop.f32.mrb[0].mxu0
        %v5867 = vadd.f32 0.0, %v5866
        %v5868 = vpop.f32.mrb[0].mxu0
        %v5869 = vpop.f32.mrb[0].mxu0
        %v5870 = vadd.f32 0.0, %v5869
        %v5871 = vpop.f32.mrb[0].mxu0
        %5872 = vmatprep.mubr.bf16.mxu0 0
        %5873 = vmatmul.mubr.bf16.gmra.mrb[0].mxu0 %v5723
        %v5874 = vpop.f32.mrb[0].mxu0
        %v5875 = vadd.f32 0.0, %v5874
        %v5876 = vpop.f32.mrb[0].mxu0
        %v5877 = vpop.f32.mrb[0].mxu0
        %v5878 = vadd.f32 0.0, %v5877
        %v5879 = vpop.f32.mrb[0].mxu0
        %5880 = vmatprep.mubr.bf16.mxu0 0
        %5881 = vmatmul.mubr.bf16.gmra.mrb[0].mxu0 %v5726
        %v5882 = vpop.f32.mrb[0].mxu0
        %v5883 = vadd.f32 0.0, %v5882
        %v5884 = vpop.f32.mrb[0].mxu0
        %v5885 = vpop.f32.mrb[0].mxu0
        %v5886 = vadd.f32 0.0, %v5885
        %v5887 = vpop.f32.mrb[0].mxu0
        %5888 = vdwg.mxu0
        %v5889 = vadd.f32 %v5474, %v5763
        %v5890 = vadd.f32 %v5477, %v5766
        %v5891 = vadd.f32 %v5482, %v5771
        %v5892 = vadd.f32 %v5485, %v5774
        %v5893 = vadd.f32 %v5490, %v5779
        %v5894 = vadd.f32 %v5493, %v5782
        %v5895 = vadd.f32 %v5498, %v5787
        %v5896 = vadd.f32 %v5501, %v5790
        %v5897 = vadd.f32 %v5506, %v5795
        %v5898 = vadd.f32 %v5509, %v5798
        %v5899 = vadd.f32 %v5514, %v5803
        %v5900 = vadd.f32 %v5517, %v5806
        %v5901 = vadd.f32 %v5522, %v5811
        %v5902 = vadd.f32 %v5525, %v5814
        %v5903 = vadd.f32 %v5530, %v5819
        %v5904 = vadd.f32 %v5533, %v5822
        %v5905 = vadd.f32 %v5538, %v5827
        %v5906 = vadd.f32 %v5541, %v5830
        %v5907 = vadd.f32 %v5546, %v5835
        %v5908 = vadd.f32 %v5549, %v5838
        %v5909 = vadd.f32 %v5554, %v5843
        %v5910 = vadd.f32 %v5557, %v5846
        %v5911 = vadd.f32 %v5562, %v5851
        %v5912 = vadd.f32 %v5565, %v5854
        %v5913 = vadd.f32 %v5570, %v5859
        %v5914 = vadd.f32 %v5573, %v5862
        %v5915 = vadd.f32 %v5578, %v5867
        %v5916 = vadd.f32 %v5581, %v5870
        %v5917 = vadd.f32 %v5586, %v5875
        %v5918 = vadd.f32 %v5589, %v5878
        %v5919 = vadd.f32 %v5594, %v5883
        %v5920 = vadd.f32 %v5597, %v5886
        %v5922 = vlaneseq
        %v5923 = vshrl.u32 %v5922, 7
        %v5924 = vsub.s32 0, %v5923
        %v5925 = vrot.slane %v4093, %v5924
        %v5927 = vadd.f32 %v5889, %v5925
        %v5928 = vadd.f32 %v5890, %v5925
        %v5929 = vadd.f32 %v5891, %v5925
        %v5930 = vadd.f32 %v5892, %v5925
        %v5931 = vadd.f32 %v5893, %v5925
        %v5932 = vadd.f32 %v5894, %v5925
        %v5933 = vadd.f32 %v5895, %v5925
        %v5934 = vadd.f32 %v5896, %v5925
        %v5935 = vadd.f32 %v5897, %v5925
        %v5936 = vadd.f32 %v5898, %v5925
        %v5937 = vadd.f32 %v5899, %v5925
        %v5938 = vadd.f32 %v5900, %v5925
        %v5939 = vadd.f32 %v5901, %v5925
        %v5940 = vadd.f32 %v5902, %v5925
        %v5941 = vadd.f32 %v5903, %v5925
        %v5942 = vadd.f32 %v5904, %v5925
        %v5943 = vadd.f32 %v5905, %v5925
        %v5944 = vadd.f32 %v5906, %v5925
        %v5945 = vadd.f32 %v5907, %v5925
        %v5946 = vadd.f32 %v5908, %v5925
        %v5947 = vadd.f32 %v5909, %v5925
        %v5948 = vadd.f32 %v5910, %v5925
        %v5949 = vadd.f32 %v5911, %v5925
        %v5950 = vadd.f32 %v5912, %v5925
        %v5951 = vadd.f32 %v5913, %v5925
        %v5952 = vadd.f32 %v5914, %v5925
        %v5953 = vadd.f32 %v5915, %v5925
        %v5954 = vadd.f32 %v5916, %v5925
        %v5955 = vadd.f32 %v5917, %v5925
        %v5956 = vadd.f32 %v5918, %v5925
        %v5957 = vadd.f32 %v5919, %v5925
        %v5958 = vadd.f32 %v5920, %v5925
        %v5959 = vadd.f32 %v5927, %v3359
        %v5960 = vadd.f32 %v5928, %v3360
        %v5961 = vadd.f32 %v5929, %v3361
        %v5962 = vadd.f32 %v5930, %v3362
        %v5963 = vadd.f32 %v5931, %v3363
        %v5964 = vadd.f32 %v5932, %v3364
        %v5965 = vadd.f32 %v5933, %v3365
        %v5966 = vadd.f32 %v5934, %v3366
        %v5967 = vadd.f32 %v5935, %v3367
        %v5968 = vadd.f32 %v5936, %v3368
        %v5969 = vadd.f32 %v5937, %v3369
        %v5970 = vadd.f32 %v5938, %v3370
        %v5971 = vadd.f32 %v5939, %v3371
        %v5972 = vadd.f32 %v5940, %v3372
        %v5973 = vadd.f32 %v5941, %v3373
        %v5974 = vadd.f32 %v5942, %v3374
        %v5975 = vadd.f32 %v5943, %v3375
        %v5976 = vadd.f32 %v5944, %v3376
        %v5977 = vadd.f32 %v5945, %v3377
        %v5978 = vadd.f32 %v5946, %v3378
        %v5979 = vadd.f32 %v5947, %v3379
        %v5980 = vadd.f32 %v5948, %v3380
        %v5981 = vadd.f32 %v5949, %v3381
        %v5982 = vadd.f32 %v5950, %v3382
        %v5983 = vadd.f32 %v5951, %v3383
        %v5984 = vadd.f32 %v5952, %v3384
        %v5985 = vadd.f32 %v5953, %v3385
        %v5986 = vadd.f32 %v5954, %v3386
        %v5987 = vadd.f32 %v5955, %v3387
        %v5988 = vadd.f32 %v5956, %v3388
        %v5989 = vadd.f32 %v5957, %v3389
        %v5990 = vadd.f32 %v5958, %v3390
        %5991 = vst.msk [vmem:[%s417] sm:$0xff] %vm469, %v5959
        %5992 = vst.msk [vmem:[%s417 + $0x8] sm:$0xff] %vm469, %v5960
        %5993 = vst.msk [vmem:[%s417 + $0x10] sm:$0xff] %vm469, %v5961
        %5994 = vst.msk [vmem:[%s417 + $0x18] sm:$0xff] %vm469, %v5962
        %5995 = vst.msk [vmem:[%s417 + $0x20] sm:$0xff] %vm469, %v5963
        %5996 = vst.msk [vmem:[%s417 + $0x28] sm:$0xff] %vm469, %v5964
        %5997 = vst.msk [vmem:[%s417 + $0x30] sm:$0xff] %vm469, %v5965
        %5998 = vst.msk [vmem:[%s417 + $0x38] sm:$0xff] %vm469, %v5966
        %5999 = vst.msk [vmem:[%s417 + $0x40] sm:$0xff] %vm469, %v5967
        %6000 = vst.msk [vmem:[%s417 + $0x48] sm:$0xff] %vm469, %v5968
        %6001 = vst.msk [vmem:[%s417 + $0x50] sm:$0xff] %vm469, %v5969
        %6002 = vst.msk [vmem:[%s417 + $0x58] sm:$0xff] %vm469, %v5970
        %6003 = vst.msk [vmem:[%s417 + $0x60] sm:$0xff] %vm469, %v5971
        %6004 = vst.msk [vmem:[%s417 + $0x68] sm:$0xff] %vm469, %v5972
        %6005 = vst.msk [vmem:[%s417 + $0x70] sm:$0xff] %vm469, %v5973
        %6006 = vst.msk [vmem:[%s417 + $0x78] sm:$0xff] %vm469, %v5974
        %6007 = vst.msk [vmem:[%s417 + $0x80] sm:$0xff] %vm469, %v5975
        %6008 = vst.msk [vmem:[%s417 + $0x88] sm:$0xff] %vm469, %v5976
        %6009 = vst.msk [vmem:[%s417 + $0x90] sm:$0xff] %vm469, %v5977
        %6010 = vst.msk [vmem:[%s417 + $0x98] sm:$0xff] %vm469, %v5978
        %6011 = vst.msk [vmem:[%s417 + $0xa0] sm:$0xff] %vm469, %v5979
        %6012 = vst.msk [vmem:[%s417 + $0xa8] sm:$0xff] %vm469, %v5980
        %6013 = vst.msk [vmem:[%s417 + $0xb0] sm:$0xff] %vm469, %v5981
        %6014 = vst.msk [vmem:[%s417 + $0xb8] sm:$0xff] %vm469, %v5982
        %6015 = vst.msk [vmem:[%s417 + $0xc0] sm:$0xff] %vm469, %v5983
        %6016 = vst.msk [vmem:[%s417 + $0xc8] sm:$0xff] %vm469, %v5984
        %6017 = vst.msk [vmem:[%s417 + $0xd0] sm:$0xff] %vm469, %v5985
        %6018 = vst.msk [vmem:[%s417 + $0xd8] sm:$0xff] %vm469, %v5986
        %6019 = vst.msk [vmem:[%s417 + $0xe0] sm:$0xff] %vm469, %v5987
        %6020 = vst.msk [vmem:[%s417 + $0xe8] sm:$0xff] %vm469, %v5988
        %6021 = vst.msk [vmem:[%s417 + $0xf0] sm:$0xff] %vm469, %v5989
        %6022 = vst.msk [vmem:[%s417 + $0xf8] sm:$0xff] %vm469, %v5990
        %s6023 = sand.u32 %s296, 1
        %s6024 = scalar_lea.sflag [#allocation4], %s6023
        %s6025 = sand.u32 %s296, 1
        %s6026 = smul.addr %s6025, 256
        %s6027 = scalar_lea.vmem [#allocation3], %s6026
        // Predicated region
        $region69: #{resblock_forward.1} parent=67 // pred_check
          %p6028 = pneg %p306
        $region70: #{resblock_forward.1} parent=67 // pred_check_branch
          %6030 = sbr.rel (%p6028) target = $region72
        $region71: #{resblock_forward.1} parent=67 // pred_region
          %s6032 = ssub.s32 4096, 4096
          %6033 = vsyncadd %s6024, %s6032
          %s6034 = smul.addr %s26, 32
          %s6035 = smul.addr %s6034, 128
          %s6036 = scalar_lea.hbm %s12, %s6035
          %s6037 = sshll.u32 %s6027, 4
          %s6038 = int_to_ptr.vmem [resolvable:$true] %s6037
          %6043 = dma.vmem_to_hbm [thread:$0]  %s6038, 4096, %s6036, %s6024, 128, 128, 8
        $region72: #{resblock_forward.1} parent=67 // pred_fallthru
          _
      $region68: #{resblock_forward.1} parent=5 // pred_fallthru
        _
      %p6044 = scmp.le.s32.totalorder 2, %s21
      // Predicated region
      $region73: #{resblock_forward.1} parent=5 // pred_check
        %p6045 = pneg %p6044
      $region74: #{resblock_forward.1} parent=5 // pred_check_branch
        %6047 = sbr.rel (%p6045) target = $region76
      $region75: #{resblock_forward.1} parent=5 // pred_region
        %s6048 = ssub.s32 %s21, 2
        // Predicated region
        $region77: #{resblock_forward.1} parent=75 // pred_check
          %p6049 = pneg %p312
        $region78: #{resblock_forward.1} parent=75 // pred_check_branch
          %6051 = sbr.rel (%p6049) target = $region80
        $region79: #{resblock_forward.1} parent=75 // pred_region
          %s6052 = sand.u32 %s297, 1
          %s6053 = scalar_lea.sflag [#allocation4], %s6052
          %s6054 = sand.u32 %s297, 1
          %s6055 = smul.addr %s6054, 256
          %s6056 = scalar_lea.vmem [#allocation3], %s6055
          %6057 = dma.done %s6053, 4096
        $region80: #{resblock_forward.1} parent=75 // pred_fallthru
          _
      $region76: #{resblock_forward.1} parent=5 // pred_fallthru
        _
    $region6: #{resblock_forward.1} parent=1 // loop_footer
      %s25 = sadd.s32 1, %s21
    $region7: #{resblock_forward.1} parent=1 // loop_footer_branch
      %20 = sbr.rel target = $region3
    $region8: #{resblock_forward.1} parent=1 // loop_exit
      _
    %6058 = vsyncpa [#allocation4], 1
    %s6059 = scalar_lea.sflag [#allocation4], 1
    %6060 = vsyncpa %s6059, 1

</llo_original>
